<compile_context>
chip_gen: v5e
topology: v5e:2x2
jax: 0.10.0
libtpu: 0.0.40
codegen_flags: <defaults>
</compile_context>

<pallas_src>
import functools

import jax
import jax.numpy as jnp
import numpy as np
from jax import lax
from jax.experimental import pallas as pl
from jax.experimental.pallas import tpu as pltpu

EPS = 1e-5
PAD = 16   # zero-halo rows between images = one bf16 (16,128) sublane tile


def _resblock_kernel(x_ref, bw1_ref, g1_ref, be1_ref, g2_ref, be2_ref,
                     bw2_hbm_ref, out_ref, pad_ref, bw2_vmem_ref, dma_sem,
                     *, n_img, height, width, chans):
    """Fused ResBlock forward, whole (small) batch resident in VMEM.

    x_ref       : (N*H, W*C)        f32   rows=(n,h), lanes=(w,c)
    bw1_ref     : (3, W*C, W*C)     bf16  banded conv1 weights (VMEM)
    g*/be*      : (1, C)            f32   BN gamma / beta
    bw2_hbm_ref : (3, W*C, W*C)     bf16  banded conv2 weights (ANY/HBM)
    out_ref     : (N*H, W*C)        f32
    pad_ref     : (N*(PAD+H)+PAD, W*C) bf16  height-padded activation scratch
    bw2_vmem_ref: (3, W*C, W*C)     bf16  VMEM landing buffer for conv2 weights
    dma_sem     : DMA semaphore for the conv2 weight copy
    """
    N, H, W, C = n_img, height, width, chans
    WC = W * C
    BLK = PAD + H                      # per-image block rows (32: tile-aligned)
    inv_m = 1.0 / float(N * H * W)

    # --- Start the conv2 weight DMA; it overlaps conv1 + bn1 compute. -------
    bw2_copy = pltpu.make_async_copy(bw2_hbm_ref, bw2_vmem_ref, dma_sem)
    bw2_copy.start()

    # --- Zero the halo blocks once (whole sublane/lane-tile aligned stores).
    # Only rows {n*BLK+PAD-1, n*BLK+PAD+H} are ever read outside the
    # interiors, but zeroing whole 16-row blocks keeps every store unmasked.
    zblk = jnp.zeros((PAD, WC), jnp.bfloat16)
    for n in range(N + 1):
        pad_ref[n * BLK:n * BLK + PAD, :] = zblk

    def fill_interior(rows_fn):
        """Write per-image (H, W*C) activations (as bf16) into the interiors.
        Interior of image n = rows [n*BLK+PAD, n*BLK+PAD+H): full-tile,
        unmasked, lane-dense stores."""
        for n in range(N):
            pad_ref[n * BLK + PAD:n * BLK + PAD + H, :] = \
                rows_fn(n).astype(jnp.bfloat16)

    def conv3x3(w_ref):
        """3x3 conv = 3 banded matmuls, ky-outer, all images stacked along M
        (each B_ky is fed to the MXU once per conv, M = N*H, K = W*C).
        No conv bias (exactly cancelled by training-mode BN)."""
        acc = None
        for ky in range(3):
            lhs = jnp.concatenate(
                [pad_ref[n * BLK + PAD - 1 + ky:
                         n * BLK + PAD - 1 + ky + H, :] for n in range(N)],
                axis=0)                                        # (N*H, WC) bf16
            d = jnp.dot(lhs, w_ref[ky],
                        preferred_element_type=jnp.float32)   # (N*H, WC) f32
            acc = d if acc is None else acc + d
        return acc

    def fold_w(v):
        """(1, W*C) -> (1, C): sum the W lane groups of size C (log2 tree)."""
        w = W
        while w > 1 and w % 2 == 0:
            w //= 2
            v = v[:, :w * C] + v[:, w * C:]
        out = v[:, :C]
        for i in range(1, w):          # leftover groups if W not a power of 2
            out = out + v[:, i * C:(i + 1) * C]
        return out

    def bcast_w(vc):
        """(1, C) -> (1, W*C): repeat along lanes by log2 doubling."""
        v, w = vc, 1
        while 2 * w <= W:
            v = jnp.concatenate([v, v], axis=1)
            w *= 2
        if w < W:
            v = jnp.concatenate([v] + [vc] * (W - w), axis=1)
        return v

    def batchnorm(y, g_ref, b_ref):
        """Training-mode BN (stats over N,H,W; biased variance, eps=1e-5).
        One-pass per-lane sums, folded to per-channel totals."""
        s1 = fold_w(jnp.sum(y, axis=0, keepdims=True))        # (1, C)
        s2 = fold_w(jnp.sum(y * y, axis=0, keepdims=True))    # (1, C)
        mean = s1 * inv_m
        var = jnp.maximum(s2 * inv_m - mean * mean, 0.0)
        scale_c = g_ref[...] * lax.rsqrt(var + EPS)            # (1, C)
        shift_c = b_ref[...] - mean * scale_c
        return y * bcast_w(scale_c) + bcast_w(shift_c)

    # conv1 -> bn1 -> relu   (x is not kept live across the convs: it is
    # re-read from VMEM only at the residual add).
    fill_interior(lambda n: x_ref[n * H:(n + 1) * H, :])
    y = jnp.maximum(batchnorm(conv3x3(bw1_ref), g1_ref, be1_ref), 0.0)

    # conv2 -> bn2 -> +residual -> relu
    fill_interior(lambda n: y[n * H:(n + 1) * H, :])
    bw2_copy.wait()                          # conv2 weights landed in VMEM
    z = batchnorm(conv3x3(bw2_vmem_ref), g2_ref, be2_ref)
    out_ref[...] = jnp.maximum(z + x_ref[...], 0.0)


@jax.jit
def resblock_forward(x_nchw, bw1, g1, be1, bw2, g2, be2):
    """x_nchw: (N, C, H, W) f32.  bw*: (3, W*C, W*C) bf16 banded weights
    (see make_banded_weights).  g*/be*: (1, C) f32 BN affine parameters."""
    N, C, H, W = x_nchw.shape
    # TODO(synk): when stacking many ResBlocks, keep activations in this fused
    # (N*H, W*C) layout across blocks so the NCHW<->NHWC transposes amortize
    # to once per network instead of once per block.
    x_f = jnp.transpose(x_nchw, (0, 2, 3, 1)).reshape(N * H, W * C)

    vmem = pl.BlockSpec(memory_space=pltpu.MemorySpace.VMEM)
    any_spec = pl.BlockSpec(memory_space=pl.ANY)       # conv2 weights stay in HBM
    kernel = functools.partial(_resblock_kernel, n_img=N, height=H, width=W,
                               chans=C)
    # TODO(synk): for larger shapes / v7x, add a grid split over N (or H) with
    # dimension_semantics=("parallel",) plus a two-pass BN for the global
    # batch statistics, and (v5e especially) switch to a W-chunked Toeplitz
    # band (Wt=4..6) to cut banded-weight HBM traffic ~12x; re-derive the
    # VMEM budget against v7x's 64 MiB.  At this size (~3.3 MB resident) a
    # single gridless program per chip is the right shape.
    out = pl.pallas_call(
        kernel,
        out_shape=jax.ShapeDtypeStruct((N * H, W * C), jnp.float32),
        in_specs=[vmem, vmem, vmem, vmem, vmem, vmem, any_spec],
        out_specs=vmem,
        scratch_shapes=[
            pltpu.VMEM((N * (PAD + H) + PAD, W * C), jnp.bfloat16),  # padded acts
            pltpu.VMEM((3, W * C, W * C), jnp.bfloat16),             # conv2 weights
            pltpu.SemaphoreType.DMA(()),                             # weight-DMA sem
        ],
    )(x_f, bw1, g1, be1, g2, be2, bw2)

    return jnp.transpose(out.reshape(N, H, W, C), (0, 3, 1, 2))


def make_banded_weights(w_hwio, width, dtype=jnp.bfloat16):
    """Fold the kx taps of a 3x3 conv into lane-aligned banded matrices.

    w_hwio: (3, 3, Cin, Cout).  Returns (3, width*Cin, width*Cout) with
        B[ky, ww*Cin + ci, w*Cout + co] = w_hwio[ky, ww-w+1, ci, co]
    for |ww - w| <= 1 and zero otherwise (out-of-range width taps only ever
    multiply the zero padding, so they are dropped), so that summing over ky
    of (padded_activation_row(h-1+ky) @ B[ky]) equals conv output row h.
    """
    kh, kw, cin, cout = w_hwio.shape
    mats = []
    for ky in range(kh):
        b = jnp.zeros((width * cin, width * cout), jnp.float32)
        for kx in range(kw):
            # output column w reads input column ww = w + kx - 1.
            sel = jnp.eye(width, width, k=1 - kx, dtype=jnp.float32)
            b = b + jnp.kron(sel, w_hwio[ky, kx].astype(jnp.float32))
        mats.append(b)
    return jnp.stack(mats).astype(dtype)


def reference_forward(x, w1_oihw, b1, g1, be1, w2_oihw, b2, g2, be2):
    """Pure-JAX (XLA conv, f32 HIGHEST precision) reference, NCHW,
    training-mode BN, *with* conv biases."""
    def conv(a, w, b):
        y = lax.conv_general_dilated(
            a, w, window_strides=(1, 1), padding=((1, 1), (1, 1)),
            dimension_numbers=('NCHW', 'OIHW', 'NCHW'),
            precision=lax.Precision.HIGHEST)
        return y + b.reshape(1, -1, 1, 1)

    def bn(a, g, be):
        m = jnp.mean(a, axis=(0, 2, 3), keepdims=True)
        v = jnp.mean((a - m) ** 2, axis=(0, 2, 3), keepdims=True)
        return ((a - m) * lax.rsqrt(v + EPS) * g.reshape(1, -1, 1, 1)
                + be.reshape(1, -1, 1, 1))

    y = jax.nn.relu(bn(conv(x, w1_oihw, b1), g1, be1))
    z = bn(conv(y, w2_oihw, b2), g2, be2)
    return jax.nn.relu(z + x)


if __name__ == "__main__":
    # Shapes implied by ResBlock(num_hidden): NCHW input with C == num_hidden.
    N, C, H, W = 2, 32, 16, 16          # num_hidden = 32
    key = jax.random.PRNGKey(0)
    keys = jax.random.split(key, 9)

    x = jax.random.normal(keys[0], (N, C, H, W), jnp.float32)

    scale = 1.0 / np.sqrt(9 * C)
    w1_hwio = jax.random.normal(keys[1], (3, 3, C, C), jnp.float32) * scale
    w2_hwio = jax.random.normal(keys[2], (3, 3, C, C), jnp.float32) * scale
    b1 = jax.random.normal(keys[3], (C,), jnp.float32) * 0.05
    b2 = jax.random.normal(keys[4], (C,), jnp.float32) * 0.05
    g1 = 1.0 + 0.1 * jax.random.normal(keys[5], (C,), jnp.float32)
    g2 = 1.0 + 0.1 * jax.random.normal(keys[6], (C,), jnp.float32)
    be1 = 0.1 * jax.random.normal(keys[7], (C,), jnp.float32)
    be2 = 0.1 * jax.random.normal(keys[8], (C,), jnp.float32)

    # Kernel-side parameter layouts (built once; weights are static per model).
    # Conv biases are intentionally not passed: training-mode BN cancels them
    # exactly (the reference keeps them, proving the no-op).
    bw1 = make_banded_weights(w1_hwio, W)
    bw2 = make_banded_weights(w2_hwio, W)
    row = lambda v: v.reshape(1, C)

    out = resblock_forward(x, bw1, row(g1), row(be1), bw2, row(g2), row(be2))
    out = jax.block_until_ready(out)

    # Independent f32 reference (XLA conv, OIHW weights, with conv biases).
    w1_oihw = jnp.transpose(w1_hwio, (3, 2, 0, 1))
    w2_oihw = jnp.transpose(w2_hwio, (3, 2, 0, 1))
    ref = reference_forward(x, w1_oihw, b1, g1, be1, w2_oihw, b2, g2, be2)
    ref = jax.block_until_ready(ref)

    max_err = float(jnp.max(jnp.abs(out - ref)))
    assert out.shape == (N, C, H, W) and out.dtype == jnp.float32
    # bf16 MXU operands (activations + weights, f32 accumulation) vs an f32
    # reference on unit-scale data: typical max |err| ~1e-2, worst-case tails
    # ~2e-2 over 16K outputs; gate with margin at 4e-2.
    assert max_err < 4e-2, f"mismatch vs reference: max abs err {max_err}"
    print("KERNEL_OK")
</pallas_src>

<mosaic_0001>
module attributes {stable_mosaic.version = 11 : i64} {
  func.func @_resblock_kernel(%arg0: memref<32x512xf32, #tpu.memory_space<vmem>>, %arg1: memref<3x512x512xbf16, #tpu.memory_space<vmem>>, %arg2: memref<1x32xf32, #tpu.memory_space<vmem>>, %arg3: memref<1x32xf32, #tpu.memory_space<vmem>>, %arg4: memref<1x32xf32, #tpu.memory_space<vmem>>, %arg5: memref<1x32xf32, #tpu.memory_space<vmem>>, %arg6: memref<3x512x512xbf16, #tpu.memory_space<any>>, %arg7: memref<32x512xf32, #tpu.memory_space<vmem>>, %arg8: memref<80x512xbf16, #tpu.memory_space<vmem>>, %arg9: memref<3x512x512xbf16, #tpu.memory_space<vmem>>, %arg10: memref<!tpu.dma_semaphore, #tpu.memory_space<semaphore_mem>>) attributes {dimension_semantics = [], scalar_prefetch = 0 : i64, scratch_operands = 3 : i64, tpu.core_type = #tpu.core_type<tc>} {
    tpu.enqueue_dma source(%arg6 : memref<3x512x512xbf16, #tpu.memory_space<any>>) target(%arg9 : memref<3x512x512xbf16, #tpu.memory_space<vmem>>) target_semaphore(%arg10 : memref<!tpu.dma_semaphore, #tpu.memory_space<semaphore_mem>>)
    %cst = arith.constant 0.000000e+00 : bf16
    %0 = vector.broadcast %cst : bf16 to vector<16x512xbf16>
    %c0 = arith.constant 0 : index
    %c0_0 = arith.constant 0 : index
    %1 = vector.load %arg8[%c0, %c0_0] : memref<80x512xbf16, #tpu.memory_space<vmem>>, vector<16x512xbf16>
    tpu.vector_store %arg8[%c0, %c0_0], %0 {strides = array<i32>} : memref<80x512xbf16, #tpu.memory_space<vmem>>, vector<16x512xbf16>,
    %c32 = arith.constant 32 : index
    %c0_1 = arith.constant 0 : index
    %2 = vector.load %arg8[%c32, %c0_1] : memref<80x512xbf16, #tpu.memory_space<vmem>>, vector<16x512xbf16>
    tpu.vector_store %arg8[%c32, %c0_1], %0 {strides = array<i32>} : memref<80x512xbf16, #tpu.memory_space<vmem>>, vector<16x512xbf16>,
    %c64 = arith.constant 64 : index
    %c0_2 = arith.constant 0 : index
    %3 = vector.load %arg8[%c64, %c0_2] : memref<80x512xbf16, #tpu.memory_space<vmem>>, vector<16x512xbf16>
    tpu.vector_store %arg8[%c64, %c0_2], %0 {strides = array<i32>} : memref<80x512xbf16, #tpu.memory_space<vmem>>, vector<16x512xbf16>,
    %c0_3 = arith.constant 0 : index
    %c0_4 = arith.constant 0 : index
    %4 = vector.load %arg0[%c0_3, %c0_4] : memref<32x512xf32, #tpu.memory_space<vmem>>, vector<16x512xf32>
    %5 = arith.truncf %4 : vector<16x512xf32> to vector<16x512xbf16>
    %c16 = arith.constant 16 : index
    %c0_5 = arith.constant 0 : index
    %6 = vector.load %arg8[%c16, %c0_5] : memref<80x512xbf16, #tpu.memory_space<vmem>>, vector<16x512xbf16>
    tpu.vector_store %arg8[%c16, %c0_5], %5 {strides = array<i32>} : memref<80x512xbf16, #tpu.memory_space<vmem>>, vector<16x512xbf16>,
    %c16_6 = arith.constant 16 : index
    %c0_7 = arith.constant 0 : index
    %7 = vector.load %arg0[%c16_6, %c0_7] : memref<32x512xf32, #tpu.memory_space<vmem>>, vector<16x512xf32>
    %8 = arith.truncf %7 : vector<16x512xf32> to vector<16x512xbf16>
    %c48 = arith.constant 48 : index
    %c0_8 = arith.constant 0 : index
    %9 = vector.load %arg8[%c48, %c0_8] : memref<80x512xbf16, #tpu.memory_space<vmem>>, vector<16x512xbf16>
    tpu.vector_store %arg8[%c48, %c0_8], %8 {strides = array<i32>} : memref<80x512xbf16, #tpu.memory_space<vmem>>, vector<16x512xbf16>,
    %c15 = arith.constant 15 : index
    %c0_9 = arith.constant 0 : index
    %10 = vector.load %arg8[%c15, %c0_9] : memref<80x512xbf16, #tpu.memory_space<vmem>>, vector<16x512xbf16>
    %c47 = arith.constant 47 : index
    %c0_10 = arith.constant 0 : index
    %11 = vector.load %arg8[%c47, %c0_10] : memref<80x512xbf16, #tpu.memory_space<vmem>>, vector<16x512xbf16>
    %12 = tpu.concatenate %10, %11 in 0 : vector<16x512xbf16>, vector<16x512xbf16> -> vector<32x512xbf16>
    %c0_11 = arith.constant 0 : index
    %c0_12 = arith.constant 0 : index
    %c0_13 = arith.constant 0 : index
    %13 = vector.load %arg1[%c0_11, %c0_12, %c0_13] : memref<3x512x512xbf16, #tpu.memory_space<vmem>>, vector<1x512x512xbf16>
    %14 = vector.shape_cast %13 : vector<1x512x512xbf16> to vector<512x512xbf16>
    %cst_14 = arith.constant dense<0.000000e+00> : vector<32x512xf32>
    %15 = tpu.matmul %12, %14, %cst_14 {dimension_numbers = #tpu.dot_dimension_numbers<[1], [0], [0], [1], [0, 0, 1, 1], [], []>} : vector<32x512xbf16>, vector<512x512xbf16>, vector<32x512xf32> -> vector<32x512xf32>
    %c16_15 = arith.constant 16 : index
    %c0_16 = arith.constant 0 : index
    %16 = vector.load %arg8[%c16_15, %c0_16] : memref<80x512xbf16, #tpu.memory_space<vmem>>, vector<16x512xbf16>
    %c48_17 = arith.constant 48 : index
    %c0_18 = arith.constant 0 : index
    %17 = vector.load %arg8[%c48_17, %c0_18] : memref<80x512xbf16, #tpu.memory_space<vmem>>, vector<16x512xbf16>
    %18 = tpu.concatenate %16, %17 in 0 : vector<16x512xbf16>, vector<16x512xbf16> -> vector<32x512xbf16>
    %c1 = arith.constant 1 : index
    %c0_19 = arith.constant 0 : index
    %c0_20 = arith.constant 0 : index
    %19 = vector.load %arg1[%c1, %c0_19, %c0_20] : memref<3x512x512xbf16, #tpu.memory_space<vmem>>, vector<1x512x512xbf16>
    %20 = vector.shape_cast %19 : vector<1x512x512xbf16> to vector<512x512xbf16>
    %cst_21 = arith.constant dense<0.000000e+00> : vector<32x512xf32>
    %21 = tpu.matmul %18, %20, %cst_21 {dimension_numbers = #tpu.dot_dimension_numbers<[1], [0], [0], [1], [0, 0, 1, 1], [], []>} : vector<32x512xbf16>, vector<512x512xbf16>, vector<32x512xf32> -> vector<32x512xf32>
    %22 = arith.addf %15, %21 : vector<32x512xf32>
    %c17 = arith.constant 17 : index
    %c0_22 = arith.constant 0 : index
    %23 = vector.load %arg8[%c17, %c0_22] : memref<80x512xbf16, #tpu.memory_space<vmem>>, vector<16x512xbf16>
    %c49 = arith.constant 49 : index
    %c0_23 = arith.constant 0 : index
    %24 = vector.load %arg8[%c49, %c0_23] : memref<80x512xbf16, #tpu.memory_space<vmem>>, vector<16x512xbf16>
    %25 = tpu.concatenate %23, %24 in 0 : vector<16x512xbf16>, vector<16x512xbf16> -> vector<32x512xbf16>
    %c2 = arith.constant 2 : index
    %c0_24 = arith.constant 0 : index
    %c0_25 = arith.constant 0 : index
    %26 = vector.load %arg1[%c2, %c0_24, %c0_25] : memref<3x512x512xbf16, #tpu.memory_space<vmem>>, vector<1x512x512xbf16>
    %27 = vector.shape_cast %26 : vector<1x512x512xbf16> to vector<512x512xbf16>
    %cst_26 = arith.constant dense<0.000000e+00> : vector<32x512xf32>
    %28 = tpu.matmul %25, %27, %cst_26 {dimension_numbers = #tpu.dot_dimension_numbers<[1], [0], [0], [1], [0, 0, 1, 1], [], []>} : vector<32x512xbf16>, vector<512x512xbf16>, vector<32x512xf32> -> vector<32x512xf32>
    %29 = arith.addf %22, %28 : vector<32x512xf32>
    %cst_27 = arith.constant dense<0.000000e+00> : vector<512xf32>
    %30 = vector.multi_reduction <add>, %29, %cst_27 [0] : vector<32x512xf32> to vector<512xf32>
    %31 = vector.shape_cast %30 : vector<512xf32> to vector<1x512xf32>
    %32 = vector.extract_strided_slice %31 {offsets = [0, 0], sizes = [1, 256], strides = [1, 1]} : vector<1x512xf32> to vector<1x256xf32>
    %33 = vector.extract_strided_slice %31 {offsets = [0, 256], sizes = [1, 256], strides = [1, 1]} : vector<1x512xf32> to vector<1x256xf32>
    %34 = arith.addf %32, %33 : vector<1x256xf32>
    %35 = vector.extract_strided_slice %34 {offsets = [0, 0], sizes = [1, 128], strides = [1, 1]} : vector<1x256xf32> to vector<1x128xf32>
    %36 = vector.extract_strided_slice %34 {offsets = [0, 128], sizes = [1, 128], strides = [1, 1]} : vector<1x256xf32> to vector<1x128xf32>
    %37 = arith.addf %35, %36 : vector<1x128xf32>
    %38 = vector.extract_strided_slice %37 {offsets = [0, 0], sizes = [1, 64], strides = [1, 1]} : vector<1x128xf32> to vector<1x64xf32>
    %39 = vector.extract_strided_slice %37 {offsets = [0, 64], sizes = [1, 64], strides = [1, 1]} : vector<1x128xf32> to vector<1x64xf32>
    %40 = arith.addf %38, %39 : vector<1x64xf32>
    %41 = vector.extract_strided_slice %40 {offsets = [0, 0], sizes = [1, 32], strides = [1, 1]} : vector<1x64xf32> to vector<1x32xf32>
    %42 = vector.extract_strided_slice %40 {offsets = [0, 32], sizes = [1, 32], strides = [1, 1]} : vector<1x64xf32> to vector<1x32xf32>
    %43 = arith.addf %41, %42 : vector<1x32xf32>
    %44 = arith.mulf %29, %29 : vector<32x512xf32>
    %cst_28 = arith.constant dense<0.000000e+00> : vector<512xf32>
    %45 = vector.multi_reduction <add>, %44, %cst_28 [0] : vector<32x512xf32> to vector<512xf32>
    %46 = vector.shape_cast %45 : vector<512xf32> to vector<1x512xf32>
    %47 = vector.extract_strided_slice %46 {offsets = [0, 0], sizes = [1, 256], strides = [1, 1]} : vector<1x512xf32> to vector<1x256xf32>
    %48 = vector.extract_strided_slice %46 {offsets = [0, 256], sizes = [1, 256], strides = [1, 1]} : vector<1x512xf32> to vector<1x256xf32>
    %49 = arith.addf %47, %48 : vector<1x256xf32>
    %50 = vector.extract_strided_slice %49 {offsets = [0, 0], sizes = [1, 128], strides = [1, 1]} : vector<1x256xf32> to vector<1x128xf32>
    %51 = vector.extract_strided_slice %49 {offsets = [0, 128], sizes = [1, 128], strides = [1, 1]} : vector<1x256xf32> to vector<1x128xf32>
    %52 = arith.addf %50, %51 : vector<1x128xf32>
    %53 = vector.extract_strided_slice %52 {offsets = [0, 0], sizes = [1, 64], strides = [1, 1]} : vector<1x128xf32> to vector<1x64xf32>
    %54 = vector.extract_strided_slice %52 {offsets = [0, 64], sizes = [1, 64], strides = [1, 1]} : vector<1x128xf32> to vector<1x64xf32>
    %55 = arith.addf %53, %54 : vector<1x64xf32>
    %56 = vector.extract_strided_slice %55 {offsets = [0, 0], sizes = [1, 32], strides = [1, 1]} : vector<1x64xf32> to vector<1x32xf32>
    %57 = vector.extract_strided_slice %55 {offsets = [0, 32], sizes = [1, 32], strides = [1, 1]} : vector<1x64xf32> to vector<1x32xf32>
    %58 = arith.addf %56, %57 : vector<1x32xf32>
    %cst_29 = arith.constant 0.001953125 : f32
    %59 = vector.broadcast %cst_29 : f32 to vector<1x32xf32>
    %60 = arith.mulf %43, %59 : vector<1x32xf32>
    %cst_30 = arith.constant 0.001953125 : f32
    %61 = vector.broadcast %cst_30 : f32 to vector<1x32xf32>
    %62 = arith.mulf %58, %61 : vector<1x32xf32>
    %63 = arith.mulf %60, %60 : vector<1x32xf32>
    %64 = arith.subf %62, %63 : vector<1x32xf32>
    %cst_31 = arith.constant 0.000000e+00 : f32
    %65 = vector.broadcast %cst_31 : f32 to vector<1x32xf32>
    %66 = arith.maximumf %64, %65 : vector<1x32xf32>
    %c0_32 = arith.constant 0 : index
    %c0_33 = arith.constant 0 : index
    %67 = vector.load %arg2[%c0_32, %c0_33] : memref<1x32xf32, #tpu.memory_space<vmem>>, vector<1x32xf32>
    %cst_34 = arith.constant 9.99999974E-6 : f32
    %68 = vector.broadcast %cst_34 : f32 to vector<1x32xf32>
    %69 = arith.addf %66, %68 : vector<1x32xf32>
    %70 = math.rsqrt %69 : vector<1x32xf32>
    %71 = arith.mulf %67, %70 : vector<1x32xf32>
    %c0_35 = arith.constant 0 : index
    %c0_36 = arith.constant 0 : index
    %72 = vector.load %arg3[%c0_35, %c0_36] : memref<1x32xf32, #tpu.memory_space<vmem>>, vector<1x32xf32>
    %73 = arith.mulf %60, %71 : vector<1x32xf32>
    %74 = arith.subf %72, %73 : vector<1x32xf32>
    %75 = tpu.concatenate %71, %71 in 1 : vector<1x32xf32>, vector<1x32xf32> -> vector<1x64xf32>
    %76 = tpu.concatenate %75, %75 in 1 : vector<1x64xf32>, vector<1x64xf32> -> vector<1x128xf32>
    %77 = tpu.concatenate %76, %76 in 1 : vector<1x128xf32>, vector<1x128xf32> -> vector<1x256xf32>
    %78 = tpu.concatenate %77, %77 in 1 : vector<1x256xf32>, vector<1x256xf32> -> vector<1x512xf32>
    %79 = vector.broadcast %78 : vector<1x512xf32> to vector<32x512xf32>
    %80 = arith.mulf %29, %79 : vector<32x512xf32>
    %81 = tpu.concatenate %74, %74 in 1 : vector<1x32xf32>, vector<1x32xf32> -> vector<1x64xf32>
    %82 = tpu.concatenate %81, %81 in 1 : vector<1x64xf32>, vector<1x64xf32> -> vector<1x128xf32>
    %83 = tpu.concatenate %82, %82 in 1 : vector<1x128xf32>, vector<1x128xf32> -> vector<1x256xf32>
    %84 = tpu.concatenate %83, %83 in 1 : vector<1x256xf32>, vector<1x256xf32> -> vector<1x512xf32>
    %85 = vector.broadcast %84 : vector<1x512xf32> to vector<32x512xf32>
    %86 = arith.addf %80, %85 : vector<32x512xf32>
    %cst_37 = arith.constant 0.000000e+00 : f32
    %87 = vector.broadcast %cst_37 : f32 to vector<32x512xf32>
    %88 = arith.maximumf %86, %87 : vector<32x512xf32>
    %89 = vector.extract_strided_slice %88 {offsets = [0, 0], sizes = [16, 512], strides = [1, 1]} : vector<32x512xf32> to vector<16x512xf32>
    %90 = arith.truncf %89 : vector<16x512xf32> to vector<16x512xbf16>
    %c16_38 = arith.constant 16 : index
    %c0_39 = arith.constant 0 : index
    %91 = vector.load %arg8[%c16_38, %c0_39] : memref<80x512xbf16, #tpu.memory_space<vmem>>, vector<16x512xbf16>
    tpu.vector_store %arg8[%c16_38, %c0_39], %90 {strides = array<i32>} : memref<80x512xbf16, #tpu.memory_space<vmem>>, vector<16x512xbf16>,
    %92 = vector.extract_strided_slice %88 {offsets = [16, 0], sizes = [16, 512], strides = [1, 1]} : vector<32x512xf32> to vector<16x512xf32>
    %93 = arith.truncf %92 : vector<16x512xf32> to vector<16x512xbf16>
    %c48_40 = arith.constant 48 : index
    %c0_41 = arith.constant 0 : index
    %94 = vector.load %arg8[%c48_40, %c0_41] : memref<80x512xbf16, #tpu.memory_space<vmem>>, vector<16x512xbf16>
    tpu.vector_store %arg8[%c48_40, %c0_41], %93 {strides = array<i32>} : memref<80x512xbf16, #tpu.memory_space<vmem>>, vector<16x512xbf16>,
    tpu.wait_dma2 semaphore(%arg10 : memref<!tpu.dma_semaphore, #tpu.memory_space<semaphore_mem>>) src(%arg6 : memref<3x512x512xbf16, #tpu.memory_space<any>>) dst(%arg9 : memref<3x512x512xbf16, #tpu.memory_space<vmem>>)
    %c15_42 = arith.constant 15 : index
    %c0_43 = arith.constant 0 : index
    %95 = vector.load %arg8[%c15_42, %c0_43] : memref<80x512xbf16, #tpu.memory_space<vmem>>, vector<16x512xbf16>
    %c47_44 = arith.constant 47 : index
    %c0_45 = arith.constant 0 : index
    %96 = vector.load %arg8[%c47_44, %c0_45] : memref<80x512xbf16, #tpu.memory_space<vmem>>, vector<16x512xbf16>
    %97 = tpu.concatenate %95, %96 in 0 : vector<16x512xbf16>, vector<16x512xbf16> -> vector<32x512xbf16>
    %c0_46 = arith.constant 0 : index
    %c0_47 = arith.constant 0 : index
    %c0_48 = arith.constant 0 : index
    %98 = vector.load %arg9[%c0_46, %c0_47, %c0_48] : memref<3x512x512xbf16, #tpu.memory_space<vmem>>, vector<1x512x512xbf16>
    %99 = vector.shape_cast %98 : vector<1x512x512xbf16> to vector<512x512xbf16>
    %cst_49 = arith.constant dense<0.000000e+00> : vector<32x512xf32>
    %100 = tpu.matmul %97, %99, %cst_49 {dimension_numbers = #tpu.dot_dimension_numbers<[1], [0], [0], [1], [0, 0, 1, 1], [], []>} : vector<32x512xbf16>, vector<512x512xbf16>, vector<32x512xf32> -> vector<32x512xf32>
    %c16_50 = arith.constant 16 : index
    %c0_51 = arith.constant 0 : index
    %101 = vector.load %arg8[%c16_50, %c0_51] : memref<80x512xbf16, #tpu.memory_space<vmem>>, vector<16x512xbf16>
    %c48_52 = arith.constant 48 : index
    %c0_53 = arith.constant 0 : index
    %102 = vector.load %arg8[%c48_52, %c0_53] : memref<80x512xbf16, #tpu.memory_space<vmem>>, vector<16x512xbf16>
    %103 = tpu.concatenate %101, %102 in 0 : vector<16x512xbf16>, vector<16x512xbf16> -> vector<32x512xbf16>
    %c1_54 = arith.constant 1 : index
    %c0_55 = arith.constant 0 : index
    %c0_56 = arith.constant 0 : index
    %104 = vector.load %arg9[%c1_54, %c0_55, %c0_56] : memref<3x512x512xbf16, #tpu.memory_space<vmem>>, vector<1x512x512xbf16>
    %105 = vector.shape_cast %104 : vector<1x512x512xbf16> to vector<512x512xbf16>
    %cst_57 = arith.constant dense<0.000000e+00> : vector<32x512xf32>
    %106 = tpu.matmul %103, %105, %cst_57 {dimension_numbers = #tpu.dot_dimension_numbers<[1], [0], [0], [1], [0, 0, 1, 1], [], []>} : vector<32x512xbf16>, vector<512x512xbf16>, vector<32x512xf32> -> vector<32x512xf32>
    %107 = arith.addf %100, %106 : vector<32x512xf32>
    %c17_58 = arith.constant 17 : index
    %c0_59 = arith.constant 0 : index
    %108 = vector.load %arg8[%c17_58, %c0_59] : memref<80x512xbf16, #tpu.memory_space<vmem>>, vector<16x512xbf16>
    %c49_60 = arith.constant 49 : index
    %c0_61 = arith.constant 0 : index
    %109 = vector.load %arg8[%c49_60, %c0_61] : memref<80x512xbf16, #tpu.memory_space<vmem>>, vector<16x512xbf16>
    %110 = tpu.concatenate %108, %109 in 0 : vector<16x512xbf16>, vector<16x512xbf16> -> vector<32x512xbf16>
    %c2_62 = arith.constant 2 : index
    %c0_63 = arith.constant 0 : index
    %c0_64 = arith.constant 0 : index
    %111 = vector.load %arg9[%c2_62, %c0_63, %c0_64] : memref<3x512x512xbf16, #tpu.memory_space<vmem>>, vector<1x512x512xbf16>
    %112 = vector.shape_cast %111 : vector<1x512x512xbf16> to vector<512x512xbf16>
    %cst_65 = arith.constant dense<0.000000e+00> : vector<32x512xf32>
    %113 = tpu.matmul %110, %112, %cst_65 {dimension_numbers = #tpu.dot_dimension_numbers<[1], [0], [0], [1], [0, 0, 1, 1], [], []>} : vector<32x512xbf16>, vector<512x512xbf16>, vector<32x512xf32> -> vector<32x512xf32>
    %114 = arith.addf %107, %113 : vector<32x512xf32>
    %cst_66 = arith.constant dense<0.000000e+00> : vector<512xf32>
    %115 = vector.multi_reduction <add>, %114, %cst_66 [0] : vector<32x512xf32> to vector<512xf32>
    %116 = vector.shape_cast %115 : vector<512xf32> to vector<1x512xf32>
    %117 = vector.extract_strided_slice %116 {offsets = [0, 0], sizes = [1, 256], strides = [1, 1]} : vector<1x512xf32> to vector<1x256xf32>
    %118 = vector.extract_strided_slice %116 {offsets = [0, 256], sizes = [1, 256], strides = [1, 1]} : vector<1x512xf32> to vector<1x256xf32>
    %119 = arith.addf %117, %118 : vector<1x256xf32>
    %120 = vector.extract_strided_slice %119 {offsets = [0, 0], sizes = [1, 128], strides = [1, 1]} : vector<1x256xf32> to vector<1x128xf32>
    %121 = vector.extract_strided_slice %119 {offsets = [0, 128], sizes = [1, 128], strides = [1, 1]} : vector<1x256xf32> to vector<1x128xf32>
    %122 = arith.addf %120, %121 : vector<1x128xf32>
    %123 = vector.extract_strided_slice %122 {offsets = [0, 0], sizes = [1, 64], strides = [1, 1]} : vector<1x128xf32> to vector<1x64xf32>
    %124 = vector.extract_strided_slice %122 {offsets = [0, 64], sizes = [1, 64], strides = [1, 1]} : vector<1x128xf32> to vector<1x64xf32>
    %125 = arith.addf %123, %124 : vector<1x64xf32>
    %126 = vector.extract_strided_slice %125 {offsets = [0, 0], sizes = [1, 32], strides = [1, 1]} : vector<1x64xf32> to vector<1x32xf32>
    %127 = vector.extract_strided_slice %125 {offsets = [0, 32], sizes = [1, 32], strides = [1, 1]} : vector<1x64xf32> to vector<1x32xf32>
    %128 = arith.addf %126, %127 : vector<1x32xf32>
    %129 = arith.mulf %114, %114 : vector<32x512xf32>
    %cst_67 = arith.constant dense<0.000000e+00> : vector<512xf32>
    %130 = vector.multi_reduction <add>, %129, %cst_67 [0] : vector<32x512xf32> to vector<512xf32>
    %131 = vector.shape_cast %130 : vector<512xf32> to vector<1x512xf32>
    %132 = vector.extract_strided_slice %131 {offsets = [0, 0], sizes = [1, 256], strides = [1, 1]} : vector<1x512xf32> to vector<1x256xf32>
    %133 = vector.extract_strided_slice %131 {offsets = [0, 256], sizes = [1, 256], strides = [1, 1]} : vector<1x512xf32> to vector<1x256xf32>
    %134 = arith.addf %132, %133 : vector<1x256xf32>
    %135 = vector.extract_strided_slice %134 {offsets = [0, 0], sizes = [1, 128], strides = [1, 1]} : vector<1x256xf32> to vector<1x128xf32>
    %136 = vector.extract_strided_slice %134 {offsets = [0, 128], sizes = [1, 128], strides = [1, 1]} : vector<1x256xf32> to vector<1x128xf32>
    %137 = arith.addf %135, %136 : vector<1x128xf32>
    %138 = vector.extract_strided_slice %137 {offsets = [0, 0], sizes = [1, 64], strides = [1, 1]} : vector<1x128xf32> to vector<1x64xf32>
    %139 = vector.extract_strided_slice %137 {offsets = [0, 64], sizes = [1, 64], strides = [1, 1]} : vector<1x128xf32> to vector<1x64xf32>
    %140 = arith.addf %138, %139 : vector<1x64xf32>
    %141 = vector.extract_strided_slice %140 {offsets = [0, 0], sizes = [1, 32], strides = [1, 1]} : vector<1x64xf32> to vector<1x32xf32>
    %142 = vector.extract_strided_slice %140 {offsets = [0, 32], sizes = [1, 32], strides = [1, 1]} : vector<1x64xf32> to vector<1x32xf32>
    %143 = arith.addf %141, %142 : vector<1x32xf32>
    %cst_68 = arith.constant 0.001953125 : f32
    %144 = vector.broadcast %cst_68 : f32 to vector<1x32xf32>
    %145 = arith.mulf %128, %144 : vector<1x32xf32>
    %cst_69 = arith.constant 0.001953125 : f32
    %146 = vector.broadcast %cst_69 : f32 to vector<1x32xf32>
    %147 = arith.mulf %143, %146 : vector<1x32xf32>
    %148 = arith.mulf %145, %145 : vector<1x32xf32>
    %149 = arith.subf %147, %148 : vector<1x32xf32>
    %cst_70 = arith.constant 0.000000e+00 : f32
    %150 = vector.broadcast %cst_70 : f32 to vector<1x32xf32>
    %151 = arith.maximumf %149, %150 : vector<1x32xf32>
    %c0_71 = arith.constant 0 : index
    %c0_72 = arith.constant 0 : index
    %152 = vector.load %arg4[%c0_71, %c0_72] : memref<1x32xf32, #tpu.memory_space<vmem>>, vector<1x32xf32>
    %cst_73 = arith.constant 9.99999974E-6 : f32
    %153 = vector.broadcast %cst_73 : f32 to vector<1x32xf32>
    %154 = arith.addf %151, %153 : vector<1x32xf32>
    %155 = math.rsqrt %154 : vector<1x32xf32>
    %156 = arith.mulf %152, %155 : vector<1x32xf32>
    %c0_74 = arith.constant 0 : index
    %c0_75 = arith.constant 0 : index
    %157 = vector.load %arg5[%c0_74, %c0_75] : memref<1x32xf32, #tpu.memory_space<vmem>>, vector<1x32xf32>
    %158 = arith.mulf %145, %156 : vector<1x32xf32>
    %159 = arith.subf %157, %158 : vector<1x32xf32>
    %160 = tpu.concatenate %156, %156 in 1 : vector<1x32xf32>, vector<1x32xf32> -> vector<1x64xf32>
    %161 = tpu.concatenate %160, %160 in 1 : vector<1x64xf32>, vector<1x64xf32> -> vector<1x128xf32>
    %162 = tpu.concatenate %161, %161 in 1 : vector<1x128xf32>, vector<1x128xf32> -> vector<1x256xf32>
    %163 = tpu.concatenate %162, %162 in 1 : vector<1x256xf32>, vector<1x256xf32> -> vector<1x512xf32>
    %164 = vector.broadcast %163 : vector<1x512xf32> to vector<32x512xf32>
    %165 = arith.mulf %114, %164 : vector<32x512xf32>
    %166 = tpu.concatenate %159, %159 in 1 : vector<1x32xf32>, vector<1x32xf32> -> vector<1x64xf32>
    %167 = tpu.concatenate %166, %166 in 1 : vector<1x64xf32>, vector<1x64xf32> -> vector<1x128xf32>
    %168 = tpu.concatenate %167, %167 in 1 : vector<1x128xf32>, vector<1x128xf32> -> vector<1x256xf32>
    %169 = tpu.concatenate %168, %168 in 1 : vector<1x256xf32>, vector<1x256xf32> -> vector<1x512xf32>
    %170 = vector.broadcast %169 : vector<1x512xf32> to vector<32x512xf32>
    %171 = arith.addf %165, %170 : vector<32x512xf32>
    %c0_76 = arith.constant 0 : index
    %c0_77 = arith.constant 0 : index
    %172 = vector.load %arg0[%c0_76, %c0_77] : memref<32x512xf32, #tpu.memory_space<vmem>>, vector<32x512xf32>
    %173 = arith.addf %171, %172 : vector<32x512xf32>
    %cst_78 = arith.constant 0.000000e+00 : f32
    %174 = vector.broadcast %cst_78 : f32 to vector<32x512xf32>
    %175 = arith.maximumf %173, %174 : vector<32x512xf32>
    %c0_79 = arith.constant 0 : index
    %c0_80 = arith.constant 0 : index
    %176 = vector.load %arg7[%c0_79, %c0_80] : memref<32x512xf32, #tpu.memory_space<vmem>>, vector<32x512xf32>
    tpu.vector_store %arg7[%c0_79, %c0_80], %175 {strides = array<i32>} : memref<32x512xf32, #tpu.memory_space<vmem>>, vector<32x512xf32>,
    return
  }
}

</mosaic_0001>

<llo_original>
// kernel: resblock_forward.1
$region0: #{resblock_forward.1}
  #allocation0 [shape = 'u32[]', space=smem, size = 0x4, offset = 0x4, fixed_abs, tag = 'smem constant byte address 0x4 - core index']
  #allocation1 [shape = 'u32[72,128]{1,0:T(1,128)}', space=vmem, size = 0x9000, scoped, tag = 'internal scratch']
  #allocation2 [shape = 'bf16[80,512]{1,0:T(8,128)(2,1)}', space=vmem, size = 0x14000, scoped, tag = 'scratch operand']
  #allocation3 [shape = 'bf16[3,512,512]{2,1,0:T(8,128)(2,1)}', space=vmem, size = 0x180000, scoped, tag = 'scratch operand']
  #allocation4 [shape = 's32[1]{0}', space=sflag, size = 0x4, scoped, tag = 'scratch operand']
  #allocation13 [shape = 's32[]', space=sflag, size = 0x4, offset = 0, fixed_abs, tag = 'sflag constant byte address 0x0 - dummy sync flag']
  #allocation14 [shape = 's32[]', space=sflag, size = 0x4, offset = 0, fixed_abs, tag = 'sflag constant byte address 0x0 - dummy sync flag']
  #allocation15 [shape = 'u32[]', space=smem, size = 0x4, offset = 0x44, fixed_abs, tag = 'smem constant byte address 0x44 - assertion arg 0']
  #allocation16 [shape = 'u32[]', space=smem, size = 0x4, offset = 0x48, fixed_abs, tag = 'smem constant byte address 0x48 - assertion arg 1']
  %s0 = inlined_call_operand.vmem [shape: f32[32,512], index: 0, kind: input, shape index: {}]
  %s1 = inlined_call_operand.hbm [shape: bf16[3,512,512], index: 1, kind: input, shape index: {}]
  %s2 = inlined_call_operand.hbm [shape: f32[1,32], index: 2, kind: input, shape index: {}]
  %s3 = inlined_call_operand.hbm [shape: f32[1,32], index: 3, kind: input, shape index: {}]
  %s4 = inlined_call_operand.hbm [shape: f32[1,32], index: 4, kind: input, shape index: {}]
  %s5 = inlined_call_operand.hbm [shape: f32[1,32], index: 5, kind: input, shape index: {}]
  %s6 = inlined_call_operand.hbm [shape: bf16[3,512,512], index: 6, kind: input, shape index: {}]
  %s7 = inlined_call_operand.vmem [shape: f32[32,512], index: 7, kind: output, shape index: {}]
  %s8 = sld [smem:[#allocation0]]
  $region58: #{resblock_forward.1} parent=0
    _
  %s10 = ssub.s32 1, %s8
  %s11 = scalar_select 0, %s10, %s8
  $region1: #{resblock_forward.1} parent=0
    #allocation5 [shape = 'u8[1572864]{0}', space=vmem, size = 0x180000, scoped, tag = 'input window, operand 1, single buffered']
    #allocation6 [shape = 's32[1]{0}', space=sflag, size = 0x4, scoped, tag = 'scoped memory for resblock_forward.1']
    #allocation7 [shape = 'u8[512]{0}', space=vmem, size = 0x400, scoped, tag = 'input window, operand 2, single buffered']
    #allocation8 [shape = 's32[1]{0}', space=sflag, size = 0x4, scoped, tag = 'scoped memory for resblock_forward.1']
    #allocation9 [shape = 'u8[512]{0}', space=vmem, size = 0x400, scoped, tag = 'input window, operand 3, single buffered']
    #allocation10 [shape = 'u8[512]{0}', space=vmem, size = 0x400, scoped, tag = 'input window, operand 4, single buffered']
    #allocation11 [shape = 's32[1]{0}', space=sflag, size = 0x4, scoped, tag = 'scoped memory for resblock_forward.1']
    #allocation12 [shape = 'u8[512]{0}', space=vmem, size = 0x400, scoped, tag = 'input window, operand 5, single buffered']
    %12 = vsyncpa [#allocation6], 0
    %13 = vsyncpa [#allocation8], 0
    %14 = vsyncpa [#allocation11], 0
    // Predicated region
    $region2: #{resblock_forward.1} parent=1 // pred_check
      _
    $region3: #{resblock_forward.1} parent=1 // pred_check_branch
      %16 = sbr.rel (0) target = $region5
    $region4: #{resblock_forward.1} parent=1 // pred_region
      _
    $region5: #{resblock_forward.1} parent=1 // pred_fallthru
      _
    // Predicated region
    $region6: #{resblock_forward.1} parent=1 // pred_check
      _
    $region7: #{resblock_forward.1} parent=1 // pred_check_branch
      %18 = sbr.rel (0) target = $region9
    $region8: #{resblock_forward.1} parent=1 // pred_region
      %20 = vsyncadd [#allocation6], 0
      %s21 = sshll.u32 %s1, 4
      %s22 = int_to_ptr.hbm [resolvable:$true] %s21
      %s23 = sshll.u32 [#allocation5], 4
      %s24 = int_to_ptr.vmem [resolvable:$true] %s23
      %29 = dma.hbm_to_vmem [thread:$0]  %s22, 49152, %s24, [#allocation6], 256, 256, 16
    $region9: #{resblock_forward.1} parent=1 // pred_fallthru
      _
    // Predicated region
    $region10: #{resblock_forward.1} parent=1 // pred_check
      _
    $region11: #{resblock_forward.1} parent=1 // pred_check_branch
      %31 = sbr.rel (0) target = $region13
    $region12: #{resblock_forward.1} parent=1 // pred_region
      %33 = vsyncadd [#allocation8], 0
      %s35 = sshll.u32 %s2, 4
      %s36 = int_to_ptr.hbm [resolvable:$true] %s35
      %s37 = sshll.u32 [#allocation7], 4
      %s38 = int_to_ptr.vmem [resolvable:$true] %s37
      %40 = dma.hbm_to_vmem [thread:$0]  %s36, 16, %s38, [#allocation8]
    $region13: #{resblock_forward.1} parent=1 // pred_fallthru
      _
    // Predicated region
    $region14: #{resblock_forward.1} parent=1 // pred_check
      _
    $region15: #{resblock_forward.1} parent=1 // pred_check_branch
      %42 = sbr.rel (0) target = $region17
    $region16: #{resblock_forward.1} parent=1 // pred_region
      %44 = vsyncadd [#allocation8], 0
      %s46 = sshll.u32 %s3, 4
      %s47 = int_to_ptr.hbm [resolvable:$true] %s46
      %s48 = sshll.u32 [#allocation9], 4
      %s49 = int_to_ptr.vmem [resolvable:$true] %s48
      %51 = dma.hbm_to_vmem [thread:$0]  %s47, 16, %s49, [#allocation8]
    $region17: #{resblock_forward.1} parent=1 // pred_fallthru
      _
    // Predicated region
    $region18: #{resblock_forward.1} parent=1 // pred_check
      _
    $region19: #{resblock_forward.1} parent=1 // pred_check_branch
      %53 = sbr.rel (0) target = $region21
    $region20: #{resblock_forward.1} parent=1 // pred_region
      %55 = vsyncadd [#allocation11], 0
      %s57 = sshll.u32 %s4, 4
      %s58 = int_to_ptr.hbm [resolvable:$true] %s57
      %s59 = sshll.u32 [#allocation10], 4
      %s60 = int_to_ptr.vmem [resolvable:$true] %s59
      %62 = dma.hbm_to_vmem [thread:$0]  %s58, 16, %s60, [#allocation11]
    $region21: #{resblock_forward.1} parent=1 // pred_fallthru
      _
    // Predicated region
    $region22: #{resblock_forward.1} parent=1 // pred_check
      _
    $region23: #{resblock_forward.1} parent=1 // pred_check_branch
      %64 = sbr.rel (0) target = $region25
    $region24: #{resblock_forward.1} parent=1 // pred_region
      %66 = vsyncadd [#allocation11], 0
      %s68 = sshll.u32 %s5, 4
      %s69 = int_to_ptr.hbm [resolvable:$true] %s68
      %s70 = sshll.u32 [#allocation12], 4
      %s71 = int_to_ptr.vmem [resolvable:$true] %s70
      %73 = dma.hbm_to_vmem [thread:$0]  %s69, 16, %s71, [#allocation11]
    $region25: #{resblock_forward.1} parent=1 // pred_fallthru
      _
    // Predicated region
    $region26: #{resblock_forward.1} parent=1 // pred_check
      _
    $region27: #{resblock_forward.1} parent=1 // pred_check_branch
      %75 = sbr.rel (0) target = $region29
    $region28: #{resblock_forward.1} parent=1 // pred_region
      %77 = dma.done [#allocation6], 49152
    $region29: #{resblock_forward.1} parent=1 // pred_fallthru
      _
    // Predicated region
    $region30: #{resblock_forward.1} parent=1 // pred_check
      _
    $region31: #{resblock_forward.1} parent=1 // pred_check_branch
      %79 = sbr.rel (0) target = $region33
    $region32: #{resblock_forward.1} parent=1 // pred_region
      %81 = dma.done [#allocation8], 16
    $region33: #{resblock_forward.1} parent=1 // pred_fallthru
      _
    // Predicated region
    $region34: #{resblock_forward.1} parent=1 // pred_check
      _
    $region35: #{resblock_forward.1} parent=1 // pred_check_branch
      %83 = sbr.rel (0) target = $region37
    $region36: #{resblock_forward.1} parent=1 // pred_region
      %85 = dma.done [#allocation8], 16
    $region37: #{resblock_forward.1} parent=1 // pred_fallthru
      _
    // Predicated region
    $region38: #{resblock_forward.1} parent=1 // pred_check
      _
    $region39: #{resblock_forward.1} parent=1 // pred_check_branch
      %87 = sbr.rel (0) target = $region41
    $region40: #{resblock_forward.1} parent=1 // pred_region
      %89 = dma.done [#allocation11], 16
    $region41: #{resblock_forward.1} parent=1 // pred_fallthru
      _
    // Predicated region
    $region42: #{resblock_forward.1} parent=1 // pred_check
      _
    $region43: #{resblock_forward.1} parent=1 // pred_check_branch
      %91 = sbr.rel (0) target = $region45
    $region44: #{resblock_forward.1} parent=1 // pred_region
      %93 = dma.done [#allocation11], 16
    $region45: #{resblock_forward.1} parent=1 // pred_fallthru
      _
    // Predicated region
    $region46: #{resblock_forward.1} parent=1 // pred_check
      _
    $region47: #{resblock_forward.1} parent=1 // pred_check_branch
      %96 = sbr.rel target = $region49
    $region48: #{resblock_forward.1} parent=1 // pred_region
      %97 = sst [smem:[#allocation15]] [#allocation14]
      %98 = sst [smem:[#allocation16]] [#allocation13]
    $region49: #{resblock_forward.1} parent=1 // pred_fallthru
      _
    %100 = shalt.err (0)
    %s102 = sshll.u32 %s6, 4
    %s103 = int_to_ptr.hbm [resolvable:$true] %s102
    %s104 = sshll.u32 [#allocation3], 4
    %s105 = int_to_ptr.vmem [resolvable:$true] %s104
    %107 = dma.hbm_to_vmem [thread:$0]  %s103, 49152, %s105, [#allocation4]
    %108 = vst [vmem:[#allocation2] sm:$0xff] 0
    %109 = vst [vmem:[#allocation2 + $0x8] sm:$0xff] 0
    %110 = vst [vmem:[#allocation2 + $0x10] sm:$0xff] 0
    %111 = vst [vmem:[#allocation2 + $0x18] sm:$0xff] 0
    %112 = vst [vmem:[#allocation2 + $0x40] sm:$0xff] 0
    %113 = vst [vmem:[#allocation2 + $0x48] sm:$0xff] 0
    %114 = vst [vmem:[#allocation2 + $0x50] sm:$0xff] 0
    %115 = vst [vmem:[#allocation2 + $0x58] sm:$0xff] 0
    %116 = vst [vmem:[#allocation2 + $0x80] sm:$0xff] 0
    %117 = vst [vmem:[#allocation2 + $0x88] sm:$0xff] 0
    %118 = vst [vmem:[#allocation2 + $0x90] sm:$0xff] 0
    %119 = vst [vmem:[#allocation2 + $0x98] sm:$0xff] 0
    %v120 = vld [vmem:[%s0] sm:$0xff]
    %v121 = vld [vmem:[%s0 + $0x8] sm:$0xff]
    %v122 = vld [vmem:[%s0 + $0x10] sm:$0xff]
    %v123 = vld [vmem:[%s0 + $0x18] sm:$0xff]
    %v124 = vld [vmem:[%s0 + $0x20] sm:$0xff]
    %v125 = vld [vmem:[%s0 + $0x28] sm:$0xff]
    %v126 = vld [vmem:[%s0 + $0x30] sm:$0xff]
    %v127 = vld [vmem:[%s0 + $0x38] sm:$0xff]
    %v128 = vpack.c.bf16 %v121, %v120
    %v129 = vpack.c.bf16 %v123, %v122
    %v130 = vpack.c.bf16 %v125, %v124
    %v131 = vpack.c.bf16 %v127, %v126
    %132 = vst [vmem:[#allocation2 + $0x20] sm:$0xff] %v128
    %133 = vst [vmem:[#allocation2 + $0x28] sm:$0xff] %v129
    %134 = vst [vmem:[#allocation2 + $0x30] sm:$0xff] %v130
    %135 = vst [vmem:[#allocation2 + $0x38] sm:$0xff] %v131
    %v136 = vld [vmem:[%s0 + $0x40] sm:$0xff]
    %v137 = vld [vmem:[%s0 + $0x48] sm:$0xff]
    %v138 = vld [vmem:[%s0 + $0x50] sm:$0xff]
    %v139 = vld [vmem:[%s0 + $0x58] sm:$0xff]
    %v140 = vld [vmem:[%s0 + $0x60] sm:$0xff]
    %v141 = vld [vmem:[%s0 + $0x68] sm:$0xff]
    %v142 = vld [vmem:[%s0 + $0x70] sm:$0xff]
    %v143 = vld [vmem:[%s0 + $0x78] sm:$0xff]
    %v144 = vpack.c.bf16 %v137, %v136
    %v145 = vpack.c.bf16 %v139, %v138
    %v146 = vpack.c.bf16 %v141, %v140
    %v147 = vpack.c.bf16 %v143, %v142
    %148 = vst [vmem:[#allocation2 + $0x60] sm:$0xff] %v144
    %149 = vst [vmem:[#allocation2 + $0x68] sm:$0xff] %v145
    %150 = vst [vmem:[#allocation2 + $0x70] sm:$0xff] %v146
    %151 = vst [vmem:[#allocation2 + $0x78] sm:$0xff] %v147
    %v152 = vld [vmem:[#allocation2 + $0x10] sm:$0x88]
    %v153 = vld [vmem:[#allocation2 + $0x18] sm:$0x88]
    %v154 = vld [vmem:[#allocation2 + $0x20] sm:$0xff]
    %v155 = vld [vmem:[#allocation2 + $0x28] sm:$0xff]
    %v156 = vld [vmem:[#allocation2 + $0x30] sm:$0xff]
    %v157 = vld [vmem:[#allocation2 + $0x38] sm:$0xff]
    %v158 = vld [vmem:[#allocation2 + $0x50] sm:$0x88]
    %v159 = vld [vmem:[#allocation2 + $0x58] sm:$0x88]
    %v160 = vld [vmem:[#allocation2 + $0x60] sm:$0xff]
    %v161 = vld [vmem:[#allocation2 + $0x68] sm:$0xff]
    %v162 = vld [vmem:[#allocation2 + $0x70] sm:$0xff]
    %v163 = vld [vmem:[#allocation2 + $0x78] sm:$0xff]
    %v170 = vunpack.c.l.b16 %v152
    %v171 = vunpack.c.h.b16 %v152
    %v172 = vunpack.c.l.b16 %v153
    %v173 = vunpack.c.h.b16 %v153
    %v174 = vunpack.c.l.b16 %v154
    %v175 = vunpack.c.h.b16 %v154
    %v176 = vunpack.c.l.b16 %v155
    %v177 = vunpack.c.h.b16 %v155
    %v178 = vunpack.c.l.b16 %v156
    %v179 = vunpack.c.h.b16 %v156
    %v180 = vunpack.c.l.b16 %v157
    %v181 = vunpack.c.h.b16 %v157
    %v182 = vpack.c.b16 %v174, %v170
    %v183 = vpack.c.b16 %v175, %v171
    %v184 = vpack.c.b16 %v176, %v172
    %v185 = vpack.c.b16 %v177, %v173
    %v186 = vpack.c.b16 %v178, %v178
    %v187 = vpack.c.b16 %v179, %v179
    %v188 = vpack.c.b16 %v180, %v180
    %v189 = vpack.c.b16 %v181, %v181
    %vm190 = vsmask.f32 4352
    %v192 = vshrl.u32 %v182, 16
    %v194 = vrot.slane %v192, 3
    %v195 = vshll.u32 %v182, 16
    %v197 = vrot.slane %v195, 4
    %v198 = vor.u32 %v194, %v197
    %v200 = vshrl.u32 %v186, 16
    %v202 = vrot.slane %v200, 3
    %v203 = vshll.u32 %v186, 16
    %v205 = vrot.slane %v203, 4
    %v206 = vor.u32 %v202, %v205
    %v207 = vsel %vm190, %v198, %v206
    %v209 = vshrl.u32 %v183, 16
    %v211 = vrot.slane %v209, 3
    %v212 = vshll.u32 %v183, 16
    %v214 = vrot.slane %v212, 4
    %v215 = vor.u32 %v211, %v214
    %v217 = vshrl.u32 %v187, 16
    %v219 = vrot.slane %v217, 3
    %v220 = vshll.u32 %v187, 16
    %v222 = vrot.slane %v220, 4
    %v223 = vor.u32 %v219, %v222
    %v224 = vsel %vm190, %v215, %v223
    %v226 = vshrl.u32 %v184, 16
    %v228 = vrot.slane %v226, 3
    %v229 = vshll.u32 %v184, 16
    %v231 = vrot.slane %v229, 4
    %v232 = vor.u32 %v228, %v231
    %v234 = vshrl.u32 %v188, 16
    %v236 = vrot.slane %v234, 3
    %v237 = vshll.u32 %v188, 16
    %v239 = vrot.slane %v237, 4
    %v240 = vor.u32 %v236, %v239
    %v241 = vsel %vm190, %v232, %v240
    %v243 = vshrl.u32 %v185, 16
    %v245 = vrot.slane %v243, 3
    %v246 = vshll.u32 %v185, 16
    %v248 = vrot.slane %v246, 4
    %v249 = vor.u32 %v245, %v248
    %v251 = vshrl.u32 %v189, 16
    %v253 = vrot.slane %v251, 3
    %v254 = vshll.u32 %v189, 16
    %v256 = vrot.slane %v254, 4
    %v257 = vor.u32 %v253, %v256
    %v258 = vsel %vm190, %v249, %v257
    %v269 = vunpack.c.l.b16 %v158
    %v270 = vunpack.c.h.b16 %v158
    %v271 = vunpack.c.l.b16 %v159
    %v272 = vunpack.c.h.b16 %v159
    %v273 = vunpack.c.l.b16 %v160
    %v274 = vunpack.c.h.b16 %v160
    %v275 = vunpack.c.l.b16 %v161
    %v276 = vunpack.c.h.b16 %v161
    %v277 = vunpack.c.l.b16 %v162
    %v278 = vunpack.c.h.b16 %v162
    %v279 = vunpack.c.l.b16 %v163
    %v280 = vunpack.c.h.b16 %v163
    %v281 = vpack.c.b16 %v273, %v269
    %v282 = vpack.c.b16 %v274, %v270
    %v283 = vpack.c.b16 %v275, %v271
    %v284 = vpack.c.b16 %v276, %v272
    %v285 = vpack.c.b16 %v277, %v277
    %v286 = vpack.c.b16 %v278, %v278
    %v287 = vpack.c.b16 %v279, %v279
    %v288 = vpack.c.b16 %v280, %v280
    %v290 = vshrl.u32 %v281, 16
    %v292 = vrot.slane %v290, 3
    %v293 = vshll.u32 %v281, 16
    %v295 = vrot.slane %v293, 4
    %v296 = vor.u32 %v292, %v295
    %v298 = vshrl.u32 %v285, 16
    %v300 = vrot.slane %v298, 3
    %v301 = vshll.u32 %v285, 16
    %v303 = vrot.slane %v301, 4
    %v304 = vor.u32 %v300, %v303
    %v305 = vsel %vm190, %v296, %v304
    %v307 = vshrl.u32 %v282, 16
    %v309 = vrot.slane %v307, 3
    %v310 = vshll.u32 %v282, 16
    %v312 = vrot.slane %v310, 4
    %v313 = vor.u32 %v309, %v312
    %v315 = vshrl.u32 %v286, 16
    %v317 = vrot.slane %v315, 3
    %v318 = vshll.u32 %v286, 16
    %v320 = vrot.slane %v318, 4
    %v321 = vor.u32 %v317, %v320
    %v322 = vsel %vm190, %v313, %v321
    %v324 = vshrl.u32 %v283, 16
    %v326 = vrot.slane %v324, 3
    %v327 = vshll.u32 %v283, 16
    %v329 = vrot.slane %v327, 4
    %v330 = vor.u32 %v326, %v329
    %v332 = vshrl.u32 %v287, 16
    %v334 = vrot.slane %v332, 3
    %v335 = vshll.u32 %v287, 16
    %v337 = vrot.slane %v335, 4
    %v338 = vor.u32 %v334, %v337
    %v339 = vsel %vm190, %v330, %v338
    %v341 = vshrl.u32 %v284, 16
    %v343 = vrot.slane %v341, 3
    %v344 = vshll.u32 %v284, 16
    %v346 = vrot.slane %v344, 4
    %v347 = vor.u32 %v343, %v346
    %v349 = vshrl.u32 %v288, 16
    %v351 = vrot.slane %v349, 3
    %v352 = vshll.u32 %v288, 16
    %v354 = vrot.slane %v352, 4
    %v355 = vor.u32 %v351, %v354
    %v356 = vsel %vm190, %v347, %v355
    %v361 = vld [vmem:[#allocation5] sm:$0xff]
    %v362 = vld [vmem:[#allocation5 + $0x8] sm:$0xff]
    %v363 = vld [vmem:[#allocation5 + $0x10] sm:$0xff]
    %v364 = vld [vmem:[#allocation5 + $0x18] sm:$0xff]
    %v365 = vld [vmem:[#allocation5 + $0x20] sm:$0xff]
    %v366 = vld [vmem:[#allocation5 + $0x28] sm:$0xff]
    %v367 = vld [vmem:[#allocation5 + $0x30] sm:$0xff]
    %v368 = vld [vmem:[#allocation5 + $0x38] sm:$0xff]
    %v369 = vld [vmem:[#allocation5 + $0x40] sm:$0xff]
    %v370 = vld [vmem:[#allocation5 + $0x48] sm:$0xff]
    %v371 = vld [vmem:[#allocation5 + $0x50] sm:$0xff]
    %v372 = vld [vmem:[#allocation5 + $0x58] sm:$0xff]
    %v373 = vld [vmem:[#allocation5 + $0x60] sm:$0xff]
    %v374 = vld [vmem:[#allocation5 + $0x68] sm:$0xff]
    %v375 = vld [vmem:[#allocation5 + $0x70] sm:$0xff]
    %v376 = vld [vmem:[#allocation5 + $0x78] sm:$0xff]
    %v377 = vld [vmem:[#allocation5 + $0x80] sm:$0xff]
    %v378 = vld [vmem:[#allocation5 + $0x88] sm:$0xff]
    %v379 = vld [vmem:[#allocation5 + $0x90] sm:$0xff]
    %v380 = vld [vmem:[#allocation5 + $0x98] sm:$0xff]
    %v381 = vld [vmem:[#allocation5 + $0xa0] sm:$0xff]
    %v382 = vld [vmem:[#allocation5 + $0xa8] sm:$0xff]
    %v383 = vld [vmem:[#allocation5 + $0xb0] sm:$0xff]
    %v384 = vld [vmem:[#allocation5 + $0xb8] sm:$0xff]
    %v385 = vld [vmem:[#allocation5 + $0xc0] sm:$0xff]
    %v386 = vld [vmem:[#allocation5 + $0xc8] sm:$0xff]
    %v387 = vld [vmem:[#allocation5 + $0xd0] sm:$0xff]
    %v388 = vld [vmem:[#allocation5 + $0xd8] sm:$0xff]
    %v389 = vld [vmem:[#allocation5 + $0xe0] sm:$0xff]
    %v390 = vld [vmem:[#allocation5 + $0xe8] sm:$0xff]
    %v391 = vld [vmem:[#allocation5 + $0xf0] sm:$0xff]
    %v392 = vld [vmem:[#allocation5 + $0xf8] sm:$0xff]
    %v393 = vld [vmem:[#allocation5 + $0x100] sm:$0xff]
    %v394 = vld [vmem:[#allocation5 + $0x108] sm:$0xff]
    %v395 = vld [vmem:[#allocation5 + $0x110] sm:$0xff]
    %v396 = vld [vmem:[#allocation5 + $0x118] sm:$0xff]
    %v397 = vld [vmem:[#allocation5 + $0x120] sm:$0xff]
    %v398 = vld [vmem:[#allocation5 + $0x128] sm:$0xff]
    %v399 = vld [vmem:[#allocation5 + $0x130] sm:$0xff]
    %v400 = vld [vmem:[#allocation5 + $0x138] sm:$0xff]
    %v401 = vld [vmem:[#allocation5 + $0x140] sm:$0xff]
    %v402 = vld [vmem:[#allocation5 + $0x148] sm:$0xff]
    %v403 = vld [vmem:[#allocation5 + $0x150] sm:$0xff]
    %v404 = vld [vmem:[#allocation5 + $0x158] sm:$0xff]
    %v405 = vld [vmem:[#allocation5 + $0x160] sm:$0xff]
    %v406 = vld [vmem:[#allocation5 + $0x168] sm:$0xff]
    %v407 = vld [vmem:[#allocation5 + $0x170] sm:$0xff]
    %v408 = vld [vmem:[#allocation5 + $0x178] sm:$0xff]
    %v409 = vld [vmem:[#allocation5 + $0x180] sm:$0xff]
    %v410 = vld [vmem:[#allocation5 + $0x188] sm:$0xff]
    %v411 = vld [vmem:[#allocation5 + $0x190] sm:$0xff]
    %v412 = vld [vmem:[#allocation5 + $0x198] sm:$0xff]
    %v413 = vld [vmem:[#allocation5 + $0x1a0] sm:$0xff]
    %v414 = vld [vmem:[#allocation5 + $0x1a8] sm:$0xff]
    %v415 = vld [vmem:[#allocation5 + $0x1b0] sm:$0xff]
    %v416 = vld [vmem:[#allocation5 + $0x1b8] sm:$0xff]
    %v417 = vld [vmem:[#allocation5 + $0x1c0] sm:$0xff]
    %v418 = vld [vmem:[#allocation5 + $0x1c8] sm:$0xff]
    %v419 = vld [vmem:[#allocation5 + $0x1d0] sm:$0xff]
    %v420 = vld [vmem:[#allocation5 + $0x1d8] sm:$0xff]
    %v421 = vld [vmem:[#allocation5 + $0x1e0] sm:$0xff]
    %v422 = vld [vmem:[#allocation5 + $0x1e8] sm:$0xff]
    %v423 = vld [vmem:[#allocation5 + $0x1f0] sm:$0xff]
    %v424 = vld [vmem:[#allocation5 + $0x1f8] sm:$0xff]
    %v425 = vld [vmem:[#allocation5 + $0x200] sm:$0xff]
    %v426 = vld [vmem:[#allocation5 + $0x208] sm:$0xff]
    %v427 = vld [vmem:[#allocation5 + $0x210] sm:$0xff]
    %v428 = vld [vmem:[#allocation5 + $0x218] sm:$0xff]
    %v429 = vld [vmem:[#allocation5 + $0x220] sm:$0xff]
    %v430 = vld [vmem:[#allocation5 + $0x228] sm:$0xff]
    %v431 = vld [vmem:[#allocation5 + $0x230] sm:$0xff]
    %v432 = vld [vmem:[#allocation5 + $0x238] sm:$0xff]
    %v433 = vld [vmem:[#allocation5 + $0x240] sm:$0xff]
    %v434 = vld [vmem:[#allocation5 + $0x248] sm:$0xff]
    %v435 = vld [vmem:[#allocation5 + $0x250] sm:$0xff]
    %v436 = vld [vmem:[#allocation5 + $0x258] sm:$0xff]
    %v437 = vld [vmem:[#allocation5 + $0x260] sm:$0xff]
    %v438 = vld [vmem:[#allocation5 + $0x268] sm:$0xff]
    %v439 = vld [vmem:[#allocation5 + $0x270] sm:$0xff]
    %v440 = vld [vmem:[#allocation5 + $0x278] sm:$0xff]
    %v441 = vld [vmem:[#allocation5 + $0x280] sm:$0xff]
    %v442 = vld [vmem:[#allocation5 + $0x288] sm:$0xff]
    %v443 = vld [vmem:[#allocation5 + $0x290] sm:$0xff]
    %v444 = vld [vmem:[#allocation5 + $0x298] sm:$0xff]
    %v445 = vld [vmem:[#allocation5 + $0x2a0] sm:$0xff]
    %v446 = vld [vmem:[#allocation5 + $0x2a8] sm:$0xff]
    %v447 = vld [vmem:[#allocation5 + $0x2b0] sm:$0xff]
    %v448 = vld [vmem:[#allocation5 + $0x2b8] sm:$0xff]
    %v449 = vld [vmem:[#allocation5 + $0x2c0] sm:$0xff]
    %v450 = vld [vmem:[#allocation5 + $0x2c8] sm:$0xff]
    %v451 = vld [vmem:[#allocation5 + $0x2d0] sm:$0xff]
    %v452 = vld [vmem:[#allocation5 + $0x2d8] sm:$0xff]
    %v453 = vld [vmem:[#allocation5 + $0x2e0] sm:$0xff]
    %v454 = vld [vmem:[#allocation5 + $0x2e8] sm:$0xff]
    %v455 = vld [vmem:[#allocation5 + $0x2f0] sm:$0xff]
    %v456 = vld [vmem:[#allocation5 + $0x2f8] sm:$0xff]
    %v457 = vld [vmem:[#allocation5 + $0x300] sm:$0xff]
    %v458 = vld [vmem:[#allocation5 + $0x308] sm:$0xff]
    %v459 = vld [vmem:[#allocation5 + $0x310] sm:$0xff]
    %v460 = vld [vmem:[#allocation5 + $0x318] sm:$0xff]
    %v461 = vld [vmem:[#allocation5 + $0x320] sm:$0xff]
    %v462 = vld [vmem:[#allocation5 + $0x328] sm:$0xff]
    %v463 = vld [vmem:[#allocation5 + $0x330] sm:$0xff]
    %v464 = vld [vmem:[#allocation5 + $0x338] sm:$0xff]
    %v465 = vld [vmem:[#allocation5 + $0x340] sm:$0xff]
    %v466 = vld [vmem:[#allocation5 + $0x348] sm:$0xff]
    %v467 = vld [vmem:[#allocation5 + $0x350] sm:$0xff]
    %v468 = vld [vmem:[#allocation5 + $0x358] sm:$0xff]
    %v469 = vld [vmem:[#allocation5 + $0x360] sm:$0xff]
    %v470 = vld [vmem:[#allocation5 + $0x368] sm:$0xff]
    %v471 = vld [vmem:[#allocation5 + $0x370] sm:$0xff]
    %v472 = vld [vmem:[#allocation5 + $0x378] sm:$0xff]
    %v473 = vld [vmem:[#allocation5 + $0x380] sm:$0xff]
    %v474 = vld [vmem:[#allocation5 + $0x388] sm:$0xff]
    %v475 = vld [vmem:[#allocation5 + $0x390] sm:$0xff]
    %v476 = vld [vmem:[#allocation5 + $0x398] sm:$0xff]
    %v477 = vld [vmem:[#allocation5 + $0x3a0] sm:$0xff]
    %v478 = vld [vmem:[#allocation5 + $0x3a8] sm:$0xff]
    %v479 = vld [vmem:[#allocation5 + $0x3b0] sm:$0xff]
    %v480 = vld [vmem:[#allocation5 + $0x3b8] sm:$0xff]
    %v481 = vld [vmem:[#allocation5 + $0x3c0] sm:$0xff]
    %v482 = vld [vmem:[#allocation5 + $0x3c8] sm:$0xff]
    %v483 = vld [vmem:[#allocation5 + $0x3d0] sm:$0xff]
    %v484 = vld [vmem:[#allocation5 + $0x3d8] sm:$0xff]
    %v485 = vld [vmem:[#allocation5 + $0x3e0] sm:$0xff]
    %v486 = vld [vmem:[#allocation5 + $0x3e8] sm:$0xff]
    %v487 = vld [vmem:[#allocation5 + $0x3f0] sm:$0xff]
    %v488 = vld [vmem:[#allocation5 + $0x3f8] sm:$0xff]
    %v489 = vpack.c.b16 %v178, %v174
    %v490 = vpack.c.b16 %v179, %v175
    %v491 = vpack.c.b16 %v180, %v176
    %v492 = vpack.c.b16 %v181, %v177
    %v497 = vpack.c.b16 %v277, %v273
    %v498 = vpack.c.b16 %v278, %v274
    %v499 = vpack.c.b16 %v279, %v275
    %v500 = vpack.c.b16 %v280, %v276
    %s505 = scalar_lea.vmem [#allocation5], 1024
    %v506 = vld [vmem:[%s505] sm:$0xff]
    %v507 = vld [vmem:[%s505 + $0x8] sm:$0xff]
    %v508 = vld [vmem:[%s505 + $0x10] sm:$0xff]
    %v509 = vld [vmem:[%s505 + $0x18] sm:$0xff]
    %v510 = vld [vmem:[%s505 + $0x20] sm:$0xff]
    %v511 = vld [vmem:[%s505 + $0x28] sm:$0xff]
    %v512 = vld [vmem:[%s505 + $0x30] sm:$0xff]
    %v513 = vld [vmem:[%s505 + $0x38] sm:$0xff]
    %v514 = vld [vmem:[%s505 + $0x40] sm:$0xff]
    %v515 = vld [vmem:[%s505 + $0x48] sm:$0xff]
    %v516 = vld [vmem:[%s505 + $0x50] sm:$0xff]
    %v517 = vld [vmem:[%s505 + $0x58] sm:$0xff]
    %v518 = vld [vmem:[%s505 + $0x60] sm:$0xff]
    %v519 = vld [vmem:[%s505 + $0x68] sm:$0xff]
    %v520 = vld [vmem:[%s505 + $0x70] sm:$0xff]
    %v521 = vld [vmem:[%s505 + $0x78] sm:$0xff]
    %v522 = vld [vmem:[%s505 + $0x80] sm:$0xff]
    %v523 = vld [vmem:[%s505 + $0x88] sm:$0xff]
    %v524 = vld [vmem:[%s505 + $0x90] sm:$0xff]
    %v525 = vld [vmem:[%s505 + $0x98] sm:$0xff]
    %v526 = vld [vmem:[%s505 + $0xa0] sm:$0xff]
    %v527 = vld [vmem:[%s505 + $0xa8] sm:$0xff]
    %v528 = vld [vmem:[%s505 + $0xb0] sm:$0xff]
    %v529 = vld [vmem:[%s505 + $0xb8] sm:$0xff]
    %v530 = vld [vmem:[%s505 + $0xc0] sm:$0xff]
    %v531 = vld [vmem:[%s505 + $0xc8] sm:$0xff]
    %v532 = vld [vmem:[%s505 + $0xd0] sm:$0xff]
    %v533 = vld [vmem:[%s505 + $0xd8] sm:$0xff]
    %v534 = vld [vmem:[%s505 + $0xe0] sm:$0xff]
    %v535 = vld [vmem:[%s505 + $0xe8] sm:$0xff]
    %v536 = vld [vmem:[%s505 + $0xf0] sm:$0xff]
    %v537 = vld [vmem:[%s505 + $0xf8] sm:$0xff]
    %v538 = vld [vmem:[%s505 + $0x100] sm:$0xff]
    %v539 = vld [vmem:[%s505 + $0x108] sm:$0xff]
    %v540 = vld [vmem:[%s505 + $0x110] sm:$0xff]
    %v541 = vld [vmem:[%s505 + $0x118] sm:$0xff]
    %v542 = vld [vmem:[%s505 + $0x120] sm:$0xff]
    %v543 = vld [vmem:[%s505 + $0x128] sm:$0xff]
    %v544 = vld [vmem:[%s505 + $0x130] sm:$0xff]
    %v545 = vld [vmem:[%s505 + $0x138] sm:$0xff]
    %v546 = vld [vmem:[%s505 + $0x140] sm:$0xff]
    %v547 = vld [vmem:[%s505 + $0x148] sm:$0xff]
    %v548 = vld [vmem:[%s505 + $0x150] sm:$0xff]
    %v549 = vld [vmem:[%s505 + $0x158] sm:$0xff]
    %v550 = vld [vmem:[%s505 + $0x160] sm:$0xff]
    %v551 = vld [vmem:[%s505 + $0x168] sm:$0xff]
    %v552 = vld [vmem:[%s505 + $0x170] sm:$0xff]
    %v553 = vld [vmem:[%s505 + $0x178] sm:$0xff]
    %v554 = vld [vmem:[%s505 + $0x180] sm:$0xff]
    %v555 = vld [vmem:[%s505 + $0x188] sm:$0xff]
    %v556 = vld [vmem:[%s505 + $0x190] sm:$0xff]
    %v557 = vld [vmem:[%s505 + $0x198] sm:$0xff]
    %v558 = vld [vmem:[%s505 + $0x1a0] sm:$0xff]
    %v559 = vld [vmem:[%s505 + $0x1a8] sm:$0xff]
    %v560 = vld [vmem:[%s505 + $0x1b0] sm:$0xff]
    %v561 = vld [vmem:[%s505 + $0x1b8] sm:$0xff]
    %v562 = vld [vmem:[%s505 + $0x1c0] sm:$0xff]
    %v563 = vld [vmem:[%s505 + $0x1c8] sm:$0xff]
    %v564 = vld [vmem:[%s505 + $0x1d0] sm:$0xff]
    %v565 = vld [vmem:[%s505 + $0x1d8] sm:$0xff]
    %v566 = vld [vmem:[%s505 + $0x1e0] sm:$0xff]
    %v567 = vld [vmem:[%s505 + $0x1e8] sm:$0xff]
    %v568 = vld [vmem:[%s505 + $0x1f0] sm:$0xff]
    %v569 = vld [vmem:[%s505 + $0x1f8] sm:$0xff]
    %v570 = vld [vmem:[%s505 + $0x200] sm:$0xff]
    %v571 = vld [vmem:[%s505 + $0x208] sm:$0xff]
    %v572 = vld [vmem:[%s505 + $0x210] sm:$0xff]
    %v573 = vld [vmem:[%s505 + $0x218] sm:$0xff]
    %v574 = vld [vmem:[%s505 + $0x220] sm:$0xff]
    %v575 = vld [vmem:[%s505 + $0x228] sm:$0xff]
    %v576 = vld [vmem:[%s505 + $0x230] sm:$0xff]
    %v577 = vld [vmem:[%s505 + $0x238] sm:$0xff]
    %v578 = vld [vmem:[%s505 + $0x240] sm:$0xff]
    %v579 = vld [vmem:[%s505 + $0x248] sm:$0xff]
    %v580 = vld [vmem:[%s505 + $0x250] sm:$0xff]
    %v581 = vld [vmem:[%s505 + $0x258] sm:$0xff]
    %v582 = vld [vmem:[%s505 + $0x260] sm:$0xff]
    %v583 = vld [vmem:[%s505 + $0x268] sm:$0xff]
    %v584 = vld [vmem:[%s505 + $0x270] sm:$0xff]
    %v585 = vld [vmem:[%s505 + $0x278] sm:$0xff]
    %v586 = vld [vmem:[%s505 + $0x280] sm:$0xff]
    %v587 = vld [vmem:[%s505 + $0x288] sm:$0xff]
    %v588 = vld [vmem:[%s505 + $0x290] sm:$0xff]
    %v589 = vld [vmem:[%s505 + $0x298] sm:$0xff]
    %v590 = vld [vmem:[%s505 + $0x2a0] sm:$0xff]
    %v591 = vld [vmem:[%s505 + $0x2a8] sm:$0xff]
    %v592 = vld [vmem:[%s505 + $0x2b0] sm:$0xff]
    %v593 = vld [vmem:[%s505 + $0x2b8] sm:$0xff]
    %v594 = vld [vmem:[%s505 + $0x2c0] sm:$0xff]
    %v595 = vld [vmem:[%s505 + $0x2c8] sm:$0xff]
    %v596 = vld [vmem:[%s505 + $0x2d0] sm:$0xff]
    %v597 = vld [vmem:[%s505 + $0x2d8] sm:$0xff]
    %v598 = vld [vmem:[%s505 + $0x2e0] sm:$0xff]
    %v599 = vld [vmem:[%s505 + $0x2e8] sm:$0xff]
    %v600 = vld [vmem:[%s505 + $0x2f0] sm:$0xff]
    %v601 = vld [vmem:[%s505 + $0x2f8] sm:$0xff]
    %v602 = vld [vmem:[%s505 + $0x300] sm:$0xff]
    %v603 = vld [vmem:[%s505 + $0x308] sm:$0xff]
    %v604 = vld [vmem:[%s505 + $0x310] sm:$0xff]
    %v605 = vld [vmem:[%s505 + $0x318] sm:$0xff]
    %v606 = vld [vmem:[%s505 + $0x320] sm:$0xff]
    %v607 = vld [vmem:[%s505 + $0x328] sm:$0xff]
    %v608 = vld [vmem:[%s505 + $0x330] sm:$0xff]
    %v609 = vld [vmem:[%s505 + $0x338] sm:$0xff]
    %v610 = vld [vmem:[%s505 + $0x340] sm:$0xff]
    %v611 = vld [vmem:[%s505 + $0x348] sm:$0xff]
    %v612 = vld [vmem:[%s505 + $0x350] sm:$0xff]
    %v613 = vld [vmem:[%s505 + $0x358] sm:$0xff]
    %v614 = vld [vmem:[%s505 + $0x360] sm:$0xff]
    %v615 = vld [vmem:[%s505 + $0x368] sm:$0xff]
    %v616 = vld [vmem:[%s505 + $0x370] sm:$0xff]
    %v617 = vld [vmem:[%s505 + $0x378] sm:$0xff]
    %v618 = vld [vmem:[%s505 + $0x380] sm:$0xff]
    %v619 = vld [vmem:[%s505 + $0x388] sm:$0xff]
    %v620 = vld [vmem:[%s505 + $0x390] sm:$0xff]
    %v621 = vld [vmem:[%s505 + $0x398] sm:$0xff]
    %v622 = vld [vmem:[%s505 + $0x3a0] sm:$0xff]
    %v623 = vld [vmem:[%s505 + $0x3a8] sm:$0xff]
    %v624 = vld [vmem:[%s505 + $0x3b0] sm:$0xff]
    %v625 = vld [vmem:[%s505 + $0x3b8] sm:$0xff]
    %v626 = vld [vmem:[%s505 + $0x3c0] sm:$0xff]
    %v627 = vld [vmem:[%s505 + $0x3c8] sm:$0xff]
    %v628 = vld [vmem:[%s505 + $0x3d0] sm:$0xff]
    %v629 = vld [vmem:[%s505 + $0x3d8] sm:$0xff]
    %v630 = vld [vmem:[%s505 + $0x3e0] sm:$0xff]
    %v631 = vld [vmem:[%s505 + $0x3e8] sm:$0xff]
    %v632 = vld [vmem:[%s505 + $0x3f0] sm:$0xff]
    %v633 = vld [vmem:[%s505 + $0x3f8] sm:$0xff]
    %v762 = vunpack.c.l.b16 %v506
    %v763 = vunpack.c.h.b16 %v506
    %v764 = vunpack.c.l.b16 %v507
    %v765 = vunpack.c.h.b16 %v507
    %v766 = vunpack.c.l.b16 %v508
    %v767 = vunpack.c.h.b16 %v508
    %v768 = vunpack.c.l.b16 %v509
    %v769 = vunpack.c.h.b16 %v509
    %v770 = vunpack.c.l.b16 %v510
    %v771 = vunpack.c.h.b16 %v510
    %v772 = vunpack.c.l.b16 %v511
    %v773 = vunpack.c.h.b16 %v511
    %v774 = vunpack.c.l.b16 %v512
    %v775 = vunpack.c.h.b16 %v512
    %v776 = vunpack.c.l.b16 %v513
    %v777 = vunpack.c.h.b16 %v513
    %v778 = vunpack.c.l.b16 %v514
    %v779 = vunpack.c.h.b16 %v514
    %v780 = vunpack.c.l.b16 %v515
    %v781 = vunpack.c.h.b16 %v515
    %v782 = vunpack.c.l.b16 %v516
    %v783 = vunpack.c.h.b16 %v516
    %v784 = vunpack.c.l.b16 %v517
    %v785 = vunpack.c.h.b16 %v517
    %v786 = vunpack.c.l.b16 %v518
    %v787 = vunpack.c.h.b16 %v518
    %v788 = vunpack.c.l.b16 %v519
    %v789 = vunpack.c.h.b16 %v519
    %v790 = vunpack.c.l.b16 %v520
    %v791 = vunpack.c.h.b16 %v520
    %v792 = vunpack.c.l.b16 %v521
    %v793 = vunpack.c.h.b16 %v521
    %v794 = vunpack.c.l.b16 %v522
    %v795 = vunpack.c.h.b16 %v522
    %v796 = vunpack.c.l.b16 %v523
    %v797 = vunpack.c.h.b16 %v523
    %v798 = vunpack.c.l.b16 %v524
    %v799 = vunpack.c.h.b16 %v524
    %v800 = vunpack.c.l.b16 %v525
    %v801 = vunpack.c.h.b16 %v525
    %v802 = vunpack.c.l.b16 %v526
    %v803 = vunpack.c.h.b16 %v526
    %v804 = vunpack.c.l.b16 %v527
    %v805 = vunpack.c.h.b16 %v527
    %v806 = vunpack.c.l.b16 %v528
    %v807 = vunpack.c.h.b16 %v528
    %v808 = vunpack.c.l.b16 %v529
    %v809 = vunpack.c.h.b16 %v529
    %v810 = vunpack.c.l.b16 %v530
    %v811 = vunpack.c.h.b16 %v530
    %v812 = vunpack.c.l.b16 %v531
    %v813 = vunpack.c.h.b16 %v531
    %v814 = vunpack.c.l.b16 %v532
    %v815 = vunpack.c.h.b16 %v532
    %v816 = vunpack.c.l.b16 %v533
    %v817 = vunpack.c.h.b16 %v533
    %v818 = vunpack.c.l.b16 %v534
    %v819 = vunpack.c.h.b16 %v534
    %v820 = vunpack.c.l.b16 %v535
    %v821 = vunpack.c.h.b16 %v535
    %v822 = vunpack.c.l.b16 %v536
    %v823 = vunpack.c.h.b16 %v536
    %v824 = vunpack.c.l.b16 %v537
    %v825 = vunpack.c.h.b16 %v537
    %v826 = vunpack.c.l.b16 %v538
    %v827 = vunpack.c.h.b16 %v538
    %v828 = vunpack.c.l.b16 %v539
    %v829 = vunpack.c.h.b16 %v539
    %v830 = vunpack.c.l.b16 %v540
    %v831 = vunpack.c.h.b16 %v540
    %v832 = vunpack.c.l.b16 %v541
    %v833 = vunpack.c.h.b16 %v541
    %v834 = vunpack.c.l.b16 %v542
    %v835 = vunpack.c.h.b16 %v542
    %v836 = vunpack.c.l.b16 %v543
    %v837 = vunpack.c.h.b16 %v543
    %v838 = vunpack.c.l.b16 %v544
    %v839 = vunpack.c.h.b16 %v544
    %v840 = vunpack.c.l.b16 %v545
    %v841 = vunpack.c.h.b16 %v545
    %v842 = vunpack.c.l.b16 %v546
    %v843 = vunpack.c.h.b16 %v546
    %v844 = vunpack.c.l.b16 %v547
    %v845 = vunpack.c.h.b16 %v547
    %v846 = vunpack.c.l.b16 %v548
    %v847 = vunpack.c.h.b16 %v548
    %v848 = vunpack.c.l.b16 %v549
    %v849 = vunpack.c.h.b16 %v549
    %v850 = vunpack.c.l.b16 %v550
    %v851 = vunpack.c.h.b16 %v550
    %v852 = vunpack.c.l.b16 %v551
    %v853 = vunpack.c.h.b16 %v551
    %v854 = vunpack.c.l.b16 %v552
    %v855 = vunpack.c.h.b16 %v552
    %v856 = vunpack.c.l.b16 %v553
    %v857 = vunpack.c.h.b16 %v553
    %v858 = vunpack.c.l.b16 %v554
    %v859 = vunpack.c.h.b16 %v554
    %v860 = vunpack.c.l.b16 %v555
    %v861 = vunpack.c.h.b16 %v555
    %v862 = vunpack.c.l.b16 %v556
    %v863 = vunpack.c.h.b16 %v556
    %v864 = vunpack.c.l.b16 %v557
    %v865 = vunpack.c.h.b16 %v557
    %v866 = vunpack.c.l.b16 %v558
    %v867 = vunpack.c.h.b16 %v558
    %v868 = vunpack.c.l.b16 %v559
    %v869 = vunpack.c.h.b16 %v559
    %v870 = vunpack.c.l.b16 %v560
    %v871 = vunpack.c.h.b16 %v560
    %v872 = vunpack.c.l.b16 %v561
    %v873 = vunpack.c.h.b16 %v561
    %v874 = vunpack.c.l.b16 %v562
    %v875 = vunpack.c.h.b16 %v562
    %v876 = vunpack.c.l.b16 %v563
    %v877 = vunpack.c.h.b16 %v563
    %v878 = vunpack.c.l.b16 %v564
    %v879 = vunpack.c.h.b16 %v564
    %v880 = vunpack.c.l.b16 %v565
    %v881 = vunpack.c.h.b16 %v565
    %v882 = vunpack.c.l.b16 %v566
    %v883 = vunpack.c.h.b16 %v566
    %v884 = vunpack.c.l.b16 %v567
    %v885 = vunpack.c.h.b16 %v567
    %v886 = vunpack.c.l.b16 %v568
    %v887 = vunpack.c.h.b16 %v568
    %v888 = vunpack.c.l.b16 %v569
    %v889 = vunpack.c.h.b16 %v569
    %v890 = vunpack.c.l.b16 %v570
    %v891 = vunpack.c.h.b16 %v570
    %v892 = vunpack.c.l.b16 %v571
    %v893 = vunpack.c.h.b16 %v571
    %v894 = vunpack.c.l.b16 %v572
    %v895 = vunpack.c.h.b16 %v572
    %v896 = vunpack.c.l.b16 %v573
    %v897 = vunpack.c.h.b16 %v573
    %v898 = vunpack.c.l.b16 %v574
    %v899 = vunpack.c.h.b16 %v574
    %v900 = vunpack.c.l.b16 %v575
    %v901 = vunpack.c.h.b16 %v575
    %v902 = vunpack.c.l.b16 %v576
    %v903 = vunpack.c.h.b16 %v576
    %v904 = vunpack.c.l.b16 %v577
    %v905 = vunpack.c.h.b16 %v577
    %v906 = vunpack.c.l.b16 %v578
    %v907 = vunpack.c.h.b16 %v578
    %v908 = vunpack.c.l.b16 %v579
    %v909 = vunpack.c.h.b16 %v579
    %v910 = vunpack.c.l.b16 %v580
    %v911 = vunpack.c.h.b16 %v580
    %v912 = vunpack.c.l.b16 %v581
    %v913 = vunpack.c.h.b16 %v581
    %v914 = vunpack.c.l.b16 %v582
    %v915 = vunpack.c.h.b16 %v582
    %v916 = vunpack.c.l.b16 %v583
    %v917 = vunpack.c.h.b16 %v583
    %v918 = vunpack.c.l.b16 %v584
    %v919 = vunpack.c.h.b16 %v584
    %v920 = vunpack.c.l.b16 %v585
    %v921 = vunpack.c.h.b16 %v585
    %v922 = vunpack.c.l.b16 %v586
    %v923 = vunpack.c.h.b16 %v586
    %v924 = vunpack.c.l.b16 %v587
    %v925 = vunpack.c.h.b16 %v587
    %v926 = vunpack.c.l.b16 %v588
    %v927 = vunpack.c.h.b16 %v588
    %v928 = vunpack.c.l.b16 %v589
    %v929 = vunpack.c.h.b16 %v589
    %v930 = vunpack.c.l.b16 %v590
    %v931 = vunpack.c.h.b16 %v590
    %v932 = vunpack.c.l.b16 %v591
    %v933 = vunpack.c.h.b16 %v591
    %v934 = vunpack.c.l.b16 %v592
    %v935 = vunpack.c.h.b16 %v592
    %v936 = vunpack.c.l.b16 %v593
    %v937 = vunpack.c.h.b16 %v593
    %v938 = vunpack.c.l.b16 %v594
    %v939 = vunpack.c.h.b16 %v594
    %v940 = vunpack.c.l.b16 %v595
    %v941 = vunpack.c.h.b16 %v595
    %v942 = vunpack.c.l.b16 %v596
    %v943 = vunpack.c.h.b16 %v596
    %v944 = vunpack.c.l.b16 %v597
    %v945 = vunpack.c.h.b16 %v597
    %v946 = vunpack.c.l.b16 %v598
    %v947 = vunpack.c.h.b16 %v598
    %v948 = vunpack.c.l.b16 %v599
    %v949 = vunpack.c.h.b16 %v599
    %v950 = vunpack.c.l.b16 %v600
    %v951 = vunpack.c.h.b16 %v600
    %v952 = vunpack.c.l.b16 %v601
    %v953 = vunpack.c.h.b16 %v601
    %v954 = vunpack.c.l.b16 %v602
    %v955 = vunpack.c.h.b16 %v602
    %v956 = vunpack.c.l.b16 %v603
    %v957 = vunpack.c.h.b16 %v603
    %v958 = vunpack.c.l.b16 %v604
    %v959 = vunpack.c.h.b16 %v604
    %v960 = vunpack.c.l.b16 %v605
    %v961 = vunpack.c.h.b16 %v605
    %v962 = vunpack.c.l.b16 %v606
    %v963 = vunpack.c.h.b16 %v606
    %v964 = vunpack.c.l.b16 %v607
    %v965 = vunpack.c.h.b16 %v607
    %v966 = vunpack.c.l.b16 %v608
    %v967 = vunpack.c.h.b16 %v608
    %v968 = vunpack.c.l.b16 %v609
    %v969 = vunpack.c.h.b16 %v609
    %v970 = vunpack.c.l.b16 %v610
    %v971 = vunpack.c.h.b16 %v610
    %v972 = vunpack.c.l.b16 %v611
    %v973 = vunpack.c.h.b16 %v611
    %v974 = vunpack.c.l.b16 %v612
    %v975 = vunpack.c.h.b16 %v612
    %v976 = vunpack.c.l.b16 %v613
    %v977 = vunpack.c.h.b16 %v613
    %v978 = vunpack.c.l.b16 %v614
    %v979 = vunpack.c.h.b16 %v614
    %v980 = vunpack.c.l.b16 %v615
    %v981 = vunpack.c.h.b16 %v615
    %v982 = vunpack.c.l.b16 %v616
    %v983 = vunpack.c.h.b16 %v616
    %v984 = vunpack.c.l.b16 %v617
    %v985 = vunpack.c.h.b16 %v617
    %v986 = vunpack.c.l.b16 %v618
    %v987 = vunpack.c.h.b16 %v618
    %v988 = vunpack.c.l.b16 %v619
    %v989 = vunpack.c.h.b16 %v619
    %v990 = vunpack.c.l.b16 %v620
    %v991 = vunpack.c.h.b16 %v620
    %v992 = vunpack.c.l.b16 %v621
    %v993 = vunpack.c.h.b16 %v621
    %v994 = vunpack.c.l.b16 %v622
    %v995 = vunpack.c.h.b16 %v622
    %v996 = vunpack.c.l.b16 %v623
    %v997 = vunpack.c.h.b16 %v623
    %v998 = vunpack.c.l.b16 %v624
    %v999 = vunpack.c.h.b16 %v624
    %v1000 = vunpack.c.l.b16 %v625
    %v1001 = vunpack.c.h.b16 %v625
    %v1002 = vunpack.c.l.b16 %v626
    %v1003 = vunpack.c.h.b16 %v626
    %v1004 = vunpack.c.l.b16 %v627
    %v1005 = vunpack.c.h.b16 %v627
    %v1006 = vunpack.c.l.b16 %v628
    %v1007 = vunpack.c.h.b16 %v628
    %v1008 = vunpack.c.l.b16 %v629
    %v1009 = vunpack.c.h.b16 %v629
    %v1010 = vunpack.c.l.b16 %v630
    %v1011 = vunpack.c.h.b16 %v630
    %v1012 = vunpack.c.l.b16 %v631
    %v1013 = vunpack.c.h.b16 %v631
    %v1014 = vunpack.c.l.b16 %v632
    %v1015 = vunpack.c.h.b16 %v632
    %v1016 = vunpack.c.l.b16 %v633
    %v1017 = vunpack.c.h.b16 %v633
    %v1018 = vpack.c.b16 %v766, %v762
    %v1019 = vpack.c.b16 %v767, %v763
    %v1020 = vpack.c.b16 %v768, %v764
    %v1021 = vpack.c.b16 %v769, %v765
    %v1022 = vpack.c.b16 %v774, %v770
    %v1023 = vpack.c.b16 %v775, %v771
    %v1024 = vpack.c.b16 %v776, %v772
    %v1025 = vpack.c.b16 %v777, %v773
    %v1026 = vpack.c.b16 %v782, %v778
    %v1027 = vpack.c.b16 %v783, %v779
    %v1028 = vpack.c.b16 %v784, %v780
    %v1029 = vpack.c.b16 %v785, %v781
    %v1030 = vpack.c.b16 %v790, %v786
    %v1031 = vpack.c.b16 %v791, %v787
    %v1032 = vpack.c.b16 %v792, %v788
    %v1033 = vpack.c.b16 %v793, %v789
    %v1034 = vpack.c.b16 %v798, %v794
    %v1035 = vpack.c.b16 %v799, %v795
    %v1036 = vpack.c.b16 %v800, %v796
    %v1037 = vpack.c.b16 %v801, %v797
    %v1038 = vpack.c.b16 %v806, %v802
    %v1039 = vpack.c.b16 %v807, %v803
    %v1040 = vpack.c.b16 %v808, %v804
    %v1041 = vpack.c.b16 %v809, %v805
    %v1042 = vpack.c.b16 %v814, %v810
    %v1043 = vpack.c.b16 %v815, %v811
    %v1044 = vpack.c.b16 %v816, %v812
    %v1045 = vpack.c.b16 %v817, %v813
    %v1046 = vpack.c.b16 %v822, %v818
    %v1047 = vpack.c.b16 %v823, %v819
    %v1048 = vpack.c.b16 %v824, %v820
    %v1049 = vpack.c.b16 %v825, %v821
    %v1050 = vpack.c.b16 %v830, %v826
    %v1051 = vpack.c.b16 %v831, %v827
    %v1052 = vpack.c.b16 %v832, %v828
    %v1053 = vpack.c.b16 %v833, %v829
    %v1054 = vpack.c.b16 %v838, %v834
    %v1055 = vpack.c.b16 %v839, %v835
    %v1056 = vpack.c.b16 %v840, %v836
    %v1057 = vpack.c.b16 %v841, %v837
    %v1058 = vpack.c.b16 %v846, %v842
    %v1059 = vpack.c.b16 %v847, %v843
    %v1060 = vpack.c.b16 %v848, %v844
    %v1061 = vpack.c.b16 %v849, %v845
    %v1062 = vpack.c.b16 %v854, %v850
    %v1063 = vpack.c.b16 %v855, %v851
    %v1064 = vpack.c.b16 %v856, %v852
    %v1065 = vpack.c.b16 %v857, %v853
    %v1066 = vpack.c.b16 %v862, %v858
    %v1067 = vpack.c.b16 %v863, %v859
    %v1068 = vpack.c.b16 %v864, %v860
    %v1069 = vpack.c.b16 %v865, %v861
    %v1070 = vpack.c.b16 %v870, %v866
    %v1071 = vpack.c.b16 %v871, %v867
    %v1072 = vpack.c.b16 %v872, %v868
    %v1073 = vpack.c.b16 %v873, %v869
    %v1074 = vpack.c.b16 %v878, %v874
    %v1075 = vpack.c.b16 %v879, %v875
    %v1076 = vpack.c.b16 %v880, %v876
    %v1077 = vpack.c.b16 %v881, %v877
    %v1078 = vpack.c.b16 %v886, %v882
    %v1079 = vpack.c.b16 %v887, %v883
    %v1080 = vpack.c.b16 %v888, %v884
    %v1081 = vpack.c.b16 %v889, %v885
    %v1082 = vpack.c.b16 %v894, %v890
    %v1083 = vpack.c.b16 %v895, %v891
    %v1084 = vpack.c.b16 %v896, %v892
    %v1085 = vpack.c.b16 %v897, %v893
    %v1086 = vpack.c.b16 %v902, %v898
    %v1087 = vpack.c.b16 %v903, %v899
    %v1088 = vpack.c.b16 %v904, %v900
    %v1089 = vpack.c.b16 %v905, %v901
    %v1090 = vpack.c.b16 %v910, %v906
    %v1091 = vpack.c.b16 %v911, %v907
    %v1092 = vpack.c.b16 %v912, %v908
    %v1093 = vpack.c.b16 %v913, %v909
    %v1094 = vpack.c.b16 %v918, %v914
    %v1095 = vpack.c.b16 %v919, %v915
    %v1096 = vpack.c.b16 %v920, %v916
    %v1097 = vpack.c.b16 %v921, %v917
    %v1098 = vpack.c.b16 %v926, %v922
    %v1099 = vpack.c.b16 %v927, %v923
    %v1100 = vpack.c.b16 %v928, %v924
    %v1101 = vpack.c.b16 %v929, %v925
    %v1102 = vpack.c.b16 %v934, %v930
    %v1103 = vpack.c.b16 %v935, %v931
    %v1104 = vpack.c.b16 %v936, %v932
    %v1105 = vpack.c.b16 %v937, %v933
    %v1106 = vpack.c.b16 %v942, %v938
    %v1107 = vpack.c.b16 %v943, %v939
    %v1108 = vpack.c.b16 %v944, %v940
    %v1109 = vpack.c.b16 %v945, %v941
    %v1110 = vpack.c.b16 %v950, %v946
    %v1111 = vpack.c.b16 %v951, %v947
    %v1112 = vpack.c.b16 %v952, %v948
    %v1113 = vpack.c.b16 %v953, %v949
    %v1114 = vpack.c.b16 %v958, %v954
    %v1115 = vpack.c.b16 %v959, %v955
    %v1116 = vpack.c.b16 %v960, %v956
    %v1117 = vpack.c.b16 %v961, %v957
    %v1118 = vpack.c.b16 %v966, %v962
    %v1119 = vpack.c.b16 %v967, %v963
    %v1120 = vpack.c.b16 %v968, %v964
    %v1121 = vpack.c.b16 %v969, %v965
    %v1122 = vpack.c.b16 %v974, %v970
    %v1123 = vpack.c.b16 %v975, %v971
    %v1124 = vpack.c.b16 %v976, %v972
    %v1125 = vpack.c.b16 %v977, %v973
    %v1126 = vpack.c.b16 %v982, %v978
    %v1127 = vpack.c.b16 %v983, %v979
    %v1128 = vpack.c.b16 %v984, %v980
    %v1129 = vpack.c.b16 %v985, %v981
    %v1130 = vpack.c.b16 %v990, %v986
    %v1131 = vpack.c.b16 %v991, %v987
    %v1132 = vpack.c.b16 %v992, %v988
    %v1133 = vpack.c.b16 %v993, %v989
    %v1134 = vpack.c.b16 %v998, %v994
    %v1135 = vpack.c.b16 %v999, %v995
    %v1136 = vpack.c.b16 %v1000, %v996
    %v1137 = vpack.c.b16 %v1001, %v997
    %v1138 = vpack.c.b16 %v1006, %v1002
    %v1139 = vpack.c.b16 %v1007, %v1003
    %v1140 = vpack.c.b16 %v1008, %v1004
    %v1141 = vpack.c.b16 %v1009, %v1005
    %v1142 = vpack.c.b16 %v1014, %v1010
    %v1143 = vpack.c.b16 %v1015, %v1011
    %v1144 = vpack.c.b16 %v1016, %v1012
    %v1145 = vpack.c.b16 %v1017, %v1013
    %1274 = vmatpush.bf16.msra.mxu0 %v1046
    %1275 = vmatpush.bf16.msra.mxu0 %v1042
    %1276 = vmatpush.bf16.msra.mxu0 %v1038
    %1277 = vmatpush.bf16.msra.mxu0 %v1034
    %1278 = vmatpush.bf16.msra.mxu0 %v1030
    %1279 = vmatpush.bf16.msra.mxu0 %v1026
    %1280 = vmatpush.bf16.msra.mxu0 %v1022
    %1281 = vmatpush.bf16.msra.mxu0 %v1018
    %1282 = vmatmul.bf16.gmra.mxu0 %v489
    %v1283 = vpop.f32.mrf.mxu0
    %v1284 = vadd.f32 0.0, %v1283
    %v1285 = vpop.f32.mrf.mxu0
    %v1286 = vadd.f32 0.0, %v1285
    %1287 = vmatmul.bf16.gmra.mxu0 %v497
    %v1288 = vpop.f32.mrf.mxu0
    %v1289 = vadd.f32 0.0, %v1288
    %v1290 = vpop.f32.mrf.mxu0
    %v1291 = vadd.f32 0.0, %v1290
    %1292 = vdwg.mxu0
    %1293 = vmatpush.bf16.msra.mxu0 %v1078
    %1294 = vmatpush.bf16.msra.mxu0 %v1074
    %1295 = vmatpush.bf16.msra.mxu0 %v1070
    %1296 = vmatpush.bf16.msra.mxu0 %v1066
    %1297 = vmatpush.bf16.msra.mxu0 %v1062
    %1298 = vmatpush.bf16.msra.mxu0 %v1058
    %1299 = vmatpush.bf16.msra.mxu0 %v1054
    %1300 = vmatpush.bf16.msra.mxu0 %v1050
    %1301 = vmatmul.bf16.gmra.mxu0 %v490
    %v1302 = vpop.f32.mrf.mxu0
    %v1303 = vadd.f32 %v1284, %v1302
    %v1304 = vpop.f32.mrf.mxu0
    %v1305 = vadd.f32 %v1286, %v1304
    %1306 = vmatmul.bf16.gmra.mxu0 %v498
    %v1307 = vpop.f32.mrf.mxu0
    %v1308 = vadd.f32 %v1289, %v1307
    %v1309 = vpop.f32.mrf.mxu0
    %v1310 = vadd.f32 %v1291, %v1309
    %1311 = vdwg.mxu0
    %1312 = vmatpush.bf16.msra.mxu0 %v1110
    %1313 = vmatpush.bf16.msra.mxu0 %v1106
    %1314 = vmatpush.bf16.msra.mxu0 %v1102
    %1315 = vmatpush.bf16.msra.mxu0 %v1098
    %1316 = vmatpush.bf16.msra.mxu0 %v1094
    %1317 = vmatpush.bf16.msra.mxu0 %v1090
    %1318 = vmatpush.bf16.msra.mxu0 %v1086
    %1319 = vmatpush.bf16.msra.mxu0 %v1082
    %1320 = vmatmul.bf16.gmra.mxu0 %v491
    %v1321 = vpop.f32.mrf.mxu0
    %v1322 = vadd.f32 %v1303, %v1321
    %v1323 = vpop.f32.mrf.mxu0
    %v1324 = vadd.f32 %v1305, %v1323
    %1325 = vmatmul.bf16.gmra.mxu0 %v499
    %v1326 = vpop.f32.mrf.mxu0
    %v1327 = vadd.f32 %v1308, %v1326
    %v1328 = vpop.f32.mrf.mxu0
    %v1329 = vadd.f32 %v1310, %v1328
    %1330 = vdwg.mxu0
    %1331 = vmatpush.bf16.msra.mxu0 %v1142
    %1332 = vmatpush.bf16.msra.mxu0 %v1138
    %1333 = vmatpush.bf16.msra.mxu0 %v1134
    %1334 = vmatpush.bf16.msra.mxu0 %v1130
    %1335 = vmatpush.bf16.msra.mxu0 %v1126
    %1336 = vmatpush.bf16.msra.mxu0 %v1122
    %1337 = vmatpush.bf16.msra.mxu0 %v1118
    %1338 = vmatpush.bf16.msra.mxu0 %v1114
    %1339 = vmatmul.bf16.gmra.mxu0 %v492
    %v1340 = vpop.f32.mrf.mxu0
    %v1341 = vadd.f32 %v1322, %v1340
    %v1342 = vpop.f32.mrf.mxu0
    %v1343 = vadd.f32 %v1324, %v1342
    %1344 = vmatmul.bf16.gmra.mxu0 %v500
    %v1345 = vpop.f32.mrf.mxu0
    %v1346 = vadd.f32 %v1327, %v1345
    %v1347 = vpop.f32.mrf.mxu0
    %v1348 = vadd.f32 %v1329, %v1347
    %1349 = vdwg.mxu0
    %1350 = vmatpush.bf16.msra.mxu0 %v1047
    %1351 = vmatpush.bf16.msra.mxu0 %v1043
    %1352 = vmatpush.bf16.msra.mxu0 %v1039
    %1353 = vmatpush.bf16.msra.mxu0 %v1035
    %1354 = vmatpush.bf16.msra.mxu0 %v1031
    %1355 = vmatpush.bf16.msra.mxu0 %v1027
    %1356 = vmatpush.bf16.msra.mxu0 %v1023
    %1357 = vmatpush.bf16.msra.mxu0 %v1019
    %1358 = vmatmul.bf16.gmra.mxu0 %v489
    %v1359 = vpop.f32.mrf.mxu0
    %v1360 = vadd.f32 0.0, %v1359
    %v1361 = vpop.f32.mrf.mxu0
    %v1362 = vadd.f32 0.0, %v1361
    %1363 = vmatmul.bf16.gmra.mxu0 %v497
    %v1364 = vpop.f32.mrf.mxu0
    %v1365 = vadd.f32 0.0, %v1364
    %v1366 = vpop.f32.mrf.mxu0
    %v1367 = vadd.f32 0.0, %v1366
    %1368 = vdwg.mxu0
    %1369 = vmatpush.bf16.msra.mxu0 %v1079
    %1370 = vmatpush.bf16.msra.mxu0 %v1075
    %1371 = vmatpush.bf16.msra.mxu0 %v1071
    %1372 = vmatpush.bf16.msra.mxu0 %v1067
    %1373 = vmatpush.bf16.msra.mxu0 %v1063
    %1374 = vmatpush.bf16.msra.mxu0 %v1059
    %1375 = vmatpush.bf16.msra.mxu0 %v1055
    %1376 = vmatpush.bf16.msra.mxu0 %v1051
    %1377 = vmatmul.bf16.gmra.mxu0 %v490
    %v1378 = vpop.f32.mrf.mxu0
    %v1379 = vadd.f32 %v1360, %v1378
    %v1380 = vpop.f32.mrf.mxu0
    %v1381 = vadd.f32 %v1362, %v1380
    %1382 = vmatmul.bf16.gmra.mxu0 %v498
    %v1383 = vpop.f32.mrf.mxu0
    %v1384 = vadd.f32 %v1365, %v1383
    %v1385 = vpop.f32.mrf.mxu0
    %v1386 = vadd.f32 %v1367, %v1385
    %1387 = vdwg.mxu0
    %1388 = vmatpush.bf16.msra.mxu0 %v1111
    %1389 = vmatpush.bf16.msra.mxu0 %v1107
    %1390 = vmatpush.bf16.msra.mxu0 %v1103
    %1391 = vmatpush.bf16.msra.mxu0 %v1099
    %1392 = vmatpush.bf16.msra.mxu0 %v1095
    %1393 = vmatpush.bf16.msra.mxu0 %v1091
    %1394 = vmatpush.bf16.msra.mxu0 %v1087
    %1395 = vmatpush.bf16.msra.mxu0 %v1083
    %1396 = vmatmul.bf16.gmra.mxu0 %v491
    %v1397 = vpop.f32.mrf.mxu0
    %v1398 = vadd.f32 %v1379, %v1397
    %v1399 = vpop.f32.mrf.mxu0
    %v1400 = vadd.f32 %v1381, %v1399
    %1401 = vmatmul.bf16.gmra.mxu0 %v499
    %v1402 = vpop.f32.mrf.mxu0
    %v1403 = vadd.f32 %v1384, %v1402
    %v1404 = vpop.f32.mrf.mxu0
    %v1405 = vadd.f32 %v1386, %v1404
    %1406 = vdwg.mxu0
    %1407 = vmatpush.bf16.msra.mxu0 %v1143
    %1408 = vmatpush.bf16.msra.mxu0 %v1139
    %1409 = vmatpush.bf16.msra.mxu0 %v1135
    %1410 = vmatpush.bf16.msra.mxu0 %v1131
    %1411 = vmatpush.bf16.msra.mxu0 %v1127
    %1412 = vmatpush.bf16.msra.mxu0 %v1123
    %1413 = vmatpush.bf16.msra.mxu0 %v1119
    %1414 = vmatpush.bf16.msra.mxu0 %v1115
    %1415 = vmatmul.bf16.gmra.mxu0 %v492
    %v1416 = vpop.f32.mrf.mxu0
    %v1417 = vadd.f32 %v1398, %v1416
    %v1418 = vpop.f32.mrf.mxu0
    %v1419 = vadd.f32 %v1400, %v1418
    %1420 = vmatmul.bf16.gmra.mxu0 %v500
    %v1421 = vpop.f32.mrf.mxu0
    %v1422 = vadd.f32 %v1403, %v1421
    %v1423 = vpop.f32.mrf.mxu0
    %v1424 = vadd.f32 %v1405, %v1423
    %1425 = vdwg.mxu0
    %1426 = vmatpush.bf16.msra.mxu0 %v1048
    %1427 = vmatpush.bf16.msra.mxu0 %v1044
    %1428 = vmatpush.bf16.msra.mxu0 %v1040
    %1429 = vmatpush.bf16.msra.mxu0 %v1036
    %1430 = vmatpush.bf16.msra.mxu0 %v1032
    %1431 = vmatpush.bf16.msra.mxu0 %v1028
    %1432 = vmatpush.bf16.msra.mxu0 %v1024
    %1433 = vmatpush.bf16.msra.mxu0 %v1020
    %1434 = vmatmul.bf16.gmra.mxu0 %v489
    %v1435 = vpop.f32.mrf.mxu0
    %v1436 = vadd.f32 0.0, %v1435
    %v1437 = vpop.f32.mrf.mxu0
    %v1438 = vadd.f32 0.0, %v1437
    %1439 = vmatmul.bf16.gmra.mxu0 %v497
    %v1440 = vpop.f32.mrf.mxu0
    %v1441 = vadd.f32 0.0, %v1440
    %v1442 = vpop.f32.mrf.mxu0
    %v1443 = vadd.f32 0.0, %v1442
    %1444 = vdwg.mxu0
    %1445 = vmatpush.bf16.msra.mxu0 %v1080
    %1446 = vmatpush.bf16.msra.mxu0 %v1076
    %1447 = vmatpush.bf16.msra.mxu0 %v1072
    %1448 = vmatpush.bf16.msra.mxu0 %v1068
    %1449 = vmatpush.bf16.msra.mxu0 %v1064
    %1450 = vmatpush.bf16.msra.mxu0 %v1060
    %1451 = vmatpush.bf16.msra.mxu0 %v1056
    %1452 = vmatpush.bf16.msra.mxu0 %v1052
    %1453 = vmatmul.bf16.gmra.mxu0 %v490
    %v1454 = vpop.f32.mrf.mxu0
    %v1455 = vadd.f32 %v1436, %v1454
    %v1456 = vpop.f32.mrf.mxu0
    %v1457 = vadd.f32 %v1438, %v1456
    %1458 = vmatmul.bf16.gmra.mxu0 %v498
    %v1459 = vpop.f32.mrf.mxu0
    %v1460 = vadd.f32 %v1441, %v1459
    %v1461 = vpop.f32.mrf.mxu0
    %v1462 = vadd.f32 %v1443, %v1461
    %1463 = vdwg.mxu0
    %1464 = vmatpush.bf16.msra.mxu0 %v1112
    %1465 = vmatpush.bf16.msra.mxu0 %v1108
    %1466 = vmatpush.bf16.msra.mxu0 %v1104
    %1467 = vmatpush.bf16.msra.mxu0 %v1100
    %1468 = vmatpush.bf16.msra.mxu0 %v1096
    %1469 = vmatpush.bf16.msra.mxu0 %v1092
    %1470 = vmatpush.bf16.msra.mxu0 %v1088
    %1471 = vmatpush.bf16.msra.mxu0 %v1084
    %1472 = vmatmul.bf16.gmra.mxu0 %v491
    %v1473 = vpop.f32.mrf.mxu0
    %v1474 = vadd.f32 %v1455, %v1473
    %v1475 = vpop.f32.mrf.mxu0
    %v1476 = vadd.f32 %v1457, %v1475
    %1477 = vmatmul.bf16.gmra.mxu0 %v499
    %v1478 = vpop.f32.mrf.mxu0
    %v1479 = vadd.f32 %v1460, %v1478
    %v1480 = vpop.f32.mrf.mxu0
    %v1481 = vadd.f32 %v1462, %v1480
    %1482 = vdwg.mxu0
    %1483 = vmatpush.bf16.msra.mxu0 %v1144
    %1484 = vmatpush.bf16.msra.mxu0 %v1140
    %1485 = vmatpush.bf16.msra.mxu0 %v1136
    %1486 = vmatpush.bf16.msra.mxu0 %v1132
    %1487 = vmatpush.bf16.msra.mxu0 %v1128
    %1488 = vmatpush.bf16.msra.mxu0 %v1124
    %1489 = vmatpush.bf16.msra.mxu0 %v1120
    %1490 = vmatpush.bf16.msra.mxu0 %v1116
    %1491 = vmatmul.bf16.gmra.mxu0 %v492
    %v1492 = vpop.f32.mrf.mxu0
    %v1493 = vadd.f32 %v1474, %v1492
    %v1494 = vpop.f32.mrf.mxu0
    %v1495 = vadd.f32 %v1476, %v1494
    %1496 = vmatmul.bf16.gmra.mxu0 %v500
    %v1497 = vpop.f32.mrf.mxu0
    %v1498 = vadd.f32 %v1479, %v1497
    %v1499 = vpop.f32.mrf.mxu0
    %v1500 = vadd.f32 %v1481, %v1499
    %1501 = vdwg.mxu0
    %1502 = vmatpush.bf16.msra.mxu0 %v1049
    %1503 = vmatpush.bf16.msra.mxu0 %v1045
    %1504 = vmatpush.bf16.msra.mxu0 %v1041
    %1505 = vmatpush.bf16.msra.mxu0 %v1037
    %1506 = vmatpush.bf16.msra.mxu0 %v1033
    %1507 = vmatpush.bf16.msra.mxu0 %v1029
    %1508 = vmatpush.bf16.msra.mxu0 %v1025
    %1509 = vmatpush.bf16.msra.mxu0 %v1021
    %1510 = vmatmul.bf16.gmra.mxu0 %v489
    %v1511 = vpop.f32.mrf.mxu0
    %v1512 = vadd.f32 0.0, %v1511
    %v1513 = vpop.f32.mrf.mxu0
    %v1514 = vadd.f32 0.0, %v1513
    %1515 = vmatmul.bf16.gmra.mxu0 %v497
    %v1516 = vpop.f32.mrf.mxu0
    %v1517 = vadd.f32 0.0, %v1516
    %v1518 = vpop.f32.mrf.mxu0
    %v1519 = vadd.f32 0.0, %v1518
    %1520 = vdwg.mxu0
    %1521 = vmatpush.bf16.msra.mxu0 %v1081
    %1522 = vmatpush.bf16.msra.mxu0 %v1077
    %1523 = vmatpush.bf16.msra.mxu0 %v1073
    %1524 = vmatpush.bf16.msra.mxu0 %v1069
    %1525 = vmatpush.bf16.msra.mxu0 %v1065
    %1526 = vmatpush.bf16.msra.mxu0 %v1061
    %1527 = vmatpush.bf16.msra.mxu0 %v1057
    %1528 = vmatpush.bf16.msra.mxu0 %v1053
    %1529 = vmatmul.bf16.gmra.mxu0 %v490
    %v1530 = vpop.f32.mrf.mxu0
    %v1531 = vadd.f32 %v1512, %v1530
    %v1532 = vpop.f32.mrf.mxu0
    %v1533 = vadd.f32 %v1514, %v1532
    %1534 = vmatmul.bf16.gmra.mxu0 %v498
    %v1535 = vpop.f32.mrf.mxu0
    %v1536 = vadd.f32 %v1517, %v1535
    %v1537 = vpop.f32.mrf.mxu0
    %v1538 = vadd.f32 %v1519, %v1537
    %1539 = vdwg.mxu0
    %1540 = vmatpush.bf16.msra.mxu0 %v1113
    %1541 = vmatpush.bf16.msra.mxu0 %v1109
    %1542 = vmatpush.bf16.msra.mxu0 %v1105
    %1543 = vmatpush.bf16.msra.mxu0 %v1101
    %1544 = vmatpush.bf16.msra.mxu0 %v1097
    %1545 = vmatpush.bf16.msra.mxu0 %v1093
    %1546 = vmatpush.bf16.msra.mxu0 %v1089
    %1547 = vmatpush.bf16.msra.mxu0 %v1085
    %1548 = vmatmul.bf16.gmra.mxu0 %v491
    %v1549 = vpop.f32.mrf.mxu0
    %v1550 = vadd.f32 %v1531, %v1549
    %v1551 = vpop.f32.mrf.mxu0
    %v1552 = vadd.f32 %v1533, %v1551
    %1553 = vmatmul.bf16.gmra.mxu0 %v499
    %v1554 = vpop.f32.mrf.mxu0
    %v1555 = vadd.f32 %v1536, %v1554
    %v1556 = vpop.f32.mrf.mxu0
    %v1557 = vadd.f32 %v1538, %v1556
    %1558 = vdwg.mxu0
    %1559 = vmatpush.bf16.msra.mxu0 %v1145
    %1560 = vmatpush.bf16.msra.mxu0 %v1141
    %1561 = vmatpush.bf16.msra.mxu0 %v1137
    %1562 = vmatpush.bf16.msra.mxu0 %v1133
    %1563 = vmatpush.bf16.msra.mxu0 %v1129
    %1564 = vmatpush.bf16.msra.mxu0 %v1125
    %1565 = vmatpush.bf16.msra.mxu0 %v1121
    %1566 = vmatpush.bf16.msra.mxu0 %v1117
    %1567 = vmatmul.bf16.gmra.mxu0 %v492
    %v1568 = vpop.f32.mrf.mxu0
    %v1569 = vadd.f32 %v1550, %v1568
    %v1570 = vpop.f32.mrf.mxu0
    %v1571 = vadd.f32 %v1552, %v1570
    %1572 = vmatmul.bf16.gmra.mxu0 %v500
    %v1573 = vpop.f32.mrf.mxu0
    %v1574 = vadd.f32 %v1555, %v1573
    %v1575 = vpop.f32.mrf.mxu0
    %v1576 = vadd.f32 %v1557, %v1575
    %1577 = vdwg.mxu0
    %v1706 = vunpack.c.l.b16 %v361
    %v1707 = vunpack.c.h.b16 %v361
    %v1708 = vunpack.c.l.b16 %v362
    %v1709 = vunpack.c.h.b16 %v362
    %v1710 = vunpack.c.l.b16 %v363
    %v1711 = vunpack.c.h.b16 %v363
    %v1712 = vunpack.c.l.b16 %v364
    %v1713 = vunpack.c.h.b16 %v364
    %v1714 = vunpack.c.l.b16 %v365
    %v1715 = vunpack.c.h.b16 %v365
    %v1716 = vunpack.c.l.b16 %v366
    %v1717 = vunpack.c.h.b16 %v366
    %v1718 = vunpack.c.l.b16 %v367
    %v1719 = vunpack.c.h.b16 %v367
    %v1720 = vunpack.c.l.b16 %v368
    %v1721 = vunpack.c.h.b16 %v368
    %v1722 = vunpack.c.l.b16 %v369
    %v1723 = vunpack.c.h.b16 %v369
    %v1724 = vunpack.c.l.b16 %v370
    %v1725 = vunpack.c.h.b16 %v370
    %v1726 = vunpack.c.l.b16 %v371
    %v1727 = vunpack.c.h.b16 %v371
    %v1728 = vunpack.c.l.b16 %v372
    %v1729 = vunpack.c.h.b16 %v372
    %v1730 = vunpack.c.l.b16 %v373
    %v1731 = vunpack.c.h.b16 %v373
    %v1732 = vunpack.c.l.b16 %v374
    %v1733 = vunpack.c.h.b16 %v374
    %v1734 = vunpack.c.l.b16 %v375
    %v1735 = vunpack.c.h.b16 %v375
    %v1736 = vunpack.c.l.b16 %v376
    %v1737 = vunpack.c.h.b16 %v376
    %v1738 = vunpack.c.l.b16 %v377
    %v1739 = vunpack.c.h.b16 %v377
    %v1740 = vunpack.c.l.b16 %v378
    %v1741 = vunpack.c.h.b16 %v378
    %v1742 = vunpack.c.l.b16 %v379
    %v1743 = vunpack.c.h.b16 %v379
    %v1744 = vunpack.c.l.b16 %v380
    %v1745 = vunpack.c.h.b16 %v380
    %v1746 = vunpack.c.l.b16 %v381
    %v1747 = vunpack.c.h.b16 %v381
    %v1748 = vunpack.c.l.b16 %v382
    %v1749 = vunpack.c.h.b16 %v382
    %v1750 = vunpack.c.l.b16 %v383
    %v1751 = vunpack.c.h.b16 %v383
    %v1752 = vunpack.c.l.b16 %v384
    %v1753 = vunpack.c.h.b16 %v384
    %v1754 = vunpack.c.l.b16 %v385
    %v1755 = vunpack.c.h.b16 %v385
    %v1756 = vunpack.c.l.b16 %v386
    %v1757 = vunpack.c.h.b16 %v386
    %v1758 = vunpack.c.l.b16 %v387
    %v1759 = vunpack.c.h.b16 %v387
    %v1760 = vunpack.c.l.b16 %v388
    %v1761 = vunpack.c.h.b16 %v388
    %v1762 = vunpack.c.l.b16 %v389
    %v1763 = vunpack.c.h.b16 %v389
    %v1764 = vunpack.c.l.b16 %v390
    %v1765 = vunpack.c.h.b16 %v390
    %v1766 = vunpack.c.l.b16 %v391
    %v1767 = vunpack.c.h.b16 %v391
    %v1768 = vunpack.c.l.b16 %v392
    %v1769 = vunpack.c.h.b16 %v392
    %v1770 = vunpack.c.l.b16 %v393
    %v1771 = vunpack.c.h.b16 %v393
    %v1772 = vunpack.c.l.b16 %v394
    %v1773 = vunpack.c.h.b16 %v394
    %v1774 = vunpack.c.l.b16 %v395
    %v1775 = vunpack.c.h.b16 %v395
    %v1776 = vunpack.c.l.b16 %v396
    %v1777 = vunpack.c.h.b16 %v396
    %v1778 = vunpack.c.l.b16 %v397
    %v1779 = vunpack.c.h.b16 %v397
    %v1780 = vunpack.c.l.b16 %v398
    %v1781 = vunpack.c.h.b16 %v398
    %v1782 = vunpack.c.l.b16 %v399
    %v1783 = vunpack.c.h.b16 %v399
    %v1784 = vunpack.c.l.b16 %v400
    %v1785 = vunpack.c.h.b16 %v400
    %v1786 = vunpack.c.l.b16 %v401
    %v1787 = vunpack.c.h.b16 %v401
    %v1788 = vunpack.c.l.b16 %v402
    %v1789 = vunpack.c.h.b16 %v402
    %v1790 = vunpack.c.l.b16 %v403
    %v1791 = vunpack.c.h.b16 %v403
    %v1792 = vunpack.c.l.b16 %v404
    %v1793 = vunpack.c.h.b16 %v404
    %v1794 = vunpack.c.l.b16 %v405
    %v1795 = vunpack.c.h.b16 %v405
    %v1796 = vunpack.c.l.b16 %v406
    %v1797 = vunpack.c.h.b16 %v406
    %v1798 = vunpack.c.l.b16 %v407
    %v1799 = vunpack.c.h.b16 %v407
    %v1800 = vunpack.c.l.b16 %v408
    %v1801 = vunpack.c.h.b16 %v408
    %v1802 = vunpack.c.l.b16 %v409
    %v1803 = vunpack.c.h.b16 %v409
    %v1804 = vunpack.c.l.b16 %v410
    %v1805 = vunpack.c.h.b16 %v410
    %v1806 = vunpack.c.l.b16 %v411
    %v1807 = vunpack.c.h.b16 %v411
    %v1808 = vunpack.c.l.b16 %v412
    %v1809 = vunpack.c.h.b16 %v412
    %v1810 = vunpack.c.l.b16 %v413
    %v1811 = vunpack.c.h.b16 %v413
    %v1812 = vunpack.c.l.b16 %v414
    %v1813 = vunpack.c.h.b16 %v414
    %v1814 = vunpack.c.l.b16 %v415
    %v1815 = vunpack.c.h.b16 %v415
    %v1816 = vunpack.c.l.b16 %v416
    %v1817 = vunpack.c.h.b16 %v416
    %v1818 = vunpack.c.l.b16 %v417
    %v1819 = vunpack.c.h.b16 %v417
    %v1820 = vunpack.c.l.b16 %v418
    %v1821 = vunpack.c.h.b16 %v418
    %v1822 = vunpack.c.l.b16 %v419
    %v1823 = vunpack.c.h.b16 %v419
    %v1824 = vunpack.c.l.b16 %v420
    %v1825 = vunpack.c.h.b16 %v420
    %v1826 = vunpack.c.l.b16 %v421
    %v1827 = vunpack.c.h.b16 %v421
    %v1828 = vunpack.c.l.b16 %v422
    %v1829 = vunpack.c.h.b16 %v422
    %v1830 = vunpack.c.l.b16 %v423
    %v1831 = vunpack.c.h.b16 %v423
    %v1832 = vunpack.c.l.b16 %v424
    %v1833 = vunpack.c.h.b16 %v424
    %v1834 = vunpack.c.l.b16 %v425
    %v1835 = vunpack.c.h.b16 %v425
    %v1836 = vunpack.c.l.b16 %v426
    %v1837 = vunpack.c.h.b16 %v426
    %v1838 = vunpack.c.l.b16 %v427
    %v1839 = vunpack.c.h.b16 %v427
    %v1840 = vunpack.c.l.b16 %v428
    %v1841 = vunpack.c.h.b16 %v428
    %v1842 = vunpack.c.l.b16 %v429
    %v1843 = vunpack.c.h.b16 %v429
    %v1844 = vunpack.c.l.b16 %v430
    %v1845 = vunpack.c.h.b16 %v430
    %v1846 = vunpack.c.l.b16 %v431
    %v1847 = vunpack.c.h.b16 %v431
    %v1848 = vunpack.c.l.b16 %v432
    %v1849 = vunpack.c.h.b16 %v432
    %v1850 = vunpack.c.l.b16 %v433
    %v1851 = vunpack.c.h.b16 %v433
    %v1852 = vunpack.c.l.b16 %v434
    %v1853 = vunpack.c.h.b16 %v434
    %v1854 = vunpack.c.l.b16 %v435
    %v1855 = vunpack.c.h.b16 %v435
    %v1856 = vunpack.c.l.b16 %v436
    %v1857 = vunpack.c.h.b16 %v436
    %v1858 = vunpack.c.l.b16 %v437
    %v1859 = vunpack.c.h.b16 %v437
    %v1860 = vunpack.c.l.b16 %v438
    %v1861 = vunpack.c.h.b16 %v438
    %v1862 = vunpack.c.l.b16 %v439
    %v1863 = vunpack.c.h.b16 %v439
    %v1864 = vunpack.c.l.b16 %v440
    %v1865 = vunpack.c.h.b16 %v440
    %v1866 = vunpack.c.l.b16 %v441
    %v1867 = vunpack.c.h.b16 %v441
    %v1868 = vunpack.c.l.b16 %v442
    %v1869 = vunpack.c.h.b16 %v442
    %v1870 = vunpack.c.l.b16 %v443
    %v1871 = vunpack.c.h.b16 %v443
    %v1872 = vunpack.c.l.b16 %v444
    %v1873 = vunpack.c.h.b16 %v444
    %v1874 = vunpack.c.l.b16 %v445
    %v1875 = vunpack.c.h.b16 %v445
    %v1876 = vunpack.c.l.b16 %v446
    %v1877 = vunpack.c.h.b16 %v446
    %v1878 = vunpack.c.l.b16 %v447
    %v1879 = vunpack.c.h.b16 %v447
    %v1880 = vunpack.c.l.b16 %v448
    %v1881 = vunpack.c.h.b16 %v448
    %v1882 = vunpack.c.l.b16 %v449
    %v1883 = vunpack.c.h.b16 %v449
    %v1884 = vunpack.c.l.b16 %v450
    %v1885 = vunpack.c.h.b16 %v450
    %v1886 = vunpack.c.l.b16 %v451
    %v1887 = vunpack.c.h.b16 %v451
    %v1888 = vunpack.c.l.b16 %v452
    %v1889 = vunpack.c.h.b16 %v452
    %v1890 = vunpack.c.l.b16 %v453
    %v1891 = vunpack.c.h.b16 %v453
    %v1892 = vunpack.c.l.b16 %v454
    %v1893 = vunpack.c.h.b16 %v454
    %v1894 = vunpack.c.l.b16 %v455
    %v1895 = vunpack.c.h.b16 %v455
    %v1896 = vunpack.c.l.b16 %v456
    %v1897 = vunpack.c.h.b16 %v456
    %v1898 = vunpack.c.l.b16 %v457
    %v1899 = vunpack.c.h.b16 %v457
    %v1900 = vunpack.c.l.b16 %v458
    %v1901 = vunpack.c.h.b16 %v458
    %v1902 = vunpack.c.l.b16 %v459
    %v1903 = vunpack.c.h.b16 %v459
    %v1904 = vunpack.c.l.b16 %v460
    %v1905 = vunpack.c.h.b16 %v460
    %v1906 = vunpack.c.l.b16 %v461
    %v1907 = vunpack.c.h.b16 %v461
    %v1908 = vunpack.c.l.b16 %v462
    %v1909 = vunpack.c.h.b16 %v462
    %v1910 = vunpack.c.l.b16 %v463
    %v1911 = vunpack.c.h.b16 %v463
    %v1912 = vunpack.c.l.b16 %v464
    %v1913 = vunpack.c.h.b16 %v464
    %v1914 = vunpack.c.l.b16 %v465
    %v1915 = vunpack.c.h.b16 %v465
    %v1916 = vunpack.c.l.b16 %v466
    %v1917 = vunpack.c.h.b16 %v466
    %v1918 = vunpack.c.l.b16 %v467
    %v1919 = vunpack.c.h.b16 %v467
    %v1920 = vunpack.c.l.b16 %v468
    %v1921 = vunpack.c.h.b16 %v468
    %v1922 = vunpack.c.l.b16 %v469
    %v1923 = vunpack.c.h.b16 %v469
    %v1924 = vunpack.c.l.b16 %v470
    %v1925 = vunpack.c.h.b16 %v470
    %v1926 = vunpack.c.l.b16 %v471
    %v1927 = vunpack.c.h.b16 %v471
    %v1928 = vunpack.c.l.b16 %v472
    %v1929 = vunpack.c.h.b16 %v472
    %v1930 = vunpack.c.l.b16 %v473
    %v1931 = vunpack.c.h.b16 %v473
    %v1932 = vunpack.c.l.b16 %v474
    %v1933 = vunpack.c.h.b16 %v474
    %v1934 = vunpack.c.l.b16 %v475
    %v1935 = vunpack.c.h.b16 %v475
    %v1936 = vunpack.c.l.b16 %v476
    %v1937 = vunpack.c.h.b16 %v476
    %v1938 = vunpack.c.l.b16 %v477
    %v1939 = vunpack.c.h.b16 %v477
    %v1940 = vunpack.c.l.b16 %v478
    %v1941 = vunpack.c.h.b16 %v478
    %v1942 = vunpack.c.l.b16 %v479
    %v1943 = vunpack.c.h.b16 %v479
    %v1944 = vunpack.c.l.b16 %v480
    %v1945 = vunpack.c.h.b16 %v480
    %v1946 = vunpack.c.l.b16 %v481
    %v1947 = vunpack.c.h.b16 %v481
    %v1948 = vunpack.c.l.b16 %v482
    %v1949 = vunpack.c.h.b16 %v482
    %v1950 = vunpack.c.l.b16 %v483
    %v1951 = vunpack.c.h.b16 %v483
    %v1952 = vunpack.c.l.b16 %v484
    %v1953 = vunpack.c.h.b16 %v484
    %v1954 = vunpack.c.l.b16 %v485
    %v1955 = vunpack.c.h.b16 %v485
    %v1956 = vunpack.c.l.b16 %v486
    %v1957 = vunpack.c.h.b16 %v486
    %v1958 = vunpack.c.l.b16 %v487
    %v1959 = vunpack.c.h.b16 %v487
    %v1960 = vunpack.c.l.b16 %v488
    %v1961 = vunpack.c.h.b16 %v488
    %v1962 = vpack.c.b16 %v1710, %v1706
    %v1963 = vpack.c.b16 %v1711, %v1707
    %v1964 = vpack.c.b16 %v1712, %v1708
    %v1965 = vpack.c.b16 %v1713, %v1709
    %v1966 = vpack.c.b16 %v1718, %v1714
    %v1967 = vpack.c.b16 %v1719, %v1715
    %v1968 = vpack.c.b16 %v1720, %v1716
    %v1969 = vpack.c.b16 %v1721, %v1717
    %v1970 = vpack.c.b16 %v1726, %v1722
    %v1971 = vpack.c.b16 %v1727, %v1723
    %v1972 = vpack.c.b16 %v1728, %v1724
    %v1973 = vpack.c.b16 %v1729, %v1725
    %v1974 = vpack.c.b16 %v1734, %v1730
    %v1975 = vpack.c.b16 %v1735, %v1731
    %v1976 = vpack.c.b16 %v1736, %v1732
    %v1977 = vpack.c.b16 %v1737, %v1733
    %v1978 = vpack.c.b16 %v1742, %v1738
    %v1979 = vpack.c.b16 %v1743, %v1739
    %v1980 = vpack.c.b16 %v1744, %v1740
    %v1981 = vpack.c.b16 %v1745, %v1741
    %v1982 = vpack.c.b16 %v1750, %v1746
    %v1983 = vpack.c.b16 %v1751, %v1747
    %v1984 = vpack.c.b16 %v1752, %v1748
    %v1985 = vpack.c.b16 %v1753, %v1749
    %v1986 = vpack.c.b16 %v1758, %v1754
    %v1987 = vpack.c.b16 %v1759, %v1755
    %v1988 = vpack.c.b16 %v1760, %v1756
    %v1989 = vpack.c.b16 %v1761, %v1757
    %v1990 = vpack.c.b16 %v1766, %v1762
    %v1991 = vpack.c.b16 %v1767, %v1763
    %v1992 = vpack.c.b16 %v1768, %v1764
    %v1993 = vpack.c.b16 %v1769, %v1765
    %v1994 = vpack.c.b16 %v1774, %v1770
    %v1995 = vpack.c.b16 %v1775, %v1771
    %v1996 = vpack.c.b16 %v1776, %v1772
    %v1997 = vpack.c.b16 %v1777, %v1773
    %v1998 = vpack.c.b16 %v1782, %v1778
    %v1999 = vpack.c.b16 %v1783, %v1779
    %v2000 = vpack.c.b16 %v1784, %v1780
    %v2001 = vpack.c.b16 %v1785, %v1781
    %v2002 = vpack.c.b16 %v1790, %v1786
    %v2003 = vpack.c.b16 %v1791, %v1787
    %v2004 = vpack.c.b16 %v1792, %v1788
    %v2005 = vpack.c.b16 %v1793, %v1789
    %v2006 = vpack.c.b16 %v1798, %v1794
    %v2007 = vpack.c.b16 %v1799, %v1795
    %v2008 = vpack.c.b16 %v1800, %v1796
    %v2009 = vpack.c.b16 %v1801, %v1797
    %v2010 = vpack.c.b16 %v1806, %v1802
    %v2011 = vpack.c.b16 %v1807, %v1803
    %v2012 = vpack.c.b16 %v1808, %v1804
    %v2013 = vpack.c.b16 %v1809, %v1805
    %v2014 = vpack.c.b16 %v1814, %v1810
    %v2015 = vpack.c.b16 %v1815, %v1811
    %v2016 = vpack.c.b16 %v1816, %v1812
    %v2017 = vpack.c.b16 %v1817, %v1813
    %v2018 = vpack.c.b16 %v1822, %v1818
    %v2019 = vpack.c.b16 %v1823, %v1819
    %v2020 = vpack.c.b16 %v1824, %v1820
    %v2021 = vpack.c.b16 %v1825, %v1821
    %v2022 = vpack.c.b16 %v1830, %v1826
    %v2023 = vpack.c.b16 %v1831, %v1827
    %v2024 = vpack.c.b16 %v1832, %v1828
    %v2025 = vpack.c.b16 %v1833, %v1829
    %v2026 = vpack.c.b16 %v1838, %v1834
    %v2027 = vpack.c.b16 %v1839, %v1835
    %v2028 = vpack.c.b16 %v1840, %v1836
    %v2029 = vpack.c.b16 %v1841, %v1837
    %v2030 = vpack.c.b16 %v1846, %v1842
    %v2031 = vpack.c.b16 %v1847, %v1843
    %v2032 = vpack.c.b16 %v1848, %v1844
    %v2033 = vpack.c.b16 %v1849, %v1845
    %v2034 = vpack.c.b16 %v1854, %v1850
    %v2035 = vpack.c.b16 %v1855, %v1851
    %v2036 = vpack.c.b16 %v1856, %v1852
    %v2037 = vpack.c.b16 %v1857, %v1853
    %v2038 = vpack.c.b16 %v1862, %v1858
    %v2039 = vpack.c.b16 %v1863, %v1859
    %v2040 = vpack.c.b16 %v1864, %v1860
    %v2041 = vpack.c.b16 %v1865, %v1861
    %v2042 = vpack.c.b16 %v1870, %v1866
    %v2043 = vpack.c.b16 %v1871, %v1867
    %v2044 = vpack.c.b16 %v1872, %v1868
    %v2045 = vpack.c.b16 %v1873, %v1869
    %v2046 = vpack.c.b16 %v1878, %v1874
    %v2047 = vpack.c.b16 %v1879, %v1875
    %v2048 = vpack.c.b16 %v1880, %v1876
    %v2049 = vpack.c.b16 %v1881, %v1877
    %v2050 = vpack.c.b16 %v1886, %v1882
    %v2051 = vpack.c.b16 %v1887, %v1883
    %v2052 = vpack.c.b16 %v1888, %v1884
    %v2053 = vpack.c.b16 %v1889, %v1885
    %v2054 = vpack.c.b16 %v1894, %v1890
    %v2055 = vpack.c.b16 %v1895, %v1891
    %v2056 = vpack.c.b16 %v1896, %v1892
    %v2057 = vpack.c.b16 %v1897, %v1893
    %v2058 = vpack.c.b16 %v1902, %v1898
    %v2059 = vpack.c.b16 %v1903, %v1899
    %v2060 = vpack.c.b16 %v1904, %v1900
    %v2061 = vpack.c.b16 %v1905, %v1901
    %v2062 = vpack.c.b16 %v1910, %v1906
    %v2063 = vpack.c.b16 %v1911, %v1907
    %v2064 = vpack.c.b16 %v1912, %v1908
    %v2065 = vpack.c.b16 %v1913, %v1909
    %v2066 = vpack.c.b16 %v1918, %v1914
    %v2067 = vpack.c.b16 %v1919, %v1915
    %v2068 = vpack.c.b16 %v1920, %v1916
    %v2069 = vpack.c.b16 %v1921, %v1917
    %v2070 = vpack.c.b16 %v1926, %v1922
    %v2071 = vpack.c.b16 %v1927, %v1923
    %v2072 = vpack.c.b16 %v1928, %v1924
    %v2073 = vpack.c.b16 %v1929, %v1925
    %v2074 = vpack.c.b16 %v1934, %v1930
    %v2075 = vpack.c.b16 %v1935, %v1931
    %v2076 = vpack.c.b16 %v1936, %v1932
    %v2077 = vpack.c.b16 %v1937, %v1933
    %v2078 = vpack.c.b16 %v1942, %v1938
    %v2079 = vpack.c.b16 %v1943, %v1939
    %v2080 = vpack.c.b16 %v1944, %v1940
    %v2081 = vpack.c.b16 %v1945, %v1941
    %v2082 = vpack.c.b16 %v1950, %v1946
    %v2083 = vpack.c.b16 %v1951, %v1947
    %v2084 = vpack.c.b16 %v1952, %v1948
    %v2085 = vpack.c.b16 %v1953, %v1949
    %v2086 = vpack.c.b16 %v1958, %v1954
    %v2087 = vpack.c.b16 %v1959, %v1955
    %v2088 = vpack.c.b16 %v1960, %v1956
    %v2089 = vpack.c.b16 %v1961, %v1957
    %2218 = vmatpush.bf16.msra.mxu0 %v1990
    %2219 = vmatpush.bf16.msra.mxu0 %v1986
    %2220 = vmatpush.bf16.msra.mxu0 %v1982
    %2221 = vmatpush.bf16.msra.mxu0 %v1978
    %2222 = vmatpush.bf16.msra.mxu0 %v1974
    %2223 = vmatpush.bf16.msra.mxu0 %v1970
    %2224 = vmatpush.bf16.msra.mxu0 %v1966
    %2225 = vmatpush.bf16.msra.mxu0 %v1962
    %2226 = vmatmul.bf16.gmra.mxu0 %v207
    %v2227 = vpop.f32.mrf.mxu0
    %v2228 = vadd.f32 %v1341, %v2227
    %v2229 = vpop.f32.mrf.mxu0
    %v2230 = vadd.f32 %v1343, %v2229
    %2231 = vmatmul.bf16.gmra.mxu0 %v305
    %v2232 = vpop.f32.mrf.mxu0
    %v2233 = vadd.f32 %v1346, %v2232
    %v2234 = vpop.f32.mrf.mxu0
    %v2235 = vadd.f32 %v1348, %v2234
    %2236 = vdwg.mxu0
    %2237 = vmatpush.bf16.msra.mxu0 %v2022
    %2238 = vmatpush.bf16.msra.mxu0 %v2018
    %2239 = vmatpush.bf16.msra.mxu0 %v2014
    %2240 = vmatpush.bf16.msra.mxu0 %v2010
    %2241 = vmatpush.bf16.msra.mxu0 %v2006
    %2242 = vmatpush.bf16.msra.mxu0 %v2002
    %2243 = vmatpush.bf16.msra.mxu0 %v1998
    %2244 = vmatpush.bf16.msra.mxu0 %v1994
    %2245 = vmatmul.bf16.gmra.mxu0 %v224
    %v2246 = vpop.f32.mrf.mxu0
    %v2247 = vadd.f32 %v2228, %v2246
    %v2248 = vpop.f32.mrf.mxu0
    %v2249 = vadd.f32 %v2230, %v2248
    %2250 = vmatmul.bf16.gmra.mxu0 %v322
    %v2251 = vpop.f32.mrf.mxu0
    %v2252 = vadd.f32 %v2233, %v2251
    %v2253 = vpop.f32.mrf.mxu0
    %v2254 = vadd.f32 %v2235, %v2253
    %2255 = vdwg.mxu0
    %2256 = vmatpush.bf16.msra.mxu0 %v2054
    %2257 = vmatpush.bf16.msra.mxu0 %v2050
    %2258 = vmatpush.bf16.msra.mxu0 %v2046
    %2259 = vmatpush.bf16.msra.mxu0 %v2042
    %2260 = vmatpush.bf16.msra.mxu0 %v2038
    %2261 = vmatpush.bf16.msra.mxu0 %v2034
    %2262 = vmatpush.bf16.msra.mxu0 %v2030
    %2263 = vmatpush.bf16.msra.mxu0 %v2026
    %2264 = vmatmul.bf16.gmra.mxu0 %v241
    %v2265 = vpop.f32.mrf.mxu0
    %v2266 = vadd.f32 %v2247, %v2265
    %v2267 = vpop.f32.mrf.mxu0
    %v2268 = vadd.f32 %v2249, %v2267
    %2269 = vmatmul.bf16.gmra.mxu0 %v339
    %v2270 = vpop.f32.mrf.mxu0
    %v2271 = vadd.f32 %v2252, %v2270
    %v2272 = vpop.f32.mrf.mxu0
    %v2273 = vadd.f32 %v2254, %v2272
    %2274 = vdwg.mxu0
    %2275 = vmatpush.bf16.msra.mxu0 %v2086
    %2276 = vmatpush.bf16.msra.mxu0 %v2082
    %2277 = vmatpush.bf16.msra.mxu0 %v2078
    %2278 = vmatpush.bf16.msra.mxu0 %v2074
    %2279 = vmatpush.bf16.msra.mxu0 %v2070
    %2280 = vmatpush.bf16.msra.mxu0 %v2066
    %2281 = vmatpush.bf16.msra.mxu0 %v2062
    %2282 = vmatpush.bf16.msra.mxu0 %v2058
    %2283 = vmatmul.bf16.gmra.mxu0 %v258
    %v2284 = vpop.f32.mrf.mxu0
    %v2285 = vadd.f32 %v2266, %v2284
    %v2286 = vpop.f32.mrf.mxu0
    %v2287 = vadd.f32 %v2268, %v2286
    %2288 = vmatmul.bf16.gmra.mxu0 %v356
    %v2289 = vpop.f32.mrf.mxu0
    %v2290 = vadd.f32 %v2271, %v2289
    %v2291 = vpop.f32.mrf.mxu0
    %v2292 = vadd.f32 %v2273, %v2291
    %2293 = vdwg.mxu0
    %2294 = vmatpush.bf16.msra.mxu0 %v1991
    %2295 = vmatpush.bf16.msra.mxu0 %v1987
    %2296 = vmatpush.bf16.msra.mxu0 %v1983
    %2297 = vmatpush.bf16.msra.mxu0 %v1979
    %2298 = vmatpush.bf16.msra.mxu0 %v1975
    %2299 = vmatpush.bf16.msra.mxu0 %v1971
    %2300 = vmatpush.bf16.msra.mxu0 %v1967
    %2301 = vmatpush.bf16.msra.mxu0 %v1963
    %2302 = vmatmul.bf16.gmra.mxu0 %v207
    %v2303 = vpop.f32.mrf.mxu0
    %v2304 = vadd.f32 %v1417, %v2303
    %v2305 = vpop.f32.mrf.mxu0
    %v2306 = vadd.f32 %v1419, %v2305
    %2307 = vmatmul.bf16.gmra.mxu0 %v305
    %v2308 = vpop.f32.mrf.mxu0
    %v2309 = vadd.f32 %v1422, %v2308
    %v2310 = vpop.f32.mrf.mxu0
    %v2311 = vadd.f32 %v1424, %v2310
    %2312 = vdwg.mxu0
    %2313 = vmatpush.bf16.msra.mxu0 %v2023
    %2314 = vmatpush.bf16.msra.mxu0 %v2019
    %2315 = vmatpush.bf16.msra.mxu0 %v2015
    %2316 = vmatpush.bf16.msra.mxu0 %v2011
    %2317 = vmatpush.bf16.msra.mxu0 %v2007
    %2318 = vmatpush.bf16.msra.mxu0 %v2003
    %2319 = vmatpush.bf16.msra.mxu0 %v1999
    %2320 = vmatpush.bf16.msra.mxu0 %v1995
    %2321 = vmatmul.bf16.gmra.mxu0 %v224
    %v2322 = vpop.f32.mrf.mxu0
    %v2323 = vadd.f32 %v2304, %v2322
    %v2324 = vpop.f32.mrf.mxu0
    %v2325 = vadd.f32 %v2306, %v2324
    %2326 = vmatmul.bf16.gmra.mxu0 %v322
    %v2327 = vpop.f32.mrf.mxu0
    %v2328 = vadd.f32 %v2309, %v2327
    %v2329 = vpop.f32.mrf.mxu0
    %v2330 = vadd.f32 %v2311, %v2329
    %2331 = vdwg.mxu0
    %2332 = vmatpush.bf16.msra.mxu0 %v2055
    %2333 = vmatpush.bf16.msra.mxu0 %v2051
    %2334 = vmatpush.bf16.msra.mxu0 %v2047
    %2335 = vmatpush.bf16.msra.mxu0 %v2043
    %2336 = vmatpush.bf16.msra.mxu0 %v2039
    %2337 = vmatpush.bf16.msra.mxu0 %v2035
    %2338 = vmatpush.bf16.msra.mxu0 %v2031
    %2339 = vmatpush.bf16.msra.mxu0 %v2027
    %2340 = vmatmul.bf16.gmra.mxu0 %v241
    %v2341 = vpop.f32.mrf.mxu0
    %v2342 = vadd.f32 %v2323, %v2341
    %v2343 = vpop.f32.mrf.mxu0
    %v2344 = vadd.f32 %v2325, %v2343
    %2345 = vmatmul.bf16.gmra.mxu0 %v339
    %v2346 = vpop.f32.mrf.mxu0
    %v2347 = vadd.f32 %v2328, %v2346
    %v2348 = vpop.f32.mrf.mxu0
    %v2349 = vadd.f32 %v2330, %v2348
    %2350 = vdwg.mxu0
    %2351 = vmatpush.bf16.msra.mxu0 %v2087
    %2352 = vmatpush.bf16.msra.mxu0 %v2083
    %2353 = vmatpush.bf16.msra.mxu0 %v2079
    %2354 = vmatpush.bf16.msra.mxu0 %v2075
    %2355 = vmatpush.bf16.msra.mxu0 %v2071
    %2356 = vmatpush.bf16.msra.mxu0 %v2067
    %2357 = vmatpush.bf16.msra.mxu0 %v2063
    %2358 = vmatpush.bf16.msra.mxu0 %v2059
    %2359 = vmatmul.bf16.gmra.mxu0 %v258
    %v2360 = vpop.f32.mrf.mxu0
    %v2361 = vadd.f32 %v2342, %v2360
    %v2362 = vpop.f32.mrf.mxu0
    %v2363 = vadd.f32 %v2344, %v2362
    %2364 = vmatmul.bf16.gmra.mxu0 %v356
    %v2365 = vpop.f32.mrf.mxu0
    %v2366 = vadd.f32 %v2347, %v2365
    %v2367 = vpop.f32.mrf.mxu0
    %v2368 = vadd.f32 %v2349, %v2367
    %2369 = vdwg.mxu0
    %2370 = vmatpush.bf16.msra.mxu0 %v1992
    %2371 = vmatpush.bf16.msra.mxu0 %v1988
    %2372 = vmatpush.bf16.msra.mxu0 %v1984
    %2373 = vmatpush.bf16.msra.mxu0 %v1980
    %2374 = vmatpush.bf16.msra.mxu0 %v1976
    %2375 = vmatpush.bf16.msra.mxu0 %v1972
    %2376 = vmatpush.bf16.msra.mxu0 %v1968
    %2377 = vmatpush.bf16.msra.mxu0 %v1964
    %2378 = vmatmul.bf16.gmra.mxu0 %v207
    %v2379 = vpop.f32.mrf.mxu0
    %v2380 = vadd.f32 %v1493, %v2379
    %v2381 = vpop.f32.mrf.mxu0
    %v2382 = vadd.f32 %v1495, %v2381
    %2383 = vmatmul.bf16.gmra.mxu0 %v305
    %v2384 = vpop.f32.mrf.mxu0
    %v2385 = vadd.f32 %v1498, %v2384
    %v2386 = vpop.f32.mrf.mxu0
    %v2387 = vadd.f32 %v1500, %v2386
    %2388 = vdwg.mxu0
    %2389 = vmatpush.bf16.msra.mxu0 %v2024
    %2390 = vmatpush.bf16.msra.mxu0 %v2020
    %2391 = vmatpush.bf16.msra.mxu0 %v2016
    %2392 = vmatpush.bf16.msra.mxu0 %v2012
    %2393 = vmatpush.bf16.msra.mxu0 %v2008
    %2394 = vmatpush.bf16.msra.mxu0 %v2004
    %2395 = vmatpush.bf16.msra.mxu0 %v2000
    %2396 = vmatpush.bf16.msra.mxu0 %v1996
    %2397 = vmatmul.bf16.gmra.mxu0 %v224
    %v2398 = vpop.f32.mrf.mxu0
    %v2399 = vadd.f32 %v2380, %v2398
    %v2400 = vpop.f32.mrf.mxu0
    %v2401 = vadd.f32 %v2382, %v2400
    %2402 = vmatmul.bf16.gmra.mxu0 %v322
    %v2403 = vpop.f32.mrf.mxu0
    %v2404 = vadd.f32 %v2385, %v2403
    %v2405 = vpop.f32.mrf.mxu0
    %v2406 = vadd.f32 %v2387, %v2405
    %2407 = vdwg.mxu0
    %2408 = vmatpush.bf16.msra.mxu0 %v2056
    %2409 = vmatpush.bf16.msra.mxu0 %v2052
    %2410 = vmatpush.bf16.msra.mxu0 %v2048
    %2411 = vmatpush.bf16.msra.mxu0 %v2044
    %2412 = vmatpush.bf16.msra.mxu0 %v2040
    %2413 = vmatpush.bf16.msra.mxu0 %v2036
    %2414 = vmatpush.bf16.msra.mxu0 %v2032
    %2415 = vmatpush.bf16.msra.mxu0 %v2028
    %2416 = vmatmul.bf16.gmra.mxu0 %v241
    %v2417 = vpop.f32.mrf.mxu0
    %v2418 = vadd.f32 %v2399, %v2417
    %v2419 = vpop.f32.mrf.mxu0
    %v2420 = vadd.f32 %v2401, %v2419
    %2421 = vmatmul.bf16.gmra.mxu0 %v339
    %v2422 = vpop.f32.mrf.mxu0
    %v2423 = vadd.f32 %v2404, %v2422
    %v2424 = vpop.f32.mrf.mxu0
    %v2425 = vadd.f32 %v2406, %v2424
    %2426 = vdwg.mxu0
    %2427 = vmatpush.bf16.msra.mxu0 %v2088
    %2428 = vmatpush.bf16.msra.mxu0 %v2084
    %2429 = vmatpush.bf16.msra.mxu0 %v2080
    %2430 = vmatpush.bf16.msra.mxu0 %v2076
    %2431 = vmatpush.bf16.msra.mxu0 %v2072
    %2432 = vmatpush.bf16.msra.mxu0 %v2068
    %2433 = vmatpush.bf16.msra.mxu0 %v2064
    %2434 = vmatpush.bf16.msra.mxu0 %v2060
    %2435 = vmatmul.bf16.gmra.mxu0 %v258
    %v2436 = vpop.f32.mrf.mxu0
    %v2437 = vadd.f32 %v2418, %v2436
    %v2438 = vpop.f32.mrf.mxu0
    %v2439 = vadd.f32 %v2420, %v2438
    %2440 = vmatmul.bf16.gmra.mxu0 %v356
    %v2441 = vpop.f32.mrf.mxu0
    %v2442 = vadd.f32 %v2423, %v2441
    %v2443 = vpop.f32.mrf.mxu0
    %v2444 = vadd.f32 %v2425, %v2443
    %2445 = vdwg.mxu0
    %2446 = vmatpush.bf16.msra.mxu0 %v1993
    %2447 = vmatpush.bf16.msra.mxu0 %v1989
    %2448 = vmatpush.bf16.msra.mxu0 %v1985
    %2449 = vmatpush.bf16.msra.mxu0 %v1981
    %2450 = vmatpush.bf16.msra.mxu0 %v1977
    %2451 = vmatpush.bf16.msra.mxu0 %v1973
    %2452 = vmatpush.bf16.msra.mxu0 %v1969
    %2453 = vmatpush.bf16.msra.mxu0 %v1965
    %2454 = vmatmul.bf16.gmra.mxu0 %v207
    %v2455 = vpop.f32.mrf.mxu0
    %v2456 = vadd.f32 %v1569, %v2455
    %v2457 = vpop.f32.mrf.mxu0
    %v2458 = vadd.f32 %v1571, %v2457
    %2459 = vmatmul.bf16.gmra.mxu0 %v305
    %v2460 = vpop.f32.mrf.mxu0
    %v2461 = vadd.f32 %v1574, %v2460
    %v2462 = vpop.f32.mrf.mxu0
    %v2463 = vadd.f32 %v1576, %v2462
    %2464 = vdwg.mxu0
    %2465 = vmatpush.bf16.msra.mxu0 %v2025
    %2466 = vmatpush.bf16.msra.mxu0 %v2021
    %2467 = vmatpush.bf16.msra.mxu0 %v2017
    %2468 = vmatpush.bf16.msra.mxu0 %v2013
    %2469 = vmatpush.bf16.msra.mxu0 %v2009
    %2470 = vmatpush.bf16.msra.mxu0 %v2005
    %2471 = vmatpush.bf16.msra.mxu0 %v2001
    %2472 = vmatpush.bf16.msra.mxu0 %v1997
    %2473 = vmatmul.bf16.gmra.mxu0 %v224
    %v2474 = vpop.f32.mrf.mxu0
    %v2475 = vadd.f32 %v2456, %v2474
    %v2476 = vpop.f32.mrf.mxu0
    %v2477 = vadd.f32 %v2458, %v2476
    %2478 = vmatmul.bf16.gmra.mxu0 %v322
    %v2479 = vpop.f32.mrf.mxu0
    %v2480 = vadd.f32 %v2461, %v2479
    %v2481 = vpop.f32.mrf.mxu0
    %v2482 = vadd.f32 %v2463, %v2481
    %2483 = vdwg.mxu0
    %2484 = vmatpush.bf16.msra.mxu0 %v2057
    %2485 = vmatpush.bf16.msra.mxu0 %v2053
    %2486 = vmatpush.bf16.msra.mxu0 %v2049
    %2487 = vmatpush.bf16.msra.mxu0 %v2045
    %2488 = vmatpush.bf16.msra.mxu0 %v2041
    %2489 = vmatpush.bf16.msra.mxu0 %v2037
    %2490 = vmatpush.bf16.msra.mxu0 %v2033
    %2491 = vmatpush.bf16.msra.mxu0 %v2029
    %2492 = vmatmul.bf16.gmra.mxu0 %v241
    %v2493 = vpop.f32.mrf.mxu0
    %v2494 = vadd.f32 %v2475, %v2493
    %v2495 = vpop.f32.mrf.mxu0
    %v2496 = vadd.f32 %v2477, %v2495
    %2497 = vmatmul.bf16.gmra.mxu0 %v339
    %v2498 = vpop.f32.mrf.mxu0
    %v2499 = vadd.f32 %v2480, %v2498
    %v2500 = vpop.f32.mrf.mxu0
    %v2501 = vadd.f32 %v2482, %v2500
    %2502 = vdwg.mxu0
    %2503 = vmatpush.bf16.msra.mxu0 %v2089
    %2504 = vmatpush.bf16.msra.mxu0 %v2085
    %2505 = vmatpush.bf16.msra.mxu0 %v2081
    %2506 = vmatpush.bf16.msra.mxu0 %v2077
    %2507 = vmatpush.bf16.msra.mxu0 %v2073
    %2508 = vmatpush.bf16.msra.mxu0 %v2069
    %2509 = vmatpush.bf16.msra.mxu0 %v2065
    %2510 = vmatpush.bf16.msra.mxu0 %v2061
    %2511 = vmatmul.bf16.gmra.mxu0 %v258
    %v2512 = vpop.f32.mrf.mxu0
    %v2513 = vadd.f32 %v2494, %v2512
    %v2514 = vpop.f32.mrf.mxu0
    %v2515 = vadd.f32 %v2496, %v2514
    %2516 = vmatmul.bf16.gmra.mxu0 %v356
    %v2517 = vpop.f32.mrf.mxu0
    %v2518 = vadd.f32 %v2499, %v2517
    %v2519 = vpop.f32.mrf.mxu0
    %v2520 = vadd.f32 %v2501, %v2519
    %2521 = vdwg.mxu0
    %v2522 = vld [vmem:[#allocation2 + $0x20] sm:$0xff]
    %v2523 = vld [vmem:[#allocation2 + $0x28] sm:$0xff]
    %v2524 = vld [vmem:[#allocation2 + $0x30] sm:$0xff]
    %v2525 = vld [vmem:[#allocation2 + $0x38] sm:$0xff]
    %v2526 = vld [vmem:[#allocation2 + $0x40] sm:$0x11]
    %v2527 = vld [vmem:[#allocation2 + $0x48] sm:$0x11]
    %v2528 = vld [vmem:[#allocation2 + $0x60] sm:$0xff]
    %v2529 = vld [vmem:[#allocation2 + $0x68] sm:$0xff]
    %v2530 = vld [vmem:[#allocation2 + $0x70] sm:$0xff]
    %v2531 = vld [vmem:[#allocation2 + $0x78] sm:$0xff]
    %v2532 = vld [vmem:[#allocation2 + $0x80] sm:$0x11]
    %v2533 = vld [vmem:[#allocation2 + $0x88] sm:$0x11]
    %v2540 = vunpack.c.l.b16 %v2522
    %v2541 = vunpack.c.h.b16 %v2522
    %v2542 = vunpack.c.l.b16 %v2523
    %v2543 = vunpack.c.h.b16 %v2523
    %v2544 = vunpack.c.l.b16 %v2524
    %v2545 = vunpack.c.h.b16 %v2524
    %v2546 = vunpack.c.l.b16 %v2525
    %v2547 = vunpack.c.h.b16 %v2525
    %v2548 = vunpack.c.l.b16 %v2526
    %v2549 = vunpack.c.h.b16 %v2526
    %v2550 = vunpack.c.l.b16 %v2527
    %v2551 = vunpack.c.h.b16 %v2527
    %v2552 = vpack.c.b16 %v2544, %v2540
    %v2553 = vpack.c.b16 %v2545, %v2541
    %v2554 = vpack.c.b16 %v2546, %v2542
    %v2555 = vpack.c.b16 %v2547, %v2543
    %v2556 = vpack.c.b16 %v2548, %v2548
    %v2557 = vpack.c.b16 %v2549, %v2549
    %v2558 = vpack.c.b16 %v2550, %v2550
    %v2559 = vpack.c.b16 %v2551, %v2551
    %vm2560 = vsmask.f32 7424
    %v2562 = vshrl.u32 %v2552, 16
    %v2564 = vshll.u32 %v2552, 16
    %v2566 = vrot.slane %v2564, 1
    %v2567 = vor.u32 %v2562, %v2566
    %v2569 = vshll.u32 %v2556, 16
    %v2571 = vrot.slane %v2569, 1
    %v2572 = vsel %vm2560, %v2567, %v2571
    %v2574 = vshrl.u32 %v2553, 16
    %v2576 = vshll.u32 %v2553, 16
    %v2578 = vrot.slane %v2576, 1
    %v2579 = vor.u32 %v2574, %v2578
    %v2581 = vshll.u32 %v2557, 16
    %v2583 = vrot.slane %v2581, 1
    %v2584 = vsel %vm2560, %v2579, %v2583
    %v2586 = vshrl.u32 %v2554, 16
    %v2588 = vshll.u32 %v2554, 16
    %v2590 = vrot.slane %v2588, 1
    %v2591 = vor.u32 %v2586, %v2590
    %v2593 = vshll.u32 %v2558, 16
    %v2595 = vrot.slane %v2593, 1
    %v2596 = vsel %vm2560, %v2591, %v2595
    %v2598 = vshrl.u32 %v2555, 16
    %v2600 = vshll.u32 %v2555, 16
    %v2602 = vrot.slane %v2600, 1
    %v2603 = vor.u32 %v2598, %v2602
    %v2605 = vshll.u32 %v2559, 16
    %v2607 = vrot.slane %v2605, 1
    %v2608 = vsel %vm2560, %v2603, %v2607
    %v2619 = vunpack.c.l.b16 %v2528
    %v2620 = vunpack.c.h.b16 %v2528
    %v2621 = vunpack.c.l.b16 %v2529
    %v2622 = vunpack.c.h.b16 %v2529
    %v2623 = vunpack.c.l.b16 %v2530
    %v2624 = vunpack.c.h.b16 %v2530
    %v2625 = vunpack.c.l.b16 %v2531
    %v2626 = vunpack.c.h.b16 %v2531
    %v2627 = vunpack.c.l.b16 %v2532
    %v2628 = vunpack.c.h.b16 %v2532
    %v2629 = vunpack.c.l.b16 %v2533
    %v2630 = vunpack.c.h.b16 %v2533
    %v2631 = vpack.c.b16 %v2623, %v2619
    %v2632 = vpack.c.b16 %v2624, %v2620
    %v2633 = vpack.c.b16 %v2625, %v2621
    %v2634 = vpack.c.b16 %v2626, %v2622
    %v2635 = vpack.c.b16 %v2627, %v2627
    %v2636 = vpack.c.b16 %v2628, %v2628
    %v2637 = vpack.c.b16 %v2629, %v2629
    %v2638 = vpack.c.b16 %v2630, %v2630
    %v2640 = vshrl.u32 %v2631, 16
    %v2642 = vshll.u32 %v2631, 16
    %v2644 = vrot.slane %v2642, 1
    %v2645 = vor.u32 %v2640, %v2644
    %v2647 = vshll.u32 %v2635, 16
    %v2649 = vrot.slane %v2647, 1
    %v2650 = vsel %vm2560, %v2645, %v2649
    %v2652 = vshrl.u32 %v2632, 16
    %v2654 = vshll.u32 %v2632, 16
    %v2656 = vrot.slane %v2654, 1
    %v2657 = vor.u32 %v2652, %v2656
    %v2659 = vshll.u32 %v2636, 16
    %v2661 = vrot.slane %v2659, 1
    %v2662 = vsel %vm2560, %v2657, %v2661
    %v2664 = vshrl.u32 %v2633, 16
    %v2666 = vshll.u32 %v2633, 16
    %v2668 = vrot.slane %v2666, 1
    %v2669 = vor.u32 %v2664, %v2668
    %v2671 = vshll.u32 %v2637, 16
    %v2673 = vrot.slane %v2671, 1
    %v2674 = vsel %vm2560, %v2669, %v2673
    %v2676 = vshrl.u32 %v2634, 16
    %v2678 = vshll.u32 %v2634, 16
    %v2680 = vrot.slane %v2678, 1
    %v2681 = vor.u32 %v2676, %v2680
    %v2683 = vshll.u32 %v2638, 16
    %v2685 = vrot.slane %v2683, 1
    %v2686 = vsel %vm2560, %v2681, %v2685
    %s2691 = scalar_lea.vmem [#allocation5], 2048
    %v2692 = vld [vmem:[%s2691] sm:$0xff]
    %v2693 = vld [vmem:[%s2691 + $0x8] sm:$0xff]
    %v2694 = vld [vmem:[%s2691 + $0x10] sm:$0xff]
    %v2695 = vld [vmem:[%s2691 + $0x18] sm:$0xff]
    %v2696 = vld [vmem:[%s2691 + $0x20] sm:$0xff]
    %v2697 = vld [vmem:[%s2691 + $0x28] sm:$0xff]
    %v2698 = vld [vmem:[%s2691 + $0x30] sm:$0xff]
    %v2699 = vld [vmem:[%s2691 + $0x38] sm:$0xff]
    %v2700 = vld [vmem:[%s2691 + $0x40] sm:$0xff]
    %v2701 = vld [vmem:[%s2691 + $0x48] sm:$0xff]
    %v2702 = vld [vmem:[%s2691 + $0x50] sm:$0xff]
    %v2703 = vld [vmem:[%s2691 + $0x58] sm:$0xff]
    %v2704 = vld [vmem:[%s2691 + $0x60] sm:$0xff]
    %v2705 = vld [vmem:[%s2691 + $0x68] sm:$0xff]
    %v2706 = vld [vmem:[%s2691 + $0x70] sm:$0xff]
    %v2707 = vld [vmem:[%s2691 + $0x78] sm:$0xff]
    %v2708 = vld [vmem:[%s2691 + $0x80] sm:$0xff]
    %v2709 = vld [vmem:[%s2691 + $0x88] sm:$0xff]
    %v2710 = vld [vmem:[%s2691 + $0x90] sm:$0xff]
    %v2711 = vld [vmem:[%s2691 + $0x98] sm:$0xff]
    %v2712 = vld [vmem:[%s2691 + $0xa0] sm:$0xff]
    %v2713 = vld [vmem:[%s2691 + $0xa8] sm:$0xff]
    %v2714 = vld [vmem:[%s2691 + $0xb0] sm:$0xff]
    %v2715 = vld [vmem:[%s2691 + $0xb8] sm:$0xff]
    %v2716 = vld [vmem:[%s2691 + $0xc0] sm:$0xff]
    %v2717 = vld [vmem:[%s2691 + $0xc8] sm:$0xff]
    %v2718 = vld [vmem:[%s2691 + $0xd0] sm:$0xff]
    %v2719 = vld [vmem:[%s2691 + $0xd8] sm:$0xff]
    %v2720 = vld [vmem:[%s2691 + $0xe0] sm:$0xff]
    %v2721 = vld [vmem:[%s2691 + $0xe8] sm:$0xff]
    %v2722 = vld [vmem:[%s2691 + $0xf0] sm:$0xff]
    %v2723 = vld [vmem:[%s2691 + $0xf8] sm:$0xff]
    %v2724 = vld [vmem:[%s2691 + $0x100] sm:$0xff]
    %v2725 = vld [vmem:[%s2691 + $0x108] sm:$0xff]
    %v2726 = vld [vmem:[%s2691 + $0x110] sm:$0xff]
    %v2727 = vld [vmem:[%s2691 + $0x118] sm:$0xff]
    %v2728 = vld [vmem:[%s2691 + $0x120] sm:$0xff]
    %v2729 = vld [vmem:[%s2691 + $0x128] sm:$0xff]
    %v2730 = vld [vmem:[%s2691 + $0x130] sm:$0xff]
    %v2731 = vld [vmem:[%s2691 + $0x138] sm:$0xff]
    %v2732 = vld [vmem:[%s2691 + $0x140] sm:$0xff]
    %v2733 = vld [vmem:[%s2691 + $0x148] sm:$0xff]
    %v2734 = vld [vmem:[%s2691 + $0x150] sm:$0xff]
    %v2735 = vld [vmem:[%s2691 + $0x158] sm:$0xff]
    %v2736 = vld [vmem:[%s2691 + $0x160] sm:$0xff]
    %v2737 = vld [vmem:[%s2691 + $0x168] sm:$0xff]
    %v2738 = vld [vmem:[%s2691 + $0x170] sm:$0xff]
    %v2739 = vld [vmem:[%s2691 + $0x178] sm:$0xff]
    %v2740 = vld [vmem:[%s2691 + $0x180] sm:$0xff]
    %v2741 = vld [vmem:[%s2691 + $0x188] sm:$0xff]
    %v2742 = vld [vmem:[%s2691 + $0x190] sm:$0xff]
    %v2743 = vld [vmem:[%s2691 + $0x198] sm:$0xff]
    %v2744 = vld [vmem:[%s2691 + $0x1a0] sm:$0xff]
    %v2745 = vld [vmem:[%s2691 + $0x1a8] sm:$0xff]
    %v2746 = vld [vmem:[%s2691 + $0x1b0] sm:$0xff]
    %v2747 = vld [vmem:[%s2691 + $0x1b8] sm:$0xff]
    %v2748 = vld [vmem:[%s2691 + $0x1c0] sm:$0xff]
    %v2749 = vld [vmem:[%s2691 + $0x1c8] sm:$0xff]
    %v2750 = vld [vmem:[%s2691 + $0x1d0] sm:$0xff]
    %v2751 = vld [vmem:[%s2691 + $0x1d8] sm:$0xff]
    %v2752 = vld [vmem:[%s2691 + $0x1e0] sm:$0xff]
    %v2753 = vld [vmem:[%s2691 + $0x1e8] sm:$0xff]
    %v2754 = vld [vmem:[%s2691 + $0x1f0] sm:$0xff]
    %v2755 = vld [vmem:[%s2691 + $0x1f8] sm:$0xff]
    %v2756 = vld [vmem:[%s2691 + $0x200] sm:$0xff]
    %v2757 = vld [vmem:[%s2691 + $0x208] sm:$0xff]
    %v2758 = vld [vmem:[%s2691 + $0x210] sm:$0xff]
    %v2759 = vld [vmem:[%s2691 + $0x218] sm:$0xff]
    %v2760 = vld [vmem:[%s2691 + $0x220] sm:$0xff]
    %v2761 = vld [vmem:[%s2691 + $0x228] sm:$0xff]
    %v2762 = vld [vmem:[%s2691 + $0x230] sm:$0xff]
    %v2763 = vld [vmem:[%s2691 + $0x238] sm:$0xff]
    %v2764 = vld [vmem:[%s2691 + $0x240] sm:$0xff]
    %v2765 = vld [vmem:[%s2691 + $0x248] sm:$0xff]
    %v2766 = vld [vmem:[%s2691 + $0x250] sm:$0xff]
    %v2767 = vld [vmem:[%s2691 + $0x258] sm:$0xff]
    %v2768 = vld [vmem:[%s2691 + $0x260] sm:$0xff]
    %v2769 = vld [vmem:[%s2691 + $0x268] sm:$0xff]
    %v2770 = vld [vmem:[%s2691 + $0x270] sm:$0xff]
    %v2771 = vld [vmem:[%s2691 + $0x278] sm:$0xff]
    %v2772 = vld [vmem:[%s2691 + $0x280] sm:$0xff]
    %v2773 = vld [vmem:[%s2691 + $0x288] sm:$0xff]
    %v2774 = vld [vmem:[%s2691 + $0x290] sm:$0xff]
    %v2775 = vld [vmem:[%s2691 + $0x298] sm:$0xff]
    %v2776 = vld [vmem:[%s2691 + $0x2a0] sm:$0xff]
    %v2777 = vld [vmem:[%s2691 + $0x2a8] sm:$0xff]
    %v2778 = vld [vmem:[%s2691 + $0x2b0] sm:$0xff]
    %v2779 = vld [vmem:[%s2691 + $0x2b8] sm:$0xff]
    %v2780 = vld [vmem:[%s2691 + $0x2c0] sm:$0xff]
    %v2781 = vld [vmem:[%s2691 + $0x2c8] sm:$0xff]
    %v2782 = vld [vmem:[%s2691 + $0x2d0] sm:$0xff]
    %v2783 = vld [vmem:[%s2691 + $0x2d8] sm:$0xff]
    %v2784 = vld [vmem:[%s2691 + $0x2e0] sm:$0xff]
    %v2785 = vld [vmem:[%s2691 + $0x2e8] sm:$0xff]
    %v2786 = vld [vmem:[%s2691 + $0x2f0] sm:$0xff]
    %v2787 = vld [vmem:[%s2691 + $0x2f8] sm:$0xff]
    %v2788 = vld [vmem:[%s2691 + $0x300] sm:$0xff]
    %v2789 = vld [vmem:[%s2691 + $0x308] sm:$0xff]
    %v2790 = vld [vmem:[%s2691 + $0x310] sm:$0xff]
    %v2791 = vld [vmem:[%s2691 + $0x318] sm:$0xff]
    %v2792 = vld [vmem:[%s2691 + $0x320] sm:$0xff]
    %v2793 = vld [vmem:[%s2691 + $0x328] sm:$0xff]
    %v2794 = vld [vmem:[%s2691 + $0x330] sm:$0xff]
    %v2795 = vld [vmem:[%s2691 + $0x338] sm:$0xff]
    %v2796 = vld [vmem:[%s2691 + $0x340] sm:$0xff]
    %v2797 = vld [vmem:[%s2691 + $0x348] sm:$0xff]
    %v2798 = vld [vmem:[%s2691 + $0x350] sm:$0xff]
    %v2799 = vld [vmem:[%s2691 + $0x358] sm:$0xff]
    %v2800 = vld [vmem:[%s2691 + $0x360] sm:$0xff]
    %v2801 = vld [vmem:[%s2691 + $0x368] sm:$0xff]
    %v2802 = vld [vmem:[%s2691 + $0x370] sm:$0xff]
    %v2803 = vld [vmem:[%s2691 + $0x378] sm:$0xff]
    %v2804 = vld [vmem:[%s2691 + $0x380] sm:$0xff]
    %v2805 = vld [vmem:[%s2691 + $0x388] sm:$0xff]
    %v2806 = vld [vmem:[%s2691 + $0x390] sm:$0xff]
    %v2807 = vld [vmem:[%s2691 + $0x398] sm:$0xff]
    %v2808 = vld [vmem:[%s2691 + $0x3a0] sm:$0xff]
    %v2809 = vld [vmem:[%s2691 + $0x3a8] sm:$0xff]
    %v2810 = vld [vmem:[%s2691 + $0x3b0] sm:$0xff]
    %v2811 = vld [vmem:[%s2691 + $0x3b8] sm:$0xff]
    %v2812 = vld [vmem:[%s2691 + $0x3c0] sm:$0xff]
    %v2813 = vld [vmem:[%s2691 + $0x3c8] sm:$0xff]
    %v2814 = vld [vmem:[%s2691 + $0x3d0] sm:$0xff]
    %v2815 = vld [vmem:[%s2691 + $0x3d8] sm:$0xff]
    %v2816 = vld [vmem:[%s2691 + $0x3e0] sm:$0xff]
    %v2817 = vld [vmem:[%s2691 + $0x3e8] sm:$0xff]
    %v2818 = vld [vmem:[%s2691 + $0x3f0] sm:$0xff]
    %v2819 = vld [vmem:[%s2691 + $0x3f8] sm:$0xff]
    %v2948 = vunpack.c.l.b16 %v2692
    %v2949 = vunpack.c.h.b16 %v2692
    %v2950 = vunpack.c.l.b16 %v2693
    %v2951 = vunpack.c.h.b16 %v2693
    %v2952 = vunpack.c.l.b16 %v2694
    %v2953 = vunpack.c.h.b16 %v2694
    %v2954 = vunpack.c.l.b16 %v2695
    %v2955 = vunpack.c.h.b16 %v2695
    %v2956 = vunpack.c.l.b16 %v2696
    %v2957 = vunpack.c.h.b16 %v2696
    %v2958 = vunpack.c.l.b16 %v2697
    %v2959 = vunpack.c.h.b16 %v2697
    %v2960 = vunpack.c.l.b16 %v2698
    %v2961 = vunpack.c.h.b16 %v2698
    %v2962 = vunpack.c.l.b16 %v2699
    %v2963 = vunpack.c.h.b16 %v2699
    %v2964 = vunpack.c.l.b16 %v2700
    %v2965 = vunpack.c.h.b16 %v2700
    %v2966 = vunpack.c.l.b16 %v2701
    %v2967 = vunpack.c.h.b16 %v2701
    %v2968 = vunpack.c.l.b16 %v2702
    %v2969 = vunpack.c.h.b16 %v2702
    %v2970 = vunpack.c.l.b16 %v2703
    %v2971 = vunpack.c.h.b16 %v2703
    %v2972 = vunpack.c.l.b16 %v2704
    %v2973 = vunpack.c.h.b16 %v2704
    %v2974 = vunpack.c.l.b16 %v2705
    %v2975 = vunpack.c.h.b16 %v2705
    %v2976 = vunpack.c.l.b16 %v2706
    %v2977 = vunpack.c.h.b16 %v2706
    %v2978 = vunpack.c.l.b16 %v2707
    %v2979 = vunpack.c.h.b16 %v2707
    %v2980 = vunpack.c.l.b16 %v2708
    %v2981 = vunpack.c.h.b16 %v2708
    %v2982 = vunpack.c.l.b16 %v2709
    %v2983 = vunpack.c.h.b16 %v2709
    %v2984 = vunpack.c.l.b16 %v2710
    %v2985 = vunpack.c.h.b16 %v2710
    %v2986 = vunpack.c.l.b16 %v2711
    %v2987 = vunpack.c.h.b16 %v2711
    %v2988 = vunpack.c.l.b16 %v2712
    %v2989 = vunpack.c.h.b16 %v2712
    %v2990 = vunpack.c.l.b16 %v2713
    %v2991 = vunpack.c.h.b16 %v2713
    %v2992 = vunpack.c.l.b16 %v2714
    %v2993 = vunpack.c.h.b16 %v2714
    %v2994 = vunpack.c.l.b16 %v2715
    %v2995 = vunpack.c.h.b16 %v2715
    %v2996 = vunpack.c.l.b16 %v2716
    %v2997 = vunpack.c.h.b16 %v2716
    %v2998 = vunpack.c.l.b16 %v2717
    %v2999 = vunpack.c.h.b16 %v2717
    %v3000 = vunpack.c.l.b16 %v2718
    %v3001 = vunpack.c.h.b16 %v2718
    %v3002 = vunpack.c.l.b16 %v2719
    %v3003 = vunpack.c.h.b16 %v2719
    %v3004 = vunpack.c.l.b16 %v2720
    %v3005 = vunpack.c.h.b16 %v2720
    %v3006 = vunpack.c.l.b16 %v2721
    %v3007 = vunpack.c.h.b16 %v2721
    %v3008 = vunpack.c.l.b16 %v2722
    %v3009 = vunpack.c.h.b16 %v2722
    %v3010 = vunpack.c.l.b16 %v2723
    %v3011 = vunpack.c.h.b16 %v2723
    %v3012 = vunpack.c.l.b16 %v2724
    %v3013 = vunpack.c.h.b16 %v2724
    %v3014 = vunpack.c.l.b16 %v2725
    %v3015 = vunpack.c.h.b16 %v2725
    %v3016 = vunpack.c.l.b16 %v2726
    %v3017 = vunpack.c.h.b16 %v2726
    %v3018 = vunpack.c.l.b16 %v2727
    %v3019 = vunpack.c.h.b16 %v2727
    %v3020 = vunpack.c.l.b16 %v2728
    %v3021 = vunpack.c.h.b16 %v2728
    %v3022 = vunpack.c.l.b16 %v2729
    %v3023 = vunpack.c.h.b16 %v2729
    %v3024 = vunpack.c.l.b16 %v2730
    %v3025 = vunpack.c.h.b16 %v2730
    %v3026 = vunpack.c.l.b16 %v2731
    %v3027 = vunpack.c.h.b16 %v2731
    %v3028 = vunpack.c.l.b16 %v2732
    %v3029 = vunpack.c.h.b16 %v2732
    %v3030 = vunpack.c.l.b16 %v2733
    %v3031 = vunpack.c.h.b16 %v2733
    %v3032 = vunpack.c.l.b16 %v2734
    %v3033 = vunpack.c.h.b16 %v2734
    %v3034 = vunpack.c.l.b16 %v2735
    %v3035 = vunpack.c.h.b16 %v2735
    %v3036 = vunpack.c.l.b16 %v2736
    %v3037 = vunpack.c.h.b16 %v2736
    %v3038 = vunpack.c.l.b16 %v2737
    %v3039 = vunpack.c.h.b16 %v2737
    %v3040 = vunpack.c.l.b16 %v2738
    %v3041 = vunpack.c.h.b16 %v2738
    %v3042 = vunpack.c.l.b16 %v2739
    %v3043 = vunpack.c.h.b16 %v2739
    %v3044 = vunpack.c.l.b16 %v2740
    %v3045 = vunpack.c.h.b16 %v2740
    %v3046 = vunpack.c.l.b16 %v2741
    %v3047 = vunpack.c.h.b16 %v2741
    %v3048 = vunpack.c.l.b16 %v2742
    %v3049 = vunpack.c.h.b16 %v2742
    %v3050 = vunpack.c.l.b16 %v2743
    %v3051 = vunpack.c.h.b16 %v2743
    %v3052 = vunpack.c.l.b16 %v2744
    %v3053 = vunpack.c.h.b16 %v2744
    %v3054 = vunpack.c.l.b16 %v2745
    %v3055 = vunpack.c.h.b16 %v2745
    %v3056 = vunpack.c.l.b16 %v2746
    %v3057 = vunpack.c.h.b16 %v2746
    %v3058 = vunpack.c.l.b16 %v2747
    %v3059 = vunpack.c.h.b16 %v2747
    %v3060 = vunpack.c.l.b16 %v2748
    %v3061 = vunpack.c.h.b16 %v2748
    %v3062 = vunpack.c.l.b16 %v2749
    %v3063 = vunpack.c.h.b16 %v2749
    %v3064 = vunpack.c.l.b16 %v2750
    %v3065 = vunpack.c.h.b16 %v2750
    %v3066 = vunpack.c.l.b16 %v2751
    %v3067 = vunpack.c.h.b16 %v2751
    %v3068 = vunpack.c.l.b16 %v2752
    %v3069 = vunpack.c.h.b16 %v2752
    %v3070 = vunpack.c.l.b16 %v2753
    %v3071 = vunpack.c.h.b16 %v2753
    %v3072 = vunpack.c.l.b16 %v2754
    %v3073 = vunpack.c.h.b16 %v2754
    %v3074 = vunpack.c.l.b16 %v2755
    %v3075 = vunpack.c.h.b16 %v2755
    %v3076 = vunpack.c.l.b16 %v2756
    %v3077 = vunpack.c.h.b16 %v2756
    %v3078 = vunpack.c.l.b16 %v2757
    %v3079 = vunpack.c.h.b16 %v2757
    %v3080 = vunpack.c.l.b16 %v2758
    %v3081 = vunpack.c.h.b16 %v2758
    %v3082 = vunpack.c.l.b16 %v2759
    %v3083 = vunpack.c.h.b16 %v2759
    %v3084 = vunpack.c.l.b16 %v2760
    %v3085 = vunpack.c.h.b16 %v2760
    %v3086 = vunpack.c.l.b16 %v2761
    %v3087 = vunpack.c.h.b16 %v2761
    %v3088 = vunpack.c.l.b16 %v2762
    %v3089 = vunpack.c.h.b16 %v2762
    %v3090 = vunpack.c.l.b16 %v2763
    %v3091 = vunpack.c.h.b16 %v2763
    %v3092 = vunpack.c.l.b16 %v2764
    %v3093 = vunpack.c.h.b16 %v2764
    %v3094 = vunpack.c.l.b16 %v2765
    %v3095 = vunpack.c.h.b16 %v2765
    %v3096 = vunpack.c.l.b16 %v2766
    %v3097 = vunpack.c.h.b16 %v2766
    %v3098 = vunpack.c.l.b16 %v2767
    %v3099 = vunpack.c.h.b16 %v2767
    %v3100 = vunpack.c.l.b16 %v2768
    %v3101 = vunpack.c.h.b16 %v2768
    %v3102 = vunpack.c.l.b16 %v2769
    %v3103 = vunpack.c.h.b16 %v2769
    %v3104 = vunpack.c.l.b16 %v2770
    %v3105 = vunpack.c.h.b16 %v2770
    %v3106 = vunpack.c.l.b16 %v2771
    %v3107 = vunpack.c.h.b16 %v2771
    %v3108 = vunpack.c.l.b16 %v2772
    %v3109 = vunpack.c.h.b16 %v2772
    %v3110 = vunpack.c.l.b16 %v2773
    %v3111 = vunpack.c.h.b16 %v2773
    %v3112 = vunpack.c.l.b16 %v2774
    %v3113 = vunpack.c.h.b16 %v2774
    %v3114 = vunpack.c.l.b16 %v2775
    %v3115 = vunpack.c.h.b16 %v2775
    %v3116 = vunpack.c.l.b16 %v2776
    %v3117 = vunpack.c.h.b16 %v2776
    %v3118 = vunpack.c.l.b16 %v2777
    %v3119 = vunpack.c.h.b16 %v2777
    %v3120 = vunpack.c.l.b16 %v2778
    %v3121 = vunpack.c.h.b16 %v2778
    %v3122 = vunpack.c.l.b16 %v2779
    %v3123 = vunpack.c.h.b16 %v2779
    %v3124 = vunpack.c.l.b16 %v2780
    %v3125 = vunpack.c.h.b16 %v2780
    %v3126 = vunpack.c.l.b16 %v2781
    %v3127 = vunpack.c.h.b16 %v2781
    %v3128 = vunpack.c.l.b16 %v2782
    %v3129 = vunpack.c.h.b16 %v2782
    %v3130 = vunpack.c.l.b16 %v2783
    %v3131 = vunpack.c.h.b16 %v2783
    %v3132 = vunpack.c.l.b16 %v2784
    %v3133 = vunpack.c.h.b16 %v2784
    %v3134 = vunpack.c.l.b16 %v2785
    %v3135 = vunpack.c.h.b16 %v2785
    %v3136 = vunpack.c.l.b16 %v2786
    %v3137 = vunpack.c.h.b16 %v2786
    %v3138 = vunpack.c.l.b16 %v2787
    %v3139 = vunpack.c.h.b16 %v2787
    %v3140 = vunpack.c.l.b16 %v2788
    %v3141 = vunpack.c.h.b16 %v2788
    %v3142 = vunpack.c.l.b16 %v2789
    %v3143 = vunpack.c.h.b16 %v2789
    %v3144 = vunpack.c.l.b16 %v2790
    %v3145 = vunpack.c.h.b16 %v2790
    %v3146 = vunpack.c.l.b16 %v2791
    %v3147 = vunpack.c.h.b16 %v2791
    %v3148 = vunpack.c.l.b16 %v2792
    %v3149 = vunpack.c.h.b16 %v2792
    %v3150 = vunpack.c.l.b16 %v2793
    %v3151 = vunpack.c.h.b16 %v2793
    %v3152 = vunpack.c.l.b16 %v2794
    %v3153 = vunpack.c.h.b16 %v2794
    %v3154 = vunpack.c.l.b16 %v2795
    %v3155 = vunpack.c.h.b16 %v2795
    %v3156 = vunpack.c.l.b16 %v2796
    %v3157 = vunpack.c.h.b16 %v2796
    %v3158 = vunpack.c.l.b16 %v2797
    %v3159 = vunpack.c.h.b16 %v2797
    %v3160 = vunpack.c.l.b16 %v2798
    %v3161 = vunpack.c.h.b16 %v2798
    %v3162 = vunpack.c.l.b16 %v2799
    %v3163 = vunpack.c.h.b16 %v2799
    %v3164 = vunpack.c.l.b16 %v2800
    %v3165 = vunpack.c.h.b16 %v2800
    %v3166 = vunpack.c.l.b16 %v2801
    %v3167 = vunpack.c.h.b16 %v2801
    %v3168 = vunpack.c.l.b16 %v2802
    %v3169 = vunpack.c.h.b16 %v2802
    %v3170 = vunpack.c.l.b16 %v2803
    %v3171 = vunpack.c.h.b16 %v2803
    %v3172 = vunpack.c.l.b16 %v2804
    %v3173 = vunpack.c.h.b16 %v2804
    %v3174 = vunpack.c.l.b16 %v2805
    %v3175 = vunpack.c.h.b16 %v2805
    %v3176 = vunpack.c.l.b16 %v2806
    %v3177 = vunpack.c.h.b16 %v2806
    %v3178 = vunpack.c.l.b16 %v2807
    %v3179 = vunpack.c.h.b16 %v2807
    %v3180 = vunpack.c.l.b16 %v2808
    %v3181 = vunpack.c.h.b16 %v2808
    %v3182 = vunpack.c.l.b16 %v2809
    %v3183 = vunpack.c.h.b16 %v2809
    %v3184 = vunpack.c.l.b16 %v2810
    %v3185 = vunpack.c.h.b16 %v2810
    %v3186 = vunpack.c.l.b16 %v2811
    %v3187 = vunpack.c.h.b16 %v2811
    %v3188 = vunpack.c.l.b16 %v2812
    %v3189 = vunpack.c.h.b16 %v2812
    %v3190 = vunpack.c.l.b16 %v2813
    %v3191 = vunpack.c.h.b16 %v2813
    %v3192 = vunpack.c.l.b16 %v2814
    %v3193 = vunpack.c.h.b16 %v2814
    %v3194 = vunpack.c.l.b16 %v2815
    %v3195 = vunpack.c.h.b16 %v2815
    %v3196 = vunpack.c.l.b16 %v2816
    %v3197 = vunpack.c.h.b16 %v2816
    %v3198 = vunpack.c.l.b16 %v2817
    %v3199 = vunpack.c.h.b16 %v2817
    %v3200 = vunpack.c.l.b16 %v2818
    %v3201 = vunpack.c.h.b16 %v2818
    %v3202 = vunpack.c.l.b16 %v2819
    %v3203 = vunpack.c.h.b16 %v2819
    %v3204 = vpack.c.b16 %v2952, %v2948
    %v3205 = vpack.c.b16 %v2953, %v2949
    %v3206 = vpack.c.b16 %v2954, %v2950
    %v3207 = vpack.c.b16 %v2955, %v2951
    %v3208 = vpack.c.b16 %v2960, %v2956
    %v3209 = vpack.c.b16 %v2961, %v2957
    %v3210 = vpack.c.b16 %v2962, %v2958
    %v3211 = vpack.c.b16 %v2963, %v2959
    %v3212 = vpack.c.b16 %v2968, %v2964
    %v3213 = vpack.c.b16 %v2969, %v2965
    %v3214 = vpack.c.b16 %v2970, %v2966
    %v3215 = vpack.c.b16 %v2971, %v2967
    %v3216 = vpack.c.b16 %v2976, %v2972
    %v3217 = vpack.c.b16 %v2977, %v2973
    %v3218 = vpack.c.b16 %v2978, %v2974
    %v3219 = vpack.c.b16 %v2979, %v2975
    %v3220 = vpack.c.b16 %v2984, %v2980
    %v3221 = vpack.c.b16 %v2985, %v2981
    %v3222 = vpack.c.b16 %v2986, %v2982
    %v3223 = vpack.c.b16 %v2987, %v2983
    %v3224 = vpack.c.b16 %v2992, %v2988
    %v3225 = vpack.c.b16 %v2993, %v2989
    %v3226 = vpack.c.b16 %v2994, %v2990
    %v3227 = vpack.c.b16 %v2995, %v2991
    %v3228 = vpack.c.b16 %v3000, %v2996
    %v3229 = vpack.c.b16 %v3001, %v2997
    %v3230 = vpack.c.b16 %v3002, %v2998
    %v3231 = vpack.c.b16 %v3003, %v2999
    %v3232 = vpack.c.b16 %v3008, %v3004
    %v3233 = vpack.c.b16 %v3009, %v3005
    %v3234 = vpack.c.b16 %v3010, %v3006
    %v3235 = vpack.c.b16 %v3011, %v3007
    %v3236 = vpack.c.b16 %v3016, %v3012
    %v3237 = vpack.c.b16 %v3017, %v3013
    %v3238 = vpack.c.b16 %v3018, %v3014
    %v3239 = vpack.c.b16 %v3019, %v3015
    %v3240 = vpack.c.b16 %v3024, %v3020
    %v3241 = vpack.c.b16 %v3025, %v3021
    %v3242 = vpack.c.b16 %v3026, %v3022
    %v3243 = vpack.c.b16 %v3027, %v3023
    %v3244 = vpack.c.b16 %v3032, %v3028
    %v3245 = vpack.c.b16 %v3033, %v3029
    %v3246 = vpack.c.b16 %v3034, %v3030
    %v3247 = vpack.c.b16 %v3035, %v3031
    %v3248 = vpack.c.b16 %v3040, %v3036
    %v3249 = vpack.c.b16 %v3041, %v3037
    %v3250 = vpack.c.b16 %v3042, %v3038
    %v3251 = vpack.c.b16 %v3043, %v3039
    %v3252 = vpack.c.b16 %v3048, %v3044
    %v3253 = vpack.c.b16 %v3049, %v3045
    %v3254 = vpack.c.b16 %v3050, %v3046
    %v3255 = vpack.c.b16 %v3051, %v3047
    %v3256 = vpack.c.b16 %v3056, %v3052
    %v3257 = vpack.c.b16 %v3057, %v3053
    %v3258 = vpack.c.b16 %v3058, %v3054
    %v3259 = vpack.c.b16 %v3059, %v3055
    %v3260 = vpack.c.b16 %v3064, %v3060
    %v3261 = vpack.c.b16 %v3065, %v3061
    %v3262 = vpack.c.b16 %v3066, %v3062
    %v3263 = vpack.c.b16 %v3067, %v3063
    %v3264 = vpack.c.b16 %v3072, %v3068
    %v3265 = vpack.c.b16 %v3073, %v3069
    %v3266 = vpack.c.b16 %v3074, %v3070
    %v3267 = vpack.c.b16 %v3075, %v3071
    %v3268 = vpack.c.b16 %v3080, %v3076
    %v3269 = vpack.c.b16 %v3081, %v3077
    %v3270 = vpack.c.b16 %v3082, %v3078
    %v3271 = vpack.c.b16 %v3083, %v3079
    %v3272 = vpack.c.b16 %v3088, %v3084
    %v3273 = vpack.c.b16 %v3089, %v3085
    %v3274 = vpack.c.b16 %v3090, %v3086
    %v3275 = vpack.c.b16 %v3091, %v3087
    %v3276 = vpack.c.b16 %v3096, %v3092
    %v3277 = vpack.c.b16 %v3097, %v3093
    %v3278 = vpack.c.b16 %v3098, %v3094
    %v3279 = vpack.c.b16 %v3099, %v3095
    %v3280 = vpack.c.b16 %v3104, %v3100
    %v3281 = vpack.c.b16 %v3105, %v3101
    %v3282 = vpack.c.b16 %v3106, %v3102
    %v3283 = vpack.c.b16 %v3107, %v3103
    %v3284 = vpack.c.b16 %v3112, %v3108
    %v3285 = vpack.c.b16 %v3113, %v3109
    %v3286 = vpack.c.b16 %v3114, %v3110
    %v3287 = vpack.c.b16 %v3115, %v3111
    %v3288 = vpack.c.b16 %v3120, %v3116
    %v3289 = vpack.c.b16 %v3121, %v3117
    %v3290 = vpack.c.b16 %v3122, %v3118
    %v3291 = vpack.c.b16 %v3123, %v3119
    %v3292 = vpack.c.b16 %v3128, %v3124
    %v3293 = vpack.c.b16 %v3129, %v3125
    %v3294 = vpack.c.b16 %v3130, %v3126
    %v3295 = vpack.c.b16 %v3131, %v3127
    %v3296 = vpack.c.b16 %v3136, %v3132
    %v3297 = vpack.c.b16 %v3137, %v3133
    %v3298 = vpack.c.b16 %v3138, %v3134
    %v3299 = vpack.c.b16 %v3139, %v3135
    %v3300 = vpack.c.b16 %v3144, %v3140
    %v3301 = vpack.c.b16 %v3145, %v3141
    %v3302 = vpack.c.b16 %v3146, %v3142
    %v3303 = vpack.c.b16 %v3147, %v3143
    %v3304 = vpack.c.b16 %v3152, %v3148
    %v3305 = vpack.c.b16 %v3153, %v3149
    %v3306 = vpack.c.b16 %v3154, %v3150
    %v3307 = vpack.c.b16 %v3155, %v3151
    %v3308 = vpack.c.b16 %v3160, %v3156
    %v3309 = vpack.c.b16 %v3161, %v3157
    %v3310 = vpack.c.b16 %v3162, %v3158
    %v3311 = vpack.c.b16 %v3163, %v3159
    %v3312 = vpack.c.b16 %v3168, %v3164
    %v3313 = vpack.c.b16 %v3169, %v3165
    %v3314 = vpack.c.b16 %v3170, %v3166
    %v3315 = vpack.c.b16 %v3171, %v3167
    %v3316 = vpack.c.b16 %v3176, %v3172
    %v3317 = vpack.c.b16 %v3177, %v3173
    %v3318 = vpack.c.b16 %v3178, %v3174
    %v3319 = vpack.c.b16 %v3179, %v3175
    %v3320 = vpack.c.b16 %v3184, %v3180
    %v3321 = vpack.c.b16 %v3185, %v3181
    %v3322 = vpack.c.b16 %v3186, %v3182
    %v3323 = vpack.c.b16 %v3187, %v3183
    %v3324 = vpack.c.b16 %v3192, %v3188
    %v3325 = vpack.c.b16 %v3193, %v3189
    %v3326 = vpack.c.b16 %v3194, %v3190
    %v3327 = vpack.c.b16 %v3195, %v3191
    %v3328 = vpack.c.b16 %v3200, %v3196
    %v3329 = vpack.c.b16 %v3201, %v3197
    %v3330 = vpack.c.b16 %v3202, %v3198
    %v3331 = vpack.c.b16 %v3203, %v3199
    %3460 = vmatpush.bf16.msra.mxu0 %v3232
    %3461 = vmatpush.bf16.msra.mxu0 %v3228
    %3462 = vmatpush.bf16.msra.mxu0 %v3224
    %3463 = vmatpush.bf16.msra.mxu0 %v3220
    %3464 = vmatpush.bf16.msra.mxu0 %v3216
    %3465 = vmatpush.bf16.msra.mxu0 %v3212
    %3466 = vmatpush.bf16.msra.mxu0 %v3208
    %3467 = vmatpush.bf16.msra.mxu0 %v3204
    %3468 = vmatmul.bf16.gmra.mxu0 %v2572
    %v3469 = vpop.f32.mrf.mxu0
    %v3470 = vadd.f32 0.0, %v3469
    %v3471 = vpop.f32.mrf.mxu0
    %v3472 = vadd.f32 0.0, %v3471
    %3473 = vmatmul.bf16.gmra.mxu0 %v2650
    %v3474 = vpop.f32.mrf.mxu0
    %v3475 = vadd.f32 0.0, %v3474
    %v3476 = vpop.f32.mrf.mxu0
    %v3477 = vadd.f32 0.0, %v3476
    %3478 = vdwg.mxu0
    %3479 = vmatpush.bf16.msra.mxu0 %v3264
    %3480 = vmatpush.bf16.msra.mxu0 %v3260
    %3481 = vmatpush.bf16.msra.mxu0 %v3256
    %3482 = vmatpush.bf16.msra.mxu0 %v3252
    %3483 = vmatpush.bf16.msra.mxu0 %v3248
    %3484 = vmatpush.bf16.msra.mxu0 %v3244
    %3485 = vmatpush.bf16.msra.mxu0 %v3240
    %3486 = vmatpush.bf16.msra.mxu0 %v3236
    %3487 = vmatmul.bf16.gmra.mxu0 %v2584
    %v3488 = vpop.f32.mrf.mxu0
    %v3489 = vadd.f32 %v3470, %v3488
    %v3490 = vpop.f32.mrf.mxu0
    %v3491 = vadd.f32 %v3472, %v3490
    %3492 = vmatmul.bf16.gmra.mxu0 %v2662
    %v3493 = vpop.f32.mrf.mxu0
    %v3494 = vadd.f32 %v3475, %v3493
    %v3495 = vpop.f32.mrf.mxu0
    %v3496 = vadd.f32 %v3477, %v3495
    %3497 = vdwg.mxu0
    %3498 = vmatpush.bf16.msra.mxu0 %v3296
    %3499 = vmatpush.bf16.msra.mxu0 %v3292
    %3500 = vmatpush.bf16.msra.mxu0 %v3288
    %3501 = vmatpush.bf16.msra.mxu0 %v3284
    %3502 = vmatpush.bf16.msra.mxu0 %v3280
    %3503 = vmatpush.bf16.msra.mxu0 %v3276
    %3504 = vmatpush.bf16.msra.mxu0 %v3272
    %3505 = vmatpush.bf16.msra.mxu0 %v3268
    %3506 = vmatmul.bf16.gmra.mxu0 %v2596
    %v3507 = vpop.f32.mrf.mxu0
    %v3508 = vadd.f32 %v3489, %v3507
    %v3509 = vpop.f32.mrf.mxu0
    %v3510 = vadd.f32 %v3491, %v3509
    %3511 = vmatmul.bf16.gmra.mxu0 %v2674
    %v3512 = vpop.f32.mrf.mxu0
    %v3513 = vadd.f32 %v3494, %v3512
    %v3514 = vpop.f32.mrf.mxu0
    %v3515 = vadd.f32 %v3496, %v3514
    %3516 = vdwg.mxu0
    %3517 = vmatpush.bf16.msra.mxu0 %v3328
    %3518 = vmatpush.bf16.msra.mxu0 %v3324
    %3519 = vmatpush.bf16.msra.mxu0 %v3320
    %3520 = vmatpush.bf16.msra.mxu0 %v3316
    %3521 = vmatpush.bf16.msra.mxu0 %v3312
    %3522 = vmatpush.bf16.msra.mxu0 %v3308
    %3523 = vmatpush.bf16.msra.mxu0 %v3304
    %3524 = vmatpush.bf16.msra.mxu0 %v3300
    %3525 = vmatmul.bf16.gmra.mxu0 %v2608
    %v3526 = vpop.f32.mrf.mxu0
    %v3527 = vadd.f32 %v3508, %v3526
    %v3528 = vpop.f32.mrf.mxu0
    %v3529 = vadd.f32 %v3510, %v3528
    %3530 = vmatmul.bf16.gmra.mxu0 %v2686
    %v3531 = vpop.f32.mrf.mxu0
    %v3532 = vadd.f32 %v3513, %v3531
    %v3533 = vpop.f32.mrf.mxu0
    %v3534 = vadd.f32 %v3515, %v3533
    %3535 = vdwg.mxu0
    %3536 = vmatpush.bf16.msra.mxu0 %v3233
    %3537 = vmatpush.bf16.msra.mxu0 %v3229
    %3538 = vmatpush.bf16.msra.mxu0 %v3225
    %3539 = vmatpush.bf16.msra.mxu0 %v3221
    %3540 = vmatpush.bf16.msra.mxu0 %v3217
    %3541 = vmatpush.bf16.msra.mxu0 %v3213
    %3542 = vmatpush.bf16.msra.mxu0 %v3209
    %3543 = vmatpush.bf16.msra.mxu0 %v3205
    %3544 = vmatmul.bf16.gmra.mxu0 %v2572
    %v3545 = vpop.f32.mrf.mxu0
    %v3546 = vadd.f32 0.0, %v3545
    %v3547 = vpop.f32.mrf.mxu0
    %v3548 = vadd.f32 0.0, %v3547
    %3549 = vmatmul.bf16.gmra.mxu0 %v2650
    %v3550 = vpop.f32.mrf.mxu0
    %v3551 = vadd.f32 0.0, %v3550
    %v3552 = vpop.f32.mrf.mxu0
    %v3553 = vadd.f32 0.0, %v3552
    %3554 = vdwg.mxu0
    %3555 = vmatpush.bf16.msra.mxu0 %v3265
    %3556 = vmatpush.bf16.msra.mxu0 %v3261
    %3557 = vmatpush.bf16.msra.mxu0 %v3257
    %3558 = vmatpush.bf16.msra.mxu0 %v3253
    %3559 = vmatpush.bf16.msra.mxu0 %v3249
    %3560 = vmatpush.bf16.msra.mxu0 %v3245
    %3561 = vmatpush.bf16.msra.mxu0 %v3241
    %3562 = vmatpush.bf16.msra.mxu0 %v3237
    %3563 = vmatmul.bf16.gmra.mxu0 %v2584
    %v3564 = vpop.f32.mrf.mxu0
    %v3565 = vadd.f32 %v3546, %v3564
    %v3566 = vpop.f32.mrf.mxu0
    %v3567 = vadd.f32 %v3548, %v3566
    %3568 = vmatmul.bf16.gmra.mxu0 %v2662
    %v3569 = vpop.f32.mrf.mxu0
    %v3570 = vadd.f32 %v3551, %v3569
    %v3571 = vpop.f32.mrf.mxu0
    %v3572 = vadd.f32 %v3553, %v3571
    %3573 = vdwg.mxu0
    %3574 = vmatpush.bf16.msra.mxu0 %v3297
    %3575 = vmatpush.bf16.msra.mxu0 %v3293
    %3576 = vmatpush.bf16.msra.mxu0 %v3289
    %3577 = vmatpush.bf16.msra.mxu0 %v3285
    %3578 = vmatpush.bf16.msra.mxu0 %v3281
    %3579 = vmatpush.bf16.msra.mxu0 %v3277
    %3580 = vmatpush.bf16.msra.mxu0 %v3273
    %3581 = vmatpush.bf16.msra.mxu0 %v3269
    %3582 = vmatmul.bf16.gmra.mxu0 %v2596
    %v3583 = vpop.f32.mrf.mxu0
    %v3584 = vadd.f32 %v3565, %v3583
    %v3585 = vpop.f32.mrf.mxu0
    %v3586 = vadd.f32 %v3567, %v3585
    %3587 = vmatmul.bf16.gmra.mxu0 %v2674
    %v3588 = vpop.f32.mrf.mxu0
    %v3589 = vadd.f32 %v3570, %v3588
    %v3590 = vpop.f32.mrf.mxu0
    %v3591 = vadd.f32 %v3572, %v3590
    %3592 = vdwg.mxu0
    %3593 = vmatpush.bf16.msra.mxu0 %v3329
    %3594 = vmatpush.bf16.msra.mxu0 %v3325
    %3595 = vmatpush.bf16.msra.mxu0 %v3321
    %3596 = vmatpush.bf16.msra.mxu0 %v3317
    %3597 = vmatpush.bf16.msra.mxu0 %v3313
    %3598 = vmatpush.bf16.msra.mxu0 %v3309
    %3599 = vmatpush.bf16.msra.mxu0 %v3305
    %3600 = vmatpush.bf16.msra.mxu0 %v3301
    %3601 = vmatmul.bf16.gmra.mxu0 %v2608
    %v3602 = vpop.f32.mrf.mxu0
    %v3603 = vadd.f32 %v3584, %v3602
    %v3604 = vpop.f32.mrf.mxu0
    %v3605 = vadd.f32 %v3586, %v3604
    %3606 = vmatmul.bf16.gmra.mxu0 %v2686
    %v3607 = vpop.f32.mrf.mxu0
    %v3608 = vadd.f32 %v3589, %v3607
    %v3609 = vpop.f32.mrf.mxu0
    %v3610 = vadd.f32 %v3591, %v3609
    %3611 = vdwg.mxu0
    %3612 = vmatpush.bf16.msra.mxu0 %v3234
    %3613 = vmatpush.bf16.msra.mxu0 %v3230
    %3614 = vmatpush.bf16.msra.mxu0 %v3226
    %3615 = vmatpush.bf16.msra.mxu0 %v3222
    %3616 = vmatpush.bf16.msra.mxu0 %v3218
    %3617 = vmatpush.bf16.msra.mxu0 %v3214
    %3618 = vmatpush.bf16.msra.mxu0 %v3210
    %3619 = vmatpush.bf16.msra.mxu0 %v3206
    %3620 = vmatmul.bf16.gmra.mxu0 %v2572
    %v3621 = vpop.f32.mrf.mxu0
    %v3622 = vadd.f32 0.0, %v3621
    %v3623 = vpop.f32.mrf.mxu0
    %v3624 = vadd.f32 0.0, %v3623
    %3625 = vmatmul.bf16.gmra.mxu0 %v2650
    %v3626 = vpop.f32.mrf.mxu0
    %v3627 = vadd.f32 0.0, %v3626
    %v3628 = vpop.f32.mrf.mxu0
    %v3629 = vadd.f32 0.0, %v3628
    %3630 = vdwg.mxu0
    %3631 = vmatpush.bf16.msra.mxu0 %v3266
    %3632 = vmatpush.bf16.msra.mxu0 %v3262
    %3633 = vmatpush.bf16.msra.mxu0 %v3258
    %3634 = vmatpush.bf16.msra.mxu0 %v3254
    %3635 = vmatpush.bf16.msra.mxu0 %v3250
    %3636 = vmatpush.bf16.msra.mxu0 %v3246
    %3637 = vmatpush.bf16.msra.mxu0 %v3242
    %3638 = vmatpush.bf16.msra.mxu0 %v3238
    %3639 = vmatmul.bf16.gmra.mxu0 %v2584
    %v3640 = vpop.f32.mrf.mxu0
    %v3641 = vadd.f32 %v3622, %v3640
    %v3642 = vpop.f32.mrf.mxu0
    %v3643 = vadd.f32 %v3624, %v3642
    %3644 = vmatmul.bf16.gmra.mxu0 %v2662
    %v3645 = vpop.f32.mrf.mxu0
    %v3646 = vadd.f32 %v3627, %v3645
    %v3647 = vpop.f32.mrf.mxu0
    %v3648 = vadd.f32 %v3629, %v3647
    %3649 = vdwg.mxu0
    %3650 = vmatpush.bf16.msra.mxu0 %v3298
    %3651 = vmatpush.bf16.msra.mxu0 %v3294
    %3652 = vmatpush.bf16.msra.mxu0 %v3290
    %3653 = vmatpush.bf16.msra.mxu0 %v3286
    %3654 = vmatpush.bf16.msra.mxu0 %v3282
    %3655 = vmatpush.bf16.msra.mxu0 %v3278
    %3656 = vmatpush.bf16.msra.mxu0 %v3274
    %3657 = vmatpush.bf16.msra.mxu0 %v3270
    %3658 = vmatmul.bf16.gmra.mxu0 %v2596
    %v3659 = vpop.f32.mrf.mxu0
    %v3660 = vadd.f32 %v3641, %v3659
    %v3661 = vpop.f32.mrf.mxu0
    %v3662 = vadd.f32 %v3643, %v3661
    %3663 = vmatmul.bf16.gmra.mxu0 %v2674
    %v3664 = vpop.f32.mrf.mxu0
    %v3665 = vadd.f32 %v3646, %v3664
    %v3666 = vpop.f32.mrf.mxu0
    %v3667 = vadd.f32 %v3648, %v3666
    %3668 = vdwg.mxu0
    %3669 = vmatpush.bf16.msra.mxu0 %v3330
    %3670 = vmatpush.bf16.msra.mxu0 %v3326
    %3671 = vmatpush.bf16.msra.mxu0 %v3322
    %3672 = vmatpush.bf16.msra.mxu0 %v3318
    %3673 = vmatpush.bf16.msra.mxu0 %v3314
    %3674 = vmatpush.bf16.msra.mxu0 %v3310
    %3675 = vmatpush.bf16.msra.mxu0 %v3306
    %3676 = vmatpush.bf16.msra.mxu0 %v3302
    %3677 = vmatmul.bf16.gmra.mxu0 %v2608
    %v3678 = vpop.f32.mrf.mxu0
    %v3679 = vadd.f32 %v3660, %v3678
    %v3680 = vpop.f32.mrf.mxu0
    %v3681 = vadd.f32 %v3662, %v3680
    %3682 = vmatmul.bf16.gmra.mxu0 %v2686
    %v3683 = vpop.f32.mrf.mxu0
    %v3684 = vadd.f32 %v3665, %v3683
    %v3685 = vpop.f32.mrf.mxu0
    %v3686 = vadd.f32 %v3667, %v3685
    %3687 = vdwg.mxu0
    %3688 = vmatpush.bf16.msra.mxu0 %v3235
    %3689 = vmatpush.bf16.msra.mxu0 %v3231
    %3690 = vmatpush.bf16.msra.mxu0 %v3227
    %3691 = vmatpush.bf16.msra.mxu0 %v3223
    %3692 = vmatpush.bf16.msra.mxu0 %v3219
    %3693 = vmatpush.bf16.msra.mxu0 %v3215
    %3694 = vmatpush.bf16.msra.mxu0 %v3211
    %3695 = vmatpush.bf16.msra.mxu0 %v3207
    %3696 = vmatmul.bf16.gmra.mxu0 %v2572
    %v3697 = vpop.f32.mrf.mxu0
    %v3698 = vadd.f32 0.0, %v3697
    %v3699 = vpop.f32.mrf.mxu0
    %v3700 = vadd.f32 0.0, %v3699
    %3701 = vmatmul.bf16.gmra.mxu0 %v2650
    %v3702 = vpop.f32.mrf.mxu0
    %v3703 = vadd.f32 0.0, %v3702
    %v3704 = vpop.f32.mrf.mxu0
    %v3705 = vadd.f32 0.0, %v3704
    %3706 = vdwg.mxu0
    %3707 = vmatpush.bf16.msra.mxu0 %v3267
    %3708 = vmatpush.bf16.msra.mxu0 %v3263
    %3709 = vmatpush.bf16.msra.mxu0 %v3259
    %3710 = vmatpush.bf16.msra.mxu0 %v3255
    %3711 = vmatpush.bf16.msra.mxu0 %v3251
    %3712 = vmatpush.bf16.msra.mxu0 %v3247
    %3713 = vmatpush.bf16.msra.mxu0 %v3243
    %3714 = vmatpush.bf16.msra.mxu0 %v3239
    %3715 = vmatmul.bf16.gmra.mxu0 %v2584
    %v3716 = vpop.f32.mrf.mxu0
    %v3717 = vadd.f32 %v3698, %v3716
    %v3718 = vpop.f32.mrf.mxu0
    %v3719 = vadd.f32 %v3700, %v3718
    %3720 = vmatmul.bf16.gmra.mxu0 %v2662
    %v3721 = vpop.f32.mrf.mxu0
    %v3722 = vadd.f32 %v3703, %v3721
    %v3723 = vpop.f32.mrf.mxu0
    %v3724 = vadd.f32 %v3705, %v3723
    %3725 = vdwg.mxu0
    %3726 = vmatpush.bf16.msra.mxu0 %v3299
    %3727 = vmatpush.bf16.msra.mxu0 %v3295
    %3728 = vmatpush.bf16.msra.mxu0 %v3291
    %3729 = vmatpush.bf16.msra.mxu0 %v3287
    %3730 = vmatpush.bf16.msra.mxu0 %v3283
    %3731 = vmatpush.bf16.msra.mxu0 %v3279
    %3732 = vmatpush.bf16.msra.mxu0 %v3275
    %3733 = vmatpush.bf16.msra.mxu0 %v3271
    %3734 = vmatmul.bf16.gmra.mxu0 %v2596
    %v3735 = vpop.f32.mrf.mxu0
    %v3736 = vadd.f32 %v3717, %v3735
    %v3737 = vpop.f32.mrf.mxu0
    %v3738 = vadd.f32 %v3719, %v3737
    %3739 = vmatmul.bf16.gmra.mxu0 %v2674
    %v3740 = vpop.f32.mrf.mxu0
    %v3741 = vadd.f32 %v3722, %v3740
    %v3742 = vpop.f32.mrf.mxu0
    %v3743 = vadd.f32 %v3724, %v3742
    %3744 = vdwg.mxu0
    %3745 = vmatpush.bf16.msra.mxu0 %v3331
    %3746 = vmatpush.bf16.msra.mxu0 %v3327
    %3747 = vmatpush.bf16.msra.mxu0 %v3323
    %3748 = vmatpush.bf16.msra.mxu0 %v3319
    %3749 = vmatpush.bf16.msra.mxu0 %v3315
    %3750 = vmatpush.bf16.msra.mxu0 %v3311
    %3751 = vmatpush.bf16.msra.mxu0 %v3307
    %3752 = vmatpush.bf16.msra.mxu0 %v3303
    %3753 = vmatmul.bf16.gmra.mxu0 %v2608
    %v3754 = vpop.f32.mrf.mxu0
    %v3755 = vadd.f32 %v3736, %v3754
    %v3756 = vpop.f32.mrf.mxu0
    %v3757 = vadd.f32 %v3738, %v3756
    %3758 = vmatmul.bf16.gmra.mxu0 %v2686
    %v3759 = vpop.f32.mrf.mxu0
    %v3760 = vadd.f32 %v3741, %v3759
    %v3761 = vpop.f32.mrf.mxu0
    %v3762 = vadd.f32 %v3743, %v3761
    %3763 = vdwg.mxu0
    %v3764 = vadd.f32 %v2285, %v3527
    %v3765 = vadd.f32 %v2361, %v3603
    %v3766 = vadd.f32 %v2437, %v3679
    %v3767 = vadd.f32 %v2513, %v3755
    %v3768 = vadd.f32 %v2287, %v3529
    %v3769 = vadd.f32 %v2363, %v3605
    %v3770 = vadd.f32 %v2439, %v3681
    %v3771 = vadd.f32 %v2515, %v3757
    %v3772 = vadd.f32 %v2290, %v3532
    %v3773 = vadd.f32 %v2366, %v3608
    %v3774 = vadd.f32 %v2442, %v3684
    %v3775 = vadd.f32 %v2518, %v3760
    %v3776 = vadd.f32 %v2292, %v3534
    %v3777 = vadd.f32 %v2368, %v3610
    %v3778 = vadd.f32 %v2444, %v3686
    %v3779 = vadd.f32 %v2520, %v3762
    %v3780 = vadd.f32 %v3764, %v3768
    %v3781 = vadd.f32 %v3780, %v3772
    %v3782 = vadd.f32 %v3781, %v3776
    %v3783 = vrot.slane %v3782, 4
    %v3784 = vadd.f32 %v3782, %v3783
    %v3785 = vrot.slane %v3784, 2
    %v3786 = vadd.f32 %v3784, %v3785
    %v3787 = vrot.slane %v3786, 1
    %v3788 = vadd.f32 %v3786, %v3787
    %v3789 = vadd.f32 %v3765, %v3769
    %v3790 = vadd.f32 %v3789, %v3773
    %v3791 = vadd.f32 %v3790, %v3777
    %v3792 = vrot.slane %v3791, 4
    %v3793 = vadd.f32 %v3791, %v3792
    %v3794 = vrot.slane %v3793, 2
    %v3795 = vadd.f32 %v3793, %v3794
    %v3796 = vrot.slane %v3795, 1
    %v3797 = vadd.f32 %v3795, %v3796
    %v3798 = vadd.f32 %v3766, %v3770
    %v3799 = vadd.f32 %v3798, %v3774
    %v3800 = vadd.f32 %v3799, %v3778
    %v3801 = vrot.slane %v3800, 4
    %v3802 = vadd.f32 %v3800, %v3801
    %v3803 = vrot.slane %v3802, 2
    %v3804 = vadd.f32 %v3802, %v3803
    %v3805 = vrot.slane %v3804, 1
    %v3806 = vadd.f32 %v3804, %v3805
    %v3807 = vadd.f32 %v3767, %v3771
    %v3808 = vadd.f32 %v3807, %v3775
    %v3809 = vadd.f32 %v3808, %v3779
    %v3810 = vrot.slane %v3809, 4
    %v3811 = vadd.f32 %v3809, %v3810
    %v3812 = vrot.slane %v3811, 2
    %v3813 = vadd.f32 %v3811, %v3812
    %v3814 = vrot.slane %v3813, 1
    %v3815 = vadd.f32 %v3813, %v3814
    %v3816 = vadd.f32 %v3788, %v3806
    %v3817 = vadd.f32 %v3797, %v3815
    %v3818 = vadd.f32 %v3816, %v3817
    %3820 = vrot.lane.b32.xlu0 %v3818, 64
    %v3821 = vpop.permute.xlu0 %3820
    %v3823 = vadd.f32 %v3818, %v3821
    %3825 = vrot.lane.b32.xlu0 %v3823, 96
    %v3826 = vpop.permute.xlu0 %3825
    %v3828 = vadd.f32 %v3823, %v3826
    %v3829 = vmul.f32 %v3764, %v3764
    %v3830 = vmul.f32 %v3765, %v3765
    %v3831 = vmul.f32 %v3766, %v3766
    %v3832 = vmul.f32 %v3767, %v3767
    %v3833 = vmul.f32 %v3768, %v3768
    %v3834 = vmul.f32 %v3769, %v3769
    %v3835 = vmul.f32 %v3770, %v3770
    %v3836 = vmul.f32 %v3771, %v3771
    %v3837 = vmul.f32 %v3772, %v3772
    %v3838 = vmul.f32 %v3773, %v3773
    %v3839 = vmul.f32 %v3774, %v3774
    %v3840 = vmul.f32 %v3775, %v3775
    %v3841 = vmul.f32 %v3776, %v3776
    %v3842 = vmul.f32 %v3777, %v3777
    %v3843 = vmul.f32 %v3778, %v3778
    %v3844 = vmul.f32 %v3779, %v3779
    %v3845 = vadd.f32 %v3829, %v3833
    %v3846 = vadd.f32 %v3845, %v3837
    %v3847 = vadd.f32 %v3846, %v3841
    %v3848 = vrot.slane %v3847, 4
    %v3849 = vadd.f32 %v3847, %v3848
    %v3850 = vrot.slane %v3849, 2
    %v3851 = vadd.f32 %v3849, %v3850
    %v3852 = vrot.slane %v3851, 1
    %v3853 = vadd.f32 %v3851, %v3852
    %v3854 = vadd.f32 %v3830, %v3834
    %v3855 = vadd.f32 %v3854, %v3838
    %v3856 = vadd.f32 %v3855, %v3842
    %v3857 = vrot.slane %v3856, 4
    %v3858 = vadd.f32 %v3856, %v3857
    %v3859 = vrot.slane %v3858, 2
    %v3860 = vadd.f32 %v3858, %v3859
    %v3861 = vrot.slane %v3860, 1
    %v3862 = vadd.f32 %v3860, %v3861
    %v3863 = vadd.f32 %v3831, %v3835
    %v3864 = vadd.f32 %v3863, %v3839
    %v3865 = vadd.f32 %v3864, %v3843
    %v3866 = vrot.slane %v3865, 4
    %v3867 = vadd.f32 %v3865, %v3866
    %v3868 = vrot.slane %v3867, 2
    %v3869 = vadd.f32 %v3867, %v3868
    %v3870 = vrot.slane %v3869, 1
    %v3871 = vadd.f32 %v3869, %v3870
    %v3872 = vadd.f32 %v3832, %v3836
    %v3873 = vadd.f32 %v3872, %v3840
    %v3874 = vadd.f32 %v3873, %v3844
    %v3875 = vrot.slane %v3874, 4
    %v3876 = vadd.f32 %v3874, %v3875
    %v3877 = vrot.slane %v3876, 2
    %v3878 = vadd.f32 %v3876, %v3877
    %v3879 = vrot.slane %v3878, 1
    %v3880 = vadd.f32 %v3878, %v3879
    %v3881 = vadd.f32 %v3853, %v3871
    %v3882 = vadd.f32 %v3862, %v3880
    %v3883 = vadd.f32 %v3881, %v3882
    %3885 = vrot.lane.b32.xlu0 %v3883, 64
    %v3886 = vpop.permute.xlu0 %3885
    %v3888 = vadd.f32 %v3883, %v3886
    %3890 = vrot.lane.b32.xlu0 %v3888, 96
    %v3891 = vpop.permute.xlu0 %3890
    %v3893 = vadd.f32 %v3888, %v3891
    %v3894 = vmul.f32 %v3828, 0.001953125
    %v3895 = vmul.f32 %v3893, 0.001953125
    %v3896 = vmul.f32 %v3894, %v3894
    %v3897 = vsub.f32 %v3895, %v3896
    %v3898 = vmax.f32 %v3897, 0.0
    %v3899 = vld [vmem:[#allocation7] sm:$0x1]
    %v3900 = vadd.f32 %v3898, 1e-05
    %v3901 = vrsqrt.pop %v3900
    %v3902 = vmul.f32 %v3901, %v3900
    %v3903 = vmul.f32 %v3902, %v3901
    %v3904 = vmul.f32 0.5, %v3903
    %v3905 = vsub.f32 1.5, %v3904
    %v3906 = vmul.f32 %v3901, %v3905
    %vm3907 = vweird.f32 %v3900
    %vm3908 = vweird.f32 %v3901
    %vm3909 = vmor %vm3907, %vm3908
    %v3910 = vsel %vm3909, %v3901, %v3906
    %v3911 = vmul.f32 %v3899, %v3910
    %v3912 = vld [vmem:[#allocation9] sm:$0x1]
    %v3913 = vmul.f32 %v3894, %v3911
    %v3914 = vsub.f32 %v3912, %v3913
    %v3916 = vperm.slane %v3911, 0
    %3917 = vrot.lane.b32.xlu0 %v3916, 32
    %v3918 = vpop.permute.xlu0 %3917
    %vm3920 = vcmask 261120
    %v3921 = vsel %vm3920, %v3911, %v3918
    %3923 = vrot.lane.b32.xlu0 %v3921, 64
    %v3924 = vpop.permute.xlu0 %3923
    %vm3926 = vcmask 523264
    %v3927 = vsel %vm3926, %v3921, %v3924
    %v3928 = vperm.slane %v3927, 0
    %v3929 = vmul.f32 %v3764, %v3928
    %v3930 = vmul.f32 %v3765, %v3928
    %v3931 = vmul.f32 %v3766, %v3928
    %v3932 = vmul.f32 %v3767, %v3928
    %v3933 = vmul.f32 %v3768, %v3928
    %v3934 = vmul.f32 %v3769, %v3928
    %v3935 = vmul.f32 %v3770, %v3928
    %v3936 = vmul.f32 %v3771, %v3928
    %v3937 = vmul.f32 %v3772, %v3928
    %v3938 = vmul.f32 %v3773, %v3928
    %v3939 = vmul.f32 %v3774, %v3928
    %v3940 = vmul.f32 %v3775, %v3928
    %v3941 = vmul.f32 %v3776, %v3928
    %v3942 = vmul.f32 %v3777, %v3928
    %v3943 = vmul.f32 %v3778, %v3928
    %v3944 = vmul.f32 %v3779, %v3928
    %v3946 = vperm.slane %v3914, 0
    %3947 = vrot.lane.b32.xlu0 %v3946, 32
    %v3948 = vpop.permute.xlu0 %3947
    %v3950 = vsel %vm3920, %v3914, %v3948
    %3952 = vrot.lane.b32.xlu0 %v3950, 64
    %v3953 = vpop.permute.xlu0 %3952
    %v3955 = vsel %vm3926, %v3950, %v3953
    %v3956 = vperm.slane %v3955, 0
    %v3957 = vadd.f32 %v3929, %v3956
    %v3958 = vadd.f32 %v3930, %v3956
    %v3959 = vadd.f32 %v3931, %v3956
    %v3960 = vadd.f32 %v3932, %v3956
    %v3961 = vadd.f32 %v3933, %v3956
    %v3962 = vadd.f32 %v3934, %v3956
    %v3963 = vadd.f32 %v3935, %v3956
    %v3964 = vadd.f32 %v3936, %v3956
    %v3965 = vadd.f32 %v3937, %v3956
    %v3966 = vadd.f32 %v3938, %v3956
    %v3967 = vadd.f32 %v3939, %v3956
    %v3968 = vadd.f32 %v3940, %v3956
    %v3969 = vadd.f32 %v3941, %v3956
    %v3970 = vadd.f32 %v3942, %v3956
    %v3971 = vadd.f32 %v3943, %v3956
    %v3972 = vadd.f32 %v3944, %v3956
    %v3973 = vmax.f32 %v3957, 0.0
    %v3974 = vmax.f32 %v3958, 0.0
    %v3975 = vmax.f32 %v3959, 0.0
    %v3976 = vmax.f32 %v3960, 0.0
    %v3977 = vmax.f32 %v3961, 0.0
    %v3978 = vmax.f32 %v3962, 0.0
    %v3979 = vmax.f32 %v3963, 0.0
    %v3980 = vmax.f32 %v3964, 0.0
    %v3981 = vmax.f32 %v3965, 0.0
    %v3982 = vmax.f32 %v3966, 0.0
    %v3983 = vmax.f32 %v3967, 0.0
    %v3984 = vmax.f32 %v3968, 0.0
    %v3985 = vmax.f32 %v3969, 0.0
    %v3986 = vmax.f32 %v3970, 0.0
    %v3987 = vmax.f32 %v3971, 0.0
    %v3988 = vmax.f32 %v3972, 0.0
    %v3989 = vpack.c.bf16 %v3974, %v3973
    %v3990 = vpack.c.bf16 %v3976, %v3975
    %v3991 = vpack.c.bf16 %v3978, %v3977
    %v3992 = vpack.c.bf16 %v3980, %v3979
    %3993 = vst [vmem:[#allocation2 + $0x20] sm:$0xff] %v3989
    %3994 = vst [vmem:[#allocation2 + $0x28] sm:$0xff] %v3990
    %3995 = vst [vmem:[#allocation2 + $0x30] sm:$0xff] %v3991
    %3996 = vst [vmem:[#allocation2 + $0x38] sm:$0xff] %v3992
    %v3997 = vpack.c.bf16 %v3982, %v3981
    %v3998 = vpack.c.bf16 %v3984, %v3983
    %v3999 = vpack.c.bf16 %v3986, %v3985
    %v4000 = vpack.c.bf16 %v3988, %v3987
    %4001 = vst [vmem:[#allocation2 + $0x60] sm:$0xff] %v3997
    %4002 = vst [vmem:[#allocation2 + $0x68] sm:$0xff] %v3998
    %4003 = vst [vmem:[#allocation2 + $0x70] sm:$0xff] %v3999
    %4004 = vst [vmem:[#allocation2 + $0x78] sm:$0xff] %v4000
    %s4005 = smul.u32 4, 3
    %s4006 = smul.u32 %s4005, 64
    %s4007 = smul.u32 %s4006, 4
    %s4008 = sshll.u32 %s4007, 4
    %4009 = dma.done [#allocation4], %s4008
    %v4010 = vld [vmem:[#allocation2 + $0x10] sm:$0x88]
    %v4011 = vld [vmem:[#allocation2 + $0x18] sm:$0x88]
    %v4012 = vld [vmem:[#allocation2 + $0x20] sm:$0xff]
    %v4013 = vld [vmem:[#allocation2 + $0x28] sm:$0xff]
    %v4014 = vld [vmem:[#allocation2 + $0x30] sm:$0xff]
    %v4015 = vld [vmem:[#allocation2 + $0x38] sm:$0xff]
    %v4016 = vld [vmem:[#allocation2 + $0x50] sm:$0x88]
    %v4017 = vld [vmem:[#allocation2 + $0x58] sm:$0x88]
    %v4018 = vld [vmem:[#allocation2 + $0x60] sm:$0xff]
    %v4019 = vld [vmem:[#allocation2 + $0x68] sm:$0xff]
    %v4020 = vld [vmem:[#allocation2 + $0x70] sm:$0xff]
    %v4021 = vld [vmem:[#allocation2 + $0x78] sm:$0xff]
    %v4028 = vunpack.c.l.b16 %v4010
    %v4029 = vunpack.c.h.b16 %v4010
    %v4030 = vunpack.c.l.b16 %v4011
    %v4031 = vunpack.c.h.b16 %v4011
    %v4032 = vunpack.c.l.b16 %v4012
    %v4033 = vunpack.c.h.b16 %v4012
    %v4034 = vunpack.c.l.b16 %v4013
    %v4035 = vunpack.c.h.b16 %v4013
    %v4036 = vunpack.c.l.b16 %v4014
    %v4037 = vunpack.c.h.b16 %v4014
    %v4038 = vunpack.c.l.b16 %v4015
    %v4039 = vunpack.c.h.b16 %v4015
    %v4040 = vpack.c.b16 %v4032, %v4028
    %v4041 = vpack.c.b16 %v4033, %v4029
    %v4042 = vpack.c.b16 %v4034, %v4030
    %v4043 = vpack.c.b16 %v4035, %v4031
    %v4044 = vpack.c.b16 %v4036, %v4036
    %v4045 = vpack.c.b16 %v4037, %v4037
    %v4046 = vpack.c.b16 %v4038, %v4038
    %v4047 = vpack.c.b16 %v4039, %v4039
    %v4049 = vshrl.u32 %v4040, 16
    %v4051 = vrot.slane %v4049, 3
    %v4052 = vshll.u32 %v4040, 16
    %v4054 = vrot.slane %v4052, 4
    %v4055 = vor.u32 %v4051, %v4054
    %v4057 = vshrl.u32 %v4044, 16
    %v4059 = vrot.slane %v4057, 3
    %v4060 = vshll.u32 %v4044, 16
    %v4062 = vrot.slane %v4060, 4
    %v4063 = vor.u32 %v4059, %v4062
    %v4064 = vsel %vm190, %v4055, %v4063
    %v4066 = vshrl.u32 %v4041, 16
    %v4068 = vrot.slane %v4066, 3
    %v4069 = vshll.u32 %v4041, 16
    %v4071 = vrot.slane %v4069, 4
    %v4072 = vor.u32 %v4068, %v4071
    %v4074 = vshrl.u32 %v4045, 16
    %v4076 = vrot.slane %v4074, 3
    %v4077 = vshll.u32 %v4045, 16
    %v4079 = vrot.slane %v4077, 4
    %v4080 = vor.u32 %v4076, %v4079
    %v4081 = vsel %vm190, %v4072, %v4080
    %v4083 = vshrl.u32 %v4042, 16
    %v4085 = vrot.slane %v4083, 3
    %v4086 = vshll.u32 %v4042, 16
    %v4088 = vrot.slane %v4086, 4
    %v4089 = vor.u32 %v4085, %v4088
    %v4091 = vshrl.u32 %v4046, 16
    %v4093 = vrot.slane %v4091, 3
    %v4094 = vshll.u32 %v4046, 16
    %v4096 = vrot.slane %v4094, 4
    %v4097 = vor.u32 %v4093, %v4096
    %v4098 = vsel %vm190, %v4089, %v4097
    %v4100 = vshrl.u32 %v4043, 16
    %v4102 = vrot.slane %v4100, 3
    %v4103 = vshll.u32 %v4043, 16
    %v4105 = vrot.slane %v4103, 4
    %v4106 = vor.u32 %v4102, %v4105
    %v4108 = vshrl.u32 %v4047, 16
    %v4110 = vrot.slane %v4108, 3
    %v4111 = vshll.u32 %v4047, 16
    %v4113 = vrot.slane %v4111, 4
    %v4114 = vor.u32 %v4110, %v4113
    %v4115 = vsel %vm190, %v4106, %v4114
    %v4126 = vunpack.c.l.b16 %v4016
    %v4127 = vunpack.c.h.b16 %v4016
    %v4128 = vunpack.c.l.b16 %v4017
    %v4129 = vunpack.c.h.b16 %v4017
    %v4130 = vunpack.c.l.b16 %v4018
    %v4131 = vunpack.c.h.b16 %v4018
    %v4132 = vunpack.c.l.b16 %v4019
    %v4133 = vunpack.c.h.b16 %v4019
    %v4134 = vunpack.c.l.b16 %v4020
    %v4135 = vunpack.c.h.b16 %v4020
    %v4136 = vunpack.c.l.b16 %v4021
    %v4137 = vunpack.c.h.b16 %v4021
    %v4138 = vpack.c.b16 %v4130, %v4126
    %v4139 = vpack.c.b16 %v4131, %v4127
    %v4140 = vpack.c.b16 %v4132, %v4128
    %v4141 = vpack.c.b16 %v4133, %v4129
    %v4142 = vpack.c.b16 %v4134, %v4134
    %v4143 = vpack.c.b16 %v4135, %v4135
    %v4144 = vpack.c.b16 %v4136, %v4136
    %v4145 = vpack.c.b16 %v4137, %v4137
    %v4147 = vshrl.u32 %v4138, 16
    %v4149 = vrot.slane %v4147, 3
    %v4150 = vshll.u32 %v4138, 16
    %v4152 = vrot.slane %v4150, 4
    %v4153 = vor.u32 %v4149, %v4152
    %v4155 = vshrl.u32 %v4142, 16
    %v4157 = vrot.slane %v4155, 3
    %v4158 = vshll.u32 %v4142, 16
    %v4160 = vrot.slane %v4158, 4
    %v4161 = vor.u32 %v4157, %v4160
    %v4162 = vsel %vm190, %v4153, %v4161
    %v4164 = vshrl.u32 %v4139, 16
    %v4166 = vrot.slane %v4164, 3
    %v4167 = vshll.u32 %v4139, 16
    %v4169 = vrot.slane %v4167, 4
    %v4170 = vor.u32 %v4166, %v4169
    %v4172 = vshrl.u32 %v4143, 16
    %v4174 = vrot.slane %v4172, 3
    %v4175 = vshll.u32 %v4143, 16
    %v4177 = vrot.slane %v4175, 4
    %v4178 = vor.u32 %v4174, %v4177
    %v4179 = vsel %vm190, %v4170, %v4178
    %v4181 = vshrl.u32 %v4140, 16
    %v4183 = vrot.slane %v4181, 3
    %v4184 = vshll.u32 %v4140, 16
    %v4186 = vrot.slane %v4184, 4
    %v4187 = vor.u32 %v4183, %v4186
    %v4189 = vshrl.u32 %v4144, 16
    %v4191 = vrot.slane %v4189, 3
    %v4192 = vshll.u32 %v4144, 16
    %v4194 = vrot.slane %v4192, 4
    %v4195 = vor.u32 %v4191, %v4194
    %v4196 = vsel %vm190, %v4187, %v4195
    %v4198 = vshrl.u32 %v4141, 16
    %v4200 = vrot.slane %v4198, 3
    %v4201 = vshll.u32 %v4141, 16
    %v4203 = vrot.slane %v4201, 4
    %v4204 = vor.u32 %v4200, %v4203
    %v4206 = vshrl.u32 %v4145, 16
    %v4208 = vrot.slane %v4206, 3
    %v4209 = vshll.u32 %v4145, 16
    %v4211 = vrot.slane %v4209, 4
    %v4212 = vor.u32 %v4208, %v4211
    %v4213 = vsel %vm190, %v4204, %v4212
    %v4218 = vld [vmem:[#allocation3] sm:$0xff]
    %v4219 = vld [vmem:[#allocation3 + $0x8] sm:$0xff]
    %v4220 = vld [vmem:[#allocation3 + $0x10] sm:$0xff]
    %v4221 = vld [vmem:[#allocation3 + $0x18] sm:$0xff]
    %v4222 = vld [vmem:[#allocation3 + $0x20] sm:$0xff]
    %v4223 = vld [vmem:[#allocation3 + $0x28] sm:$0xff]
    %v4224 = vld [vmem:[#allocation3 + $0x30] sm:$0xff]
    %v4225 = vld [vmem:[#allocation3 + $0x38] sm:$0xff]
    %v4226 = vld [vmem:[#allocation3 + $0x40] sm:$0xff]
    %v4227 = vld [vmem:[#allocation3 + $0x48] sm:$0xff]
    %v4228 = vld [vmem:[#allocation3 + $0x50] sm:$0xff]
    %v4229 = vld [vmem:[#allocation3 + $0x58] sm:$0xff]
    %v4230 = vld [vmem:[#allocation3 + $0x60] sm:$0xff]
    %v4231 = vld [vmem:[#allocation3 + $0x68] sm:$0xff]
    %v4232 = vld [vmem:[#allocation3 + $0x70] sm:$0xff]
    %v4233 = vld [vmem:[#allocation3 + $0x78] sm:$0xff]
    %v4234 = vld [vmem:[#allocation3 + $0x80] sm:$0xff]
    %v4235 = vld [vmem:[#allocation3 + $0x88] sm:$0xff]
    %v4236 = vld [vmem:[#allocation3 + $0x90] sm:$0xff]
    %v4237 = vld [vmem:[#allocation3 + $0x98] sm:$0xff]
    %v4238 = vld [vmem:[#allocation3 + $0xa0] sm:$0xff]
    %v4239 = vld [vmem:[#allocation3 + $0xa8] sm:$0xff]
    %v4240 = vld [vmem:[#allocation3 + $0xb0] sm:$0xff]
    %v4241 = vld [vmem:[#allocation3 + $0xb8] sm:$0xff]
    %v4242 = vld [vmem:[#allocation3 + $0xc0] sm:$0xff]
    %v4243 = vld [vmem:[#allocation3 + $0xc8] sm:$0xff]
    %v4244 = vld [vmem:[#allocation3 + $0xd0] sm:$0xff]
    %v4245 = vld [vmem:[#allocation3 + $0xd8] sm:$0xff]
    %v4246 = vld [vmem:[#allocation3 + $0xe0] sm:$0xff]
    %v4247 = vld [vmem:[#allocation3 + $0xe8] sm:$0xff]
    %v4248 = vld [vmem:[#allocation3 + $0xf0] sm:$0xff]
    %v4249 = vld [vmem:[#allocation3 + $0xf8] sm:$0xff]
    %v4250 = vld [vmem:[#allocation3 + $0x100] sm:$0xff]
    %v4251 = vld [vmem:[#allocation3 + $0x108] sm:$0xff]
    %v4252 = vld [vmem:[#allocation3 + $0x110] sm:$0xff]
    %v4253 = vld [vmem:[#allocation3 + $0x118] sm:$0xff]
    %v4254 = vld [vmem:[#allocation3 + $0x120] sm:$0xff]
    %v4255 = vld [vmem:[#allocation3 + $0x128] sm:$0xff]
    %v4256 = vld [vmem:[#allocation3 + $0x130] sm:$0xff]
    %v4257 = vld [vmem:[#allocation3 + $0x138] sm:$0xff]
    %v4258 = vld [vmem:[#allocation3 + $0x140] sm:$0xff]
    %v4259 = vld [vmem:[#allocation3 + $0x148] sm:$0xff]
    %v4260 = vld [vmem:[#allocation3 + $0x150] sm:$0xff]
    %v4261 = vld [vmem:[#allocation3 + $0x158] sm:$0xff]
    %v4262 = vld [vmem:[#allocation3 + $0x160] sm:$0xff]
    %v4263 = vld [vmem:[#allocation3 + $0x168] sm:$0xff]
    %v4264 = vld [vmem:[#allocation3 + $0x170] sm:$0xff]
    %v4265 = vld [vmem:[#allocation3 + $0x178] sm:$0xff]
    %v4266 = vld [vmem:[#allocation3 + $0x180] sm:$0xff]
    %v4267 = vld [vmem:[#allocation3 + $0x188] sm:$0xff]
    %v4268 = vld [vmem:[#allocation3 + $0x190] sm:$0xff]
    %v4269 = vld [vmem:[#allocation3 + $0x198] sm:$0xff]
    %v4270 = vld [vmem:[#allocation3 + $0x1a0] sm:$0xff]
    %v4271 = vld [vmem:[#allocation3 + $0x1a8] sm:$0xff]
    %v4272 = vld [vmem:[#allocation3 + $0x1b0] sm:$0xff]
    %v4273 = vld [vmem:[#allocation3 + $0x1b8] sm:$0xff]
    %v4274 = vld [vmem:[#allocation3 + $0x1c0] sm:$0xff]
    %v4275 = vld [vmem:[#allocation3 + $0x1c8] sm:$0xff]
    %v4276 = vld [vmem:[#allocation3 + $0x1d0] sm:$0xff]
    %v4277 = vld [vmem:[#allocation3 + $0x1d8] sm:$0xff]
    %v4278 = vld [vmem:[#allocation3 + $0x1e0] sm:$0xff]
    %v4279 = vld [vmem:[#allocation3 + $0x1e8] sm:$0xff]
    %v4280 = vld [vmem:[#allocation3 + $0x1f0] sm:$0xff]
    %v4281 = vld [vmem:[#allocation3 + $0x1f8] sm:$0xff]
    %v4282 = vld [vmem:[#allocation3 + $0x200] sm:$0xff]
    %v4283 = vld [vmem:[#allocation3 + $0x208] sm:$0xff]
    %v4284 = vld [vmem:[#allocation3 + $0x210] sm:$0xff]
    %v4285 = vld [vmem:[#allocation3 + $0x218] sm:$0xff]
    %v4286 = vld [vmem:[#allocation3 + $0x220] sm:$0xff]
    %v4287 = vld [vmem:[#allocation3 + $0x228] sm:$0xff]
    %v4288 = vld [vmem:[#allocation3 + $0x230] sm:$0xff]
    %v4289 = vld [vmem:[#allocation3 + $0x238] sm:$0xff]
    %v4290 = vld [vmem:[#allocation3 + $0x240] sm:$0xff]
    %v4291 = vld [vmem:[#allocation3 + $0x248] sm:$0xff]
    %v4292 = vld [vmem:[#allocation3 + $0x250] sm:$0xff]
    %v4293 = vld [vmem:[#allocation3 + $0x258] sm:$0xff]
    %v4294 = vld [vmem:[#allocation3 + $0x260] sm:$0xff]
    %v4295 = vld [vmem:[#allocation3 + $0x268] sm:$0xff]
    %v4296 = vld [vmem:[#allocation3 + $0x270] sm:$0xff]
    %v4297 = vld [vmem:[#allocation3 + $0x278] sm:$0xff]
    %v4298 = vld [vmem:[#allocation3 + $0x280] sm:$0xff]
    %v4299 = vld [vmem:[#allocation3 + $0x288] sm:$0xff]
    %v4300 = vld [vmem:[#allocation3 + $0x290] sm:$0xff]
    %v4301 = vld [vmem:[#allocation3 + $0x298] sm:$0xff]
    %v4302 = vld [vmem:[#allocation3 + $0x2a0] sm:$0xff]
    %v4303 = vld [vmem:[#allocation3 + $0x2a8] sm:$0xff]
    %v4304 = vld [vmem:[#allocation3 + $0x2b0] sm:$0xff]
    %v4305 = vld [vmem:[#allocation3 + $0x2b8] sm:$0xff]
    %v4306 = vld [vmem:[#allocation3 + $0x2c0] sm:$0xff]
    %v4307 = vld [vmem:[#allocation3 + $0x2c8] sm:$0xff]
    %v4308 = vld [vmem:[#allocation3 + $0x2d0] sm:$0xff]
    %v4309 = vld [vmem:[#allocation3 + $0x2d8] sm:$0xff]
    %v4310 = vld [vmem:[#allocation3 + $0x2e0] sm:$0xff]
    %v4311 = vld [vmem:[#allocation3 + $0x2e8] sm:$0xff]
    %v4312 = vld [vmem:[#allocation3 + $0x2f0] sm:$0xff]
    %v4313 = vld [vmem:[#allocation3 + $0x2f8] sm:$0xff]
    %v4314 = vld [vmem:[#allocation3 + $0x300] sm:$0xff]
    %v4315 = vld [vmem:[#allocation3 + $0x308] sm:$0xff]
    %v4316 = vld [vmem:[#allocation3 + $0x310] sm:$0xff]
    %v4317 = vld [vmem:[#allocation3 + $0x318] sm:$0xff]
    %v4318 = vld [vmem:[#allocation3 + $0x320] sm:$0xff]
    %v4319 = vld [vmem:[#allocation3 + $0x328] sm:$0xff]
    %v4320 = vld [vmem:[#allocation3 + $0x330] sm:$0xff]
    %v4321 = vld [vmem:[#allocation3 + $0x338] sm:$0xff]
    %v4322 = vld [vmem:[#allocation3 + $0x340] sm:$0xff]
    %v4323 = vld [vmem:[#allocation3 + $0x348] sm:$0xff]
    %v4324 = vld [vmem:[#allocation3 + $0x350] sm:$0xff]
    %v4325 = vld [vmem:[#allocation3 + $0x358] sm:$0xff]
    %v4326 = vld [vmem:[#allocation3 + $0x360] sm:$0xff]
    %v4327 = vld [vmem:[#allocation3 + $0x368] sm:$0xff]
    %v4328 = vld [vmem:[#allocation3 + $0x370] sm:$0xff]
    %v4329 = vld [vmem:[#allocation3 + $0x378] sm:$0xff]
    %v4330 = vld [vmem:[#allocation3 + $0x380] sm:$0xff]
    %v4331 = vld [vmem:[#allocation3 + $0x388] sm:$0xff]
    %v4332 = vld [vmem:[#allocation3 + $0x390] sm:$0xff]
    %v4333 = vld [vmem:[#allocation3 + $0x398] sm:$0xff]
    %v4334 = vld [vmem:[#allocation3 + $0x3a0] sm:$0xff]
    %v4335 = vld [vmem:[#allocation3 + $0x3a8] sm:$0xff]
    %v4336 = vld [vmem:[#allocation3 + $0x3b0] sm:$0xff]
    %v4337 = vld [vmem:[#allocation3 + $0x3b8] sm:$0xff]
    %v4338 = vld [vmem:[#allocation3 + $0x3c0] sm:$0xff]
    %v4339 = vld [vmem:[#allocation3 + $0x3c8] sm:$0xff]
    %v4340 = vld [vmem:[#allocation3 + $0x3d0] sm:$0xff]
    %v4341 = vld [vmem:[#allocation3 + $0x3d8] sm:$0xff]
    %v4342 = vld [vmem:[#allocation3 + $0x3e0] sm:$0xff]
    %v4343 = vld [vmem:[#allocation3 + $0x3e8] sm:$0xff]
    %v4344 = vld [vmem:[#allocation3 + $0x3f0] sm:$0xff]
    %v4345 = vld [vmem:[#allocation3 + $0x3f8] sm:$0xff]
    %v4346 = vpack.c.b16 %v4036, %v4032
    %v4347 = vpack.c.b16 %v4037, %v4033
    %v4348 = vpack.c.b16 %v4038, %v4034
    %v4349 = vpack.c.b16 %v4039, %v4035
    %v4354 = vpack.c.b16 %v4134, %v4130
    %v4355 = vpack.c.b16 %v4135, %v4131
    %v4356 = vpack.c.b16 %v4136, %v4132
    %v4357 = vpack.c.b16 %v4137, %v4133
    %s4362 = scalar_lea.vmem [#allocation3], 1024
    %v4363 = vld [vmem:[%s4362] sm:$0xff]
    %v4364 = vld [vmem:[%s4362 + $0x8] sm:$0xff]
    %v4365 = vld [vmem:[%s4362 + $0x10] sm:$0xff]
    %v4366 = vld [vmem:[%s4362 + $0x18] sm:$0xff]
    %v4367 = vld [vmem:[%s4362 + $0x20] sm:$0xff]
    %v4368 = vld [vmem:[%s4362 + $0x28] sm:$0xff]
    %v4369 = vld [vmem:[%s4362 + $0x30] sm:$0xff]
    %v4370 = vld [vmem:[%s4362 + $0x38] sm:$0xff]
    %v4371 = vld [vmem:[%s4362 + $0x40] sm:$0xff]
    %v4372 = vld [vmem:[%s4362 + $0x48] sm:$0xff]
    %v4373 = vld [vmem:[%s4362 + $0x50] sm:$0xff]
    %v4374 = vld [vmem:[%s4362 + $0x58] sm:$0xff]
    %v4375 = vld [vmem:[%s4362 + $0x60] sm:$0xff]
    %v4376 = vld [vmem:[%s4362 + $0x68] sm:$0xff]
    %v4377 = vld [vmem:[%s4362 + $0x70] sm:$0xff]
    %v4378 = vld [vmem:[%s4362 + $0x78] sm:$0xff]
    %v4379 = vld [vmem:[%s4362 + $0x80] sm:$0xff]
    %v4380 = vld [vmem:[%s4362 + $0x88] sm:$0xff]
    %v4381 = vld [vmem:[%s4362 + $0x90] sm:$0xff]
    %v4382 = vld [vmem:[%s4362 + $0x98] sm:$0xff]
    %v4383 = vld [vmem:[%s4362 + $0xa0] sm:$0xff]
    %v4384 = vld [vmem:[%s4362 + $0xa8] sm:$0xff]
    %v4385 = vld [vmem:[%s4362 + $0xb0] sm:$0xff]
    %v4386 = vld [vmem:[%s4362 + $0xb8] sm:$0xff]
    %v4387 = vld [vmem:[%s4362 + $0xc0] sm:$0xff]
    %v4388 = vld [vmem:[%s4362 + $0xc8] sm:$0xff]
    %v4389 = vld [vmem:[%s4362 + $0xd0] sm:$0xff]
    %v4390 = vld [vmem:[%s4362 + $0xd8] sm:$0xff]
    %v4391 = vld [vmem:[%s4362 + $0xe0] sm:$0xff]
    %v4392 = vld [vmem:[%s4362 + $0xe8] sm:$0xff]
    %v4393 = vld [vmem:[%s4362 + $0xf0] sm:$0xff]
    %v4394 = vld [vmem:[%s4362 + $0xf8] sm:$0xff]
    %v4395 = vld [vmem:[%s4362 + $0x100] sm:$0xff]
    %v4396 = vld [vmem:[%s4362 + $0x108] sm:$0xff]
    %v4397 = vld [vmem:[%s4362 + $0x110] sm:$0xff]
    %v4398 = vld [vmem:[%s4362 + $0x118] sm:$0xff]
    %v4399 = vld [vmem:[%s4362 + $0x120] sm:$0xff]
    %v4400 = vld [vmem:[%s4362 + $0x128] sm:$0xff]
    %v4401 = vld [vmem:[%s4362 + $0x130] sm:$0xff]
    %v4402 = vld [vmem:[%s4362 + $0x138] sm:$0xff]
    %v4403 = vld [vmem:[%s4362 + $0x140] sm:$0xff]
    %v4404 = vld [vmem:[%s4362 + $0x148] sm:$0xff]
    %v4405 = vld [vmem:[%s4362 + $0x150] sm:$0xff]
    %v4406 = vld [vmem:[%s4362 + $0x158] sm:$0xff]
    %v4407 = vld [vmem:[%s4362 + $0x160] sm:$0xff]
    %v4408 = vld [vmem:[%s4362 + $0x168] sm:$0xff]
    %v4409 = vld [vmem:[%s4362 + $0x170] sm:$0xff]
    %v4410 = vld [vmem:[%s4362 + $0x178] sm:$0xff]
    %v4411 = vld [vmem:[%s4362 + $0x180] sm:$0xff]
    %v4412 = vld [vmem:[%s4362 + $0x188] sm:$0xff]
    %v4413 = vld [vmem:[%s4362 + $0x190] sm:$0xff]
    %v4414 = vld [vmem:[%s4362 + $0x198] sm:$0xff]
    %v4415 = vld [vmem:[%s4362 + $0x1a0] sm:$0xff]
    %v4416 = vld [vmem:[%s4362 + $0x1a8] sm:$0xff]
    %v4417 = vld [vmem:[%s4362 + $0x1b0] sm:$0xff]
    %v4418 = vld [vmem:[%s4362 + $0x1b8] sm:$0xff]
    %v4419 = vld [vmem:[%s4362 + $0x1c0] sm:$0xff]
    %v4420 = vld [vmem:[%s4362 + $0x1c8] sm:$0xff]
    %v4421 = vld [vmem:[%s4362 + $0x1d0] sm:$0xff]
    %v4422 = vld [vmem:[%s4362 + $0x1d8] sm:$0xff]
    %v4423 = vld [vmem:[%s4362 + $0x1e0] sm:$0xff]
    %v4424 = vld [vmem:[%s4362 + $0x1e8] sm:$0xff]
    %v4425 = vld [vmem:[%s4362 + $0x1f0] sm:$0xff]
    %v4426 = vld [vmem:[%s4362 + $0x1f8] sm:$0xff]
    %v4427 = vld [vmem:[%s4362 + $0x200] sm:$0xff]
    %v4428 = vld [vmem:[%s4362 + $0x208] sm:$0xff]
    %v4429 = vld [vmem:[%s4362 + $0x210] sm:$0xff]
    %v4430 = vld [vmem:[%s4362 + $0x218] sm:$0xff]
    %v4431 = vld [vmem:[%s4362 + $0x220] sm:$0xff]
    %v4432 = vld [vmem:[%s4362 + $0x228] sm:$0xff]
    %v4433 = vld [vmem:[%s4362 + $0x230] sm:$0xff]
    %v4434 = vld [vmem:[%s4362 + $0x238] sm:$0xff]
    %v4435 = vld [vmem:[%s4362 + $0x240] sm:$0xff]
    %v4436 = vld [vmem:[%s4362 + $0x248] sm:$0xff]
    %v4437 = vld [vmem:[%s4362 + $0x250] sm:$0xff]
    %v4438 = vld [vmem:[%s4362 + $0x258] sm:$0xff]
    %v4439 = vld [vmem:[%s4362 + $0x260] sm:$0xff]
    %v4440 = vld [vmem:[%s4362 + $0x268] sm:$0xff]
    %v4441 = vld [vmem:[%s4362 + $0x270] sm:$0xff]
    %v4442 = vld [vmem:[%s4362 + $0x278] sm:$0xff]
    %v4443 = vld [vmem:[%s4362 + $0x280] sm:$0xff]
    %v4444 = vld [vmem:[%s4362 + $0x288] sm:$0xff]
    %v4445 = vld [vmem:[%s4362 + $0x290] sm:$0xff]
    %v4446 = vld [vmem:[%s4362 + $0x298] sm:$0xff]
    %v4447 = vld [vmem:[%s4362 + $0x2a0] sm:$0xff]
    %v4448 = vld [vmem:[%s4362 + $0x2a8] sm:$0xff]
    %v4449 = vld [vmem:[%s4362 + $0x2b0] sm:$0xff]
    %v4450 = vld [vmem:[%s4362 + $0x2b8] sm:$0xff]
    %v4451 = vld [vmem:[%s4362 + $0x2c0] sm:$0xff]
    %v4452 = vld [vmem:[%s4362 + $0x2c8] sm:$0xff]
    %v4453 = vld [vmem:[%s4362 + $0x2d0] sm:$0xff]
    %v4454 = vld [vmem:[%s4362 + $0x2d8] sm:$0xff]
    %v4455 = vld [vmem:[%s4362 + $0x2e0] sm:$0xff]
    %v4456 = vld [vmem:[%s4362 + $0x2e8] sm:$0xff]
    %v4457 = vld [vmem:[%s4362 + $0x2f0] sm:$0xff]
    %v4458 = vld [vmem:[%s4362 + $0x2f8] sm:$0xff]
    %v4459 = vld [vmem:[%s4362 + $0x300] sm:$0xff]
    %v4460 = vld [vmem:[%s4362 + $0x308] sm:$0xff]
    %v4461 = vld [vmem:[%s4362 + $0x310] sm:$0xff]
    %v4462 = vld [vmem:[%s4362 + $0x318] sm:$0xff]
    %v4463 = vld [vmem:[%s4362 + $0x320] sm:$0xff]
    %v4464 = vld [vmem:[%s4362 + $0x328] sm:$0xff]
    %v4465 = vld [vmem:[%s4362 + $0x330] sm:$0xff]
    %v4466 = vld [vmem:[%s4362 + $0x338] sm:$0xff]
    %v4467 = vld [vmem:[%s4362 + $0x340] sm:$0xff]
    %v4468 = vld [vmem:[%s4362 + $0x348] sm:$0xff]
    %v4469 = vld [vmem:[%s4362 + $0x350] sm:$0xff]
    %v4470 = vld [vmem:[%s4362 + $0x358] sm:$0xff]
    %v4471 = vld [vmem:[%s4362 + $0x360] sm:$0xff]
    %v4472 = vld [vmem:[%s4362 + $0x368] sm:$0xff]
    %v4473 = vld [vmem:[%s4362 + $0x370] sm:$0xff]
    %v4474 = vld [vmem:[%s4362 + $0x378] sm:$0xff]
    %v4475 = vld [vmem:[%s4362 + $0x380] sm:$0xff]
    %v4476 = vld [vmem:[%s4362 + $0x388] sm:$0xff]
    %v4477 = vld [vmem:[%s4362 + $0x390] sm:$0xff]
    %v4478 = vld [vmem:[%s4362 + $0x398] sm:$0xff]
    %v4479 = vld [vmem:[%s4362 + $0x3a0] sm:$0xff]
    %v4480 = vld [vmem:[%s4362 + $0x3a8] sm:$0xff]
    %v4481 = vld [vmem:[%s4362 + $0x3b0] sm:$0xff]
    %v4482 = vld [vmem:[%s4362 + $0x3b8] sm:$0xff]
    %v4483 = vld [vmem:[%s4362 + $0x3c0] sm:$0xff]
    %v4484 = vld [vmem:[%s4362 + $0x3c8] sm:$0xff]
    %v4485 = vld [vmem:[%s4362 + $0x3d0] sm:$0xff]
    %v4486 = vld [vmem:[%s4362 + $0x3d8] sm:$0xff]
    %v4487 = vld [vmem:[%s4362 + $0x3e0] sm:$0xff]
    %v4488 = vld [vmem:[%s4362 + $0x3e8] sm:$0xff]
    %v4489 = vld [vmem:[%s4362 + $0x3f0] sm:$0xff]
    %v4490 = vld [vmem:[%s4362 + $0x3f8] sm:$0xff]
    %v4619 = vunpack.c.l.b16 %v4363
    %v4620 = vunpack.c.h.b16 %v4363
    %v4621 = vunpack.c.l.b16 %v4364
    %v4622 = vunpack.c.h.b16 %v4364
    %v4623 = vunpack.c.l.b16 %v4365
    %v4624 = vunpack.c.h.b16 %v4365
    %v4625 = vunpack.c.l.b16 %v4366
    %v4626 = vunpack.c.h.b16 %v4366
    %v4627 = vunpack.c.l.b16 %v4367
    %v4628 = vunpack.c.h.b16 %v4367
    %v4629 = vunpack.c.l.b16 %v4368
    %v4630 = vunpack.c.h.b16 %v4368
    %v4631 = vunpack.c.l.b16 %v4369
    %v4632 = vunpack.c.h.b16 %v4369
    %v4633 = vunpack.c.l.b16 %v4370
    %v4634 = vunpack.c.h.b16 %v4370
    %v4635 = vunpack.c.l.b16 %v4371
    %v4636 = vunpack.c.h.b16 %v4371
    %v4637 = vunpack.c.l.b16 %v4372
    %v4638 = vunpack.c.h.b16 %v4372
    %v4639 = vunpack.c.l.b16 %v4373
    %v4640 = vunpack.c.h.b16 %v4373
    %v4641 = vunpack.c.l.b16 %v4374
    %v4642 = vunpack.c.h.b16 %v4374
    %v4643 = vunpack.c.l.b16 %v4375
    %v4644 = vunpack.c.h.b16 %v4375
    %v4645 = vunpack.c.l.b16 %v4376
    %v4646 = vunpack.c.h.b16 %v4376
    %v4647 = vunpack.c.l.b16 %v4377
    %v4648 = vunpack.c.h.b16 %v4377
    %v4649 = vunpack.c.l.b16 %v4378
    %v4650 = vunpack.c.h.b16 %v4378
    %v4651 = vunpack.c.l.b16 %v4379
    %v4652 = vunpack.c.h.b16 %v4379
    %v4653 = vunpack.c.l.b16 %v4380
    %v4654 = vunpack.c.h.b16 %v4380
    %v4655 = vunpack.c.l.b16 %v4381
    %v4656 = vunpack.c.h.b16 %v4381
    %v4657 = vunpack.c.l.b16 %v4382
    %v4658 = vunpack.c.h.b16 %v4382
    %v4659 = vunpack.c.l.b16 %v4383
    %v4660 = vunpack.c.h.b16 %v4383
    %v4661 = vunpack.c.l.b16 %v4384
    %v4662 = vunpack.c.h.b16 %v4384
    %v4663 = vunpack.c.l.b16 %v4385
    %v4664 = vunpack.c.h.b16 %v4385
    %v4665 = vunpack.c.l.b16 %v4386
    %v4666 = vunpack.c.h.b16 %v4386
    %v4667 = vunpack.c.l.b16 %v4387
    %v4668 = vunpack.c.h.b16 %v4387
    %v4669 = vunpack.c.l.b16 %v4388
    %v4670 = vunpack.c.h.b16 %v4388
    %v4671 = vunpack.c.l.b16 %v4389
    %v4672 = vunpack.c.h.b16 %v4389
    %v4673 = vunpack.c.l.b16 %v4390
    %v4674 = vunpack.c.h.b16 %v4390
    %v4675 = vunpack.c.l.b16 %v4391
    %v4676 = vunpack.c.h.b16 %v4391
    %v4677 = vunpack.c.l.b16 %v4392
    %v4678 = vunpack.c.h.b16 %v4392
    %v4679 = vunpack.c.l.b16 %v4393
    %v4680 = vunpack.c.h.b16 %v4393
    %v4681 = vunpack.c.l.b16 %v4394
    %v4682 = vunpack.c.h.b16 %v4394
    %v4683 = vunpack.c.l.b16 %v4395
    %v4684 = vunpack.c.h.b16 %v4395
    %v4685 = vunpack.c.l.b16 %v4396
    %v4686 = vunpack.c.h.b16 %v4396
    %v4687 = vunpack.c.l.b16 %v4397
    %v4688 = vunpack.c.h.b16 %v4397
    %v4689 = vunpack.c.l.b16 %v4398
    %v4690 = vunpack.c.h.b16 %v4398
    %v4691 = vunpack.c.l.b16 %v4399
    %v4692 = vunpack.c.h.b16 %v4399
    %v4693 = vunpack.c.l.b16 %v4400
    %v4694 = vunpack.c.h.b16 %v4400
    %v4695 = vunpack.c.l.b16 %v4401
    %v4696 = vunpack.c.h.b16 %v4401
    %v4697 = vunpack.c.l.b16 %v4402
    %v4698 = vunpack.c.h.b16 %v4402
    %v4699 = vunpack.c.l.b16 %v4403
    %v4700 = vunpack.c.h.b16 %v4403
    %v4701 = vunpack.c.l.b16 %v4404
    %v4702 = vunpack.c.h.b16 %v4404
    %v4703 = vunpack.c.l.b16 %v4405
    %v4704 = vunpack.c.h.b16 %v4405
    %v4705 = vunpack.c.l.b16 %v4406
    %v4706 = vunpack.c.h.b16 %v4406
    %v4707 = vunpack.c.l.b16 %v4407
    %v4708 = vunpack.c.h.b16 %v4407
    %v4709 = vunpack.c.l.b16 %v4408
    %v4710 = vunpack.c.h.b16 %v4408
    %v4711 = vunpack.c.l.b16 %v4409
    %v4712 = vunpack.c.h.b16 %v4409
    %v4713 = vunpack.c.l.b16 %v4410
    %v4714 = vunpack.c.h.b16 %v4410
    %v4715 = vunpack.c.l.b16 %v4411
    %v4716 = vunpack.c.h.b16 %v4411
    %v4717 = vunpack.c.l.b16 %v4412
    %v4718 = vunpack.c.h.b16 %v4412
    %v4719 = vunpack.c.l.b16 %v4413
    %v4720 = vunpack.c.h.b16 %v4413
    %v4721 = vunpack.c.l.b16 %v4414
    %v4722 = vunpack.c.h.b16 %v4414
    %v4723 = vunpack.c.l.b16 %v4415
    %v4724 = vunpack.c.h.b16 %v4415
    %v4725 = vunpack.c.l.b16 %v4416
    %v4726 = vunpack.c.h.b16 %v4416
    %v4727 = vunpack.c.l.b16 %v4417
    %v4728 = vunpack.c.h.b16 %v4417
    %v4729 = vunpack.c.l.b16 %v4418
    %v4730 = vunpack.c.h.b16 %v4418
    %v4731 = vunpack.c.l.b16 %v4419
    %v4732 = vunpack.c.h.b16 %v4419
    %v4733 = vunpack.c.l.b16 %v4420
    %v4734 = vunpack.c.h.b16 %v4420
    %v4735 = vunpack.c.l.b16 %v4421
    %v4736 = vunpack.c.h.b16 %v4421
    %v4737 = vunpack.c.l.b16 %v4422
    %v4738 = vunpack.c.h.b16 %v4422
    %v4739 = vunpack.c.l.b16 %v4423
    %v4740 = vunpack.c.h.b16 %v4423
    %v4741 = vunpack.c.l.b16 %v4424
    %v4742 = vunpack.c.h.b16 %v4424
    %v4743 = vunpack.c.l.b16 %v4425
    %v4744 = vunpack.c.h.b16 %v4425
    %v4745 = vunpack.c.l.b16 %v4426
    %v4746 = vunpack.c.h.b16 %v4426
    %v4747 = vunpack.c.l.b16 %v4427
    %v4748 = vunpack.c.h.b16 %v4427
    %v4749 = vunpack.c.l.b16 %v4428
    %v4750 = vunpack.c.h.b16 %v4428
    %v4751 = vunpack.c.l.b16 %v4429
    %v4752 = vunpack.c.h.b16 %v4429
    %v4753 = vunpack.c.l.b16 %v4430
    %v4754 = vunpack.c.h.b16 %v4430
    %v4755 = vunpack.c.l.b16 %v4431
    %v4756 = vunpack.c.h.b16 %v4431
    %v4757 = vunpack.c.l.b16 %v4432
    %v4758 = vunpack.c.h.b16 %v4432
    %v4759 = vunpack.c.l.b16 %v4433
    %v4760 = vunpack.c.h.b16 %v4433
    %v4761 = vunpack.c.l.b16 %v4434
    %v4762 = vunpack.c.h.b16 %v4434
    %v4763 = vunpack.c.l.b16 %v4435
    %v4764 = vunpack.c.h.b16 %v4435
    %v4765 = vunpack.c.l.b16 %v4436
    %v4766 = vunpack.c.h.b16 %v4436
    %v4767 = vunpack.c.l.b16 %v4437
    %v4768 = vunpack.c.h.b16 %v4437
    %v4769 = vunpack.c.l.b16 %v4438
    %v4770 = vunpack.c.h.b16 %v4438
    %v4771 = vunpack.c.l.b16 %v4439
    %v4772 = vunpack.c.h.b16 %v4439
    %v4773 = vunpack.c.l.b16 %v4440
    %v4774 = vunpack.c.h.b16 %v4440
    %v4775 = vunpack.c.l.b16 %v4441
    %v4776 = vunpack.c.h.b16 %v4441
    %v4777 = vunpack.c.l.b16 %v4442
    %v4778 = vunpack.c.h.b16 %v4442
    %v4779 = vunpack.c.l.b16 %v4443
    %v4780 = vunpack.c.h.b16 %v4443
    %v4781 = vunpack.c.l.b16 %v4444
    %v4782 = vunpack.c.h.b16 %v4444
    %v4783 = vunpack.c.l.b16 %v4445
    %v4784 = vunpack.c.h.b16 %v4445
    %v4785 = vunpack.c.l.b16 %v4446
    %v4786 = vunpack.c.h.b16 %v4446
    %v4787 = vunpack.c.l.b16 %v4447
    %v4788 = vunpack.c.h.b16 %v4447
    %v4789 = vunpack.c.l.b16 %v4448
    %v4790 = vunpack.c.h.b16 %v4448
    %v4791 = vunpack.c.l.b16 %v4449
    %v4792 = vunpack.c.h.b16 %v4449
    %v4793 = vunpack.c.l.b16 %v4450
    %v4794 = vunpack.c.h.b16 %v4450
    %v4795 = vunpack.c.l.b16 %v4451
    %v4796 = vunpack.c.h.b16 %v4451
    %v4797 = vunpack.c.l.b16 %v4452
    %v4798 = vunpack.c.h.b16 %v4452
    %v4799 = vunpack.c.l.b16 %v4453
    %v4800 = vunpack.c.h.b16 %v4453
    %v4801 = vunpack.c.l.b16 %v4454
    %v4802 = vunpack.c.h.b16 %v4454
    %v4803 = vunpack.c.l.b16 %v4455
    %v4804 = vunpack.c.h.b16 %v4455
    %v4805 = vunpack.c.l.b16 %v4456
    %v4806 = vunpack.c.h.b16 %v4456
    %v4807 = vunpack.c.l.b16 %v4457
    %v4808 = vunpack.c.h.b16 %v4457
    %v4809 = vunpack.c.l.b16 %v4458
    %v4810 = vunpack.c.h.b16 %v4458
    %v4811 = vunpack.c.l.b16 %v4459
    %v4812 = vunpack.c.h.b16 %v4459
    %v4813 = vunpack.c.l.b16 %v4460
    %v4814 = vunpack.c.h.b16 %v4460
    %v4815 = vunpack.c.l.b16 %v4461
    %v4816 = vunpack.c.h.b16 %v4461
    %v4817 = vunpack.c.l.b16 %v4462
    %v4818 = vunpack.c.h.b16 %v4462
    %v4819 = vunpack.c.l.b16 %v4463
    %v4820 = vunpack.c.h.b16 %v4463
    %v4821 = vunpack.c.l.b16 %v4464
    %v4822 = vunpack.c.h.b16 %v4464
    %v4823 = vunpack.c.l.b16 %v4465
    %v4824 = vunpack.c.h.b16 %v4465
    %v4825 = vunpack.c.l.b16 %v4466
    %v4826 = vunpack.c.h.b16 %v4466
    %v4827 = vunpack.c.l.b16 %v4467
    %v4828 = vunpack.c.h.b16 %v4467
    %v4829 = vunpack.c.l.b16 %v4468
    %v4830 = vunpack.c.h.b16 %v4468
    %v4831 = vunpack.c.l.b16 %v4469
    %v4832 = vunpack.c.h.b16 %v4469
    %v4833 = vunpack.c.l.b16 %v4470
    %v4834 = vunpack.c.h.b16 %v4470
    %v4835 = vunpack.c.l.b16 %v4471
    %v4836 = vunpack.c.h.b16 %v4471
    %v4837 = vunpack.c.l.b16 %v4472
    %v4838 = vunpack.c.h.b16 %v4472
    %v4839 = vunpack.c.l.b16 %v4473
    %v4840 = vunpack.c.h.b16 %v4473
    %v4841 = vunpack.c.l.b16 %v4474
    %v4842 = vunpack.c.h.b16 %v4474
    %v4843 = vunpack.c.l.b16 %v4475
    %v4844 = vunpack.c.h.b16 %v4475
    %v4845 = vunpack.c.l.b16 %v4476
    %v4846 = vunpack.c.h.b16 %v4476
    %v4847 = vunpack.c.l.b16 %v4477
    %v4848 = vunpack.c.h.b16 %v4477
    %v4849 = vunpack.c.l.b16 %v4478
    %v4850 = vunpack.c.h.b16 %v4478
    %v4851 = vunpack.c.l.b16 %v4479
    %v4852 = vunpack.c.h.b16 %v4479
    %v4853 = vunpack.c.l.b16 %v4480
    %v4854 = vunpack.c.h.b16 %v4480
    %v4855 = vunpack.c.l.b16 %v4481
    %v4856 = vunpack.c.h.b16 %v4481
    %v4857 = vunpack.c.l.b16 %v4482
    %v4858 = vunpack.c.h.b16 %v4482
    %v4859 = vunpack.c.l.b16 %v4483
    %v4860 = vunpack.c.h.b16 %v4483
    %v4861 = vunpack.c.l.b16 %v4484
    %v4862 = vunpack.c.h.b16 %v4484
    %v4863 = vunpack.c.l.b16 %v4485
    %v4864 = vunpack.c.h.b16 %v4485
    %v4865 = vunpack.c.l.b16 %v4486
    %v4866 = vunpack.c.h.b16 %v4486
    %v4867 = vunpack.c.l.b16 %v4487
    %v4868 = vunpack.c.h.b16 %v4487
    %v4869 = vunpack.c.l.b16 %v4488
    %v4870 = vunpack.c.h.b16 %v4488
    %v4871 = vunpack.c.l.b16 %v4489
    %v4872 = vunpack.c.h.b16 %v4489
    %v4873 = vunpack.c.l.b16 %v4490
    %v4874 = vunpack.c.h.b16 %v4490
    %v4875 = vpack.c.b16 %v4623, %v4619
    %v4876 = vpack.c.b16 %v4624, %v4620
    %v4877 = vpack.c.b16 %v4625, %v4621
    %v4878 = vpack.c.b16 %v4626, %v4622
    %v4879 = vpack.c.b16 %v4631, %v4627
    %v4880 = vpack.c.b16 %v4632, %v4628
    %v4881 = vpack.c.b16 %v4633, %v4629
    %v4882 = vpack.c.b16 %v4634, %v4630
    %v4883 = vpack.c.b16 %v4639, %v4635
    %v4884 = vpack.c.b16 %v4640, %v4636
    %v4885 = vpack.c.b16 %v4641, %v4637
    %v4886 = vpack.c.b16 %v4642, %v4638
    %v4887 = vpack.c.b16 %v4647, %v4643
    %v4888 = vpack.c.b16 %v4648, %v4644
    %v4889 = vpack.c.b16 %v4649, %v4645
    %v4890 = vpack.c.b16 %v4650, %v4646
    %v4891 = vpack.c.b16 %v4655, %v4651
    %v4892 = vpack.c.b16 %v4656, %v4652
    %v4893 = vpack.c.b16 %v4657, %v4653
    %v4894 = vpack.c.b16 %v4658, %v4654
    %v4895 = vpack.c.b16 %v4663, %v4659
    %v4896 = vpack.c.b16 %v4664, %v4660
    %v4897 = vpack.c.b16 %v4665, %v4661
    %v4898 = vpack.c.b16 %v4666, %v4662
    %v4899 = vpack.c.b16 %v4671, %v4667
    %v4900 = vpack.c.b16 %v4672, %v4668
    %v4901 = vpack.c.b16 %v4673, %v4669
    %v4902 = vpack.c.b16 %v4674, %v4670
    %v4903 = vpack.c.b16 %v4679, %v4675
    %v4904 = vpack.c.b16 %v4680, %v4676
    %v4905 = vpack.c.b16 %v4681, %v4677
    %v4906 = vpack.c.b16 %v4682, %v4678
    %v4907 = vpack.c.b16 %v4687, %v4683
    %v4908 = vpack.c.b16 %v4688, %v4684
    %v4909 = vpack.c.b16 %v4689, %v4685
    %v4910 = vpack.c.b16 %v4690, %v4686
    %v4911 = vpack.c.b16 %v4695, %v4691
    %v4912 = vpack.c.b16 %v4696, %v4692
    %v4913 = vpack.c.b16 %v4697, %v4693
    %v4914 = vpack.c.b16 %v4698, %v4694
    %v4915 = vpack.c.b16 %v4703, %v4699
    %v4916 = vpack.c.b16 %v4704, %v4700
    %v4917 = vpack.c.b16 %v4705, %v4701
    %v4918 = vpack.c.b16 %v4706, %v4702
    %v4919 = vpack.c.b16 %v4711, %v4707
    %v4920 = vpack.c.b16 %v4712, %v4708
    %v4921 = vpack.c.b16 %v4713, %v4709
    %v4922 = vpack.c.b16 %v4714, %v4710
    %v4923 = vpack.c.b16 %v4719, %v4715
    %v4924 = vpack.c.b16 %v4720, %v4716
    %v4925 = vpack.c.b16 %v4721, %v4717
    %v4926 = vpack.c.b16 %v4722, %v4718
    %v4927 = vpack.c.b16 %v4727, %v4723
    %v4928 = vpack.c.b16 %v4728, %v4724
    %v4929 = vpack.c.b16 %v4729, %v4725
    %v4930 = vpack.c.b16 %v4730, %v4726
    %v4931 = vpack.c.b16 %v4735, %v4731
    %v4932 = vpack.c.b16 %v4736, %v4732
    %v4933 = vpack.c.b16 %v4737, %v4733
    %v4934 = vpack.c.b16 %v4738, %v4734
    %v4935 = vpack.c.b16 %v4743, %v4739
    %v4936 = vpack.c.b16 %v4744, %v4740
    %v4937 = vpack.c.b16 %v4745, %v4741
    %v4938 = vpack.c.b16 %v4746, %v4742
    %v4939 = vpack.c.b16 %v4751, %v4747
    %v4940 = vpack.c.b16 %v4752, %v4748
    %v4941 = vpack.c.b16 %v4753, %v4749
    %v4942 = vpack.c.b16 %v4754, %v4750
    %v4943 = vpack.c.b16 %v4759, %v4755
    %v4944 = vpack.c.b16 %v4760, %v4756
    %v4945 = vpack.c.b16 %v4761, %v4757
    %v4946 = vpack.c.b16 %v4762, %v4758
    %v4947 = vpack.c.b16 %v4767, %v4763
    %v4948 = vpack.c.b16 %v4768, %v4764
    %v4949 = vpack.c.b16 %v4769, %v4765
    %v4950 = vpack.c.b16 %v4770, %v4766
    %v4951 = vpack.c.b16 %v4775, %v4771
    %v4952 = vpack.c.b16 %v4776, %v4772
    %v4953 = vpack.c.b16 %v4777, %v4773
    %v4954 = vpack.c.b16 %v4778, %v4774
    %v4955 = vpack.c.b16 %v4783, %v4779
    %v4956 = vpack.c.b16 %v4784, %v4780
    %v4957 = vpack.c.b16 %v4785, %v4781
    %v4958 = vpack.c.b16 %v4786, %v4782
    %v4959 = vpack.c.b16 %v4791, %v4787
    %v4960 = vpack.c.b16 %v4792, %v4788
    %v4961 = vpack.c.b16 %v4793, %v4789
    %v4962 = vpack.c.b16 %v4794, %v4790
    %v4963 = vpack.c.b16 %v4799, %v4795
    %v4964 = vpack.c.b16 %v4800, %v4796
    %v4965 = vpack.c.b16 %v4801, %v4797
    %v4966 = vpack.c.b16 %v4802, %v4798
    %v4967 = vpack.c.b16 %v4807, %v4803
    %v4968 = vpack.c.b16 %v4808, %v4804
    %v4969 = vpack.c.b16 %v4809, %v4805
    %v4970 = vpack.c.b16 %v4810, %v4806
    %v4971 = vpack.c.b16 %v4815, %v4811
    %v4972 = vpack.c.b16 %v4816, %v4812
    %v4973 = vpack.c.b16 %v4817, %v4813
    %v4974 = vpack.c.b16 %v4818, %v4814
    %v4975 = vpack.c.b16 %v4823, %v4819
    %v4976 = vpack.c.b16 %v4824, %v4820
    %v4977 = vpack.c.b16 %v4825, %v4821
    %v4978 = vpack.c.b16 %v4826, %v4822
    %v4979 = vpack.c.b16 %v4831, %v4827
    %v4980 = vpack.c.b16 %v4832, %v4828
    %v4981 = vpack.c.b16 %v4833, %v4829
    %v4982 = vpack.c.b16 %v4834, %v4830
    %v4983 = vpack.c.b16 %v4839, %v4835
    %v4984 = vpack.c.b16 %v4840, %v4836
    %v4985 = vpack.c.b16 %v4841, %v4837
    %v4986 = vpack.c.b16 %v4842, %v4838
    %v4987 = vpack.c.b16 %v4847, %v4843
    %v4988 = vpack.c.b16 %v4848, %v4844
    %v4989 = vpack.c.b16 %v4849, %v4845
    %v4990 = vpack.c.b16 %v4850, %v4846
    %v4991 = vpack.c.b16 %v4855, %v4851
    %v4992 = vpack.c.b16 %v4856, %v4852
    %v4993 = vpack.c.b16 %v4857, %v4853
    %v4994 = vpack.c.b16 %v4858, %v4854
    %v4995 = vpack.c.b16 %v4863, %v4859
    %v4996 = vpack.c.b16 %v4864, %v4860
    %v4997 = vpack.c.b16 %v4865, %v4861
    %v4998 = vpack.c.b16 %v4866, %v4862
    %v4999 = vpack.c.b16 %v4871, %v4867
    %v5000 = vpack.c.b16 %v4872, %v4868
    %v5001 = vpack.c.b16 %v4873, %v4869
    %v5002 = vpack.c.b16 %v4874, %v4870
    %5131 = vmatpush.bf16.msra.mxu0 %v4903
    %5132 = vmatpush.bf16.msra.mxu0 %v4899
    %5133 = vmatpush.bf16.msra.mxu0 %v4895
    %5134 = vmatpush.bf16.msra.mxu0 %v4891
    %5135 = vmatpush.bf16.msra.mxu0 %v4887
    %5136 = vmatpush.bf16.msra.mxu0 %v4883
    %5137 = vmatpush.bf16.msra.mxu0 %v4879
    %5138 = vmatpush.bf16.msra.mxu0 %v4875
    %5139 = vmatmul.bf16.gmra.mxu0 %v4346
    %v5140 = vpop.f32.mrf.mxu0
    %v5141 = vadd.f32 0.0, %v5140
    %v5142 = vpop.f32.mrf.mxu0
    %v5143 = vadd.f32 0.0, %v5142
    %5144 = vmatmul.bf16.gmra.mxu0 %v4354
    %v5145 = vpop.f32.mrf.mxu0
    %v5146 = vadd.f32 0.0, %v5145
    %v5147 = vpop.f32.mrf.mxu0
    %v5148 = vadd.f32 0.0, %v5147
    %5149 = vdwg.mxu0
    %5150 = vmatpush.bf16.msra.mxu0 %v4935
    %5151 = vmatpush.bf16.msra.mxu0 %v4931
    %5152 = vmatpush.bf16.msra.mxu0 %v4927
    %5153 = vmatpush.bf16.msra.mxu0 %v4923
    %5154 = vmatpush.bf16.msra.mxu0 %v4919
    %5155 = vmatpush.bf16.msra.mxu0 %v4915
    %5156 = vmatpush.bf16.msra.mxu0 %v4911
    %5157 = vmatpush.bf16.msra.mxu0 %v4907
    %5158 = vmatmul.bf16.gmra.mxu0 %v4347
    %v5159 = vpop.f32.mrf.mxu0
    %v5160 = vadd.f32 %v5141, %v5159
    %v5161 = vpop.f32.mrf.mxu0
    %v5162 = vadd.f32 %v5143, %v5161
    %5163 = vmatmul.bf16.gmra.mxu0 %v4355
    %v5164 = vpop.f32.mrf.mxu0
    %v5165 = vadd.f32 %v5146, %v5164
    %v5166 = vpop.f32.mrf.mxu0
    %v5167 = vadd.f32 %v5148, %v5166
    %5168 = vdwg.mxu0
    %5169 = vmatpush.bf16.msra.mxu0 %v4967
    %5170 = vmatpush.bf16.msra.mxu0 %v4963
    %5171 = vmatpush.bf16.msra.mxu0 %v4959
    %5172 = vmatpush.bf16.msra.mxu0 %v4955
    %5173 = vmatpush.bf16.msra.mxu0 %v4951
    %5174 = vmatpush.bf16.msra.mxu0 %v4947
    %5175 = vmatpush.bf16.msra.mxu0 %v4943
    %5176 = vmatpush.bf16.msra.mxu0 %v4939
    %5177 = vmatmul.bf16.gmra.mxu0 %v4348
    %v5178 = vpop.f32.mrf.mxu0
    %v5179 = vadd.f32 %v5160, %v5178
    %v5180 = vpop.f32.mrf.mxu0
    %v5181 = vadd.f32 %v5162, %v5180
    %5182 = vmatmul.bf16.gmra.mxu0 %v4356
    %v5183 = vpop.f32.mrf.mxu0
    %v5184 = vadd.f32 %v5165, %v5183
    %v5185 = vpop.f32.mrf.mxu0
    %v5186 = vadd.f32 %v5167, %v5185
    %5187 = vdwg.mxu0
    %5188 = vmatpush.bf16.msra.mxu0 %v4999
    %5189 = vmatpush.bf16.msra.mxu0 %v4995
    %5190 = vmatpush.bf16.msra.mxu0 %v4991
    %5191 = vmatpush.bf16.msra.mxu0 %v4987
    %5192 = vmatpush.bf16.msra.mxu0 %v4983
    %5193 = vmatpush.bf16.msra.mxu0 %v4979
    %5194 = vmatpush.bf16.msra.mxu0 %v4975
    %5195 = vmatpush.bf16.msra.mxu0 %v4971
    %5196 = vmatmul.bf16.gmra.mxu0 %v4349
    %v5197 = vpop.f32.mrf.mxu0
    %v5198 = vadd.f32 %v5179, %v5197
    %v5199 = vpop.f32.mrf.mxu0
    %v5200 = vadd.f32 %v5181, %v5199
    %5201 = vmatmul.bf16.gmra.mxu0 %v4357
    %v5202 = vpop.f32.mrf.mxu0
    %v5203 = vadd.f32 %v5184, %v5202
    %v5204 = vpop.f32.mrf.mxu0
    %v5205 = vadd.f32 %v5186, %v5204
    %5206 = vdwg.mxu0
    %5207 = vmatpush.bf16.msra.mxu0 %v4904
    %5208 = vmatpush.bf16.msra.mxu0 %v4900
    %5209 = vmatpush.bf16.msra.mxu0 %v4896
    %5210 = vmatpush.bf16.msra.mxu0 %v4892
    %5211 = vmatpush.bf16.msra.mxu0 %v4888
    %5212 = vmatpush.bf16.msra.mxu0 %v4884
    %5213 = vmatpush.bf16.msra.mxu0 %v4880
    %5214 = vmatpush.bf16.msra.mxu0 %v4876
    %5215 = vmatmul.bf16.gmra.mxu0 %v4346
    %v5216 = vpop.f32.mrf.mxu0
    %v5217 = vadd.f32 0.0, %v5216
    %v5218 = vpop.f32.mrf.mxu0
    %v5219 = vadd.f32 0.0, %v5218
    %5220 = vmatmul.bf16.gmra.mxu0 %v4354
    %v5221 = vpop.f32.mrf.mxu0
    %v5222 = vadd.f32 0.0, %v5221
    %v5223 = vpop.f32.mrf.mxu0
    %v5224 = vadd.f32 0.0, %v5223
    %5225 = vdwg.mxu0
    %5226 = vmatpush.bf16.msra.mxu0 %v4936
    %5227 = vmatpush.bf16.msra.mxu0 %v4932
    %5228 = vmatpush.bf16.msra.mxu0 %v4928
    %5229 = vmatpush.bf16.msra.mxu0 %v4924
    %5230 = vmatpush.bf16.msra.mxu0 %v4920
    %5231 = vmatpush.bf16.msra.mxu0 %v4916
    %5232 = vmatpush.bf16.msra.mxu0 %v4912
    %5233 = vmatpush.bf16.msra.mxu0 %v4908
    %5234 = vmatmul.bf16.gmra.mxu0 %v4347
    %v5235 = vpop.f32.mrf.mxu0
    %v5236 = vadd.f32 %v5217, %v5235
    %v5237 = vpop.f32.mrf.mxu0
    %v5238 = vadd.f32 %v5219, %v5237
    %5239 = vmatmul.bf16.gmra.mxu0 %v4355
    %v5240 = vpop.f32.mrf.mxu0
    %v5241 = vadd.f32 %v5222, %v5240
    %v5242 = vpop.f32.mrf.mxu0
    %v5243 = vadd.f32 %v5224, %v5242
    %5244 = vdwg.mxu0
    %5245 = vmatpush.bf16.msra.mxu0 %v4968
    %5246 = vmatpush.bf16.msra.mxu0 %v4964
    %5247 = vmatpush.bf16.msra.mxu0 %v4960
    %5248 = vmatpush.bf16.msra.mxu0 %v4956
    %5249 = vmatpush.bf16.msra.mxu0 %v4952
    %5250 = vmatpush.bf16.msra.mxu0 %v4948
    %5251 = vmatpush.bf16.msra.mxu0 %v4944
    %5252 = vmatpush.bf16.msra.mxu0 %v4940
    %5253 = vmatmul.bf16.gmra.mxu0 %v4348
    %v5254 = vpop.f32.mrf.mxu0
    %v5255 = vadd.f32 %v5236, %v5254
    %v5256 = vpop.f32.mrf.mxu0
    %v5257 = vadd.f32 %v5238, %v5256
    %5258 = vmatmul.bf16.gmra.mxu0 %v4356
    %v5259 = vpop.f32.mrf.mxu0
    %v5260 = vadd.f32 %v5241, %v5259
    %v5261 = vpop.f32.mrf.mxu0
    %v5262 = vadd.f32 %v5243, %v5261
    %5263 = vdwg.mxu0
    %5264 = vmatpush.bf16.msra.mxu0 %v5000
    %5265 = vmatpush.bf16.msra.mxu0 %v4996
    %5266 = vmatpush.bf16.msra.mxu0 %v4992
    %5267 = vmatpush.bf16.msra.mxu0 %v4988
    %5268 = vmatpush.bf16.msra.mxu0 %v4984
    %5269 = vmatpush.bf16.msra.mxu0 %v4980
    %5270 = vmatpush.bf16.msra.mxu0 %v4976
    %5271 = vmatpush.bf16.msra.mxu0 %v4972
    %5272 = vmatmul.bf16.gmra.mxu0 %v4349
    %v5273 = vpop.f32.mrf.mxu0
    %v5274 = vadd.f32 %v5255, %v5273
    %v5275 = vpop.f32.mrf.mxu0
    %v5276 = vadd.f32 %v5257, %v5275
    %5277 = vmatmul.bf16.gmra.mxu0 %v4357
    %v5278 = vpop.f32.mrf.mxu0
    %v5279 = vadd.f32 %v5260, %v5278
    %v5280 = vpop.f32.mrf.mxu0
    %v5281 = vadd.f32 %v5262, %v5280
    %5282 = vdwg.mxu0
    %5283 = vmatpush.bf16.msra.mxu0 %v4905
    %5284 = vmatpush.bf16.msra.mxu0 %v4901
    %5285 = vmatpush.bf16.msra.mxu0 %v4897
    %5286 = vmatpush.bf16.msra.mxu0 %v4893
    %5287 = vmatpush.bf16.msra.mxu0 %v4889
    %5288 = vmatpush.bf16.msra.mxu0 %v4885
    %5289 = vmatpush.bf16.msra.mxu0 %v4881
    %5290 = vmatpush.bf16.msra.mxu0 %v4877
    %5291 = vmatmul.bf16.gmra.mxu0 %v4346
    %v5292 = vpop.f32.mrf.mxu0
    %v5293 = vadd.f32 0.0, %v5292
    %v5294 = vpop.f32.mrf.mxu0
    %v5295 = vadd.f32 0.0, %v5294
    %5296 = vmatmul.bf16.gmra.mxu0 %v4354
    %v5297 = vpop.f32.mrf.mxu0
    %v5298 = vadd.f32 0.0, %v5297
    %v5299 = vpop.f32.mrf.mxu0
    %v5300 = vadd.f32 0.0, %v5299
    %5301 = vdwg.mxu0
    %5302 = vmatpush.bf16.msra.mxu0 %v4937
    %5303 = vmatpush.bf16.msra.mxu0 %v4933
    %5304 = vmatpush.bf16.msra.mxu0 %v4929
    %5305 = vmatpush.bf16.msra.mxu0 %v4925
    %5306 = vmatpush.bf16.msra.mxu0 %v4921
    %5307 = vmatpush.bf16.msra.mxu0 %v4917
    %5308 = vmatpush.bf16.msra.mxu0 %v4913
    %5309 = vmatpush.bf16.msra.mxu0 %v4909
    %5310 = vmatmul.bf16.gmra.mxu0 %v4347
    %v5311 = vpop.f32.mrf.mxu0
    %v5312 = vadd.f32 %v5293, %v5311
    %v5313 = vpop.f32.mrf.mxu0
    %v5314 = vadd.f32 %v5295, %v5313
    %5315 = vmatmul.bf16.gmra.mxu0 %v4355
    %v5316 = vpop.f32.mrf.mxu0
    %v5317 = vadd.f32 %v5298, %v5316
    %v5318 = vpop.f32.mrf.mxu0
    %v5319 = vadd.f32 %v5300, %v5318
    %5320 = vdwg.mxu0
    %5321 = vmatpush.bf16.msra.mxu0 %v4969
    %5322 = vmatpush.bf16.msra.mxu0 %v4965
    %5323 = vmatpush.bf16.msra.mxu0 %v4961
    %5324 = vmatpush.bf16.msra.mxu0 %v4957
    %5325 = vmatpush.bf16.msra.mxu0 %v4953
    %5326 = vmatpush.bf16.msra.mxu0 %v4949
    %5327 = vmatpush.bf16.msra.mxu0 %v4945
    %5328 = vmatpush.bf16.msra.mxu0 %v4941
    %5329 = vmatmul.bf16.gmra.mxu0 %v4348
    %v5330 = vpop.f32.mrf.mxu0
    %v5331 = vadd.f32 %v5312, %v5330
    %v5332 = vpop.f32.mrf.mxu0
    %v5333 = vadd.f32 %v5314, %v5332
    %5334 = vmatmul.bf16.gmra.mxu0 %v4356
    %v5335 = vpop.f32.mrf.mxu0
    %v5336 = vadd.f32 %v5317, %v5335
    %v5337 = vpop.f32.mrf.mxu0
    %v5338 = vadd.f32 %v5319, %v5337
    %5339 = vdwg.mxu0
    %5340 = vmatpush.bf16.msra.mxu0 %v5001
    %5341 = vmatpush.bf16.msra.mxu0 %v4997
    %5342 = vmatpush.bf16.msra.mxu0 %v4993
    %5343 = vmatpush.bf16.msra.mxu0 %v4989
    %5344 = vmatpush.bf16.msra.mxu0 %v4985
    %5345 = vmatpush.bf16.msra.mxu0 %v4981
    %5346 = vmatpush.bf16.msra.mxu0 %v4977
    %5347 = vmatpush.bf16.msra.mxu0 %v4973
    %5348 = vmatmul.bf16.gmra.mxu0 %v4349
    %v5349 = vpop.f32.mrf.mxu0
    %v5350 = vadd.f32 %v5331, %v5349
    %v5351 = vpop.f32.mrf.mxu0
    %v5352 = vadd.f32 %v5333, %v5351
    %5353 = vmatmul.bf16.gmra.mxu0 %v4357
    %v5354 = vpop.f32.mrf.mxu0
    %v5355 = vadd.f32 %v5336, %v5354
    %v5356 = vpop.f32.mrf.mxu0
    %v5357 = vadd.f32 %v5338, %v5356
    %5358 = vdwg.mxu0
    %5359 = vmatpush.bf16.msra.mxu0 %v4906
    %5360 = vmatpush.bf16.msra.mxu0 %v4902
    %5361 = vmatpush.bf16.msra.mxu0 %v4898
    %5362 = vmatpush.bf16.msra.mxu0 %v4894
    %5363 = vmatpush.bf16.msra.mxu0 %v4890
    %5364 = vmatpush.bf16.msra.mxu0 %v4886
    %5365 = vmatpush.bf16.msra.mxu0 %v4882
    %5366 = vmatpush.bf16.msra.mxu0 %v4878
    %5367 = vmatmul.bf16.gmra.mxu0 %v4346
    %v5368 = vpop.f32.mrf.mxu0
    %v5369 = vadd.f32 0.0, %v5368
    %v5370 = vpop.f32.mrf.mxu0
    %v5371 = vadd.f32 0.0, %v5370
    %5372 = vmatmul.bf16.gmra.mxu0 %v4354
    %v5373 = vpop.f32.mrf.mxu0
    %v5374 = vadd.f32 0.0, %v5373
    %v5375 = vpop.f32.mrf.mxu0
    %v5376 = vadd.f32 0.0, %v5375
    %5377 = vdwg.mxu0
    %5378 = vmatpush.bf16.msra.mxu0 %v4938
    %5379 = vmatpush.bf16.msra.mxu0 %v4934
    %5380 = vmatpush.bf16.msra.mxu0 %v4930
    %5381 = vmatpush.bf16.msra.mxu0 %v4926
    %5382 = vmatpush.bf16.msra.mxu0 %v4922
    %5383 = vmatpush.bf16.msra.mxu0 %v4918
    %5384 = vmatpush.bf16.msra.mxu0 %v4914
    %5385 = vmatpush.bf16.msra.mxu0 %v4910
    %5386 = vmatmul.bf16.gmra.mxu0 %v4347
    %v5387 = vpop.f32.mrf.mxu0
    %v5388 = vadd.f32 %v5369, %v5387
    %v5389 = vpop.f32.mrf.mxu0
    %v5390 = vadd.f32 %v5371, %v5389
    %5391 = vmatmul.bf16.gmra.mxu0 %v4355
    %v5392 = vpop.f32.mrf.mxu0
    %v5393 = vadd.f32 %v5374, %v5392
    %v5394 = vpop.f32.mrf.mxu0
    %v5395 = vadd.f32 %v5376, %v5394
    %5396 = vdwg.mxu0
    %5397 = vmatpush.bf16.msra.mxu0 %v4970
    %5398 = vmatpush.bf16.msra.mxu0 %v4966
    %5399 = vmatpush.bf16.msra.mxu0 %v4962
    %5400 = vmatpush.bf16.msra.mxu0 %v4958
    %5401 = vmatpush.bf16.msra.mxu0 %v4954
    %5402 = vmatpush.bf16.msra.mxu0 %v4950
    %5403 = vmatpush.bf16.msra.mxu0 %v4946
    %5404 = vmatpush.bf16.msra.mxu0 %v4942
    %5405 = vmatmul.bf16.gmra.mxu0 %v4348
    %v5406 = vpop.f32.mrf.mxu0
    %v5407 = vadd.f32 %v5388, %v5406
    %v5408 = vpop.f32.mrf.mxu0
    %v5409 = vadd.f32 %v5390, %v5408
    %5410 = vmatmul.bf16.gmra.mxu0 %v4356
    %v5411 = vpop.f32.mrf.mxu0
    %v5412 = vadd.f32 %v5393, %v5411
    %v5413 = vpop.f32.mrf.mxu0
    %v5414 = vadd.f32 %v5395, %v5413
    %5415 = vdwg.mxu0
    %5416 = vmatpush.bf16.msra.mxu0 %v5002
    %5417 = vmatpush.bf16.msra.mxu0 %v4998
    %5418 = vmatpush.bf16.msra.mxu0 %v4994
    %5419 = vmatpush.bf16.msra.mxu0 %v4990
    %5420 = vmatpush.bf16.msra.mxu0 %v4986
    %5421 = vmatpush.bf16.msra.mxu0 %v4982
    %5422 = vmatpush.bf16.msra.mxu0 %v4978
    %5423 = vmatpush.bf16.msra.mxu0 %v4974
    %5424 = vmatmul.bf16.gmra.mxu0 %v4349
    %v5425 = vpop.f32.mrf.mxu0
    %v5426 = vadd.f32 %v5407, %v5425
    %v5427 = vpop.f32.mrf.mxu0
    %v5428 = vadd.f32 %v5409, %v5427
    %5429 = vmatmul.bf16.gmra.mxu0 %v4357
    %v5430 = vpop.f32.mrf.mxu0
    %v5431 = vadd.f32 %v5412, %v5430
    %v5432 = vpop.f32.mrf.mxu0
    %v5433 = vadd.f32 %v5414, %v5432
    %5434 = vdwg.mxu0
    %v5563 = vunpack.c.l.b16 %v4218
    %v5564 = vunpack.c.h.b16 %v4218
    %v5565 = vunpack.c.l.b16 %v4219
    %v5566 = vunpack.c.h.b16 %v4219
    %v5567 = vunpack.c.l.b16 %v4220
    %v5568 = vunpack.c.h.b16 %v4220
    %v5569 = vunpack.c.l.b16 %v4221
    %v5570 = vunpack.c.h.b16 %v4221
    %v5571 = vunpack.c.l.b16 %v4222
    %v5572 = vunpack.c.h.b16 %v4222
    %v5573 = vunpack.c.l.b16 %v4223
    %v5574 = vunpack.c.h.b16 %v4223
    %v5575 = vunpack.c.l.b16 %v4224
    %v5576 = vunpack.c.h.b16 %v4224
    %v5577 = vunpack.c.l.b16 %v4225
    %v5578 = vunpack.c.h.b16 %v4225
    %v5579 = vunpack.c.l.b16 %v4226
    %v5580 = vunpack.c.h.b16 %v4226
    %v5581 = vunpack.c.l.b16 %v4227
    %v5582 = vunpack.c.h.b16 %v4227
    %v5583 = vunpack.c.l.b16 %v4228
    %v5584 = vunpack.c.h.b16 %v4228
    %v5585 = vunpack.c.l.b16 %v4229
    %v5586 = vunpack.c.h.b16 %v4229
    %v5587 = vunpack.c.l.b16 %v4230
    %v5588 = vunpack.c.h.b16 %v4230
    %v5589 = vunpack.c.l.b16 %v4231
    %v5590 = vunpack.c.h.b16 %v4231
    %v5591 = vunpack.c.l.b16 %v4232
    %v5592 = vunpack.c.h.b16 %v4232
    %v5593 = vunpack.c.l.b16 %v4233
    %v5594 = vunpack.c.h.b16 %v4233
    %v5595 = vunpack.c.l.b16 %v4234
    %v5596 = vunpack.c.h.b16 %v4234
    %v5597 = vunpack.c.l.b16 %v4235
    %v5598 = vunpack.c.h.b16 %v4235
    %v5599 = vunpack.c.l.b16 %v4236
    %v5600 = vunpack.c.h.b16 %v4236
    %v5601 = vunpack.c.l.b16 %v4237
    %v5602 = vunpack.c.h.b16 %v4237
    %v5603 = vunpack.c.l.b16 %v4238
    %v5604 = vunpack.c.h.b16 %v4238
    %v5605 = vunpack.c.l.b16 %v4239
    %v5606 = vunpack.c.h.b16 %v4239
    %v5607 = vunpack.c.l.b16 %v4240
    %v5608 = vunpack.c.h.b16 %v4240
    %v5609 = vunpack.c.l.b16 %v4241
    %v5610 = vunpack.c.h.b16 %v4241
    %v5611 = vunpack.c.l.b16 %v4242
    %v5612 = vunpack.c.h.b16 %v4242
    %v5613 = vunpack.c.l.b16 %v4243
    %v5614 = vunpack.c.h.b16 %v4243
    %v5615 = vunpack.c.l.b16 %v4244
    %v5616 = vunpack.c.h.b16 %v4244
    %v5617 = vunpack.c.l.b16 %v4245
    %v5618 = vunpack.c.h.b16 %v4245
    %v5619 = vunpack.c.l.b16 %v4246
    %v5620 = vunpack.c.h.b16 %v4246
    %v5621 = vunpack.c.l.b16 %v4247
    %v5622 = vunpack.c.h.b16 %v4247
    %v5623 = vunpack.c.l.b16 %v4248
    %v5624 = vunpack.c.h.b16 %v4248
    %v5625 = vunpack.c.l.b16 %v4249
    %v5626 = vunpack.c.h.b16 %v4249
    %v5627 = vunpack.c.l.b16 %v4250
    %v5628 = vunpack.c.h.b16 %v4250
    %v5629 = vunpack.c.l.b16 %v4251
    %v5630 = vunpack.c.h.b16 %v4251
    %v5631 = vunpack.c.l.b16 %v4252
    %v5632 = vunpack.c.h.b16 %v4252
    %v5633 = vunpack.c.l.b16 %v4253
    %v5634 = vunpack.c.h.b16 %v4253
    %v5635 = vunpack.c.l.b16 %v4254
    %v5636 = vunpack.c.h.b16 %v4254
    %v5637 = vunpack.c.l.b16 %v4255
    %v5638 = vunpack.c.h.b16 %v4255
    %v5639 = vunpack.c.l.b16 %v4256
    %v5640 = vunpack.c.h.b16 %v4256
    %v5641 = vunpack.c.l.b16 %v4257
    %v5642 = vunpack.c.h.b16 %v4257
    %v5643 = vunpack.c.l.b16 %v4258
    %v5644 = vunpack.c.h.b16 %v4258
    %v5645 = vunpack.c.l.b16 %v4259
    %v5646 = vunpack.c.h.b16 %v4259
    %v5647 = vunpack.c.l.b16 %v4260
    %v5648 = vunpack.c.h.b16 %v4260
    %v5649 = vunpack.c.l.b16 %v4261
    %v5650 = vunpack.c.h.b16 %v4261
    %v5651 = vunpack.c.l.b16 %v4262
    %v5652 = vunpack.c.h.b16 %v4262
    %v5653 = vunpack.c.l.b16 %v4263
    %v5654 = vunpack.c.h.b16 %v4263
    %v5655 = vunpack.c.l.b16 %v4264
    %v5656 = vunpack.c.h.b16 %v4264
    %v5657 = vunpack.c.l.b16 %v4265
    %v5658 = vunpack.c.h.b16 %v4265
    %v5659 = vunpack.c.l.b16 %v4266
    %v5660 = vunpack.c.h.b16 %v4266
    %v5661 = vunpack.c.l.b16 %v4267
    %v5662 = vunpack.c.h.b16 %v4267
    %v5663 = vunpack.c.l.b16 %v4268
    %v5664 = vunpack.c.h.b16 %v4268
    %v5665 = vunpack.c.l.b16 %v4269
    %v5666 = vunpack.c.h.b16 %v4269
    %v5667 = vunpack.c.l.b16 %v4270
    %v5668 = vunpack.c.h.b16 %v4270
    %v5669 = vunpack.c.l.b16 %v4271
    %v5670 = vunpack.c.h.b16 %v4271
    %v5671 = vunpack.c.l.b16 %v4272
    %v5672 = vunpack.c.h.b16 %v4272
    %v5673 = vunpack.c.l.b16 %v4273
    %v5674 = vunpack.c.h.b16 %v4273
    %v5675 = vunpack.c.l.b16 %v4274
    %v5676 = vunpack.c.h.b16 %v4274
    %v5677 = vunpack.c.l.b16 %v4275
    %v5678 = vunpack.c.h.b16 %v4275
    %v5679 = vunpack.c.l.b16 %v4276
    %v5680 = vunpack.c.h.b16 %v4276
    %v5681 = vunpack.c.l.b16 %v4277
    %v5682 = vunpack.c.h.b16 %v4277
    %v5683 = vunpack.c.l.b16 %v4278
    %v5684 = vunpack.c.h.b16 %v4278
    %v5685 = vunpack.c.l.b16 %v4279
    %v5686 = vunpack.c.h.b16 %v4279
    %v5687 = vunpack.c.l.b16 %v4280
    %v5688 = vunpack.c.h.b16 %v4280
    %v5689 = vunpack.c.l.b16 %v4281
    %v5690 = vunpack.c.h.b16 %v4281
    %v5691 = vunpack.c.l.b16 %v4282
    %v5692 = vunpack.c.h.b16 %v4282
    %v5693 = vunpack.c.l.b16 %v4283
    %v5694 = vunpack.c.h.b16 %v4283
    %v5695 = vunpack.c.l.b16 %v4284
    %v5696 = vunpack.c.h.b16 %v4284
    %v5697 = vunpack.c.l.b16 %v4285
    %v5698 = vunpack.c.h.b16 %v4285
    %v5699 = vunpack.c.l.b16 %v4286
    %v5700 = vunpack.c.h.b16 %v4286
    %v5701 = vunpack.c.l.b16 %v4287
    %v5702 = vunpack.c.h.b16 %v4287
    %v5703 = vunpack.c.l.b16 %v4288
    %v5704 = vunpack.c.h.b16 %v4288
    %v5705 = vunpack.c.l.b16 %v4289
    %v5706 = vunpack.c.h.b16 %v4289
    %v5707 = vunpack.c.l.b16 %v4290
    %v5708 = vunpack.c.h.b16 %v4290
    %v5709 = vunpack.c.l.b16 %v4291
    %v5710 = vunpack.c.h.b16 %v4291
    %v5711 = vunpack.c.l.b16 %v4292
    %v5712 = vunpack.c.h.b16 %v4292
    %v5713 = vunpack.c.l.b16 %v4293
    %v5714 = vunpack.c.h.b16 %v4293
    %v5715 = vunpack.c.l.b16 %v4294
    %v5716 = vunpack.c.h.b16 %v4294
    %v5717 = vunpack.c.l.b16 %v4295
    %v5718 = vunpack.c.h.b16 %v4295
    %v5719 = vunpack.c.l.b16 %v4296
    %v5720 = vunpack.c.h.b16 %v4296
    %v5721 = vunpack.c.l.b16 %v4297
    %v5722 = vunpack.c.h.b16 %v4297
    %v5723 = vunpack.c.l.b16 %v4298
    %v5724 = vunpack.c.h.b16 %v4298
    %v5725 = vunpack.c.l.b16 %v4299
    %v5726 = vunpack.c.h.b16 %v4299
    %v5727 = vunpack.c.l.b16 %v4300
    %v5728 = vunpack.c.h.b16 %v4300
    %v5729 = vunpack.c.l.b16 %v4301
    %v5730 = vunpack.c.h.b16 %v4301
    %v5731 = vunpack.c.l.b16 %v4302
    %v5732 = vunpack.c.h.b16 %v4302
    %v5733 = vunpack.c.l.b16 %v4303
    %v5734 = vunpack.c.h.b16 %v4303
    %v5735 = vunpack.c.l.b16 %v4304
    %v5736 = vunpack.c.h.b16 %v4304
    %v5737 = vunpack.c.l.b16 %v4305
    %v5738 = vunpack.c.h.b16 %v4305
    %v5739 = vunpack.c.l.b16 %v4306
    %v5740 = vunpack.c.h.b16 %v4306
    %v5741 = vunpack.c.l.b16 %v4307
    %v5742 = vunpack.c.h.b16 %v4307
    %v5743 = vunpack.c.l.b16 %v4308
    %v5744 = vunpack.c.h.b16 %v4308
    %v5745 = vunpack.c.l.b16 %v4309
    %v5746 = vunpack.c.h.b16 %v4309
    %v5747 = vunpack.c.l.b16 %v4310
    %v5748 = vunpack.c.h.b16 %v4310
    %v5749 = vunpack.c.l.b16 %v4311
    %v5750 = vunpack.c.h.b16 %v4311
    %v5751 = vunpack.c.l.b16 %v4312
    %v5752 = vunpack.c.h.b16 %v4312
    %v5753 = vunpack.c.l.b16 %v4313
    %v5754 = vunpack.c.h.b16 %v4313
    %v5755 = vunpack.c.l.b16 %v4314
    %v5756 = vunpack.c.h.b16 %v4314
    %v5757 = vunpack.c.l.b16 %v4315
    %v5758 = vunpack.c.h.b16 %v4315
    %v5759 = vunpack.c.l.b16 %v4316
    %v5760 = vunpack.c.h.b16 %v4316
    %v5761 = vunpack.c.l.b16 %v4317
    %v5762 = vunpack.c.h.b16 %v4317
    %v5763 = vunpack.c.l.b16 %v4318
    %v5764 = vunpack.c.h.b16 %v4318
    %v5765 = vunpack.c.l.b16 %v4319
    %v5766 = vunpack.c.h.b16 %v4319
    %v5767 = vunpack.c.l.b16 %v4320
    %v5768 = vunpack.c.h.b16 %v4320
    %v5769 = vunpack.c.l.b16 %v4321
    %v5770 = vunpack.c.h.b16 %v4321
    %v5771 = vunpack.c.l.b16 %v4322
    %v5772 = vunpack.c.h.b16 %v4322
    %v5773 = vunpack.c.l.b16 %v4323
    %v5774 = vunpack.c.h.b16 %v4323
    %v5775 = vunpack.c.l.b16 %v4324
    %v5776 = vunpack.c.h.b16 %v4324
    %v5777 = vunpack.c.l.b16 %v4325
    %v5778 = vunpack.c.h.b16 %v4325
    %v5779 = vunpack.c.l.b16 %v4326
    %v5780 = vunpack.c.h.b16 %v4326
    %v5781 = vunpack.c.l.b16 %v4327
    %v5782 = vunpack.c.h.b16 %v4327
    %v5783 = vunpack.c.l.b16 %v4328
    %v5784 = vunpack.c.h.b16 %v4328
    %v5785 = vunpack.c.l.b16 %v4329
    %v5786 = vunpack.c.h.b16 %v4329
    %v5787 = vunpack.c.l.b16 %v4330
    %v5788 = vunpack.c.h.b16 %v4330
    %v5789 = vunpack.c.l.b16 %v4331
    %v5790 = vunpack.c.h.b16 %v4331
    %v5791 = vunpack.c.l.b16 %v4332
    %v5792 = vunpack.c.h.b16 %v4332
    %v5793 = vunpack.c.l.b16 %v4333
    %v5794 = vunpack.c.h.b16 %v4333
    %v5795 = vunpack.c.l.b16 %v4334
    %v5796 = vunpack.c.h.b16 %v4334
    %v5797 = vunpack.c.l.b16 %v4335
    %v5798 = vunpack.c.h.b16 %v4335
    %v5799 = vunpack.c.l.b16 %v4336
    %v5800 = vunpack.c.h.b16 %v4336
    %v5801 = vunpack.c.l.b16 %v4337
    %v5802 = vunpack.c.h.b16 %v4337
    %v5803 = vunpack.c.l.b16 %v4338
    %v5804 = vunpack.c.h.b16 %v4338
    %v5805 = vunpack.c.l.b16 %v4339
    %v5806 = vunpack.c.h.b16 %v4339
    %v5807 = vunpack.c.l.b16 %v4340
    %v5808 = vunpack.c.h.b16 %v4340
    %v5809 = vunpack.c.l.b16 %v4341
    %v5810 = vunpack.c.h.b16 %v4341
    %v5811 = vunpack.c.l.b16 %v4342
    %v5812 = vunpack.c.h.b16 %v4342
    %v5813 = vunpack.c.l.b16 %v4343
    %v5814 = vunpack.c.h.b16 %v4343
    %v5815 = vunpack.c.l.b16 %v4344
    %v5816 = vunpack.c.h.b16 %v4344
    %v5817 = vunpack.c.l.b16 %v4345
    %v5818 = vunpack.c.h.b16 %v4345
    %v5819 = vpack.c.b16 %v5567, %v5563
    %v5820 = vpack.c.b16 %v5568, %v5564
    %v5821 = vpack.c.b16 %v5569, %v5565
    %v5822 = vpack.c.b16 %v5570, %v5566
    %v5823 = vpack.c.b16 %v5575, %v5571
    %v5824 = vpack.c.b16 %v5576, %v5572
    %v5825 = vpack.c.b16 %v5577, %v5573
    %v5826 = vpack.c.b16 %v5578, %v5574
    %v5827 = vpack.c.b16 %v5583, %v5579
    %v5828 = vpack.c.b16 %v5584, %v5580
    %v5829 = vpack.c.b16 %v5585, %v5581
    %v5830 = vpack.c.b16 %v5586, %v5582
    %v5831 = vpack.c.b16 %v5591, %v5587
    %v5832 = vpack.c.b16 %v5592, %v5588
    %v5833 = vpack.c.b16 %v5593, %v5589
    %v5834 = vpack.c.b16 %v5594, %v5590
    %v5835 = vpack.c.b16 %v5599, %v5595
    %v5836 = vpack.c.b16 %v5600, %v5596
    %v5837 = vpack.c.b16 %v5601, %v5597
    %v5838 = vpack.c.b16 %v5602, %v5598
    %v5839 = vpack.c.b16 %v5607, %v5603
    %v5840 = vpack.c.b16 %v5608, %v5604
    %v5841 = vpack.c.b16 %v5609, %v5605
    %v5842 = vpack.c.b16 %v5610, %v5606
    %v5843 = vpack.c.b16 %v5615, %v5611
    %v5844 = vpack.c.b16 %v5616, %v5612
    %v5845 = vpack.c.b16 %v5617, %v5613
    %v5846 = vpack.c.b16 %v5618, %v5614
    %v5847 = vpack.c.b16 %v5623, %v5619
    %v5848 = vpack.c.b16 %v5624, %v5620
    %v5849 = vpack.c.b16 %v5625, %v5621
    %v5850 = vpack.c.b16 %v5626, %v5622
    %v5851 = vpack.c.b16 %v5631, %v5627
    %v5852 = vpack.c.b16 %v5632, %v5628
    %v5853 = vpack.c.b16 %v5633, %v5629
    %v5854 = vpack.c.b16 %v5634, %v5630
    %v5855 = vpack.c.b16 %v5639, %v5635
    %v5856 = vpack.c.b16 %v5640, %v5636
    %v5857 = vpack.c.b16 %v5641, %v5637
    %v5858 = vpack.c.b16 %v5642, %v5638
    %v5859 = vpack.c.b16 %v5647, %v5643
    %v5860 = vpack.c.b16 %v5648, %v5644
    %v5861 = vpack.c.b16 %v5649, %v5645
    %v5862 = vpack.c.b16 %v5650, %v5646
    %v5863 = vpack.c.b16 %v5655, %v5651
    %v5864 = vpack.c.b16 %v5656, %v5652
    %v5865 = vpack.c.b16 %v5657, %v5653
    %v5866 = vpack.c.b16 %v5658, %v5654
    %v5867 = vpack.c.b16 %v5663, %v5659
    %v5868 = vpack.c.b16 %v5664, %v5660
    %v5869 = vpack.c.b16 %v5665, %v5661
    %v5870 = vpack.c.b16 %v5666, %v5662
    %v5871 = vpack.c.b16 %v5671, %v5667
    %v5872 = vpack.c.b16 %v5672, %v5668
    %v5873 = vpack.c.b16 %v5673, %v5669
    %v5874 = vpack.c.b16 %v5674, %v5670
    %v5875 = vpack.c.b16 %v5679, %v5675
    %v5876 = vpack.c.b16 %v5680, %v5676
    %v5877 = vpack.c.b16 %v5681, %v5677
    %v5878 = vpack.c.b16 %v5682, %v5678
    %v5879 = vpack.c.b16 %v5687, %v5683
    %v5880 = vpack.c.b16 %v5688, %v5684
    %v5881 = vpack.c.b16 %v5689, %v5685
    %v5882 = vpack.c.b16 %v5690, %v5686
    %v5883 = vpack.c.b16 %v5695, %v5691
    %v5884 = vpack.c.b16 %v5696, %v5692
    %v5885 = vpack.c.b16 %v5697, %v5693
    %v5886 = vpack.c.b16 %v5698, %v5694
    %v5887 = vpack.c.b16 %v5703, %v5699
    %v5888 = vpack.c.b16 %v5704, %v5700
    %v5889 = vpack.c.b16 %v5705, %v5701
    %v5890 = vpack.c.b16 %v5706, %v5702
    %v5891 = vpack.c.b16 %v5711, %v5707
    %v5892 = vpack.c.b16 %v5712, %v5708
    %v5893 = vpack.c.b16 %v5713, %v5709
    %v5894 = vpack.c.b16 %v5714, %v5710
    %v5895 = vpack.c.b16 %v5719, %v5715
    %v5896 = vpack.c.b16 %v5720, %v5716
    %v5897 = vpack.c.b16 %v5721, %v5717
    %v5898 = vpack.c.b16 %v5722, %v5718
    %v5899 = vpack.c.b16 %v5727, %v5723
    %v5900 = vpack.c.b16 %v5728, %v5724
    %v5901 = vpack.c.b16 %v5729, %v5725
    %v5902 = vpack.c.b16 %v5730, %v5726
    %v5903 = vpack.c.b16 %v5735, %v5731
    %v5904 = vpack.c.b16 %v5736, %v5732
    %v5905 = vpack.c.b16 %v5737, %v5733
    %v5906 = vpack.c.b16 %v5738, %v5734
    %v5907 = vpack.c.b16 %v5743, %v5739
    %v5908 = vpack.c.b16 %v5744, %v5740
    %v5909 = vpack.c.b16 %v5745, %v5741
    %v5910 = vpack.c.b16 %v5746, %v5742
    %v5911 = vpack.c.b16 %v5751, %v5747
    %v5912 = vpack.c.b16 %v5752, %v5748
    %v5913 = vpack.c.b16 %v5753, %v5749
    %v5914 = vpack.c.b16 %v5754, %v5750
    %v5915 = vpack.c.b16 %v5759, %v5755
    %v5916 = vpack.c.b16 %v5760, %v5756
    %v5917 = vpack.c.b16 %v5761, %v5757
    %v5918 = vpack.c.b16 %v5762, %v5758
    %v5919 = vpack.c.b16 %v5767, %v5763
    %v5920 = vpack.c.b16 %v5768, %v5764
    %v5921 = vpack.c.b16 %v5769, %v5765
    %v5922 = vpack.c.b16 %v5770, %v5766
    %v5923 = vpack.c.b16 %v5775, %v5771
    %v5924 = vpack.c.b16 %v5776, %v5772
    %v5925 = vpack.c.b16 %v5777, %v5773
    %v5926 = vpack.c.b16 %v5778, %v5774
    %v5927 = vpack.c.b16 %v5783, %v5779
    %v5928 = vpack.c.b16 %v5784, %v5780
    %v5929 = vpack.c.b16 %v5785, %v5781
    %v5930 = vpack.c.b16 %v5786, %v5782
    %v5931 = vpack.c.b16 %v5791, %v5787
    %v5932 = vpack.c.b16 %v5792, %v5788
    %v5933 = vpack.c.b16 %v5793, %v5789
    %v5934 = vpack.c.b16 %v5794, %v5790
    %v5935 = vpack.c.b16 %v5799, %v5795
    %v5936 = vpack.c.b16 %v5800, %v5796
    %v5937 = vpack.c.b16 %v5801, %v5797
    %v5938 = vpack.c.b16 %v5802, %v5798
    %v5939 = vpack.c.b16 %v5807, %v5803
    %v5940 = vpack.c.b16 %v5808, %v5804
    %v5941 = vpack.c.b16 %v5809, %v5805
    %v5942 = vpack.c.b16 %v5810, %v5806
    %v5943 = vpack.c.b16 %v5815, %v5811
    %v5944 = vpack.c.b16 %v5816, %v5812
    %v5945 = vpack.c.b16 %v5817, %v5813
    %v5946 = vpack.c.b16 %v5818, %v5814
    %6075 = vmatpush.bf16.msra.mxu0 %v5847
    %6076 = vmatpush.bf16.msra.mxu0 %v5843
    %6077 = vmatpush.bf16.msra.mxu0 %v5839
    %6078 = vmatpush.bf16.msra.mxu0 %v5835
    %6079 = vmatpush.bf16.msra.mxu0 %v5831
    %6080 = vmatpush.bf16.msra.mxu0 %v5827
    %6081 = vmatpush.bf16.msra.mxu0 %v5823
    %6082 = vmatpush.bf16.msra.mxu0 %v5819
    %6083 = vmatmul.bf16.gmra.mxu0 %v4064
    %v6084 = vpop.f32.mrf.mxu0
    %v6085 = vadd.f32 %v5198, %v6084
    %v6086 = vpop.f32.mrf.mxu0
    %v6087 = vadd.f32 %v5200, %v6086
    %6088 = vmatmul.bf16.gmra.mxu0 %v4162
    %v6089 = vpop.f32.mrf.mxu0
    %v6090 = vadd.f32 %v5203, %v6089
    %v6091 = vpop.f32.mrf.mxu0
    %v6092 = vadd.f32 %v5205, %v6091
    %6093 = vdwg.mxu0
    %6094 = vmatpush.bf16.msra.mxu0 %v5879
    %6095 = vmatpush.bf16.msra.mxu0 %v5875
    %6096 = vmatpush.bf16.msra.mxu0 %v5871
    %6097 = vmatpush.bf16.msra.mxu0 %v5867
    %6098 = vmatpush.bf16.msra.mxu0 %v5863
    %6099 = vmatpush.bf16.msra.mxu0 %v5859
    %6100 = vmatpush.bf16.msra.mxu0 %v5855
    %6101 = vmatpush.bf16.msra.mxu0 %v5851
    %6102 = vmatmul.bf16.gmra.mxu0 %v4081
    %v6103 = vpop.f32.mrf.mxu0
    %v6104 = vadd.f32 %v6085, %v6103
    %v6105 = vpop.f32.mrf.mxu0
    %v6106 = vadd.f32 %v6087, %v6105
    %6107 = vmatmul.bf16.gmra.mxu0 %v4179
    %v6108 = vpop.f32.mrf.mxu0
    %v6109 = vadd.f32 %v6090, %v6108
    %v6110 = vpop.f32.mrf.mxu0
    %v6111 = vadd.f32 %v6092, %v6110
    %6112 = vdwg.mxu0
    %6113 = vmatpush.bf16.msra.mxu0 %v5911
    %6114 = vmatpush.bf16.msra.mxu0 %v5907
    %6115 = vmatpush.bf16.msra.mxu0 %v5903
    %6116 = vmatpush.bf16.msra.mxu0 %v5899
    %6117 = vmatpush.bf16.msra.mxu0 %v5895
    %6118 = vmatpush.bf16.msra.mxu0 %v5891
    %6119 = vmatpush.bf16.msra.mxu0 %v5887
    %6120 = vmatpush.bf16.msra.mxu0 %v5883
    %6121 = vmatmul.bf16.gmra.mxu0 %v4098
    %v6122 = vpop.f32.mrf.mxu0
    %v6123 = vadd.f32 %v6104, %v6122
    %v6124 = vpop.f32.mrf.mxu0
    %v6125 = vadd.f32 %v6106, %v6124
    %6126 = vmatmul.bf16.gmra.mxu0 %v4196
    %v6127 = vpop.f32.mrf.mxu0
    %v6128 = vadd.f32 %v6109, %v6127
    %v6129 = vpop.f32.mrf.mxu0
    %v6130 = vadd.f32 %v6111, %v6129
    %6131 = vdwg.mxu0
    %6132 = vmatpush.bf16.msra.mxu0 %v5943
    %6133 = vmatpush.bf16.msra.mxu0 %v5939
    %6134 = vmatpush.bf16.msra.mxu0 %v5935
    %6135 = vmatpush.bf16.msra.mxu0 %v5931
    %6136 = vmatpush.bf16.msra.mxu0 %v5927
    %6137 = vmatpush.bf16.msra.mxu0 %v5923
    %6138 = vmatpush.bf16.msra.mxu0 %v5919
    %6139 = vmatpush.bf16.msra.mxu0 %v5915
    %6140 = vmatmul.bf16.gmra.mxu0 %v4115
    %v6141 = vpop.f32.mrf.mxu0
    %v6142 = vadd.f32 %v6123, %v6141
    %v6143 = vpop.f32.mrf.mxu0
    %v6144 = vadd.f32 %v6125, %v6143
    %6145 = vmatmul.bf16.gmra.mxu0 %v4213
    %v6146 = vpop.f32.mrf.mxu0
    %v6147 = vadd.f32 %v6128, %v6146
    %v6148 = vpop.f32.mrf.mxu0
    %v6149 = vadd.f32 %v6130, %v6148
    %6150 = vdwg.mxu0
    %6151 = vmatpush.bf16.msra.mxu0 %v5848
    %6152 = vmatpush.bf16.msra.mxu0 %v5844
    %6153 = vmatpush.bf16.msra.mxu0 %v5840
    %6154 = vmatpush.bf16.msra.mxu0 %v5836
    %6155 = vmatpush.bf16.msra.mxu0 %v5832
    %6156 = vmatpush.bf16.msra.mxu0 %v5828
    %6157 = vmatpush.bf16.msra.mxu0 %v5824
    %6158 = vmatpush.bf16.msra.mxu0 %v5820
    %6159 = vmatmul.bf16.gmra.mxu0 %v4064
    %v6160 = vpop.f32.mrf.mxu0
    %v6161 = vadd.f32 %v5274, %v6160
    %v6162 = vpop.f32.mrf.mxu0
    %v6163 = vadd.f32 %v5276, %v6162
    %6164 = vmatmul.bf16.gmra.mxu0 %v4162
    %v6165 = vpop.f32.mrf.mxu0
    %v6166 = vadd.f32 %v5279, %v6165
    %v6167 = vpop.f32.mrf.mxu0
    %v6168 = vadd.f32 %v5281, %v6167
    %6169 = vdwg.mxu0
    %6170 = vmatpush.bf16.msra.mxu0 %v5880
    %6171 = vmatpush.bf16.msra.mxu0 %v5876
    %6172 = vmatpush.bf16.msra.mxu0 %v5872
    %6173 = vmatpush.bf16.msra.mxu0 %v5868
    %6174 = vmatpush.bf16.msra.mxu0 %v5864
    %6175 = vmatpush.bf16.msra.mxu0 %v5860
    %6176 = vmatpush.bf16.msra.mxu0 %v5856
    %6177 = vmatpush.bf16.msra.mxu0 %v5852
    %6178 = vmatmul.bf16.gmra.mxu0 %v4081
    %v6179 = vpop.f32.mrf.mxu0
    %v6180 = vadd.f32 %v6161, %v6179
    %v6181 = vpop.f32.mrf.mxu0
    %v6182 = vadd.f32 %v6163, %v6181
    %6183 = vmatmul.bf16.gmra.mxu0 %v4179
    %v6184 = vpop.f32.mrf.mxu0
    %v6185 = vadd.f32 %v6166, %v6184
    %v6186 = vpop.f32.mrf.mxu0
    %v6187 = vadd.f32 %v6168, %v6186
    %6188 = vdwg.mxu0
    %6189 = vmatpush.bf16.msra.mxu0 %v5912
    %6190 = vmatpush.bf16.msra.mxu0 %v5908
    %6191 = vmatpush.bf16.msra.mxu0 %v5904
    %6192 = vmatpush.bf16.msra.mxu0 %v5900
    %6193 = vmatpush.bf16.msra.mxu0 %v5896
    %6194 = vmatpush.bf16.msra.mxu0 %v5892
    %6195 = vmatpush.bf16.msra.mxu0 %v5888
    %6196 = vmatpush.bf16.msra.mxu0 %v5884
    %6197 = vmatmul.bf16.gmra.mxu0 %v4098
    %v6198 = vpop.f32.mrf.mxu0
    %v6199 = vadd.f32 %v6180, %v6198
    %v6200 = vpop.f32.mrf.mxu0
    %v6201 = vadd.f32 %v6182, %v6200
    %6202 = vmatmul.bf16.gmra.mxu0 %v4196
    %v6203 = vpop.f32.mrf.mxu0
    %v6204 = vadd.f32 %v6185, %v6203
    %v6205 = vpop.f32.mrf.mxu0
    %v6206 = vadd.f32 %v6187, %v6205
    %6207 = vdwg.mxu0
    %6208 = vmatpush.bf16.msra.mxu0 %v5944
    %6209 = vmatpush.bf16.msra.mxu0 %v5940
    %6210 = vmatpush.bf16.msra.mxu0 %v5936
    %6211 = vmatpush.bf16.msra.mxu0 %v5932
    %6212 = vmatpush.bf16.msra.mxu0 %v5928
    %6213 = vmatpush.bf16.msra.mxu0 %v5924
    %6214 = vmatpush.bf16.msra.mxu0 %v5920
    %6215 = vmatpush.bf16.msra.mxu0 %v5916
    %6216 = vmatmul.bf16.gmra.mxu0 %v4115
    %v6217 = vpop.f32.mrf.mxu0
    %v6218 = vadd.f32 %v6199, %v6217
    %v6219 = vpop.f32.mrf.mxu0
    %v6220 = vadd.f32 %v6201, %v6219
    %6221 = vmatmul.bf16.gmra.mxu0 %v4213
    %v6222 = vpop.f32.mrf.mxu0
    %v6223 = vadd.f32 %v6204, %v6222
    %v6224 = vpop.f32.mrf.mxu0
    %v6225 = vadd.f32 %v6206, %v6224
    %6226 = vdwg.mxu0
    %6227 = vmatpush.bf16.msra.mxu0 %v5849
    %6228 = vmatpush.bf16.msra.mxu0 %v5845
    %6229 = vmatpush.bf16.msra.mxu0 %v5841
    %6230 = vmatpush.bf16.msra.mxu0 %v5837
    %6231 = vmatpush.bf16.msra.mxu0 %v5833
    %6232 = vmatpush.bf16.msra.mxu0 %v5829
    %6233 = vmatpush.bf16.msra.mxu0 %v5825
    %6234 = vmatpush.bf16.msra.mxu0 %v5821
    %6235 = vmatmul.bf16.gmra.mxu0 %v4064
    %v6236 = vpop.f32.mrf.mxu0
    %v6237 = vadd.f32 %v5350, %v6236
    %v6238 = vpop.f32.mrf.mxu0
    %v6239 = vadd.f32 %v5352, %v6238
    %6240 = vmatmul.bf16.gmra.mxu0 %v4162
    %v6241 = vpop.f32.mrf.mxu0
    %v6242 = vadd.f32 %v5355, %v6241
    %v6243 = vpop.f32.mrf.mxu0
    %v6244 = vadd.f32 %v5357, %v6243
    %6245 = vdwg.mxu0
    %6246 = vmatpush.bf16.msra.mxu0 %v5881
    %6247 = vmatpush.bf16.msra.mxu0 %v5877
    %6248 = vmatpush.bf16.msra.mxu0 %v5873
    %6249 = vmatpush.bf16.msra.mxu0 %v5869
    %6250 = vmatpush.bf16.msra.mxu0 %v5865
    %6251 = vmatpush.bf16.msra.mxu0 %v5861
    %6252 = vmatpush.bf16.msra.mxu0 %v5857
    %6253 = vmatpush.bf16.msra.mxu0 %v5853
    %6254 = vmatmul.bf16.gmra.mxu0 %v4081
    %v6255 = vpop.f32.mrf.mxu0
    %v6256 = vadd.f32 %v6237, %v6255
    %v6257 = vpop.f32.mrf.mxu0
    %v6258 = vadd.f32 %v6239, %v6257
    %6259 = vmatmul.bf16.gmra.mxu0 %v4179
    %v6260 = vpop.f32.mrf.mxu0
    %v6261 = vadd.f32 %v6242, %v6260
    %v6262 = vpop.f32.mrf.mxu0
    %v6263 = vadd.f32 %v6244, %v6262
    %6264 = vdwg.mxu0
    %6265 = vmatpush.bf16.msra.mxu0 %v5913
    %6266 = vmatpush.bf16.msra.mxu0 %v5909
    %6267 = vmatpush.bf16.msra.mxu0 %v5905
    %6268 = vmatpush.bf16.msra.mxu0 %v5901
    %6269 = vmatpush.bf16.msra.mxu0 %v5897
    %6270 = vmatpush.bf16.msra.mxu0 %v5893
    %6271 = vmatpush.bf16.msra.mxu0 %v5889
    %6272 = vmatpush.bf16.msra.mxu0 %v5885
    %6273 = vmatmul.bf16.gmra.mxu0 %v4098
    %v6274 = vpop.f32.mrf.mxu0
    %v6275 = vadd.f32 %v6256, %v6274
    %v6276 = vpop.f32.mrf.mxu0
    %v6277 = vadd.f32 %v6258, %v6276
    %6278 = vmatmul.bf16.gmra.mxu0 %v4196
    %v6279 = vpop.f32.mrf.mxu0
    %v6280 = vadd.f32 %v6261, %v6279
    %v6281 = vpop.f32.mrf.mxu0
    %v6282 = vadd.f32 %v6263, %v6281
    %6283 = vdwg.mxu0
    %6284 = vmatpush.bf16.msra.mxu0 %v5945
    %6285 = vmatpush.bf16.msra.mxu0 %v5941
    %6286 = vmatpush.bf16.msra.mxu0 %v5937
    %6287 = vmatpush.bf16.msra.mxu0 %v5933
    %6288 = vmatpush.bf16.msra.mxu0 %v5929
    %6289 = vmatpush.bf16.msra.mxu0 %v5925
    %6290 = vmatpush.bf16.msra.mxu0 %v5921
    %6291 = vmatpush.bf16.msra.mxu0 %v5917
    %6292 = vmatmul.bf16.gmra.mxu0 %v4115
    %v6293 = vpop.f32.mrf.mxu0
    %v6294 = vadd.f32 %v6275, %v6293
    %v6295 = vpop.f32.mrf.mxu0
    %v6296 = vadd.f32 %v6277, %v6295
    %6297 = vmatmul.bf16.gmra.mxu0 %v4213
    %v6298 = vpop.f32.mrf.mxu0
    %v6299 = vadd.f32 %v6280, %v6298
    %v6300 = vpop.f32.mrf.mxu0
    %v6301 = vadd.f32 %v6282, %v6300
    %6302 = vdwg.mxu0
    %6303 = vmatpush.bf16.msra.mxu0 %v5850
    %6304 = vmatpush.bf16.msra.mxu0 %v5846
    %6305 = vmatpush.bf16.msra.mxu0 %v5842
    %6306 = vmatpush.bf16.msra.mxu0 %v5838
    %6307 = vmatpush.bf16.msra.mxu0 %v5834
    %6308 = vmatpush.bf16.msra.mxu0 %v5830
    %6309 = vmatpush.bf16.msra.mxu0 %v5826
    %6310 = vmatpush.bf16.msra.mxu0 %v5822
    %6311 = vmatmul.bf16.gmra.mxu0 %v4064
    %v6312 = vpop.f32.mrf.mxu0
    %v6313 = vadd.f32 %v5426, %v6312
    %v6314 = vpop.f32.mrf.mxu0
    %v6315 = vadd.f32 %v5428, %v6314
    %6316 = vmatmul.bf16.gmra.mxu0 %v4162
    %v6317 = vpop.f32.mrf.mxu0
    %v6318 = vadd.f32 %v5431, %v6317
    %v6319 = vpop.f32.mrf.mxu0
    %v6320 = vadd.f32 %v5433, %v6319
    %6321 = vdwg.mxu0
    %6322 = vmatpush.bf16.msra.mxu0 %v5882
    %6323 = vmatpush.bf16.msra.mxu0 %v5878
    %6324 = vmatpush.bf16.msra.mxu0 %v5874
    %6325 = vmatpush.bf16.msra.mxu0 %v5870
    %6326 = vmatpush.bf16.msra.mxu0 %v5866
    %6327 = vmatpush.bf16.msra.mxu0 %v5862
    %6328 = vmatpush.bf16.msra.mxu0 %v5858
    %6329 = vmatpush.bf16.msra.mxu0 %v5854
    %6330 = vmatmul.bf16.gmra.mxu0 %v4081
    %v6331 = vpop.f32.mrf.mxu0
    %v6332 = vadd.f32 %v6313, %v6331
    %v6333 = vpop.f32.mrf.mxu0
    %v6334 = vadd.f32 %v6315, %v6333
    %6335 = vmatmul.bf16.gmra.mxu0 %v4179
    %v6336 = vpop.f32.mrf.mxu0
    %v6337 = vadd.f32 %v6318, %v6336
    %v6338 = vpop.f32.mrf.mxu0
    %v6339 = vadd.f32 %v6320, %v6338
    %6340 = vdwg.mxu0
    %6341 = vmatpush.bf16.msra.mxu0 %v5914
    %6342 = vmatpush.bf16.msra.mxu0 %v5910
    %6343 = vmatpush.bf16.msra.mxu0 %v5906
    %6344 = vmatpush.bf16.msra.mxu0 %v5902
    %6345 = vmatpush.bf16.msra.mxu0 %v5898
    %6346 = vmatpush.bf16.msra.mxu0 %v5894
    %6347 = vmatpush.bf16.msra.mxu0 %v5890
    %6348 = vmatpush.bf16.msra.mxu0 %v5886
    %6349 = vmatmul.bf16.gmra.mxu0 %v4098
    %v6350 = vpop.f32.mrf.mxu0
    %v6351 = vadd.f32 %v6332, %v6350
    %v6352 = vpop.f32.mrf.mxu0
    %v6353 = vadd.f32 %v6334, %v6352
    %6354 = vmatmul.bf16.gmra.mxu0 %v4196
    %v6355 = vpop.f32.mrf.mxu0
    %v6356 = vadd.f32 %v6337, %v6355
    %v6357 = vpop.f32.mrf.mxu0
    %v6358 = vadd.f32 %v6339, %v6357
    %6359 = vdwg.mxu0
    %6360 = vmatpush.bf16.msra.mxu0 %v5946
    %6361 = vmatpush.bf16.msra.mxu0 %v5942
    %6362 = vmatpush.bf16.msra.mxu0 %v5938
    %6363 = vmatpush.bf16.msra.mxu0 %v5934
    %6364 = vmatpush.bf16.msra.mxu0 %v5930
    %6365 = vmatpush.bf16.msra.mxu0 %v5926
    %6366 = vmatpush.bf16.msra.mxu0 %v5922
    %6367 = vmatpush.bf16.msra.mxu0 %v5918
    %6368 = vmatmul.bf16.gmra.mxu0 %v4115
    %v6369 = vpop.f32.mrf.mxu0
    %v6370 = vadd.f32 %v6351, %v6369
    %v6371 = vpop.f32.mrf.mxu0
    %v6372 = vadd.f32 %v6353, %v6371
    %6373 = vmatmul.bf16.gmra.mxu0 %v4213
    %v6374 = vpop.f32.mrf.mxu0
    %v6375 = vadd.f32 %v6356, %v6374
    %v6376 = vpop.f32.mrf.mxu0
    %v6377 = vadd.f32 %v6358, %v6376
    %6378 = vdwg.mxu0
    %v6379 = vld [vmem:[#allocation2 + $0x20] sm:$0xff]
    %v6380 = vld [vmem:[#allocation2 + $0x28] sm:$0xff]
    %v6381 = vld [vmem:[#allocation2 + $0x30] sm:$0xff]
    %v6382 = vld [vmem:[#allocation2 + $0x38] sm:$0xff]
    %v6383 = vld [vmem:[#allocation2 + $0x40] sm:$0x11]
    %v6384 = vld [vmem:[#allocation2 + $0x48] sm:$0x11]
    %v6385 = vld [vmem:[#allocation2 + $0x60] sm:$0xff]
    %v6386 = vld [vmem:[#allocation2 + $0x68] sm:$0xff]
    %v6387 = vld [vmem:[#allocation2 + $0x70] sm:$0xff]
    %v6388 = vld [vmem:[#allocation2 + $0x78] sm:$0xff]
    %v6389 = vld [vmem:[#allocation2 + $0x80] sm:$0x11]
    %v6390 = vld [vmem:[#allocation2 + $0x88] sm:$0x11]
    %v6397 = vunpack.c.l.b16 %v6379
    %v6398 = vunpack.c.h.b16 %v6379
    %v6399 = vunpack.c.l.b16 %v6380
    %v6400 = vunpack.c.h.b16 %v6380
    %v6401 = vunpack.c.l.b16 %v6381
    %v6402 = vunpack.c.h.b16 %v6381
    %v6403 = vunpack.c.l.b16 %v6382
    %v6404 = vunpack.c.h.b16 %v6382
    %v6405 = vunpack.c.l.b16 %v6383
    %v6406 = vunpack.c.h.b16 %v6383
    %v6407 = vunpack.c.l.b16 %v6384
    %v6408 = vunpack.c.h.b16 %v6384
    %v6409 = vpack.c.b16 %v6401, %v6397
    %v6410 = vpack.c.b16 %v6402, %v6398
    %v6411 = vpack.c.b16 %v6403, %v6399
    %v6412 = vpack.c.b16 %v6404, %v6400
    %v6413 = vpack.c.b16 %v6405, %v6405
    %v6414 = vpack.c.b16 %v6406, %v6406
    %v6415 = vpack.c.b16 %v6407, %v6407
    %v6416 = vpack.c.b16 %v6408, %v6408
    %v6418 = vshrl.u32 %v6409, 16
    %v6420 = vshll.u32 %v6409, 16
    %v6422 = vrot.slane %v6420, 1
    %v6423 = vor.u32 %v6418, %v6422
    %v6425 = vshll.u32 %v6413, 16
    %v6427 = vrot.slane %v6425, 1
    %v6428 = vsel %vm2560, %v6423, %v6427
    %v6430 = vshrl.u32 %v6410, 16
    %v6432 = vshll.u32 %v6410, 16
    %v6434 = vrot.slane %v6432, 1
    %v6435 = vor.u32 %v6430, %v6434
    %v6437 = vshll.u32 %v6414, 16
    %v6439 = vrot.slane %v6437, 1
    %v6440 = vsel %vm2560, %v6435, %v6439
    %v6442 = vshrl.u32 %v6411, 16
    %v6444 = vshll.u32 %v6411, 16
    %v6446 = vrot.slane %v6444, 1
    %v6447 = vor.u32 %v6442, %v6446
    %v6449 = vshll.u32 %v6415, 16
    %v6451 = vrot.slane %v6449, 1
    %v6452 = vsel %vm2560, %v6447, %v6451
    %v6454 = vshrl.u32 %v6412, 16
    %v6456 = vshll.u32 %v6412, 16
    %v6458 = vrot.slane %v6456, 1
    %v6459 = vor.u32 %v6454, %v6458
    %v6461 = vshll.u32 %v6416, 16
    %v6463 = vrot.slane %v6461, 1
    %v6464 = vsel %vm2560, %v6459, %v6463
    %v6475 = vunpack.c.l.b16 %v6385
    %v6476 = vunpack.c.h.b16 %v6385
    %v6477 = vunpack.c.l.b16 %v6386
    %v6478 = vunpack.c.h.b16 %v6386
    %v6479 = vunpack.c.l.b16 %v6387
    %v6480 = vunpack.c.h.b16 %v6387
    %v6481 = vunpack.c.l.b16 %v6388
    %v6482 = vunpack.c.h.b16 %v6388
    %v6483 = vunpack.c.l.b16 %v6389
    %v6484 = vunpack.c.h.b16 %v6389
    %v6485 = vunpack.c.l.b16 %v6390
    %v6486 = vunpack.c.h.b16 %v6390
    %v6487 = vpack.c.b16 %v6479, %v6475
    %v6488 = vpack.c.b16 %v6480, %v6476
    %v6489 = vpack.c.b16 %v6481, %v6477
    %v6490 = vpack.c.b16 %v6482, %v6478
    %v6491 = vpack.c.b16 %v6483, %v6483
    %v6492 = vpack.c.b16 %v6484, %v6484
    %v6493 = vpack.c.b16 %v6485, %v6485
    %v6494 = vpack.c.b16 %v6486, %v6486
    %v6496 = vshrl.u32 %v6487, 16
    %v6498 = vshll.u32 %v6487, 16
    %v6500 = vrot.slane %v6498, 1
    %v6501 = vor.u32 %v6496, %v6500
    %v6503 = vshll.u32 %v6491, 16
    %v6505 = vrot.slane %v6503, 1
    %v6506 = vsel %vm2560, %v6501, %v6505
    %v6508 = vshrl.u32 %v6488, 16
    %v6510 = vshll.u32 %v6488, 16
    %v6512 = vrot.slane %v6510, 1
    %v6513 = vor.u32 %v6508, %v6512
    %v6515 = vshll.u32 %v6492, 16
    %v6517 = vrot.slane %v6515, 1
    %v6518 = vsel %vm2560, %v6513, %v6517
    %v6520 = vshrl.u32 %v6489, 16
    %v6522 = vshll.u32 %v6489, 16
    %v6524 = vrot.slane %v6522, 1
    %v6525 = vor.u32 %v6520, %v6524
    %v6527 = vshll.u32 %v6493, 16
    %v6529 = vrot.slane %v6527, 1
    %v6530 = vsel %vm2560, %v6525, %v6529
    %v6532 = vshrl.u32 %v6490, 16
    %v6534 = vshll.u32 %v6490, 16
    %v6536 = vrot.slane %v6534, 1
    %v6537 = vor.u32 %v6532, %v6536
    %v6539 = vshll.u32 %v6494, 16
    %v6541 = vrot.slane %v6539, 1
    %v6542 = vsel %vm2560, %v6537, %v6541
    %s6547 = scalar_lea.vmem [#allocation3], 2048
    %v6548 = vld [vmem:[%s6547] sm:$0xff]
    %v6549 = vld [vmem:[%s6547 + $0x8] sm:$0xff]
    %v6550 = vld [vmem:[%s6547 + $0x10] sm:$0xff]
    %v6551 = vld [vmem:[%s6547 + $0x18] sm:$0xff]
    %v6552 = vld [vmem:[%s6547 + $0x20] sm:$0xff]
    %v6553 = vld [vmem:[%s6547 + $0x28] sm:$0xff]
    %v6554 = vld [vmem:[%s6547 + $0x30] sm:$0xff]
    %v6555 = vld [vmem:[%s6547 + $0x38] sm:$0xff]
    %v6556 = vld [vmem:[%s6547 + $0x40] sm:$0xff]
    %v6557 = vld [vmem:[%s6547 + $0x48] sm:$0xff]
    %v6558 = vld [vmem:[%s6547 + $0x50] sm:$0xff]
    %v6559 = vld [vmem:[%s6547 + $0x58] sm:$0xff]
    %v6560 = vld [vmem:[%s6547 + $0x60] sm:$0xff]
    %v6561 = vld [vmem:[%s6547 + $0x68] sm:$0xff]
    %v6562 = vld [vmem:[%s6547 + $0x70] sm:$0xff]
    %v6563 = vld [vmem:[%s6547 + $0x78] sm:$0xff]
    %v6564 = vld [vmem:[%s6547 + $0x80] sm:$0xff]
    %v6565 = vld [vmem:[%s6547 + $0x88] sm:$0xff]
    %v6566 = vld [vmem:[%s6547 + $0x90] sm:$0xff]
    %v6567 = vld [vmem:[%s6547 + $0x98] sm:$0xff]
    %v6568 = vld [vmem:[%s6547 + $0xa0] sm:$0xff]
    %v6569 = vld [vmem:[%s6547 + $0xa8] sm:$0xff]
    %v6570 = vld [vmem:[%s6547 + $0xb0] sm:$0xff]
    %v6571 = vld [vmem:[%s6547 + $0xb8] sm:$0xff]
    %v6572 = vld [vmem:[%s6547 + $0xc0] sm:$0xff]
    %v6573 = vld [vmem:[%s6547 + $0xc8] sm:$0xff]
    %v6574 = vld [vmem:[%s6547 + $0xd0] sm:$0xff]
    %v6575 = vld [vmem:[%s6547 + $0xd8] sm:$0xff]
    %v6576 = vld [vmem:[%s6547 + $0xe0] sm:$0xff]
    %v6577 = vld [vmem:[%s6547 + $0xe8] sm:$0xff]
    %v6578 = vld [vmem:[%s6547 + $0xf0] sm:$0xff]
    %v6579 = vld [vmem:[%s6547 + $0xf8] sm:$0xff]
    %v6580 = vld [vmem:[%s6547 + $0x100] sm:$0xff]
    %v6581 = vld [vmem:[%s6547 + $0x108] sm:$0xff]
    %v6582 = vld [vmem:[%s6547 + $0x110] sm:$0xff]
    %v6583 = vld [vmem:[%s6547 + $0x118] sm:$0xff]
    %v6584 = vld [vmem:[%s6547 + $0x120] sm:$0xff]
    %v6585 = vld [vmem:[%s6547 + $0x128] sm:$0xff]
    %v6586 = vld [vmem:[%s6547 + $0x130] sm:$0xff]
    %v6587 = vld [vmem:[%s6547 + $0x138] sm:$0xff]
    %v6588 = vld [vmem:[%s6547 + $0x140] sm:$0xff]
    %v6589 = vld [vmem:[%s6547 + $0x148] sm:$0xff]
    %v6590 = vld [vmem:[%s6547 + $0x150] sm:$0xff]
    %v6591 = vld [vmem:[%s6547 + $0x158] sm:$0xff]
    %v6592 = vld [vmem:[%s6547 + $0x160] sm:$0xff]
    %v6593 = vld [vmem:[%s6547 + $0x168] sm:$0xff]
    %v6594 = vld [vmem:[%s6547 + $0x170] sm:$0xff]
    %v6595 = vld [vmem:[%s6547 + $0x178] sm:$0xff]
    %v6596 = vld [vmem:[%s6547 + $0x180] sm:$0xff]
    %v6597 = vld [vmem:[%s6547 + $0x188] sm:$0xff]
    %v6598 = vld [vmem:[%s6547 + $0x190] sm:$0xff]
    %v6599 = vld [vmem:[%s6547 + $0x198] sm:$0xff]
    %v6600 = vld [vmem:[%s6547 + $0x1a0] sm:$0xff]
    %v6601 = vld [vmem:[%s6547 + $0x1a8] sm:$0xff]
    %v6602 = vld [vmem:[%s6547 + $0x1b0] sm:$0xff]
    %v6603 = vld [vmem:[%s6547 + $0x1b8] sm:$0xff]
    %v6604 = vld [vmem:[%s6547 + $0x1c0] sm:$0xff]
    %v6605 = vld [vmem:[%s6547 + $0x1c8] sm:$0xff]
    %v6606 = vld [vmem:[%s6547 + $0x1d0] sm:$0xff]
    %v6607 = vld [vmem:[%s6547 + $0x1d8] sm:$0xff]
    %v6608 = vld [vmem:[%s6547 + $0x1e0] sm:$0xff]
    %v6609 = vld [vmem:[%s6547 + $0x1e8] sm:$0xff]
    %v6610 = vld [vmem:[%s6547 + $0x1f0] sm:$0xff]
    %v6611 = vld [vmem:[%s6547 + $0x1f8] sm:$0xff]
    %v6612 = vld [vmem:[%s6547 + $0x200] sm:$0xff]
    %v6613 = vld [vmem:[%s6547 + $0x208] sm:$0xff]
    %v6614 = vld [vmem:[%s6547 + $0x210] sm:$0xff]
    %v6615 = vld [vmem:[%s6547 + $0x218] sm:$0xff]
    %v6616 = vld [vmem:[%s6547 + $0x220] sm:$0xff]
    %v6617 = vld [vmem:[%s6547 + $0x228] sm:$0xff]
    %v6618 = vld [vmem:[%s6547 + $0x230] sm:$0xff]
    %v6619 = vld [vmem:[%s6547 + $0x238] sm:$0xff]
    %v6620 = vld [vmem:[%s6547 + $0x240] sm:$0xff]
    %v6621 = vld [vmem:[%s6547 + $0x248] sm:$0xff]
    %v6622 = vld [vmem:[%s6547 + $0x250] sm:$0xff]
    %v6623 = vld [vmem:[%s6547 + $0x258] sm:$0xff]
    %v6624 = vld [vmem:[%s6547 + $0x260] sm:$0xff]
    %v6625 = vld [vmem:[%s6547 + $0x268] sm:$0xff]
    %v6626 = vld [vmem:[%s6547 + $0x270] sm:$0xff]
    %v6627 = vld [vmem:[%s6547 + $0x278] sm:$0xff]
    %v6628 = vld [vmem:[%s6547 + $0x280] sm:$0xff]
    %v6629 = vld [vmem:[%s6547 + $0x288] sm:$0xff]
    %v6630 = vld [vmem:[%s6547 + $0x290] sm:$0xff]
    %v6631 = vld [vmem:[%s6547 + $0x298] sm:$0xff]
    %v6632 = vld [vmem:[%s6547 + $0x2a0] sm:$0xff]
    %v6633 = vld [vmem:[%s6547 + $0x2a8] sm:$0xff]
    %v6634 = vld [vmem:[%s6547 + $0x2b0] sm:$0xff]
    %v6635 = vld [vmem:[%s6547 + $0x2b8] sm:$0xff]
    %v6636 = vld [vmem:[%s6547 + $0x2c0] sm:$0xff]
    %v6637 = vld [vmem:[%s6547 + $0x2c8] sm:$0xff]
    %v6638 = vld [vmem:[%s6547 + $0x2d0] sm:$0xff]
    %v6639 = vld [vmem:[%s6547 + $0x2d8] sm:$0xff]
    %v6640 = vld [vmem:[%s6547 + $0x2e0] sm:$0xff]
    %v6641 = vld [vmem:[%s6547 + $0x2e8] sm:$0xff]
    %v6642 = vld [vmem:[%s6547 + $0x2f0] sm:$0xff]
    %v6643 = vld [vmem:[%s6547 + $0x2f8] sm:$0xff]
    %v6644 = vld [vmem:[%s6547 + $0x300] sm:$0xff]
    %v6645 = vld [vmem:[%s6547 + $0x308] sm:$0xff]
    %v6646 = vld [vmem:[%s6547 + $0x310] sm:$0xff]
    %v6647 = vld [vmem:[%s6547 + $0x318] sm:$0xff]
    %v6648 = vld [vmem:[%s6547 + $0x320] sm:$0xff]
    %v6649 = vld [vmem:[%s6547 + $0x328] sm:$0xff]
    %v6650 = vld [vmem:[%s6547 + $0x330] sm:$0xff]
    %v6651 = vld [vmem:[%s6547 + $0x338] sm:$0xff]
    %v6652 = vld [vmem:[%s6547 + $0x340] sm:$0xff]
    %v6653 = vld [vmem:[%s6547 + $0x348] sm:$0xff]
    %v6654 = vld [vmem:[%s6547 + $0x350] sm:$0xff]
    %v6655 = vld [vmem:[%s6547 + $0x358] sm:$0xff]
    %v6656 = vld [vmem:[%s6547 + $0x360] sm:$0xff]
    %v6657 = vld [vmem:[%s6547 + $0x368] sm:$0xff]
    %v6658 = vld [vmem:[%s6547 + $0x370] sm:$0xff]
    %v6659 = vld [vmem:[%s6547 + $0x378] sm:$0xff]
    %v6660 = vld [vmem:[%s6547 + $0x380] sm:$0xff]
    %v6661 = vld [vmem:[%s6547 + $0x388] sm:$0xff]
    %v6662 = vld [vmem:[%s6547 + $0x390] sm:$0xff]
    %v6663 = vld [vmem:[%s6547 + $0x398] sm:$0xff]
    %v6664 = vld [vmem:[%s6547 + $0x3a0] sm:$0xff]
    %v6665 = vld [vmem:[%s6547 + $0x3a8] sm:$0xff]
    %v6666 = vld [vmem:[%s6547 + $0x3b0] sm:$0xff]
    %v6667 = vld [vmem:[%s6547 + $0x3b8] sm:$0xff]
    %v6668 = vld [vmem:[%s6547 + $0x3c0] sm:$0xff]
    %v6669 = vld [vmem:[%s6547 + $0x3c8] sm:$0xff]
    %v6670 = vld [vmem:[%s6547 + $0x3d0] sm:$0xff]
    %v6671 = vld [vmem:[%s6547 + $0x3d8] sm:$0xff]
    %v6672 = vld [vmem:[%s6547 + $0x3e0] sm:$0xff]
    %v6673 = vld [vmem:[%s6547 + $0x3e8] sm:$0xff]
    %v6674 = vld [vmem:[%s6547 + $0x3f0] sm:$0xff]
    %v6675 = vld [vmem:[%s6547 + $0x3f8] sm:$0xff]
    %v6804 = vunpack.c.l.b16 %v6548
    %v6805 = vunpack.c.h.b16 %v6548
    %v6806 = vunpack.c.l.b16 %v6549
    %v6807 = vunpack.c.h.b16 %v6549
    %v6808 = vunpack.c.l.b16 %v6550
    %v6809 = vunpack.c.h.b16 %v6550
    %v6810 = vunpack.c.l.b16 %v6551
    %v6811 = vunpack.c.h.b16 %v6551
    %v6812 = vunpack.c.l.b16 %v6552
    %v6813 = vunpack.c.h.b16 %v6552
    %v6814 = vunpack.c.l.b16 %v6553
    %v6815 = vunpack.c.h.b16 %v6553
    %v6816 = vunpack.c.l.b16 %v6554
    %v6817 = vunpack.c.h.b16 %v6554
    %v6818 = vunpack.c.l.b16 %v6555
    %v6819 = vunpack.c.h.b16 %v6555
    %v6820 = vunpack.c.l.b16 %v6556
    %v6821 = vunpack.c.h.b16 %v6556
    %v6822 = vunpack.c.l.b16 %v6557
    %v6823 = vunpack.c.h.b16 %v6557
    %v6824 = vunpack.c.l.b16 %v6558
    %v6825 = vunpack.c.h.b16 %v6558
    %v6826 = vunpack.c.l.b16 %v6559
    %v6827 = vunpack.c.h.b16 %v6559
    %v6828 = vunpack.c.l.b16 %v6560
    %v6829 = vunpack.c.h.b16 %v6560
    %v6830 = vunpack.c.l.b16 %v6561
    %v6831 = vunpack.c.h.b16 %v6561
    %v6832 = vunpack.c.l.b16 %v6562
    %v6833 = vunpack.c.h.b16 %v6562
    %v6834 = vunpack.c.l.b16 %v6563
    %v6835 = vunpack.c.h.b16 %v6563
    %v6836 = vunpack.c.l.b16 %v6564
    %v6837 = vunpack.c.h.b16 %v6564
    %v6838 = vunpack.c.l.b16 %v6565
    %v6839 = vunpack.c.h.b16 %v6565
    %v6840 = vunpack.c.l.b16 %v6566
    %v6841 = vunpack.c.h.b16 %v6566
    %v6842 = vunpack.c.l.b16 %v6567
    %v6843 = vunpack.c.h.b16 %v6567
    %v6844 = vunpack.c.l.b16 %v6568
    %v6845 = vunpack.c.h.b16 %v6568
    %v6846 = vunpack.c.l.b16 %v6569
    %v6847 = vunpack.c.h.b16 %v6569
    %v6848 = vunpack.c.l.b16 %v6570
    %v6849 = vunpack.c.h.b16 %v6570
    %v6850 = vunpack.c.l.b16 %v6571
    %v6851 = vunpack.c.h.b16 %v6571
    %v6852 = vunpack.c.l.b16 %v6572
    %v6853 = vunpack.c.h.b16 %v6572
    %v6854 = vunpack.c.l.b16 %v6573
    %v6855 = vunpack.c.h.b16 %v6573
    %v6856 = vunpack.c.l.b16 %v6574
    %v6857 = vunpack.c.h.b16 %v6574
    %v6858 = vunpack.c.l.b16 %v6575
    %v6859 = vunpack.c.h.b16 %v6575
    %v6860 = vunpack.c.l.b16 %v6576
    %v6861 = vunpack.c.h.b16 %v6576
    %v6862 = vunpack.c.l.b16 %v6577
    %v6863 = vunpack.c.h.b16 %v6577
    %v6864 = vunpack.c.l.b16 %v6578
    %v6865 = vunpack.c.h.b16 %v6578
    %v6866 = vunpack.c.l.b16 %v6579
    %v6867 = vunpack.c.h.b16 %v6579
    %v6868 = vunpack.c.l.b16 %v6580
    %v6869 = vunpack.c.h.b16 %v6580
    %v6870 = vunpack.c.l.b16 %v6581
    %v6871 = vunpack.c.h.b16 %v6581
    %v6872 = vunpack.c.l.b16 %v6582
    %v6873 = vunpack.c.h.b16 %v6582
    %v6874 = vunpack.c.l.b16 %v6583
    %v6875 = vunpack.c.h.b16 %v6583
    %v6876 = vunpack.c.l.b16 %v6584
    %v6877 = vunpack.c.h.b16 %v6584
    %v6878 = vunpack.c.l.b16 %v6585
    %v6879 = vunpack.c.h.b16 %v6585
    %v6880 = vunpack.c.l.b16 %v6586
    %v6881 = vunpack.c.h.b16 %v6586
    %v6882 = vunpack.c.l.b16 %v6587
    %v6883 = vunpack.c.h.b16 %v6587
    %v6884 = vunpack.c.l.b16 %v6588
    %v6885 = vunpack.c.h.b16 %v6588
    %v6886 = vunpack.c.l.b16 %v6589
    %v6887 = vunpack.c.h.b16 %v6589
    %v6888 = vunpack.c.l.b16 %v6590
    %v6889 = vunpack.c.h.b16 %v6590
    %v6890 = vunpack.c.l.b16 %v6591
    %v6891 = vunpack.c.h.b16 %v6591
    %v6892 = vunpack.c.l.b16 %v6592
    %v6893 = vunpack.c.h.b16 %v6592
    %v6894 = vunpack.c.l.b16 %v6593
    %v6895 = vunpack.c.h.b16 %v6593
    %v6896 = vunpack.c.l.b16 %v6594
    %v6897 = vunpack.c.h.b16 %v6594
    %v6898 = vunpack.c.l.b16 %v6595
    %v6899 = vunpack.c.h.b16 %v6595
    %v6900 = vunpack.c.l.b16 %v6596
    %v6901 = vunpack.c.h.b16 %v6596
    %v6902 = vunpack.c.l.b16 %v6597
    %v6903 = vunpack.c.h.b16 %v6597
    %v6904 = vunpack.c.l.b16 %v6598
    %v6905 = vunpack.c.h.b16 %v6598
    %v6906 = vunpack.c.l.b16 %v6599
    %v6907 = vunpack.c.h.b16 %v6599
    %v6908 = vunpack.c.l.b16 %v6600
    %v6909 = vunpack.c.h.b16 %v6600
    %v6910 = vunpack.c.l.b16 %v6601
    %v6911 = vunpack.c.h.b16 %v6601
    %v6912 = vunpack.c.l.b16 %v6602
    %v6913 = vunpack.c.h.b16 %v6602
    %v6914 = vunpack.c.l.b16 %v6603
    %v6915 = vunpack.c.h.b16 %v6603
    %v6916 = vunpack.c.l.b16 %v6604
    %v6917 = vunpack.c.h.b16 %v6604
    %v6918 = vunpack.c.l.b16 %v6605
    %v6919 = vunpack.c.h.b16 %v6605
    %v6920 = vunpack.c.l.b16 %v6606
    %v6921 = vunpack.c.h.b16 %v6606
    %v6922 = vunpack.c.l.b16 %v6607
    %v6923 = vunpack.c.h.b16 %v6607
    %v6924 = vunpack.c.l.b16 %v6608
    %v6925 = vunpack.c.h.b16 %v6608
    %v6926 = vunpack.c.l.b16 %v6609
    %v6927 = vunpack.c.h.b16 %v6609
    %v6928 = vunpack.c.l.b16 %v6610
    %v6929 = vunpack.c.h.b16 %v6610
    %v6930 = vunpack.c.l.b16 %v6611
    %v6931 = vunpack.c.h.b16 %v6611
    %v6932 = vunpack.c.l.b16 %v6612
    %v6933 = vunpack.c.h.b16 %v6612
    %v6934 = vunpack.c.l.b16 %v6613
    %v6935 = vunpack.c.h.b16 %v6613
    %v6936 = vunpack.c.l.b16 %v6614
    %v6937 = vunpack.c.h.b16 %v6614
    %v6938 = vunpack.c.l.b16 %v6615
    %v6939 = vunpack.c.h.b16 %v6615
    %v6940 = vunpack.c.l.b16 %v6616
    %v6941 = vunpack.c.h.b16 %v6616
    %v6942 = vunpack.c.l.b16 %v6617
    %v6943 = vunpack.c.h.b16 %v6617
    %v6944 = vunpack.c.l.b16 %v6618
    %v6945 = vunpack.c.h.b16 %v6618
    %v6946 = vunpack.c.l.b16 %v6619
    %v6947 = vunpack.c.h.b16 %v6619
    %v6948 = vunpack.c.l.b16 %v6620
    %v6949 = vunpack.c.h.b16 %v6620
    %v6950 = vunpack.c.l.b16 %v6621
    %v6951 = vunpack.c.h.b16 %v6621
    %v6952 = vunpack.c.l.b16 %v6622
    %v6953 = vunpack.c.h.b16 %v6622
    %v6954 = vunpack.c.l.b16 %v6623
    %v6955 = vunpack.c.h.b16 %v6623
    %v6956 = vunpack.c.l.b16 %v6624
    %v6957 = vunpack.c.h.b16 %v6624
    %v6958 = vunpack.c.l.b16 %v6625
    %v6959 = vunpack.c.h.b16 %v6625
    %v6960 = vunpack.c.l.b16 %v6626
    %v6961 = vunpack.c.h.b16 %v6626
    %v6962 = vunpack.c.l.b16 %v6627
    %v6963 = vunpack.c.h.b16 %v6627
    %v6964 = vunpack.c.l.b16 %v6628
    %v6965 = vunpack.c.h.b16 %v6628
    %v6966 = vunpack.c.l.b16 %v6629
    %v6967 = vunpack.c.h.b16 %v6629
    %v6968 = vunpack.c.l.b16 %v6630
    %v6969 = vunpack.c.h.b16 %v6630
    %v6970 = vunpack.c.l.b16 %v6631
    %v6971 = vunpack.c.h.b16 %v6631
    %v6972 = vunpack.c.l.b16 %v6632
    %v6973 = vunpack.c.h.b16 %v6632
    %v6974 = vunpack.c.l.b16 %v6633
    %v6975 = vunpack.c.h.b16 %v6633
    %v6976 = vunpack.c.l.b16 %v6634
    %v6977 = vunpack.c.h.b16 %v6634
    %v6978 = vunpack.c.l.b16 %v6635
    %v6979 = vunpack.c.h.b16 %v6635
    %v6980 = vunpack.c.l.b16 %v6636
    %v6981 = vunpack.c.h.b16 %v6636
    %v6982 = vunpack.c.l.b16 %v6637
    %v6983 = vunpack.c.h.b16 %v6637
    %v6984 = vunpack.c.l.b16 %v6638
    %v6985 = vunpack.c.h.b16 %v6638
    %v6986 = vunpack.c.l.b16 %v6639
    %v6987 = vunpack.c.h.b16 %v6639
    %v6988 = vunpack.c.l.b16 %v6640
    %v6989 = vunpack.c.h.b16 %v6640
    %v6990 = vunpack.c.l.b16 %v6641
    %v6991 = vunpack.c.h.b16 %v6641
    %v6992 = vunpack.c.l.b16 %v6642
    %v6993 = vunpack.c.h.b16 %v6642
    %v6994 = vunpack.c.l.b16 %v6643
    %v6995 = vunpack.c.h.b16 %v6643
    %v6996 = vunpack.c.l.b16 %v6644
    %v6997 = vunpack.c.h.b16 %v6644
    %v6998 = vunpack.c.l.b16 %v6645
    %v6999 = vunpack.c.h.b16 %v6645
    %v7000 = vunpack.c.l.b16 %v6646
    %v7001 = vunpack.c.h.b16 %v6646
    %v7002 = vunpack.c.l.b16 %v6647
    %v7003 = vunpack.c.h.b16 %v6647
    %v7004 = vunpack.c.l.b16 %v6648
    %v7005 = vunpack.c.h.b16 %v6648
    %v7006 = vunpack.c.l.b16 %v6649
    %v7007 = vunpack.c.h.b16 %v6649
    %v7008 = vunpack.c.l.b16 %v6650
    %v7009 = vunpack.c.h.b16 %v6650
    %v7010 = vunpack.c.l.b16 %v6651
    %v7011 = vunpack.c.h.b16 %v6651
    %v7012 = vunpack.c.l.b16 %v6652
    %v7013 = vunpack.c.h.b16 %v6652
    %v7014 = vunpack.c.l.b16 %v6653
    %v7015 = vunpack.c.h.b16 %v6653
    %v7016 = vunpack.c.l.b16 %v6654
    %v7017 = vunpack.c.h.b16 %v6654
    %v7018 = vunpack.c.l.b16 %v6655
    %v7019 = vunpack.c.h.b16 %v6655
    %v7020 = vunpack.c.l.b16 %v6656
    %v7021 = vunpack.c.h.b16 %v6656
    %v7022 = vunpack.c.l.b16 %v6657
    %v7023 = vunpack.c.h.b16 %v6657
    %v7024 = vunpack.c.l.b16 %v6658
    %v7025 = vunpack.c.h.b16 %v6658
    %v7026 = vunpack.c.l.b16 %v6659
    %v7027 = vunpack.c.h.b16 %v6659
    %v7028 = vunpack.c.l.b16 %v6660
    %v7029 = vunpack.c.h.b16 %v6660
    %v7030 = vunpack.c.l.b16 %v6661
    %v7031 = vunpack.c.h.b16 %v6661
    %v7032 = vunpack.c.l.b16 %v6662
    %v7033 = vunpack.c.h.b16 %v6662
    %v7034 = vunpack.c.l.b16 %v6663
    %v7035 = vunpack.c.h.b16 %v6663
    %v7036 = vunpack.c.l.b16 %v6664
    %v7037 = vunpack.c.h.b16 %v6664
    %v7038 = vunpack.c.l.b16 %v6665
    %v7039 = vunpack.c.h.b16 %v6665
    %v7040 = vunpack.c.l.b16 %v6666
    %v7041 = vunpack.c.h.b16 %v6666
    %v7042 = vunpack.c.l.b16 %v6667
    %v7043 = vunpack.c.h.b16 %v6667
    %v7044 = vunpack.c.l.b16 %v6668
    %v7045 = vunpack.c.h.b16 %v6668
    %v7046 = vunpack.c.l.b16 %v6669
    %v7047 = vunpack.c.h.b16 %v6669
    %v7048 = vunpack.c.l.b16 %v6670
    %v7049 = vunpack.c.h.b16 %v6670
    %v7050 = vunpack.c.l.b16 %v6671
    %v7051 = vunpack.c.h.b16 %v6671
    %v7052 = vunpack.c.l.b16 %v6672
    %v7053 = vunpack.c.h.b16 %v6672
    %v7054 = vunpack.c.l.b16 %v6673
    %v7055 = vunpack.c.h.b16 %v6673
    %v7056 = vunpack.c.l.b16 %v6674
    %v7057 = vunpack.c.h.b16 %v6674
    %v7058 = vunpack.c.l.b16 %v6675
    %v7059 = vunpack.c.h.b16 %v6675
    %v7060 = vpack.c.b16 %v6808, %v6804
    %v7061 = vpack.c.b16 %v6809, %v6805
    %v7062 = vpack.c.b16 %v6810, %v6806
    %v7063 = vpack.c.b16 %v6811, %v6807
    %v7064 = vpack.c.b16 %v6816, %v6812
    %v7065 = vpack.c.b16 %v6817, %v6813
    %v7066 = vpack.c.b16 %v6818, %v6814
    %v7067 = vpack.c.b16 %v6819, %v6815
    %v7068 = vpack.c.b16 %v6824, %v6820
    %v7069 = vpack.c.b16 %v6825, %v6821
    %v7070 = vpack.c.b16 %v6826, %v6822
    %v7071 = vpack.c.b16 %v6827, %v6823
    %v7072 = vpack.c.b16 %v6832, %v6828
    %v7073 = vpack.c.b16 %v6833, %v6829
    %v7074 = vpack.c.b16 %v6834, %v6830
    %v7075 = vpack.c.b16 %v6835, %v6831
    %v7076 = vpack.c.b16 %v6840, %v6836
    %v7077 = vpack.c.b16 %v6841, %v6837
    %v7078 = vpack.c.b16 %v6842, %v6838
    %v7079 = vpack.c.b16 %v6843, %v6839
    %v7080 = vpack.c.b16 %v6848, %v6844
    %v7081 = vpack.c.b16 %v6849, %v6845
    %v7082 = vpack.c.b16 %v6850, %v6846
    %v7083 = vpack.c.b16 %v6851, %v6847
    %v7084 = vpack.c.b16 %v6856, %v6852
    %v7085 = vpack.c.b16 %v6857, %v6853
    %v7086 = vpack.c.b16 %v6858, %v6854
    %v7087 = vpack.c.b16 %v6859, %v6855
    %v7088 = vpack.c.b16 %v6864, %v6860
    %v7089 = vpack.c.b16 %v6865, %v6861
    %v7090 = vpack.c.b16 %v6866, %v6862
    %v7091 = vpack.c.b16 %v6867, %v6863
    %v7092 = vpack.c.b16 %v6872, %v6868
    %v7093 = vpack.c.b16 %v6873, %v6869
    %v7094 = vpack.c.b16 %v6874, %v6870
    %v7095 = vpack.c.b16 %v6875, %v6871
    %v7096 = vpack.c.b16 %v6880, %v6876
    %v7097 = vpack.c.b16 %v6881, %v6877
    %v7098 = vpack.c.b16 %v6882, %v6878
    %v7099 = vpack.c.b16 %v6883, %v6879
    %v7100 = vpack.c.b16 %v6888, %v6884
    %v7101 = vpack.c.b16 %v6889, %v6885
    %v7102 = vpack.c.b16 %v6890, %v6886
    %v7103 = vpack.c.b16 %v6891, %v6887
    %v7104 = vpack.c.b16 %v6896, %v6892
    %v7105 = vpack.c.b16 %v6897, %v6893
    %v7106 = vpack.c.b16 %v6898, %v6894
    %v7107 = vpack.c.b16 %v6899, %v6895
    %v7108 = vpack.c.b16 %v6904, %v6900
    %v7109 = vpack.c.b16 %v6905, %v6901
    %v7110 = vpack.c.b16 %v6906, %v6902
    %v7111 = vpack.c.b16 %v6907, %v6903
    %v7112 = vpack.c.b16 %v6912, %v6908
    %v7113 = vpack.c.b16 %v6913, %v6909
    %v7114 = vpack.c.b16 %v6914, %v6910
    %v7115 = vpack.c.b16 %v6915, %v6911
    %v7116 = vpack.c.b16 %v6920, %v6916
    %v7117 = vpack.c.b16 %v6921, %v6917
    %v7118 = vpack.c.b16 %v6922, %v6918
    %v7119 = vpack.c.b16 %v6923, %v6919
    %v7120 = vpack.c.b16 %v6928, %v6924
    %v7121 = vpack.c.b16 %v6929, %v6925
    %v7122 = vpack.c.b16 %v6930, %v6926
    %v7123 = vpack.c.b16 %v6931, %v6927
    %v7124 = vpack.c.b16 %v6936, %v6932
    %v7125 = vpack.c.b16 %v6937, %v6933
    %v7126 = vpack.c.b16 %v6938, %v6934
    %v7127 = vpack.c.b16 %v6939, %v6935
    %v7128 = vpack.c.b16 %v6944, %v6940
    %v7129 = vpack.c.b16 %v6945, %v6941
    %v7130 = vpack.c.b16 %v6946, %v6942
    %v7131 = vpack.c.b16 %v6947, %v6943
    %v7132 = vpack.c.b16 %v6952, %v6948
    %v7133 = vpack.c.b16 %v6953, %v6949
    %v7134 = vpack.c.b16 %v6954, %v6950
    %v7135 = vpack.c.b16 %v6955, %v6951
    %v7136 = vpack.c.b16 %v6960, %v6956
    %v7137 = vpack.c.b16 %v6961, %v6957
    %v7138 = vpack.c.b16 %v6962, %v6958
    %v7139 = vpack.c.b16 %v6963, %v6959
    %v7140 = vpack.c.b16 %v6968, %v6964
    %v7141 = vpack.c.b16 %v6969, %v6965
    %v7142 = vpack.c.b16 %v6970, %v6966
    %v7143 = vpack.c.b16 %v6971, %v6967
    %v7144 = vpack.c.b16 %v6976, %v6972
    %v7145 = vpack.c.b16 %v6977, %v6973
    %v7146 = vpack.c.b16 %v6978, %v6974
    %v7147 = vpack.c.b16 %v6979, %v6975
    %v7148 = vpack.c.b16 %v6984, %v6980
    %v7149 = vpack.c.b16 %v6985, %v6981
    %v7150 = vpack.c.b16 %v6986, %v6982
    %v7151 = vpack.c.b16 %v6987, %v6983
    %v7152 = vpack.c.b16 %v6992, %v6988
    %v7153 = vpack.c.b16 %v6993, %v6989
    %v7154 = vpack.c.b16 %v6994, %v6990
    %v7155 = vpack.c.b16 %v6995, %v6991
    %v7156 = vpack.c.b16 %v7000, %v6996
    %v7157 = vpack.c.b16 %v7001, %v6997
    %v7158 = vpack.c.b16 %v7002, %v6998
    %v7159 = vpack.c.b16 %v7003, %v6999
    %v7160 = vpack.c.b16 %v7008, %v7004
    %v7161 = vpack.c.b16 %v7009, %v7005
    %v7162 = vpack.c.b16 %v7010, %v7006
    %v7163 = vpack.c.b16 %v7011, %v7007
    %v7164 = vpack.c.b16 %v7016, %v7012
    %v7165 = vpack.c.b16 %v7017, %v7013
    %v7166 = vpack.c.b16 %v7018, %v7014
    %v7167 = vpack.c.b16 %v7019, %v7015
    %v7168 = vpack.c.b16 %v7024, %v7020
    %v7169 = vpack.c.b16 %v7025, %v7021
    %v7170 = vpack.c.b16 %v7026, %v7022
    %v7171 = vpack.c.b16 %v7027, %v7023
    %v7172 = vpack.c.b16 %v7032, %v7028
    %v7173 = vpack.c.b16 %v7033, %v7029
    %v7174 = vpack.c.b16 %v7034, %v7030
    %v7175 = vpack.c.b16 %v7035, %v7031
    %v7176 = vpack.c.b16 %v7040, %v7036
    %v7177 = vpack.c.b16 %v7041, %v7037
    %v7178 = vpack.c.b16 %v7042, %v7038
    %v7179 = vpack.c.b16 %v7043, %v7039
    %v7180 = vpack.c.b16 %v7048, %v7044
    %v7181 = vpack.c.b16 %v7049, %v7045
    %v7182 = vpack.c.b16 %v7050, %v7046
    %v7183 = vpack.c.b16 %v7051, %v7047
    %v7184 = vpack.c.b16 %v7056, %v7052
    %v7185 = vpack.c.b16 %v7057, %v7053
    %v7186 = vpack.c.b16 %v7058, %v7054
    %v7187 = vpack.c.b16 %v7059, %v7055
    %7316 = vmatpush.bf16.msra.mxu0 %v7088
    %7317 = vmatpush.bf16.msra.mxu0 %v7084
    %7318 = vmatpush.bf16.msra.mxu0 %v7080
    %7319 = vmatpush.bf16.msra.mxu0 %v7076
    %7320 = vmatpush.bf16.msra.mxu0 %v7072
    %7321 = vmatpush.bf16.msra.mxu0 %v7068
    %7322 = vmatpush.bf16.msra.mxu0 %v7064
    %7323 = vmatpush.bf16.msra.mxu0 %v7060
    %7324 = vmatmul.bf16.gmra.mxu0 %v6428
    %v7325 = vpop.f32.mrf.mxu0
    %v7326 = vadd.f32 0.0, %v7325
    %v7327 = vpop.f32.mrf.mxu0
    %v7328 = vadd.f32 0.0, %v7327
    %7329 = vmatmul.bf16.gmra.mxu0 %v6506
    %v7330 = vpop.f32.mrf.mxu0
    %v7331 = vadd.f32 0.0, %v7330
    %v7332 = vpop.f32.mrf.mxu0
    %v7333 = vadd.f32 0.0, %v7332
    %7334 = vdwg.mxu0
    %7335 = vmatpush.bf16.msra.mxu0 %v7120
    %7336 = vmatpush.bf16.msra.mxu0 %v7116
    %7337 = vmatpush.bf16.msra.mxu0 %v7112
    %7338 = vmatpush.bf16.msra.mxu0 %v7108
    %7339 = vmatpush.bf16.msra.mxu0 %v7104
    %7340 = vmatpush.bf16.msra.mxu0 %v7100
    %7341 = vmatpush.bf16.msra.mxu0 %v7096
    %7342 = vmatpush.bf16.msra.mxu0 %v7092
    %7343 = vmatmul.bf16.gmra.mxu0 %v6440
    %v7344 = vpop.f32.mrf.mxu0
    %v7345 = vadd.f32 %v7326, %v7344
    %v7346 = vpop.f32.mrf.mxu0
    %v7347 = vadd.f32 %v7328, %v7346
    %7348 = vmatmul.bf16.gmra.mxu0 %v6518
    %v7349 = vpop.f32.mrf.mxu0
    %v7350 = vadd.f32 %v7331, %v7349
    %v7351 = vpop.f32.mrf.mxu0
    %v7352 = vadd.f32 %v7333, %v7351
    %7353 = vdwg.mxu0
    %7354 = vmatpush.bf16.msra.mxu0 %v7152
    %7355 = vmatpush.bf16.msra.mxu0 %v7148
    %7356 = vmatpush.bf16.msra.mxu0 %v7144
    %7357 = vmatpush.bf16.msra.mxu0 %v7140
    %7358 = vmatpush.bf16.msra.mxu0 %v7136
    %7359 = vmatpush.bf16.msra.mxu0 %v7132
    %7360 = vmatpush.bf16.msra.mxu0 %v7128
    %7361 = vmatpush.bf16.msra.mxu0 %v7124
    %7362 = vmatmul.bf16.gmra.mxu0 %v6452
    %v7363 = vpop.f32.mrf.mxu0
    %v7364 = vadd.f32 %v7345, %v7363
    %v7365 = vpop.f32.mrf.mxu0
    %v7366 = vadd.f32 %v7347, %v7365
    %7367 = vmatmul.bf16.gmra.mxu0 %v6530
    %v7368 = vpop.f32.mrf.mxu0
    %v7369 = vadd.f32 %v7350, %v7368
    %v7370 = vpop.f32.mrf.mxu0
    %v7371 = vadd.f32 %v7352, %v7370
    %7372 = vdwg.mxu0
    %7373 = vmatpush.bf16.msra.mxu0 %v7184
    %7374 = vmatpush.bf16.msra.mxu0 %v7180
    %7375 = vmatpush.bf16.msra.mxu0 %v7176
    %7376 = vmatpush.bf16.msra.mxu0 %v7172
    %7377 = vmatpush.bf16.msra.mxu0 %v7168
    %7378 = vmatpush.bf16.msra.mxu0 %v7164
    %7379 = vmatpush.bf16.msra.mxu0 %v7160
    %7380 = vmatpush.bf16.msra.mxu0 %v7156
    %7381 = vmatmul.bf16.gmra.mxu0 %v6464
    %v7382 = vpop.f32.mrf.mxu0
    %v7383 = vadd.f32 %v7364, %v7382
    %v7384 = vpop.f32.mrf.mxu0
    %v7385 = vadd.f32 %v7366, %v7384
    %7386 = vmatmul.bf16.gmra.mxu0 %v6542
    %v7387 = vpop.f32.mrf.mxu0
    %v7388 = vadd.f32 %v7369, %v7387
    %v7389 = vpop.f32.mrf.mxu0
    %v7390 = vadd.f32 %v7371, %v7389
    %7391 = vdwg.mxu0
    %7392 = vmatpush.bf16.msra.mxu0 %v7089
    %7393 = vmatpush.bf16.msra.mxu0 %v7085
    %7394 = vmatpush.bf16.msra.mxu0 %v7081
    %7395 = vmatpush.bf16.msra.mxu0 %v7077
    %7396 = vmatpush.bf16.msra.mxu0 %v7073
    %7397 = vmatpush.bf16.msra.mxu0 %v7069
    %7398 = vmatpush.bf16.msra.mxu0 %v7065
    %7399 = vmatpush.bf16.msra.mxu0 %v7061
    %7400 = vmatmul.bf16.gmra.mxu0 %v6428
    %v7401 = vpop.f32.mrf.mxu0
    %v7402 = vadd.f32 0.0, %v7401
    %v7403 = vpop.f32.mrf.mxu0
    %v7404 = vadd.f32 0.0, %v7403
    %7405 = vmatmul.bf16.gmra.mxu0 %v6506
    %v7406 = vpop.f32.mrf.mxu0
    %v7407 = vadd.f32 0.0, %v7406
    %v7408 = vpop.f32.mrf.mxu0
    %v7409 = vadd.f32 0.0, %v7408
    %7410 = vdwg.mxu0
    %7411 = vmatpush.bf16.msra.mxu0 %v7121
    %7412 = vmatpush.bf16.msra.mxu0 %v7117
    %7413 = vmatpush.bf16.msra.mxu0 %v7113
    %7414 = vmatpush.bf16.msra.mxu0 %v7109
    %7415 = vmatpush.bf16.msra.mxu0 %v7105
    %7416 = vmatpush.bf16.msra.mxu0 %v7101
    %7417 = vmatpush.bf16.msra.mxu0 %v7097
    %7418 = vmatpush.bf16.msra.mxu0 %v7093
    %7419 = vmatmul.bf16.gmra.mxu0 %v6440
    %v7420 = vpop.f32.mrf.mxu0
    %v7421 = vadd.f32 %v7402, %v7420
    %v7422 = vpop.f32.mrf.mxu0
    %v7423 = vadd.f32 %v7404, %v7422
    %7424 = vmatmul.bf16.gmra.mxu0 %v6518
    %v7425 = vpop.f32.mrf.mxu0
    %v7426 = vadd.f32 %v7407, %v7425
    %v7427 = vpop.f32.mrf.mxu0
    %v7428 = vadd.f32 %v7409, %v7427
    %7429 = vdwg.mxu0
    %7430 = vmatpush.bf16.msra.mxu0 %v7153
    %7431 = vmatpush.bf16.msra.mxu0 %v7149
    %7432 = vmatpush.bf16.msra.mxu0 %v7145
    %7433 = vmatpush.bf16.msra.mxu0 %v7141
    %7434 = vmatpush.bf16.msra.mxu0 %v7137
    %7435 = vmatpush.bf16.msra.mxu0 %v7133
    %7436 = vmatpush.bf16.msra.mxu0 %v7129
    %7437 = vmatpush.bf16.msra.mxu0 %v7125
    %7438 = vmatmul.bf16.gmra.mxu0 %v6452
    %v7439 = vpop.f32.mrf.mxu0
    %v7440 = vadd.f32 %v7421, %v7439
    %v7441 = vpop.f32.mrf.mxu0
    %v7442 = vadd.f32 %v7423, %v7441
    %7443 = vmatmul.bf16.gmra.mxu0 %v6530
    %v7444 = vpop.f32.mrf.mxu0
    %v7445 = vadd.f32 %v7426, %v7444
    %v7446 = vpop.f32.mrf.mxu0
    %v7447 = vadd.f32 %v7428, %v7446
    %7448 = vdwg.mxu0
    %7449 = vmatpush.bf16.msra.mxu0 %v7185
    %7450 = vmatpush.bf16.msra.mxu0 %v7181
    %7451 = vmatpush.bf16.msra.mxu0 %v7177
    %7452 = vmatpush.bf16.msra.mxu0 %v7173
    %7453 = vmatpush.bf16.msra.mxu0 %v7169
    %7454 = vmatpush.bf16.msra.mxu0 %v7165
    %7455 = vmatpush.bf16.msra.mxu0 %v7161
    %7456 = vmatpush.bf16.msra.mxu0 %v7157
    %7457 = vmatmul.bf16.gmra.mxu0 %v6464
    %v7458 = vpop.f32.mrf.mxu0
    %v7459 = vadd.f32 %v7440, %v7458
    %v7460 = vpop.f32.mrf.mxu0
    %v7461 = vadd.f32 %v7442, %v7460
    %7462 = vmatmul.bf16.gmra.mxu0 %v6542
    %v7463 = vpop.f32.mrf.mxu0
    %v7464 = vadd.f32 %v7445, %v7463
    %v7465 = vpop.f32.mrf.mxu0
    %v7466 = vadd.f32 %v7447, %v7465
    %7467 = vdwg.mxu0
    %7468 = vmatpush.bf16.msra.mxu0 %v7090
    %7469 = vmatpush.bf16.msra.mxu0 %v7086
    %7470 = vmatpush.bf16.msra.mxu0 %v7082
    %7471 = vmatpush.bf16.msra.mxu0 %v7078
    %7472 = vmatpush.bf16.msra.mxu0 %v7074
    %7473 = vmatpush.bf16.msra.mxu0 %v7070
    %7474 = vmatpush.bf16.msra.mxu0 %v7066
    %7475 = vmatpush.bf16.msra.mxu0 %v7062
    %7476 = vmatmul.bf16.gmra.mxu0 %v6428
    %v7477 = vpop.f32.mrf.mxu0
    %v7478 = vadd.f32 0.0, %v7477
    %v7479 = vpop.f32.mrf.mxu0
    %v7480 = vadd.f32 0.0, %v7479
    %7481 = vmatmul.bf16.gmra.mxu0 %v6506
    %v7482 = vpop.f32.mrf.mxu0
    %v7483 = vadd.f32 0.0, %v7482
    %v7484 = vpop.f32.mrf.mxu0
    %v7485 = vadd.f32 0.0, %v7484
    %7486 = vdwg.mxu0
    %7487 = vmatpush.bf16.msra.mxu0 %v7122
    %7488 = vmatpush.bf16.msra.mxu0 %v7118
    %7489 = vmatpush.bf16.msra.mxu0 %v7114
    %7490 = vmatpush.bf16.msra.mxu0 %v7110
    %7491 = vmatpush.bf16.msra.mxu0 %v7106
    %7492 = vmatpush.bf16.msra.mxu0 %v7102
    %7493 = vmatpush.bf16.msra.mxu0 %v7098
    %7494 = vmatpush.bf16.msra.mxu0 %v7094
    %7495 = vmatmul.bf16.gmra.mxu0 %v6440
    %v7496 = vpop.f32.mrf.mxu0
    %v7497 = vadd.f32 %v7478, %v7496
    %v7498 = vpop.f32.mrf.mxu0
    %v7499 = vadd.f32 %v7480, %v7498
    %7500 = vmatmul.bf16.gmra.mxu0 %v6518
    %v7501 = vpop.f32.mrf.mxu0
    %v7502 = vadd.f32 %v7483, %v7501
    %v7503 = vpop.f32.mrf.mxu0
    %v7504 = vadd.f32 %v7485, %v7503
    %7505 = vdwg.mxu0
    %7506 = vmatpush.bf16.msra.mxu0 %v7154
    %7507 = vmatpush.bf16.msra.mxu0 %v7150
    %7508 = vmatpush.bf16.msra.mxu0 %v7146
    %7509 = vmatpush.bf16.msra.mxu0 %v7142
    %7510 = vmatpush.bf16.msra.mxu0 %v7138
    %7511 = vmatpush.bf16.msra.mxu0 %v7134
    %7512 = vmatpush.bf16.msra.mxu0 %v7130
    %7513 = vmatpush.bf16.msra.mxu0 %v7126
    %7514 = vmatmul.bf16.gmra.mxu0 %v6452
    %v7515 = vpop.f32.mrf.mxu0
    %v7516 = vadd.f32 %v7497, %v7515
    %v7517 = vpop.f32.mrf.mxu0
    %v7518 = vadd.f32 %v7499, %v7517
    %7519 = vmatmul.bf16.gmra.mxu0 %v6530
    %v7520 = vpop.f32.mrf.mxu0
    %v7521 = vadd.f32 %v7502, %v7520
    %v7522 = vpop.f32.mrf.mxu0
    %v7523 = vadd.f32 %v7504, %v7522
    %7524 = vdwg.mxu0
    %7525 = vmatpush.bf16.msra.mxu0 %v7186
    %7526 = vmatpush.bf16.msra.mxu0 %v7182
    %7527 = vmatpush.bf16.msra.mxu0 %v7178
    %7528 = vmatpush.bf16.msra.mxu0 %v7174
    %7529 = vmatpush.bf16.msra.mxu0 %v7170
    %7530 = vmatpush.bf16.msra.mxu0 %v7166
    %7531 = vmatpush.bf16.msra.mxu0 %v7162
    %7532 = vmatpush.bf16.msra.mxu0 %v7158
    %7533 = vmatmul.bf16.gmra.mxu0 %v6464
    %v7534 = vpop.f32.mrf.mxu0
    %v7535 = vadd.f32 %v7516, %v7534
    %v7536 = vpop.f32.mrf.mxu0
    %v7537 = vadd.f32 %v7518, %v7536
    %7538 = vmatmul.bf16.gmra.mxu0 %v6542
    %v7539 = vpop.f32.mrf.mxu0
    %v7540 = vadd.f32 %v7521, %v7539
    %v7541 = vpop.f32.mrf.mxu0
    %v7542 = vadd.f32 %v7523, %v7541
    %7543 = vdwg.mxu0
    %7544 = vmatpush.bf16.msra.mxu0 %v7091
    %7545 = vmatpush.bf16.msra.mxu0 %v7087
    %7546 = vmatpush.bf16.msra.mxu0 %v7083
    %7547 = vmatpush.bf16.msra.mxu0 %v7079
    %7548 = vmatpush.bf16.msra.mxu0 %v7075
    %7549 = vmatpush.bf16.msra.mxu0 %v7071
    %7550 = vmatpush.bf16.msra.mxu0 %v7067
    %7551 = vmatpush.bf16.msra.mxu0 %v7063
    %7552 = vmatmul.bf16.gmra.mxu0 %v6428
    %v7553 = vpop.f32.mrf.mxu0
    %v7554 = vadd.f32 0.0, %v7553
    %v7555 = vpop.f32.mrf.mxu0
    %v7556 = vadd.f32 0.0, %v7555
    %7557 = vmatmul.bf16.gmra.mxu0 %v6506
    %v7558 = vpop.f32.mrf.mxu0
    %v7559 = vadd.f32 0.0, %v7558
    %v7560 = vpop.f32.mrf.mxu0
    %v7561 = vadd.f32 0.0, %v7560
    %7562 = vdwg.mxu0
    %7563 = vmatpush.bf16.msra.mxu0 %v7123
    %7564 = vmatpush.bf16.msra.mxu0 %v7119
    %7565 = vmatpush.bf16.msra.mxu0 %v7115
    %7566 = vmatpush.bf16.msra.mxu0 %v7111
    %7567 = vmatpush.bf16.msra.mxu0 %v7107
    %7568 = vmatpush.bf16.msra.mxu0 %v7103
    %7569 = vmatpush.bf16.msra.mxu0 %v7099
    %7570 = vmatpush.bf16.msra.mxu0 %v7095
    %7571 = vmatmul.bf16.gmra.mxu0 %v6440
    %v7572 = vpop.f32.mrf.mxu0
    %v7573 = vadd.f32 %v7554, %v7572
    %v7574 = vpop.f32.mrf.mxu0
    %v7575 = vadd.f32 %v7556, %v7574
    %7576 = vmatmul.bf16.gmra.mxu0 %v6518
    %v7577 = vpop.f32.mrf.mxu0
    %v7578 = vadd.f32 %v7559, %v7577
    %v7579 = vpop.f32.mrf.mxu0
    %v7580 = vadd.f32 %v7561, %v7579
    %7581 = vdwg.mxu0
    %7582 = vmatpush.bf16.msra.mxu0 %v7155
    %7583 = vmatpush.bf16.msra.mxu0 %v7151
    %7584 = vmatpush.bf16.msra.mxu0 %v7147
    %7585 = vmatpush.bf16.msra.mxu0 %v7143
    %7586 = vmatpush.bf16.msra.mxu0 %v7139
    %7587 = vmatpush.bf16.msra.mxu0 %v7135
    %7588 = vmatpush.bf16.msra.mxu0 %v7131
    %7589 = vmatpush.bf16.msra.mxu0 %v7127
    %7590 = vmatmul.bf16.gmra.mxu0 %v6452
    %v7591 = vpop.f32.mrf.mxu0
    %v7592 = vadd.f32 %v7573, %v7591
    %v7593 = vpop.f32.mrf.mxu0
    %v7594 = vadd.f32 %v7575, %v7593
    %7595 = vmatmul.bf16.gmra.mxu0 %v6530
    %v7596 = vpop.f32.mrf.mxu0
    %v7597 = vadd.f32 %v7578, %v7596
    %v7598 = vpop.f32.mrf.mxu0
    %v7599 = vadd.f32 %v7580, %v7598
    %7600 = vdwg.mxu0
    %7601 = vmatpush.bf16.msra.mxu0 %v7187
    %7602 = vmatpush.bf16.msra.mxu0 %v7183
    %7603 = vmatpush.bf16.msra.mxu0 %v7179
    %7604 = vmatpush.bf16.msra.mxu0 %v7175
    %7605 = vmatpush.bf16.msra.mxu0 %v7171
    %7606 = vmatpush.bf16.msra.mxu0 %v7167
    %7607 = vmatpush.bf16.msra.mxu0 %v7163
    %7608 = vmatpush.bf16.msra.mxu0 %v7159
    %7609 = vmatmul.bf16.gmra.mxu0 %v6464
    %v7610 = vpop.f32.mrf.mxu0
    %v7611 = vadd.f32 %v7592, %v7610
    %v7612 = vpop.f32.mrf.mxu0
    %v7613 = vadd.f32 %v7594, %v7612
    %7614 = vmatmul.bf16.gmra.mxu0 %v6542
    %v7615 = vpop.f32.mrf.mxu0
    %v7616 = vadd.f32 %v7597, %v7615
    %v7617 = vpop.f32.mrf.mxu0
    %v7618 = vadd.f32 %v7599, %v7617
    %7619 = vdwg.mxu0
    %v7620 = vadd.f32 %v6142, %v7383
    %v7621 = vadd.f32 %v6218, %v7459
    %v7622 = vadd.f32 %v6294, %v7535
    %v7623 = vadd.f32 %v6370, %v7611
    %v7624 = vadd.f32 %v6144, %v7385
    %v7625 = vadd.f32 %v6220, %v7461
    %v7626 = vadd.f32 %v6296, %v7537
    %v7627 = vadd.f32 %v6372, %v7613
    %v7628 = vadd.f32 %v6147, %v7388
    %v7629 = vadd.f32 %v6223, %v7464
    %v7630 = vadd.f32 %v6299, %v7540
    %v7631 = vadd.f32 %v6375, %v7616
    %v7632 = vadd.f32 %v6149, %v7390
    %v7633 = vadd.f32 %v6225, %v7466
    %v7634 = vadd.f32 %v6301, %v7542
    %v7635 = vadd.f32 %v6377, %v7618
    %v7636 = vadd.f32 %v7620, %v7624
    %v7637 = vadd.f32 %v7636, %v7628
    %v7638 = vadd.f32 %v7637, %v7632
    %v7639 = vrot.slane %v7638, 4
    %v7640 = vadd.f32 %v7638, %v7639
    %v7641 = vrot.slane %v7640, 2
    %v7642 = vadd.f32 %v7640, %v7641
    %v7643 = vrot.slane %v7642, 1
    %v7644 = vadd.f32 %v7642, %v7643
    %v7645 = vadd.f32 %v7621, %v7625
    %v7646 = vadd.f32 %v7645, %v7629
    %v7647 = vadd.f32 %v7646, %v7633
    %v7648 = vrot.slane %v7647, 4
    %v7649 = vadd.f32 %v7647, %v7648
    %v7650 = vrot.slane %v7649, 2
    %v7651 = vadd.f32 %v7649, %v7650
    %v7652 = vrot.slane %v7651, 1
    %v7653 = vadd.f32 %v7651, %v7652
    %v7654 = vadd.f32 %v7622, %v7626
    %v7655 = vadd.f32 %v7654, %v7630
    %v7656 = vadd.f32 %v7655, %v7634
    %v7657 = vrot.slane %v7656, 4
    %v7658 = vadd.f32 %v7656, %v7657
    %v7659 = vrot.slane %v7658, 2
    %v7660 = vadd.f32 %v7658, %v7659
    %v7661 = vrot.slane %v7660, 1
    %v7662 = vadd.f32 %v7660, %v7661
    %v7663 = vadd.f32 %v7623, %v7627
    %v7664 = vadd.f32 %v7663, %v7631
    %v7665 = vadd.f32 %v7664, %v7635
    %v7666 = vrot.slane %v7665, 4
    %v7667 = vadd.f32 %v7665, %v7666
    %v7668 = vrot.slane %v7667, 2
    %v7669 = vadd.f32 %v7667, %v7668
    %v7670 = vrot.slane %v7669, 1
    %v7671 = vadd.f32 %v7669, %v7670
    %v7672 = vadd.f32 %v7644, %v7662
    %v7673 = vadd.f32 %v7653, %v7671
    %v7674 = vadd.f32 %v7672, %v7673
    %7676 = vrot.lane.b32.xlu0 %v7674, 64
    %v7677 = vpop.permute.xlu0 %7676
    %v7679 = vadd.f32 %v7674, %v7677
    %7681 = vrot.lane.b32.xlu0 %v7679, 96
    %v7682 = vpop.permute.xlu0 %7681
    %v7684 = vadd.f32 %v7679, %v7682
    %v7685 = vmul.f32 %v7620, %v7620
    %v7686 = vmul.f32 %v7621, %v7621
    %v7687 = vmul.f32 %v7622, %v7622
    %v7688 = vmul.f32 %v7623, %v7623
    %v7689 = vmul.f32 %v7624, %v7624
    %v7690 = vmul.f32 %v7625, %v7625
    %v7691 = vmul.f32 %v7626, %v7626
    %v7692 = vmul.f32 %v7627, %v7627
    %v7693 = vmul.f32 %v7628, %v7628
    %v7694 = vmul.f32 %v7629, %v7629
    %v7695 = vmul.f32 %v7630, %v7630
    %v7696 = vmul.f32 %v7631, %v7631
    %v7697 = vmul.f32 %v7632, %v7632
    %v7698 = vmul.f32 %v7633, %v7633
    %v7699 = vmul.f32 %v7634, %v7634
    %v7700 = vmul.f32 %v7635, %v7635
    %v7701 = vadd.f32 %v7685, %v7689
    %v7702 = vadd.f32 %v7701, %v7693
    %v7703 = vadd.f32 %v7702, %v7697
    %v7704 = vrot.slane %v7703, 4
    %v7705 = vadd.f32 %v7703, %v7704
    %v7706 = vrot.slane %v7705, 2
    %v7707 = vadd.f32 %v7705, %v7706
    %v7708 = vrot.slane %v7707, 1
    %v7709 = vadd.f32 %v7707, %v7708
    %v7710 = vadd.f32 %v7686, %v7690
    %v7711 = vadd.f32 %v7710, %v7694
    %v7712 = vadd.f32 %v7711, %v7698
    %v7713 = vrot.slane %v7712, 4
    %v7714 = vadd.f32 %v7712, %v7713
    %v7715 = vrot.slane %v7714, 2
    %v7716 = vadd.f32 %v7714, %v7715
    %v7717 = vrot.slane %v7716, 1
    %v7718 = vadd.f32 %v7716, %v7717
    %v7719 = vadd.f32 %v7687, %v7691
    %v7720 = vadd.f32 %v7719, %v7695
    %v7721 = vadd.f32 %v7720, %v7699
    %v7722 = vrot.slane %v7721, 4
    %v7723 = vadd.f32 %v7721, %v7722
    %v7724 = vrot.slane %v7723, 2
    %v7725 = vadd.f32 %v7723, %v7724
    %v7726 = vrot.slane %v7725, 1
    %v7727 = vadd.f32 %v7725, %v7726
    %v7728 = vadd.f32 %v7688, %v7692
    %v7729 = vadd.f32 %v7728, %v7696
    %v7730 = vadd.f32 %v7729, %v7700
    %v7731 = vrot.slane %v7730, 4
    %v7732 = vadd.f32 %v7730, %v7731
    %v7733 = vrot.slane %v7732, 2
    %v7734 = vadd.f32 %v7732, %v7733
    %v7735 = vrot.slane %v7734, 1
    %v7736 = vadd.f32 %v7734, %v7735
    %v7737 = vadd.f32 %v7709, %v7727
    %v7738 = vadd.f32 %v7718, %v7736
    %v7739 = vadd.f32 %v7737, %v7738
    %7741 = vrot.lane.b32.xlu0 %v7739, 64
    %v7742 = vpop.permute.xlu0 %7741
    %v7744 = vadd.f32 %v7739, %v7742
    %7746 = vrot.lane.b32.xlu0 %v7744, 96
    %v7747 = vpop.permute.xlu0 %7746
    %v7749 = vadd.f32 %v7744, %v7747
    %v7750 = vmul.f32 %v7684, 0.001953125
    %v7751 = vmul.f32 %v7749, 0.001953125
    %v7752 = vmul.f32 %v7750, %v7750
    %v7753 = vsub.f32 %v7751, %v7752
    %v7754 = vmax.f32 %v7753, 0.0
    %v7755 = vld [vmem:[#allocation10] sm:$0x1]
    %v7756 = vadd.f32 %v7754, 1e-05
    %v7757 = vrsqrt.pop %v7756
    %v7758 = vmul.f32 %v7757, %v7756
    %v7759 = vmul.f32 %v7758, %v7757
    %v7760 = vmul.f32 0.5, %v7759
    %v7761 = vsub.f32 1.5, %v7760
    %v7762 = vmul.f32 %v7757, %v7761
    %vm7763 = vweird.f32 %v7756
    %vm7764 = vweird.f32 %v7757
    %vm7765 = vmor %vm7763, %vm7764
    %v7766 = vsel %vm7765, %v7757, %v7762
    %v7767 = vmul.f32 %v7755, %v7766
    %v7768 = vld [vmem:[#allocation12] sm:$0x1]
    %v7769 = vmul.f32 %v7750, %v7767
    %v7770 = vsub.f32 %v7768, %v7769
    %v7772 = vperm.slane %v7767, 0
    %7773 = vrot.lane.b32.xlu0 %v7772, 32
    %v7774 = vpop.permute.xlu0 %7773
    %v7776 = vsel %vm3920, %v7767, %v7774
    %7778 = vrot.lane.b32.xlu0 %v7776, 64
    %v7779 = vpop.permute.xlu0 %7778
    %v7781 = vsel %vm3926, %v7776, %v7779
    %v7782 = vperm.slane %v7781, 0
    %v7783 = vmul.f32 %v7620, %v7782
    %v7784 = vmul.f32 %v7621, %v7782
    %v7785 = vmul.f32 %v7622, %v7782
    %v7786 = vmul.f32 %v7623, %v7782
    %v7787 = vmul.f32 %v7624, %v7782
    %v7788 = vmul.f32 %v7625, %v7782
    %v7789 = vmul.f32 %v7626, %v7782
    %v7790 = vmul.f32 %v7627, %v7782
    %v7791 = vmul.f32 %v7628, %v7782
    %v7792 = vmul.f32 %v7629, %v7782
    %v7793 = vmul.f32 %v7630, %v7782
    %v7794 = vmul.f32 %v7631, %v7782
    %v7795 = vmul.f32 %v7632, %v7782
    %v7796 = vmul.f32 %v7633, %v7782
    %v7797 = vmul.f32 %v7634, %v7782
    %v7798 = vmul.f32 %v7635, %v7782
    %v7800 = vperm.slane %v7770, 0
    %7801 = vrot.lane.b32.xlu0 %v7800, 32
    %v7802 = vpop.permute.xlu0 %7801
    %v7804 = vsel %vm3920, %v7770, %v7802
    %7806 = vrot.lane.b32.xlu0 %v7804, 64
    %v7807 = vpop.permute.xlu0 %7806
    %v7809 = vsel %vm3926, %v7804, %v7807
    %v7810 = vperm.slane %v7809, 0
    %v7811 = vadd.f32 %v7783, %v7810
    %v7812 = vadd.f32 %v7784, %v7810
    %v7813 = vadd.f32 %v7785, %v7810
    %v7814 = vadd.f32 %v7786, %v7810
    %v7815 = vadd.f32 %v7787, %v7810
    %v7816 = vadd.f32 %v7788, %v7810
    %v7817 = vadd.f32 %v7789, %v7810
    %v7818 = vadd.f32 %v7790, %v7810
    %v7819 = vadd.f32 %v7791, %v7810
    %v7820 = vadd.f32 %v7792, %v7810
    %v7821 = vadd.f32 %v7793, %v7810
    %v7822 = vadd.f32 %v7794, %v7810
    %v7823 = vadd.f32 %v7795, %v7810
    %v7824 = vadd.f32 %v7796, %v7810
    %v7825 = vadd.f32 %v7797, %v7810
    %v7826 = vadd.f32 %v7798, %v7810
    %v7827 = vld [vmem:[%s0] sm:$0xff]
    %v7828 = vld [vmem:[%s0 + $0x8] sm:$0xff]
    %v7829 = vld [vmem:[%s0 + $0x10] sm:$0xff]
    %v7830 = vld [vmem:[%s0 + $0x18] sm:$0xff]
    %v7831 = vld [vmem:[%s0 + $0x20] sm:$0xff]
    %v7832 = vld [vmem:[%s0 + $0x28] sm:$0xff]
    %v7833 = vld [vmem:[%s0 + $0x30] sm:$0xff]
    %v7834 = vld [vmem:[%s0 + $0x38] sm:$0xff]
    %v7835 = vld [vmem:[%s0 + $0x40] sm:$0xff]
    %v7836 = vld [vmem:[%s0 + $0x48] sm:$0xff]
    %v7837 = vld [vmem:[%s0 + $0x50] sm:$0xff]
    %v7838 = vld [vmem:[%s0 + $0x58] sm:$0xff]
    %v7839 = vld [vmem:[%s0 + $0x60] sm:$0xff]
    %v7840 = vld [vmem:[%s0 + $0x68] sm:$0xff]
    %v7841 = vld [vmem:[%s0 + $0x70] sm:$0xff]
    %v7842 = vld [vmem:[%s0 + $0x78] sm:$0xff]
    %v7843 = vadd.f32 %v7811, %v7827
    %v7844 = vadd.f32 %v7812, %v7828
    %v7845 = vadd.f32 %v7813, %v7829
    %v7846 = vadd.f32 %v7814, %v7830
    %v7847 = vadd.f32 %v7815, %v7831
    %v7848 = vadd.f32 %v7816, %v7832
    %v7849 = vadd.f32 %v7817, %v7833
    %v7850 = vadd.f32 %v7818, %v7834
    %v7851 = vadd.f32 %v7819, %v7835
    %v7852 = vadd.f32 %v7820, %v7836
    %v7853 = vadd.f32 %v7821, %v7837
    %v7854 = vadd.f32 %v7822, %v7838
    %v7855 = vadd.f32 %v7823, %v7839
    %v7856 = vadd.f32 %v7824, %v7840
    %v7857 = vadd.f32 %v7825, %v7841
    %v7858 = vadd.f32 %v7826, %v7842
    %v7859 = vmax.f32 %v7843, 0.0
    %v7860 = vmax.f32 %v7844, 0.0
    %v7861 = vmax.f32 %v7845, 0.0
    %v7862 = vmax.f32 %v7846, 0.0
    %v7863 = vmax.f32 %v7847, 0.0
    %v7864 = vmax.f32 %v7848, 0.0
    %v7865 = vmax.f32 %v7849, 0.0
    %v7866 = vmax.f32 %v7850, 0.0
    %v7867 = vmax.f32 %v7851, 0.0
    %v7868 = vmax.f32 %v7852, 0.0
    %v7869 = vmax.f32 %v7853, 0.0
    %v7870 = vmax.f32 %v7854, 0.0
    %v7871 = vmax.f32 %v7855, 0.0
    %v7872 = vmax.f32 %v7856, 0.0
    %v7873 = vmax.f32 %v7857, 0.0
    %v7874 = vmax.f32 %v7858, 0.0
    %7875 = vst [vmem:[%s7] sm:$0xff] %v7859
    %7876 = vst [vmem:[%s7 + $0x8] sm:$0xff] %v7860
    %7877 = vst [vmem:[%s7 + $0x10] sm:$0xff] %v7861
    %7878 = vst [vmem:[%s7 + $0x18] sm:$0xff] %v7862
    %7879 = vst [vmem:[%s7 + $0x20] sm:$0xff] %v7863
    %7880 = vst [vmem:[%s7 + $0x28] sm:$0xff] %v7864
    %7881 = vst [vmem:[%s7 + $0x30] sm:$0xff] %v7865
    %7882 = vst [vmem:[%s7 + $0x38] sm:$0xff] %v7866
    %7883 = vst [vmem:[%s7 + $0x40] sm:$0xff] %v7867
    %7884 = vst [vmem:[%s7 + $0x48] sm:$0xff] %v7868
    %7885 = vst [vmem:[%s7 + $0x50] sm:$0xff] %v7869
    %7886 = vst [vmem:[%s7 + $0x58] sm:$0xff] %v7870
    %7887 = vst [vmem:[%s7 + $0x60] sm:$0xff] %v7871
    %7888 = vst [vmem:[%s7 + $0x68] sm:$0xff] %v7872
    %7889 = vst [vmem:[%s7 + $0x70] sm:$0xff] %v7873
    %7890 = vst [vmem:[%s7 + $0x78] sm:$0xff] %v7874
    // Predicated region
    $region50: #{resblock_forward.1} parent=1 // pred_check
      _
    $region51: #{resblock_forward.1} parent=1 // pred_check_branch
      %7892 = sbr.rel (0) target = $region53
    $region52: #{resblock_forward.1} parent=1 // pred_region
      _
    $region53: #{resblock_forward.1} parent=1 // pred_fallthru
      _
    // Predicated region
    $region54: #{resblock_forward.1} parent=1 // pred_check
      _
    $region55: #{resblock_forward.1} parent=1 // pred_check_branch
      %7894 = sbr.rel (0) target = $region57
    $region56: #{resblock_forward.1} parent=1 // pred_region
      _
    $region57: #{resblock_forward.1} parent=1 // pred_fallthru
      _
    %7895 = vsyncpa [#allocation6], 1
    %7896 = vsyncpa [#allocation8], 1
    %7897 = vsyncpa [#allocation11], 1
  %7898 = vsyncmov [#allocation4]
  %s7899 = vpop.sfrf %7898
  %p7900 = scmp.eq.s32.totalorder %s7899, 0
  %p7901 = pneg %p7900
  %7903 = shalt.err (%p7901)

</llo_original>
